<compile_context>
chip_gen: v7x
topology: tpu7x:2x2x1
jax: 0.10.0
libtpu: 0.0.40
codegen_flags: <defaults>
</compile_context>

<pallas_src>
import functools

import jax
import jax.numpy as jnp
import numpy as np
from jax import lax
from jax.experimental import pallas as pl
from jax.experimental.pallas import tpu as pltpu

MATMUL_DTYPE = jnp.bfloat16      # MXU input dtype (accumulate in f32)
_NEG_LARGE = -3.0e38             # max-pool pad fill (== -inf for this pooling)


# ----------------------------------------------------------------------------
# In-kernel helpers (all static-shaped, Mosaic-friendly)
# ----------------------------------------------------------------------------
def _pad2d(x, pad, value):
    """Pad last two dims of (C, H, W) by `pad` with `value` via concatenation."""
    if pad == 0:
        return x
    C, H, W = x.shape
    col = jnp.full((C, H, pad), value, x.dtype)
    x = jnp.concatenate([col, x, col], axis=2)
    row = jnp.full((C, pad, W + 2 * pad), value, x.dtype)
    return jnp.concatenate([row, x, row], axis=1)


def _im2col(xp, K, H, W):
    """(C, H+K-1, W+K-1) padded input -> (K*K*C, H*W) patch matrix.

    Row order is tap-major / channel-minor, matching weights reshaped as
    (Cout, K, K, Cin) -> (Cout, K*K*Cin).
    """
    C = xp.shape[0]
    cols = []
    for i in range(K):
        for j in range(K):
            cols.append(xp[:, i:i + H, j:j + W].reshape(C, H * W))
    return jnp.concatenate(cols, axis=0)


def _matmul_shift_relu(w_ref, shift_ref, act):
    """(Cout, K) bf16 @ (K, M) bf16 -> f32 MXU matmul, + per-channel shift, ReLU."""
    z = jnp.dot(w_ref[...], act.astype(w_ref.dtype),
                preferred_element_type=jnp.float32)
    return jnp.maximum(z + shift_ref[...], 0.0)


# ----------------------------------------------------------------------------
# Fused InceptionBlock kernel: one image (batch tile) per grid step.
# ----------------------------------------------------------------------------
def _inception_kernel(x_ref, w1_ref, s1_ref, w2_ref, s2_ref, w3_ref, s3_ref,
                      w4_ref, s4_ref, o_ref, *, H, W, out_1x1, red_3x3,
                      red_5x5, is_custom):
    HW = H * W
    Cin = x_ref.shape[1]
    x_img = x_ref[...].reshape(Cin, H, W)           # (Cin, H, W) f32
    x_flat = x_img.reshape(Cin, HW)                 # lane-dense (Cin, M)

    # stage 1: fused 1x1 convs (branch1 | branch2-reduce | branch3-reduce)
    z1 = _matmul_shift_relu(w1_ref, s1_ref, x_flat)  # (out_1x1+red3+red5, M)
    y1 = z1[0:out_1x1]
    y2 = z1[out_1x1:out_1x1 + red_3x3]
    y3 = z1[out_1x1 + red_3x3:out_1x1 + red_3x3 + red_5x5]

    # branch2: 3x3 conv (pad=1) on y2 via im2col -> one fat matmul (K = 9*red3)
    y2p = _pad2d(y2.reshape(red_3x3, H, W), 1, 0.0)
    o2 = _matmul_shift_relu(w2_ref, s2_ref, _im2col(y2p, 3, H, W))

    outs = [y1, o2]

    if not is_custom:
        # branch3: 5x5 conv (pad=2) on y3 via im2col (K = 25*red5)
        y3p = _pad2d(y3.reshape(red_5x5, H, W), 2, 0.0)
        o3 = _matmul_shift_relu(w3_ref, s3_ref, _im2col(y3p, 5, H, W))
        outs.append(o3)

    # branch4: 3x3 max-pool (stride 1, pad 1, halo handled in-kernel) + 1x1 conv
    xpad = _pad2d(x_img, 1, _NEG_LARGE)
    pooled = xpad[:, 0:H, 0:W]
    for i in range(3):
        for j in range(3):
            if i == 0 and j == 0:
                continue
            pooled = jnp.maximum(pooled, xpad[:, i:i + H, j:j + W])
    o4 = _matmul_shift_relu(w4_ref, s4_ref, pooled.reshape(Cin, HW))
    outs.append(o4)

    result = jnp.concatenate(outs, axis=0)          # (Cout_total, M) lane-dense
    o_ref[...] = result.reshape(1, result.shape[0], HW)


# ----------------------------------------------------------------------------
# Parameter construction (raw ConvBlock params, deterministic)
# ----------------------------------------------------------------------------
def init_convblock(key, cin, cout, k):
    k1, k2, k3, k4, k5, k6 = jax.random.split(key, 6)
    w = jax.random.normal(k1, (cout, cin, k, k), jnp.float32) / np.sqrt(cin * k * k)
    b = jax.random.normal(k2, (cout,), jnp.float32) * 0.1
    gamma = jax.random.uniform(k3, (cout,), jnp.float32, 0.5, 1.5)
    beta = jax.random.normal(k4, (cout,), jnp.float32) * 0.1
    rmean = jax.random.normal(k5, (cout,), jnp.float32) * 0.1
    rvar = jax.random.uniform(k6, (cout,), jnp.float32, 0.5, 1.5)
    return dict(w=w, b=b, gamma=gamma, beta=beta, rmean=rmean, rvar=rvar)


def init_inception(key, in_ch, out_1x1, red_3x3, out_3x3, red_5x5, out_5x5,
                   out_pool):
    ks = jax.random.split(key, 6)
    return dict(
        b1=init_convblock(ks[0], in_ch, out_1x1, 1),
        b2a=init_convblock(ks[1], in_ch, red_3x3, 1),
        b2b=init_convblock(ks[2], red_3x3, out_3x3, 3),
        b3a=init_convblock(ks[3], in_ch, red_5x5, 1),
        b3b=init_convblock(ks[4], red_5x5, out_5x5, 5),
        b4=init_convblock(ks[5], in_ch, out_pool, 1),
    )


# ----------------------------------------------------------------------------
# Param packing: fold BN(eval) scale into weights, build fused / im2col mats
# ----------------------------------------------------------------------------
def _fold_convblock(p, eps=1e-5):
    scale = p['gamma'] / jnp.sqrt(p['rvar'] + eps)
    shift = p['beta'] + (p['b'] - p['rmean']) * scale
    w_fold = p['w'] * scale[:, None, None, None]     # (Cout, Cin, K, K)
    return w_fold, shift


def _conv_mat(w_fold):
    """(Cout, Cin, K, K) -> (Cout, K*K*Cin) matching _im2col row order."""
    cout, cin, k, _ = w_fold.shape
    return jnp.transpose(w_fold, (0, 2, 3, 1)).reshape(cout, k * k * cin) \
              .astype(MATMUL_DTYPE)


def pack_inception_params(P):
    w1, s1 = _fold_convblock(P['b1'])
    w2a, s2a = _fold_convblock(P['b2a'])
    w2b, s2b = _fold_convblock(P['b2b'])
    w3a, s3a = _fold_convblock(P['b3a'])
    w3b, s3b = _fold_convblock(P['b3b'])
    w4, s4 = _fold_convblock(P['b4'])

    # fused stage-1 (1x1) weights: rows = [branch1 | branch2-reduce | branch3-reduce]
    w_s1 = jnp.concatenate([w1[:, :, 0, 0], w2a[:, :, 0, 0], w3a[:, :, 0, 0]],
                           axis=0).astype(MATMUL_DTYPE)
    s_s1 = jnp.concatenate([s1, s2a, s3a], axis=0)[:, None].astype(jnp.float32)

    return dict(
        w_s1=w_s1, s_s1=s_s1,
        w_2b=_conv_mat(w2b), s_2b=s2b[:, None].astype(jnp.float32),
        w_3b=_conv_mat(w3b), s_3b=s3b[:, None].astype(jnp.float32),
        w_4=w4[:, :, 0, 0].astype(MATMUL_DTYPE),
        s_4=s4[:, None].astype(jnp.float32),
    )


# ----------------------------------------------------------------------------
# InceptionBlock forward (single fused pallas_call, gridded over the batch)
# ----------------------------------------------------------------------------
def inception_forward(x_nchw, P, is_custom=False):
    N, Cin, H, W = x_nchw.shape
    HW = H * W
    packed = pack_inception_params(P)

    out_1x1 = P['b1']['w'].shape[0]
    red_3x3 = P['b2a']['w'].shape[0]
    out_3x3 = P['b2b']['w'].shape[0]
    red_5x5 = P['b3a']['w'].shape[0]
    out_5x5 = P['b3b']['w'].shape[0]
    out_pool = P['b4']['w'].shape[0]
    c_total = out_1x1 + out_3x3 + out_pool + (0 if is_custom else out_5x5)

    kernel = functools.partial(_inception_kernel, H=H, W=W, out_1x1=out_1x1,
                               red_3x3=red_3x3, red_5x5=red_5x5,
                               is_custom=is_custom)

    args = (x_nchw, packed['w_s1'], packed['s_s1'], packed['w_2b'],
            packed['s_2b'], packed['w_3b'], packed['s_3b'], packed['w_4'],
            packed['s_4'])

    def full_spec(arr):
        nd = arr.ndim
        return pl.BlockSpec(arr.shape, lambda b, _nd=nd: (0,) * _nd)

    in_specs = ([pl.BlockSpec((1, Cin, H, W), lambda b: (b, 0, 0, 0))] +
                [full_spec(a) for a in args[1:]])

    out = pl.pallas_call(
        kernel,
        out_shape=jax.ShapeDtypeStruct((N, c_total, HW), jnp.float32),
        grid=(N,),
        in_specs=in_specs,
        out_specs=pl.BlockSpec((1, c_total, HW), lambda b: (b, 0, 0)),
        compiler_params=pltpu.CompilerParams(
            dimension_semantics=("parallel",),          # megacore over batch
            vmem_limit_bytes=32 * 1024 * 1024),         # safe on v5e/v6e/v7x
    )(*args)
    return out.reshape(N, c_total, H, W)                # NCHW, no transpose


# ----------------------------------------------------------------------------
# Pure-JAX f32 reference (for correctness check)
# ----------------------------------------------------------------------------
def _ref_convblock(x_nhwc, p, pad, do_pool=False):
    xin = x_nhwc
    if do_pool:
        xin = lax.reduce_window(xin, -jnp.inf, lax.max, (1, 3, 3, 1),
                                (1, 1, 1, 1),
                                [(0, 0), (1, 1), (1, 1), (0, 0)])
    w_hwio = jnp.transpose(p['w'], (2, 3, 1, 0))
    y = lax.conv_general_dilated(xin, w_hwio, (1, 1),
                                 [(pad, pad), (pad, pad)],
                                 dimension_numbers=('NHWC', 'HWIO', 'NHWC'),
                                 precision=lax.Precision.HIGHEST)
    y = y + p['b']
    y = p['gamma'] * (y - p['rmean']) / jnp.sqrt(p['rvar'] + 1e-5) + p['beta']
    return jnp.maximum(y, 0.0)


def inception_reference(x_nchw, P, is_custom=False):
    x = jnp.transpose(x_nchw, (0, 2, 3, 1))
    outs = [_ref_convblock(x, P['b1'], 0)]
    y2 = _ref_convblock(x, P['b2a'], 0)
    outs.append(_ref_convblock(y2, P['b2b'], 1))
    if not is_custom:
        y3 = _ref_convblock(x, P['b3a'], 0)
        outs.append(_ref_convblock(y3, P['b3b'], 2))
    outs.append(_ref_convblock(x, P['b4'], 0, do_pool=True))
    y = jnp.concatenate(outs, axis=-1)
    return jnp.transpose(y, (0, 3, 1, 2))


# ----------------------------------------------------------------------------
if __name__ == "__main__":
    key = jax.random.PRNGKey(0)
    kx, kp = jax.random.split(key)

    # InceptionBlock(in_channels=4, out_1x1=8, red_3x3=4, out_3x3=8,
    #                red_5x5=4, out_5x5=8, out_pool=8)
    in_ch, out_1x1, red_3x3, out_3x3, red_5x5, out_5x5, out_pool = 4, 8, 4, 8, 4, 8, 8
    N, H, W = 2, 16, 16

    x = jax.random.normal(kx, (N, in_ch, H, W), jnp.float32)  # NCHW like PyTorch
    params = init_inception(kp, in_ch, out_1x1, red_3x3, out_3x3, red_5x5,
                            out_5x5, out_pool)

    fwd = jax.jit(functools.partial(inception_forward, is_custom=False))
    out = jax.block_until_ready(fwd(x, params))

    expected_channels = out_1x1 + out_3x3 + out_5x5 + out_pool
    assert out.shape == (N, expected_channels, H, W), out.shape

    ref = jax.block_until_ready(inception_reference(x, params, is_custom=False))
    # Tolerance sized for bf16 MXU inputs (8-bit mantissa) compounding across
    # the two chained conv stages; accumulation and elementwise math are f32.
    np.testing.assert_allclose(np.asarray(out), np.asarray(ref),
                               rtol=5e-2, atol=5e-2)

    print("KERNEL_OK")
</pallas_src>

<mosaic_0001>
module attributes {stable_mosaic.version = 11 : i64} {
  func.func @_inception_kernel(%arg0: i32, %arg1: memref<1x4x16x16xf32, #tpu.memory_space<vmem>>, %arg2: memref<16x4xbf16, #tpu.memory_space<vmem>>, %arg3: memref<16x1xf32, #tpu.memory_space<vmem>>, %arg4: memref<8x36xbf16, #tpu.memory_space<vmem>>, %arg5: memref<8x1xf32, #tpu.memory_space<vmem>>, %arg6: memref<8x100xbf16, #tpu.memory_space<vmem>>, %arg7: memref<8x1xf32, #tpu.memory_space<vmem>>, %arg8: memref<8x4xbf16, #tpu.memory_space<vmem>>, %arg9: memref<8x1xf32, #tpu.memory_space<vmem>>, %arg10: memref<1x32x256xf32, #tpu.memory_space<vmem>>) attributes {dimension_semantics = [#tpu.dimension_semantics<parallel>], iteration_bounds = array<i64: 2>, scalar_prefetch = 0 : i64, scratch_operands = 0 : i64, tpu.core_type = #tpu.core_type<tc>, window_params = [{transform_indices = @transform_0, window_bounds = array<i64: 1, 4, 16, 16>}, {pipeline_mode = #tpu.pipeline_mode<synchronous>, transform_indices = @transform_1, window_bounds = array<i64: 16, 4>}, {pipeline_mode = #tpu.pipeline_mode<synchronous>, transform_indices = @transform_2, window_bounds = array<i64: 16, 1>}, {pipeline_mode = #tpu.pipeline_mode<synchronous>, transform_indices = @transform_3, window_bounds = array<i64: 8, 36>}, {pipeline_mode = #tpu.pipeline_mode<synchronous>, transform_indices = @transform_4, window_bounds = array<i64: 8, 1>}, {pipeline_mode = #tpu.pipeline_mode<synchronous>, transform_indices = @transform_5, window_bounds = array<i64: 8, 100>}, {pipeline_mode = #tpu.pipeline_mode<synchronous>, transform_indices = @transform_6, window_bounds = array<i64: 8, 1>}, {pipeline_mode = #tpu.pipeline_mode<synchronous>, transform_indices = @transform_7, window_bounds = array<i64: 8, 4>}, {pipeline_mode = #tpu.pipeline_mode<synchronous>, transform_indices = @transform_8, window_bounds = array<i64: 8, 1>}, {transform_indices = @transform_9, window_bounds = array<i64: 1, 32, 256>}]} {
    %c0 = arith.constant 0 : index
    %c0_0 = arith.constant 0 : index
    %c0_1 = arith.constant 0 : index
    %c0_2 = arith.constant 0 : index
    %0 = vector.load %arg1[%c0, %c0_0, %c0_1, %c0_2] : memref<1x4x16x16xf32, #tpu.memory_space<vmem>>, vector<1x4x16x16xf32>
    %1 = vector.shape_cast %0 : vector<1x4x16x16xf32> to vector<4x16x16xf32>
    %2 = vector.shape_cast %1 : vector<4x16x16xf32> to vector<4x256xf32>
    %c0_3 = arith.constant 0 : index
    %c0_4 = arith.constant 0 : index
    %3 = vector.load %arg2[%c0_3, %c0_4] : memref<16x4xbf16, #tpu.memory_space<vmem>>, vector<16x4xbf16>
    %4 = arith.truncf %2 : vector<4x256xf32> to vector<4x256xbf16>
    %cst = arith.constant dense<0.000000e+00> : vector<16x256xf32>
    %5 = tpu.matmul %3, %4, %cst {dimension_numbers = #tpu.dot_dimension_numbers<[1], [0], [0], [1], [0, 0, 1, 1], [], []>} : vector<16x4xbf16>, vector<4x256xbf16>, vector<16x256xf32> -> vector<16x256xf32>
    %c0_5 = arith.constant 0 : index
    %c0_6 = arith.constant 0 : index
    %6 = vector.load %arg3[%c0_5, %c0_6] : memref<16x1xf32, #tpu.memory_space<vmem>>, vector<16x1xf32>
    %7 = vector.broadcast %6 : vector<16x1xf32> to vector<16x256xf32>
    %8 = arith.addf %5, %7 : vector<16x256xf32>
    %cst_7 = arith.constant 0.000000e+00 : f32
    %9 = vector.broadcast %cst_7 : f32 to vector<16x256xf32>
    %10 = arith.maximumf %8, %9 : vector<16x256xf32>
    %11 = vector.extract_strided_slice %10 {offsets = [0, 0], sizes = [8, 256], strides = [1, 1]} : vector<16x256xf32> to vector<8x256xf32>
    %12 = vector.extract_strided_slice %10 {offsets = [8, 0], sizes = [4, 256], strides = [1, 1]} : vector<16x256xf32> to vector<4x256xf32>
    %13 = vector.extract_strided_slice %10 {offsets = [12, 0], sizes = [4, 256], strides = [1, 1]} : vector<16x256xf32> to vector<4x256xf32>
    %14 = vector.shape_cast %12 : vector<4x256xf32> to vector<4x16x16xf32>
    %cst_8 = arith.constant 0.000000e+00 : f32
    %15 = vector.broadcast %cst_8 : f32 to vector<4x16x1xf32>
    %16 = tpu.concatenate %15, %14, %15 in 2 : vector<4x16x1xf32>, vector<4x16x16xf32>, vector<4x16x1xf32> -> vector<4x16x18xf32>
    %cst_9 = arith.constant 0.000000e+00 : f32
    %17 = vector.broadcast %cst_9 : f32 to vector<4x1x18xf32>
    %18 = tpu.concatenate %17, %16, %17 in 1 : vector<4x1x18xf32>, vector<4x16x18xf32>, vector<4x1x18xf32> -> vector<4x18x18xf32>
    %19 = vector.extract_strided_slice %18 {offsets = [0, 0, 0], sizes = [4, 16, 16], strides = [1, 1, 1]} : vector<4x18x18xf32> to vector<4x16x16xf32>
    %20 = vector.shape_cast %19 : vector<4x16x16xf32> to vector<4x256xf32>
    %21 = vector.extract_strided_slice %18 {offsets = [0, 0, 1], sizes = [4, 16, 16], strides = [1, 1, 1]} : vector<4x18x18xf32> to vector<4x16x16xf32>
    %22 = vector.shape_cast %21 : vector<4x16x16xf32> to vector<4x256xf32>
    %23 = vector.extract_strided_slice %18 {offsets = [0, 0, 2], sizes = [4, 16, 16], strides = [1, 1, 1]} : vector<4x18x18xf32> to vector<4x16x16xf32>
    %24 = vector.shape_cast %23 : vector<4x16x16xf32> to vector<4x256xf32>
    %25 = vector.extract_strided_slice %18 {offsets = [0, 1, 0], sizes = [4, 16, 16], strides = [1, 1, 1]} : vector<4x18x18xf32> to vector<4x16x16xf32>
    %26 = vector.shape_cast %25 : vector<4x16x16xf32> to vector<4x256xf32>
    %27 = vector.extract_strided_slice %18 {offsets = [0, 1, 1], sizes = [4, 16, 16], strides = [1, 1, 1]} : vector<4x18x18xf32> to vector<4x16x16xf32>
    %28 = vector.shape_cast %27 : vector<4x16x16xf32> to vector<4x256xf32>
    %29 = vector.extract_strided_slice %18 {offsets = [0, 1, 2], sizes = [4, 16, 16], strides = [1, 1, 1]} : vector<4x18x18xf32> to vector<4x16x16xf32>
    %30 = vector.shape_cast %29 : vector<4x16x16xf32> to vector<4x256xf32>
    %31 = vector.extract_strided_slice %18 {offsets = [0, 2, 0], sizes = [4, 16, 16], strides = [1, 1, 1]} : vector<4x18x18xf32> to vector<4x16x16xf32>
    %32 = vector.shape_cast %31 : vector<4x16x16xf32> to vector<4x256xf32>
    %33 = vector.extract_strided_slice %18 {offsets = [0, 2, 1], sizes = [4, 16, 16], strides = [1, 1, 1]} : vector<4x18x18xf32> to vector<4x16x16xf32>
    %34 = vector.shape_cast %33 : vector<4x16x16xf32> to vector<4x256xf32>
    %35 = vector.extract_strided_slice %18 {offsets = [0, 2, 2], sizes = [4, 16, 16], strides = [1, 1, 1]} : vector<4x18x18xf32> to vector<4x16x16xf32>
    %36 = vector.shape_cast %35 : vector<4x16x16xf32> to vector<4x256xf32>
    %37 = tpu.concatenate %20, %22, %24, %26, %28, %30, %32, %34, %36 in 0 : vector<4x256xf32>, vector<4x256xf32>, vector<4x256xf32>, vector<4x256xf32>, vector<4x256xf32>, vector<4x256xf32>, vector<4x256xf32>, vector<4x256xf32>, vector<4x256xf32> -> vector<36x256xf32>
    %c0_10 = arith.constant 0 : index
    %c0_11 = arith.constant 0 : index
    %38 = vector.load %arg4[%c0_10, %c0_11] : memref<8x36xbf16, #tpu.memory_space<vmem>>, vector<8x36xbf16>
    %39 = arith.truncf %37 : vector<36x256xf32> to vector<36x256xbf16>
    %cst_12 = arith.constant dense<0.000000e+00> : vector<8x256xf32>
    %40 = tpu.matmul %38, %39, %cst_12 {dimension_numbers = #tpu.dot_dimension_numbers<[1], [0], [0], [1], [0, 0, 1, 1], [], []>} : vector<8x36xbf16>, vector<36x256xbf16>, vector<8x256xf32> -> vector<8x256xf32>
    %c0_13 = arith.constant 0 : index
    %c0_14 = arith.constant 0 : index
    %41 = vector.load %arg5[%c0_13, %c0_14] : memref<8x1xf32, #tpu.memory_space<vmem>>, vector<8x1xf32>
    %42 = vector.broadcast %41 : vector<8x1xf32> to vector<8x256xf32>
    %43 = arith.addf %40, %42 : vector<8x256xf32>
    %cst_15 = arith.constant 0.000000e+00 : f32
    %44 = vector.broadcast %cst_15 : f32 to vector<8x256xf32>
    %45 = arith.maximumf %43, %44 : vector<8x256xf32>
    %46 = vector.shape_cast %13 : vector<4x256xf32> to vector<4x16x16xf32>
    %cst_16 = arith.constant 0.000000e+00 : f32
    %47 = vector.broadcast %cst_16 : f32 to vector<4x16x2xf32>
    %48 = tpu.concatenate %47, %46, %47 in 2 : vector<4x16x2xf32>, vector<4x16x16xf32>, vector<4x16x2xf32> -> vector<4x16x20xf32>
    %cst_17 = arith.constant 0.000000e+00 : f32
    %49 = vector.broadcast %cst_17 : f32 to vector<4x2x20xf32>
    %50 = tpu.concatenate %49, %48, %49 in 1 : vector<4x2x20xf32>, vector<4x16x20xf32>, vector<4x2x20xf32> -> vector<4x20x20xf32>
    %51 = vector.extract_strided_slice %50 {offsets = [0, 0, 0], sizes = [4, 16, 16], strides = [1, 1, 1]} : vector<4x20x20xf32> to vector<4x16x16xf32>
    %52 = vector.shape_cast %51 : vector<4x16x16xf32> to vector<4x256xf32>
    %53 = vector.extract_strided_slice %50 {offsets = [0, 0, 1], sizes = [4, 16, 16], strides = [1, 1, 1]} : vector<4x20x20xf32> to vector<4x16x16xf32>
    %54 = vector.shape_cast %53 : vector<4x16x16xf32> to vector<4x256xf32>
    %55 = vector.extract_strided_slice %50 {offsets = [0, 0, 2], sizes = [4, 16, 16], strides = [1, 1, 1]} : vector<4x20x20xf32> to vector<4x16x16xf32>
    %56 = vector.shape_cast %55 : vector<4x16x16xf32> to vector<4x256xf32>
    %57 = vector.extract_strided_slice %50 {offsets = [0, 0, 3], sizes = [4, 16, 16], strides = [1, 1, 1]} : vector<4x20x20xf32> to vector<4x16x16xf32>
    %58 = vector.shape_cast %57 : vector<4x16x16xf32> to vector<4x256xf32>
    %59 = vector.extract_strided_slice %50 {offsets = [0, 0, 4], sizes = [4, 16, 16], strides = [1, 1, 1]} : vector<4x20x20xf32> to vector<4x16x16xf32>
    %60 = vector.shape_cast %59 : vector<4x16x16xf32> to vector<4x256xf32>
    %61 = vector.extract_strided_slice %50 {offsets = [0, 1, 0], sizes = [4, 16, 16], strides = [1, 1, 1]} : vector<4x20x20xf32> to vector<4x16x16xf32>
    %62 = vector.shape_cast %61 : vector<4x16x16xf32> to vector<4x256xf32>
    %63 = vector.extract_strided_slice %50 {offsets = [0, 1, 1], sizes = [4, 16, 16], strides = [1, 1, 1]} : vector<4x20x20xf32> to vector<4x16x16xf32>
    %64 = vector.shape_cast %63 : vector<4x16x16xf32> to vector<4x256xf32>
    %65 = vector.extract_strided_slice %50 {offsets = [0, 1, 2], sizes = [4, 16, 16], strides = [1, 1, 1]} : vector<4x20x20xf32> to vector<4x16x16xf32>
    %66 = vector.shape_cast %65 : vector<4x16x16xf32> to vector<4x256xf32>
    %67 = vector.extract_strided_slice %50 {offsets = [0, 1, 3], sizes = [4, 16, 16], strides = [1, 1, 1]} : vector<4x20x20xf32> to vector<4x16x16xf32>
    %68 = vector.shape_cast %67 : vector<4x16x16xf32> to vector<4x256xf32>
    %69 = vector.extract_strided_slice %50 {offsets = [0, 1, 4], sizes = [4, 16, 16], strides = [1, 1, 1]} : vector<4x20x20xf32> to vector<4x16x16xf32>
    %70 = vector.shape_cast %69 : vector<4x16x16xf32> to vector<4x256xf32>
    %71 = vector.extract_strided_slice %50 {offsets = [0, 2, 0], sizes = [4, 16, 16], strides = [1, 1, 1]} : vector<4x20x20xf32> to vector<4x16x16xf32>
    %72 = vector.shape_cast %71 : vector<4x16x16xf32> to vector<4x256xf32>
    %73 = vector.extract_strided_slice %50 {offsets = [0, 2, 1], sizes = [4, 16, 16], strides = [1, 1, 1]} : vector<4x20x20xf32> to vector<4x16x16xf32>
    %74 = vector.shape_cast %73 : vector<4x16x16xf32> to vector<4x256xf32>
    %75 = vector.extract_strided_slice %50 {offsets = [0, 2, 2], sizes = [4, 16, 16], strides = [1, 1, 1]} : vector<4x20x20xf32> to vector<4x16x16xf32>
    %76 = vector.shape_cast %75 : vector<4x16x16xf32> to vector<4x256xf32>
    %77 = vector.extract_strided_slice %50 {offsets = [0, 2, 3], sizes = [4, 16, 16], strides = [1, 1, 1]} : vector<4x20x20xf32> to vector<4x16x16xf32>
    %78 = vector.shape_cast %77 : vector<4x16x16xf32> to vector<4x256xf32>
    %79 = vector.extract_strided_slice %50 {offsets = [0, 2, 4], sizes = [4, 16, 16], strides = [1, 1, 1]} : vector<4x20x20xf32> to vector<4x16x16xf32>
    %80 = vector.shape_cast %79 : vector<4x16x16xf32> to vector<4x256xf32>
    %81 = vector.extract_strided_slice %50 {offsets = [0, 3, 0], sizes = [4, 16, 16], strides = [1, 1, 1]} : vector<4x20x20xf32> to vector<4x16x16xf32>
    %82 = vector.shape_cast %81 : vector<4x16x16xf32> to vector<4x256xf32>
    %83 = vector.extract_strided_slice %50 {offsets = [0, 3, 1], sizes = [4, 16, 16], strides = [1, 1, 1]} : vector<4x20x20xf32> to vector<4x16x16xf32>
    %84 = vector.shape_cast %83 : vector<4x16x16xf32> to vector<4x256xf32>
    %85 = vector.extract_strided_slice %50 {offsets = [0, 3, 2], sizes = [4, 16, 16], strides = [1, 1, 1]} : vector<4x20x20xf32> to vector<4x16x16xf32>
    %86 = vector.shape_cast %85 : vector<4x16x16xf32> to vector<4x256xf32>
    %87 = vector.extract_strided_slice %50 {offsets = [0, 3, 3], sizes = [4, 16, 16], strides = [1, 1, 1]} : vector<4x20x20xf32> to vector<4x16x16xf32>
    %88 = vector.shape_cast %87 : vector<4x16x16xf32> to vector<4x256xf32>
    %89 = vector.extract_strided_slice %50 {offsets = [0, 3, 4], sizes = [4, 16, 16], strides = [1, 1, 1]} : vector<4x20x20xf32> to vector<4x16x16xf32>
    %90 = vector.shape_cast %89 : vector<4x16x16xf32> to vector<4x256xf32>
    %91 = vector.extract_strided_slice %50 {offsets = [0, 4, 0], sizes = [4, 16, 16], strides = [1, 1, 1]} : vector<4x20x20xf32> to vector<4x16x16xf32>
    %92 = vector.shape_cast %91 : vector<4x16x16xf32> to vector<4x256xf32>
    %93 = vector.extract_strided_slice %50 {offsets = [0, 4, 1], sizes = [4, 16, 16], strides = [1, 1, 1]} : vector<4x20x20xf32> to vector<4x16x16xf32>
    %94 = vector.shape_cast %93 : vector<4x16x16xf32> to vector<4x256xf32>
    %95 = vector.extract_strided_slice %50 {offsets = [0, 4, 2], sizes = [4, 16, 16], strides = [1, 1, 1]} : vector<4x20x20xf32> to vector<4x16x16xf32>
    %96 = vector.shape_cast %95 : vector<4x16x16xf32> to vector<4x256xf32>
    %97 = vector.extract_strided_slice %50 {offsets = [0, 4, 3], sizes = [4, 16, 16], strides = [1, 1, 1]} : vector<4x20x20xf32> to vector<4x16x16xf32>
    %98 = vector.shape_cast %97 : vector<4x16x16xf32> to vector<4x256xf32>
    %99 = vector.extract_strided_slice %50 {offsets = [0, 4, 4], sizes = [4, 16, 16], strides = [1, 1, 1]} : vector<4x20x20xf32> to vector<4x16x16xf32>
    %100 = vector.shape_cast %99 : vector<4x16x16xf32> to vector<4x256xf32>
    %101 = tpu.concatenate %52, %54, %56, %58, %60, %62, %64, %66, %68, %70, %72, %74, %76, %78, %80, %82 in 0 : vector<4x256xf32>, vector<4x256xf32>, vector<4x256xf32>, vector<4x256xf32>, vector<4x256xf32>, vector<4x256xf32>, vector<4x256xf32>, vector<4x256xf32>, vector<4x256xf32>, vector<4x256xf32>, vector<4x256xf32>, vector<4x256xf32>, vector<4x256xf32>, vector<4x256xf32>, vector<4x256xf32>, vector<4x256xf32> -> vector<64x256xf32>
    %102 = tpu.concatenate %84, %86, %88, %90, %92, %94, %96, %98, %100 in 0 : vector<4x256xf32>, vector<4x256xf32>, vector<4x256xf32>, vector<4x256xf32>, vector<4x256xf32>, vector<4x256xf32>, vector<4x256xf32>, vector<4x256xf32>, vector<4x256xf32> -> vector<36x256xf32>
    %103 = tpu.concatenate %101, %102 in 0 : vector<64x256xf32>, vector<36x256xf32> -> vector<100x256xf32>
    %c0_18 = arith.constant 0 : index
    %c0_19 = arith.constant 0 : index
    %104 = vector.load %arg6[%c0_18, %c0_19] : memref<8x100xbf16, #tpu.memory_space<vmem>>, vector<8x100xbf16>
    %105 = arith.truncf %103 : vector<100x256xf32> to vector<100x256xbf16>
    %cst_20 = arith.constant dense<0.000000e+00> : vector<8x256xf32>
    %106 = tpu.matmul %104, %105, %cst_20 {dimension_numbers = #tpu.dot_dimension_numbers<[1], [0], [0], [1], [0, 0, 1, 1], [], []>} : vector<8x100xbf16>, vector<100x256xbf16>, vector<8x256xf32> -> vector<8x256xf32>
    %c0_21 = arith.constant 0 : index
    %c0_22 = arith.constant 0 : index
    %107 = vector.load %arg7[%c0_21, %c0_22] : memref<8x1xf32, #tpu.memory_space<vmem>>, vector<8x1xf32>
    %108 = vector.broadcast %107 : vector<8x1xf32> to vector<8x256xf32>
    %109 = arith.addf %106, %108 : vector<8x256xf32>
    %cst_23 = arith.constant 0.000000e+00 : f32
    %110 = vector.broadcast %cst_23 : f32 to vector<8x256xf32>
    %111 = arith.maximumf %109, %110 : vector<8x256xf32>
    %cst_24 = arith.constant -3.000000e+38 : f32
    %112 = vector.broadcast %cst_24 : f32 to vector<4x16x1xf32>
    %113 = tpu.concatenate %112, %1, %112 in 2 : vector<4x16x1xf32>, vector<4x16x16xf32>, vector<4x16x1xf32> -> vector<4x16x18xf32>
    %cst_25 = arith.constant -3.000000e+38 : f32
    %114 = vector.broadcast %cst_25 : f32 to vector<4x1x18xf32>
    %115 = tpu.concatenate %114, %113, %114 in 1 : vector<4x1x18xf32>, vector<4x16x18xf32>, vector<4x1x18xf32> -> vector<4x18x18xf32>
    %116 = vector.extract_strided_slice %115 {offsets = [0, 0, 0], sizes = [4, 16, 16], strides = [1, 1, 1]} : vector<4x18x18xf32> to vector<4x16x16xf32>
    %117 = vector.extract_strided_slice %115 {offsets = [0, 0, 1], sizes = [4, 16, 16], strides = [1, 1, 1]} : vector<4x18x18xf32> to vector<4x16x16xf32>
    %118 = arith.maximumf %116, %117 : vector<4x16x16xf32>
    %119 = vector.extract_strided_slice %115 {offsets = [0, 0, 2], sizes = [4, 16, 16], strides = [1, 1, 1]} : vector<4x18x18xf32> to vector<4x16x16xf32>
    %120 = arith.maximumf %118, %119 : vector<4x16x16xf32>
    %121 = vector.extract_strided_slice %115 {offsets = [0, 1, 0], sizes = [4, 16, 16], strides = [1, 1, 1]} : vector<4x18x18xf32> to vector<4x16x16xf32>
    %122 = arith.maximumf %120, %121 : vector<4x16x16xf32>
    %123 = vector.extract_strided_slice %115 {offsets = [0, 1, 1], sizes = [4, 16, 16], strides = [1, 1, 1]} : vector<4x18x18xf32> to vector<4x16x16xf32>
    %124 = arith.maximumf %122, %123 : vector<4x16x16xf32>
    %125 = vector.extract_strided_slice %115 {offsets = [0, 1, 2], sizes = [4, 16, 16], strides = [1, 1, 1]} : vector<4x18x18xf32> to vector<4x16x16xf32>
    %126 = arith.maximumf %124, %125 : vector<4x16x16xf32>
    %127 = vector.extract_strided_slice %115 {offsets = [0, 2, 0], sizes = [4, 16, 16], strides = [1, 1, 1]} : vector<4x18x18xf32> to vector<4x16x16xf32>
    %128 = arith.maximumf %126, %127 : vector<4x16x16xf32>
    %129 = vector.extract_strided_slice %115 {offsets = [0, 2, 1], sizes = [4, 16, 16], strides = [1, 1, 1]} : vector<4x18x18xf32> to vector<4x16x16xf32>
    %130 = arith.maximumf %128, %129 : vector<4x16x16xf32>
    %131 = vector.extract_strided_slice %115 {offsets = [0, 2, 2], sizes = [4, 16, 16], strides = [1, 1, 1]} : vector<4x18x18xf32> to vector<4x16x16xf32>
    %132 = arith.maximumf %130, %131 : vector<4x16x16xf32>
    %133 = vector.shape_cast %132 : vector<4x16x16xf32> to vector<4x256xf32>
    %c0_26 = arith.constant 0 : index
    %c0_27 = arith.constant 0 : index
    %134 = vector.load %arg8[%c0_26, %c0_27] : memref<8x4xbf16, #tpu.memory_space<vmem>>, vector<8x4xbf16>
    %135 = arith.truncf %133 : vector<4x256xf32> to vector<4x256xbf16>
    %cst_28 = arith.constant dense<0.000000e+00> : vector<8x256xf32>
    %136 = tpu.matmul %134, %135, %cst_28 {dimension_numbers = #tpu.dot_dimension_numbers<[1], [0], [0], [1], [0, 0, 1, 1], [], []>} : vector<8x4xbf16>, vector<4x256xbf16>, vector<8x256xf32> -> vector<8x256xf32>
    %c0_29 = arith.constant 0 : index
    %c0_30 = arith.constant 0 : index
    %137 = vector.load %arg9[%c0_29, %c0_30] : memref<8x1xf32, #tpu.memory_space<vmem>>, vector<8x1xf32>
    %138 = vector.broadcast %137 : vector<8x1xf32> to vector<8x256xf32>
    %139 = arith.addf %136, %138 : vector<8x256xf32>
    %cst_31 = arith.constant 0.000000e+00 : f32
    %140 = vector.broadcast %cst_31 : f32 to vector<8x256xf32>
    %141 = arith.maximumf %139, %140 : vector<8x256xf32>
    %142 = tpu.concatenate %11, %45, %111, %141 in 0 : vector<8x256xf32>, vector<8x256xf32>, vector<8x256xf32>, vector<8x256xf32> -> vector<32x256xf32>
    %143 = vector.shape_cast %142 : vector<32x256xf32> to vector<1x32x256xf32>
    %c0_32 = arith.constant 0 : index
    %c0_33 = arith.constant 0 : index
    %c0_34 = arith.constant 0 : index
    %144 = vector.load %arg10[%c0_32, %c0_33, %c0_34] : memref<1x32x256xf32, #tpu.memory_space<vmem>>, vector<1x32x256xf32>
    tpu.vector_store %arg10[%c0_32, %c0_33, %c0_34], %143 {strides = array<i32>} : memref<1x32x256xf32, #tpu.memory_space<vmem>>, vector<1x32x256xf32>,
    return
  }
  func.func @transform_0(%arg0: i32) -> (i32, i32, i32, i32) {
    %c0_i32 = arith.constant 0 : i32
    %c0_i32_0 = arith.constant 0 : i32
    %c0_i32_1 = arith.constant 0 : i32
    %c0_i32_2 = arith.constant 0 : i32
    return %arg0, %c0_i32, %c0_i32_0, %c0_i32_1 : i32, i32, i32, i32
  }
  func.func @transform_1(%arg0: i32) -> (i32, i32) {
    %c0_i32 = arith.constant 0 : i32
    %c0_i32_0 = arith.constant 0 : i32
    %c0_i32_1 = arith.constant 0 : i32
    return %c0_i32, %c0_i32_0 : i32, i32
  }
  func.func @transform_2(%arg0: i32) -> (i32, i32) {
    %c0_i32 = arith.constant 0 : i32
    %c0_i32_0 = arith.constant 0 : i32
    %c0_i32_1 = arith.constant 0 : i32
    return %c0_i32, %c0_i32_0 : i32, i32
  }
  func.func @transform_3(%arg0: i32) -> (i32, i32) {
    %c0_i32 = arith.constant 0 : i32
    %c0_i32_0 = arith.constant 0 : i32
    %c0_i32_1 = arith.constant 0 : i32
    return %c0_i32, %c0_i32_0 : i32, i32
  }
  func.func @transform_4(%arg0: i32) -> (i32, i32) {
    %c0_i32 = arith.constant 0 : i32
    %c0_i32_0 = arith.constant 0 : i32
    %c0_i32_1 = arith.constant 0 : i32
    return %c0_i32, %c0_i32_0 : i32, i32
  }
  func.func @transform_5(%arg0: i32) -> (i32, i32) {
    %c0_i32 = arith.constant 0 : i32
    %c0_i32_0 = arith.constant 0 : i32
    %c0_i32_1 = arith.constant 0 : i32
    return %c0_i32, %c0_i32_0 : i32, i32
  }
  func.func @transform_6(%arg0: i32) -> (i32, i32) {
    %c0_i32 = arith.constant 0 : i32
    %c0_i32_0 = arith.constant 0 : i32
    %c0_i32_1 = arith.constant 0 : i32
    return %c0_i32, %c0_i32_0 : i32, i32
  }
  func.func @transform_7(%arg0: i32) -> (i32, i32) {
    %c0_i32 = arith.constant 0 : i32
    %c0_i32_0 = arith.constant 0 : i32
    %c0_i32_1 = arith.constant 0 : i32
    return %c0_i32, %c0_i32_0 : i32, i32
  }
  func.func @transform_8(%arg0: i32) -> (i32, i32) {
    %c0_i32 = arith.constant 0 : i32
    %c0_i32_0 = arith.constant 0 : i32
    %c0_i32_1 = arith.constant 0 : i32
    return %c0_i32, %c0_i32_0 : i32, i32
  }
  func.func @transform_9(%arg0: i32) -> (i32, i32, i32) {
    %c0_i32 = arith.constant 0 : i32
    %c0_i32_0 = arith.constant 0 : i32
    %c0_i32_1 = arith.constant 0 : i32
    return %arg0, %c0_i32, %c0_i32_0 : i32, i32, i32
  }
}

</mosaic_0001>

<llo_original>
// kernel: inception_forward.1
$region0: #{inception_forward.1}
  #allocation0 [shape = 'u32[]', space=smem, size = 0x4, offset = 0x4, fixed_abs, tag = 'smem constant byte address 0x4 - core index']
  #allocation1 [shape = 'u32[144,128]{1,0:T(1,128)}', space=vmem, size = 0x12000, scoped, tag = 'internal scratch']
  %s0 = inlined_call_operand.vmem [shape: f32[2,4,16,16], index: 0, kind: input, shape index: {}]
  %s1 = inlined_call_operand.vmem [shape: bf16[16,4], index: 1, kind: input, shape index: {}]
  %s2 = inlined_call_operand.vmem [shape: f32[16,1], index: 2, kind: input, shape index: {}]
  %s3 = inlined_call_operand.vmem [shape: bf16[8,36], index: 3, kind: input, shape index: {}]
  %s4 = inlined_call_operand.vmem [shape: f32[8,1], index: 4, kind: input, shape index: {}]
  %s5 = inlined_call_operand.vmem [shape: bf16[8,100], index: 5, kind: input, shape index: {}]
  %s6 = inlined_call_operand.vmem [shape: f32[8,1], index: 6, kind: input, shape index: {}]
  %s7 = inlined_call_operand.vmem [shape: bf16[8,4], index: 7, kind: input, shape index: {}]
  %s8 = inlined_call_operand.vmem [shape: f32[8,1], index: 8, kind: input, shape index: {}]
  %s9 = inlined_call_operand.vmem [shape: f32[2,32,256], index: 9, kind: output, shape index: {}]
  %s10 = sld [smem:[#allocation0]]
  $region69: #{inception_forward.1} parent=0
    _
  %s12 = ssub.s32 1, %s10
  %s13 = scalar_select 0, %s12, %s10
  loop: start=0, step=1, limit=4
  $region2: #{inception_forward.1} parent=0 // loop_pre_header
    _
  $region3: #{inception_forward.1} parent=0 // loop_header
    %s15 = sphi 0, %s19
    %p16 = scmp.ge.s32.totalorder %s15, 4
    %s25 = sphi 0, %s27
    %s28 = sphi 0, %s25
    %s29 = sphi 0, %s28
    %s45 = sphi 0, %s29
    %s49 = sphi 0, %s49
    %s51 = sphi 0, %s49
    %s52 = sphi 0, %s51
    %s66 = sphi 0, %s52
    %s70 = sphi 0, %s70
    %s72 = sphi 0, %s70
    %s73 = sphi 0, %s72
    %s87 = sphi 0, %s73
    %s91 = sphi 0, %s91
    %s93 = sphi 0, %s91
    %s94 = sphi 0, %s93
    %s108 = sphi 0, %s94
    %s112 = sphi 0, %s112
    %s114 = sphi 0, %s112
    %s115 = sphi 0, %s114
    %s129 = sphi 0, %s115
    %s133 = sphi 0, %s133
    %s135 = sphi 0, %s133
    %s136 = sphi 0, %s135
    %s150 = sphi 0, %s136
    %s154 = sphi 0, %s154
    %s156 = sphi 0, %s154
    %s157 = sphi 0, %s156
    %s171 = sphi 0, %s157
    %s175 = sphi 0, %s175
    %s177 = sphi 0, %s175
    %s178 = sphi 0, %s177
    %s192 = sphi 0, %s178
    %s196 = sphi 0, %s196
    %s198 = sphi 0, %s196
    %s199 = sphi 0, %s198
    %s213 = sphi 0, %s199
    %s219 = sphi 0, %s221
    %s222 = sphi 0, %s219
    %s223 = sphi 0, %s222
    %s239 = sphi 0, %s223
  $region4: #{inception_forward.1} parent=0 // loop_header_branch
    %18 = sbr.rel (%p16) target = $region8
  $region5: #{inception_forward.1} parent=0 // loop_body
    %s20 = ssub.s32 %s15, 1
    %s21 = ssub.s32 %s15, 2
    %s22 = sadd.s32 %s15, 1
    %s23 = ssub.s32 %s15, %s22
    %p24 = scmp.eq.s32.totalorder %s23, 0
    %s26 = sadd.s32 %s25, 1
    %s27 = scalar_select %p24, %s25, %s26
    %p30 = pneg %p24
    %p31 = scmp.eq.s32.totalorder %s15, 1
    %p32 = por %p30, %p31
    %p33 = scmp.ne.s32.totalorder %s25, %s28
    %p34 = scmp.eq.s32.totalorder %s15, 0
    %p35 = por %p33, %p34
    %p36 = scmp.ne.s32.totalorder %s25, %s28
    %p37 = scmp.eq.s32.totalorder %s20, 1
    %p38 = por %p36, %p37
    %p39 = scmp.ne.s32.totalorder %s28, %s29
    %p40 = scmp.eq.s32.totalorder %s20, 0
    %p41 = por %p39, %p40
    %p42 = scmp.ne.s32.totalorder %s28, %s29
    %p43 = scmp.eq.s32.totalorder %s21, 1
    %p44 = por %p42, %p43
    %p46 = scmp.ne.s32.totalorder %s29, %s45
    %p47 = scmp.eq.s32.totalorder %s21, 0
    %p48 = por %p46, %p47
    %s50 = sadd.s32 %s49, 1
    %p53 = scmp.eq.s32.totalorder %s15, 1
    %p54 = scmp.ne.s32.totalorder %s49, %s51
    %p55 = scmp.eq.s32.totalorder %s15, 0
    %p56 = por %p54, %p55
    %p57 = scmp.ne.s32.totalorder %s49, %s51
    %p58 = scmp.eq.s32.totalorder %s20, 1
    %p59 = por %p57, %p58
    %p60 = scmp.ne.s32.totalorder %s51, %s52
    %p61 = scmp.eq.s32.totalorder %s20, 0
    %p62 = por %p60, %p61
    %p63 = scmp.ne.s32.totalorder %s51, %s52
    %p64 = scmp.eq.s32.totalorder %s21, 1
    %p65 = por %p63, %p64
    %p67 = scmp.ne.s32.totalorder %s52, %s66
    %p68 = scmp.eq.s32.totalorder %s21, 0
    %p69 = por %p67, %p68
    %s71 = sadd.s32 %s70, 1
    %p74 = scmp.eq.s32.totalorder %s15, 1
    %p75 = scmp.ne.s32.totalorder %s70, %s72
    %p76 = scmp.eq.s32.totalorder %s15, 0
    %p77 = por %p75, %p76
    %p78 = scmp.ne.s32.totalorder %s70, %s72
    %p79 = scmp.eq.s32.totalorder %s20, 1
    %p80 = por %p78, %p79
    %p81 = scmp.ne.s32.totalorder %s72, %s73
    %p82 = scmp.eq.s32.totalorder %s20, 0
    %p83 = por %p81, %p82
    %p84 = scmp.ne.s32.totalorder %s72, %s73
    %p85 = scmp.eq.s32.totalorder %s21, 1
    %p86 = por %p84, %p85
    %p88 = scmp.ne.s32.totalorder %s73, %s87
    %p89 = scmp.eq.s32.totalorder %s21, 0
    %p90 = por %p88, %p89
    %s92 = sadd.s32 %s91, 1
    %p95 = scmp.eq.s32.totalorder %s15, 1
    %p96 = scmp.ne.s32.totalorder %s91, %s93
    %p97 = scmp.eq.s32.totalorder %s15, 0
    %p98 = por %p96, %p97
    %p99 = scmp.ne.s32.totalorder %s91, %s93
    %p100 = scmp.eq.s32.totalorder %s20, 1
    %p101 = por %p99, %p100
    %p102 = scmp.ne.s32.totalorder %s93, %s94
    %p103 = scmp.eq.s32.totalorder %s20, 0
    %p104 = por %p102, %p103
    %p105 = scmp.ne.s32.totalorder %s93, %s94
    %p106 = scmp.eq.s32.totalorder %s21, 1
    %p107 = por %p105, %p106
    %p109 = scmp.ne.s32.totalorder %s94, %s108
    %p110 = scmp.eq.s32.totalorder %s21, 0
    %p111 = por %p109, %p110
    %s113 = sadd.s32 %s112, 1
    %p116 = scmp.eq.s32.totalorder %s15, 1
    %p117 = scmp.ne.s32.totalorder %s112, %s114
    %p118 = scmp.eq.s32.totalorder %s15, 0
    %p119 = por %p117, %p118
    %p120 = scmp.ne.s32.totalorder %s112, %s114
    %p121 = scmp.eq.s32.totalorder %s20, 1
    %p122 = por %p120, %p121
    %p123 = scmp.ne.s32.totalorder %s114, %s115
    %p124 = scmp.eq.s32.totalorder %s20, 0
    %p125 = por %p123, %p124
    %p126 = scmp.ne.s32.totalorder %s114, %s115
    %p127 = scmp.eq.s32.totalorder %s21, 1
    %p128 = por %p126, %p127
    %p130 = scmp.ne.s32.totalorder %s115, %s129
    %p131 = scmp.eq.s32.totalorder %s21, 0
    %p132 = por %p130, %p131
    %s134 = sadd.s32 %s133, 1
    %p137 = scmp.eq.s32.totalorder %s15, 1
    %p138 = scmp.ne.s32.totalorder %s133, %s135
    %p139 = scmp.eq.s32.totalorder %s15, 0
    %p140 = por %p138, %p139
    %p141 = scmp.ne.s32.totalorder %s133, %s135
    %p142 = scmp.eq.s32.totalorder %s20, 1
    %p143 = por %p141, %p142
    %p144 = scmp.ne.s32.totalorder %s135, %s136
    %p145 = scmp.eq.s32.totalorder %s20, 0
    %p146 = por %p144, %p145
    %p147 = scmp.ne.s32.totalorder %s135, %s136
    %p148 = scmp.eq.s32.totalorder %s21, 1
    %p149 = por %p147, %p148
    %p151 = scmp.ne.s32.totalorder %s136, %s150
    %p152 = scmp.eq.s32.totalorder %s21, 0
    %p153 = por %p151, %p152
    %s155 = sadd.s32 %s154, 1
    %p158 = scmp.eq.s32.totalorder %s15, 1
    %p159 = scmp.ne.s32.totalorder %s154, %s156
    %p160 = scmp.eq.s32.totalorder %s15, 0
    %p161 = por %p159, %p160
    %p162 = scmp.ne.s32.totalorder %s154, %s156
    %p163 = scmp.eq.s32.totalorder %s20, 1
    %p164 = por %p162, %p163
    %p165 = scmp.ne.s32.totalorder %s156, %s157
    %p166 = scmp.eq.s32.totalorder %s20, 0
    %p167 = por %p165, %p166
    %p168 = scmp.ne.s32.totalorder %s156, %s157
    %p169 = scmp.eq.s32.totalorder %s21, 1
    %p170 = por %p168, %p169
    %p172 = scmp.ne.s32.totalorder %s157, %s171
    %p173 = scmp.eq.s32.totalorder %s21, 0
    %p174 = por %p172, %p173
    %s176 = sadd.s32 %s175, 1
    %p179 = scmp.eq.s32.totalorder %s15, 1
    %p180 = scmp.ne.s32.totalorder %s175, %s177
    %p181 = scmp.eq.s32.totalorder %s15, 0
    %p182 = por %p180, %p181
    %p183 = scmp.ne.s32.totalorder %s175, %s177
    %p184 = scmp.eq.s32.totalorder %s20, 1
    %p185 = por %p183, %p184
    %p186 = scmp.ne.s32.totalorder %s177, %s178
    %p187 = scmp.eq.s32.totalorder %s20, 0
    %p188 = por %p186, %p187
    %p189 = scmp.ne.s32.totalorder %s177, %s178
    %p190 = scmp.eq.s32.totalorder %s21, 1
    %p191 = por %p189, %p190
    %p193 = scmp.ne.s32.totalorder %s178, %s192
    %p194 = scmp.eq.s32.totalorder %s21, 0
    %p195 = por %p193, %p194
    %s197 = sadd.s32 %s196, 1
    %p200 = scmp.eq.s32.totalorder %s15, 1
    %p201 = scmp.ne.s32.totalorder %s196, %s198
    %p202 = scmp.eq.s32.totalorder %s15, 0
    %p203 = por %p201, %p202
    %p204 = scmp.ne.s32.totalorder %s196, %s198
    %p205 = scmp.eq.s32.totalorder %s20, 1
    %p206 = por %p204, %p205
    %p207 = scmp.ne.s32.totalorder %s198, %s199
    %p208 = scmp.eq.s32.totalorder %s20, 0
    %p209 = por %p207, %p208
    %p210 = scmp.ne.s32.totalorder %s198, %s199
    %p211 = scmp.eq.s32.totalorder %s21, 1
    %p212 = por %p210, %p211
    %p214 = scmp.ne.s32.totalorder %s199, %s213
    %p215 = scmp.eq.s32.totalorder %s21, 0
    %p216 = por %p214, %p215
    %s217 = ssub.s32 %s15, %s22
    %p218 = scmp.eq.s32.totalorder %s217, 0
    %s220 = sadd.s32 %s219, 1
    %s221 = scalar_select %p218, %s219, %s220
    %p224 = pneg %p218
    %p225 = scmp.eq.s32.totalorder %s15, 1
    %p226 = por %p224, %p225
    %p227 = scmp.ne.s32.totalorder %s219, %s222
    %p228 = scmp.eq.s32.totalorder %s15, 0
    %p229 = por %p227, %p228
    %p230 = scmp.ne.s32.totalorder %s219, %s222
    %p231 = scmp.eq.s32.totalorder %s20, 1
    %p232 = por %p230, %p231
    %p233 = scmp.ne.s32.totalorder %s222, %s223
    %p234 = scmp.eq.s32.totalorder %s20, 0
    %p235 = por %p233, %p234
    %p236 = scmp.ne.s32.totalorder %s222, %s223
    %p237 = scmp.eq.s32.totalorder %s21, 1
    %p238 = por %p236, %p237
    %p240 = scmp.ne.s32.totalorder %s223, %s239
    %p241 = scmp.eq.s32.totalorder %s21, 0
    %p242 = por %p240, %p241
    %p243 = scmp.le.s32.totalorder 1, %s15
    %p244 = scmp.lt.s32.totalorder %s15, 3
    %p245 = pnand %p243, %p244
    %p246 = pneg %p245
    // Predicated region
    $region9: #{inception_forward.1} parent=5 // pred_check
      _
    $region10: #{inception_forward.1} parent=5 // pred_check_branch
      %248 = sbr.rel (%p245) target = $region12
    $region11: #{inception_forward.1} parent=5 // pred_region
      %s249 = ssub.s32 %s15, 1
      // Predicated region
      $region13: #{inception_forward.1} parent=11 // pred_check
        %p250 = pneg %p62
      $region14: #{inception_forward.1} parent=11 // pred_check_branch
        %252 = sbr.rel (%p250) target = $region16
      $region15: #{inception_forward.1} parent=11 // pred_region
        _
      $region16: #{inception_forward.1} parent=11 // pred_fallthru
        _
      // Predicated region
      $region17: #{inception_forward.1} parent=11 // pred_check
        %p253 = pneg %p83
      $region18: #{inception_forward.1} parent=11 // pred_check_branch
        %255 = sbr.rel (%p253) target = $region20
      $region19: #{inception_forward.1} parent=11 // pred_region
        _
      $region20: #{inception_forward.1} parent=11 // pred_fallthru
        _
      // Predicated region
      $region21: #{inception_forward.1} parent=11 // pred_check
        %p256 = pneg %p104
      $region22: #{inception_forward.1} parent=11 // pred_check_branch
        %258 = sbr.rel (%p256) target = $region24
      $region23: #{inception_forward.1} parent=11 // pred_region
        _
      $region24: #{inception_forward.1} parent=11 // pred_fallthru
        _
      // Predicated region
      $region25: #{inception_forward.1} parent=11 // pred_check
        %p259 = pneg %p125
      $region26: #{inception_forward.1} parent=11 // pred_check_branch
        %261 = sbr.rel (%p259) target = $region28
      $region27: #{inception_forward.1} parent=11 // pred_region
        _
      $region28: #{inception_forward.1} parent=11 // pred_fallthru
        _
      // Predicated region
      $region29: #{inception_forward.1} parent=11 // pred_check
        %p262 = pneg %p146
      $region30: #{inception_forward.1} parent=11 // pred_check_branch
        %264 = sbr.rel (%p262) target = $region32
      $region31: #{inception_forward.1} parent=11 // pred_region
        _
      $region32: #{inception_forward.1} parent=11 // pred_fallthru
        _
      // Predicated region
      $region33: #{inception_forward.1} parent=11 // pred_check
        %p265 = pneg %p167
      $region34: #{inception_forward.1} parent=11 // pred_check_branch
        %267 = sbr.rel (%p265) target = $region36
      $region35: #{inception_forward.1} parent=11 // pred_region
        _
      $region36: #{inception_forward.1} parent=11 // pred_fallthru
        _
      // Predicated region
      $region37: #{inception_forward.1} parent=11 // pred_check
        %p268 = pneg %p188
      $region38: #{inception_forward.1} parent=11 // pred_check_branch
        %270 = sbr.rel (%p268) target = $region40
      $region39: #{inception_forward.1} parent=11 // pred_region
        _
      $region40: #{inception_forward.1} parent=11 // pred_fallthru
        _
      // Predicated region
      $region41: #{inception_forward.1} parent=11 // pred_check
        %p271 = pneg %p209
      $region42: #{inception_forward.1} parent=11 // pred_check_branch
        %273 = sbr.rel (%p271) target = $region44
      $region43: #{inception_forward.1} parent=11 // pred_region
        _
      $region44: #{inception_forward.1} parent=11 // pred_fallthru
        _
    $region12: #{inception_forward.1} parent=5 // pred_fallthru
      _
    %p274 = scmp.lt.s32.totalorder %s15, 2
    // Predicated region
    $region45: #{inception_forward.1} parent=5 // pred_check
      %p275 = pneg %p274
    $region46: #{inception_forward.1} parent=5 // pred_check_branch
      %277 = sbr.rel (%p275) target = $region48
    $region47: #{inception_forward.1} parent=5 // pred_region
      // Predicated region
      $region49: #{inception_forward.1} parent=47 // pred_check
        %p278 = pneg %p35
      $region50: #{inception_forward.1} parent=47 // pred_check_branch
        %280 = sbr.rel (%p278) target = $region52
      $region51: #{inception_forward.1} parent=47 // pred_region
        %p281 = scmp.lt.s32.totalorder %s15, 1
        %s282 = scalar_select %p281, %s15, 1
        %s283 = smul.addr %s282, 8
        %s284 = smul.addr %s283, 8
        %s285 = scalar_lea.vmem %s0, %s284
      $region52: #{inception_forward.1} parent=47 // pred_fallthru
        _
    $region48: #{inception_forward.1} parent=5 // pred_fallthru
      _
    %p286 = scmp.le.s32.totalorder 1, %s15
    %p287 = scmp.lt.s32.totalorder %s15, 3
    %p288 = pnand %p286, %p287
    %p289 = pneg %p288
    // Predicated region
    $region53: #{inception_forward.1} parent=5 // pred_check
      _
    $region54: #{inception_forward.1} parent=5 // pred_check_branch
      %291 = sbr.rel (%p288) target = $region56
    $region55: #{inception_forward.1} parent=5 // pred_region
      %s292 = ssub.s32 %s15, 1
      %p293 = scmp.lt.s32.totalorder %s20, 1
      %s294 = scalar_select %p293, %s20, 1
      %s295 = smul.addr %s294, 8
      %s296 = smul.addr %s295, 8
      %s297 = scalar_lea.vmem %s0, %s296
      %p298 = pneg %p41
      %p299 = pneg %p38
      %p300 = pneg %p62
      %p301 = pneg %p59
      %p302 = pneg %p83
      %p303 = pneg %p80
      %p304 = pneg %p104
      %p305 = pneg %p101
      %p306 = pneg %p125
      %p307 = pneg %p122
      %p308 = pneg %p146
      %p309 = pneg %p143
      %p310 = pneg %p167
      %p311 = pneg %p164
      %p312 = pneg %p188
      %p313 = pneg %p185
      %p314 = pneg %p209
      %p315 = pneg %p206
      %p316 = pneg %p235
      %p317 = pneg %p232
      %p318 = scmp.lt.s32.totalorder %s20, 1
      %s319 = scalar_select %p318, %s20, 1
      %s320 = smul.addr %s319, 8
      %s321 = smul.addr %s320, 8
      %s322 = scalar_lea.vmem %s9, %s321
      %p323 = scmp.lt.s32.totalorder %s20, 1
      %s324 = scalar_select %p323, %s20, 1
      %s325 = smul.addr %s324, 8
      %s326 = smul.addr %s325, 8
      %s327 = scalar_lea.vmem %s0, %s326
      %p328 = scmp.lt.s32.totalorder %s20, 1
      %s329 = scalar_select %p328, %s20, 1
      %s330 = smul.addr %s329, 8
      %s331 = smul.addr %s330, 8
      %s332 = scalar_lea.vmem %s9, %s331
      %v334 = vld [vmem:[%s327] sm:$0xff]
      %v335 = vld [vmem:[%s327 + $0x8] sm:$0xff]
      %v336 = vld [vmem:[%s327 + $0x10] sm:$0xff]
      %v337 = vld [vmem:[%s327 + $0x18] sm:$0xff]
      %v338 = vld [vmem:[%s327 + $0x20] sm:$0xff]
      %v339 = vld [vmem:[%s327 + $0x28] sm:$0xff]
      %v340 = vld [vmem:[%s327 + $0x30] sm:$0xff]
      %v341 = vld [vmem:[%s327 + $0x38] sm:$0xff]
      %v342 = vcombine.low %v334, %v338
      %v343 = vcombine.high %v334, %v338
      %v345 = vunpack.c.l.s4 1983009808
      %v346 = vunpack.c.0.s8 %v345
      %v347 = vlaneseq
      %v348 = vshrl.u32 %v347, 7
      %v349 = vsub.s32 %v346, %v348
      %v350 = vrot.slane %v342, %v349
      %v352 = vunpack.c.l.s4 1983009808
      %v353 = vunpack.c.0.s8 %v352
      %v354 = vlaneseq
      %v355 = vshrl.u32 %v354, 7
      %v356 = vsub.s32 %v353, %v355
      %v357 = vrot.slane %v343, %v356
      %v358 = vcombine.low %v336, %v340
      %v359 = vcombine.high %v336, %v340
      %v361 = vunpack.c.l.s4 1983009808
      %v362 = vunpack.c.0.s8 %v361
      %v363 = vlaneseq
      %v364 = vshrl.u32 %v363, 7
      %v365 = vsub.s32 %v362, %v364
      %v366 = vrot.slane %v358, %v365
      %v368 = vunpack.c.l.s4 1983009808
      %v369 = vunpack.c.0.s8 %v368
      %v370 = vlaneseq
      %v371 = vshrl.u32 %v370, 7
      %v372 = vsub.s32 %v369, %v371
      %v373 = vrot.slane %v359, %v372
      %v374 = vcombine.low %v350, %v366
      %v375 = vcombine.high %v350, %v366
      %v377 = vunpack.c.l.s4 1934713408
      %v378 = vunpack.c.0.s8 %v377
      %v379 = vlaneseq
      %v380 = vshrl.u32 %v379, 7
      %v381 = vsub.s32 %v378, %v380
      %v382 = vrot.slane %v374, %v381
      %v384 = vunpack.c.l.s4 1934713408
      %v385 = vunpack.c.0.s8 %v384
      %v386 = vlaneseq
      %v387 = vshrl.u32 %v386, 7
      %v388 = vsub.s32 %v385, %v387
      %v389 = vrot.slane %v375, %v388
      %v390 = vcombine.low %v357, %v373
      %v391 = vcombine.high %v357, %v373
      %v393 = vunpack.c.l.s4 1934713408
      %v394 = vunpack.c.0.s8 %v393
      %v395 = vlaneseq
      %v396 = vshrl.u32 %v395, 7
      %v397 = vsub.s32 %v394, %v396
      %v398 = vrot.slane %v390, %v397
      %v400 = vunpack.c.l.s4 1934713408
      %v401 = vunpack.c.0.s8 %v400
      %v402 = vlaneseq
      %v403 = vshrl.u32 %v402, 7
      %v404 = vsub.s32 %v401, %v403
      %v405 = vrot.slane %v391, %v404
      %v406 = vcombine.high %v382, 0.0
      %v407 = vcombine.high %v389, 0.0
      %v408 = vcombine.high %v398, 0.0
      %v409 = vcombine.high %v405, 0.0
      %v410 = vcombine.low %v335, %v339
      %v411 = vcombine.high %v335, %v339
      %v413 = vunpack.c.l.s4 1983009808
      %v414 = vunpack.c.0.s8 %v413
      %v415 = vlaneseq
      %v416 = vshrl.u32 %v415, 7
      %v417 = vsub.s32 %v414, %v416
      %v418 = vrot.slane %v410, %v417
      %v420 = vunpack.c.l.s4 1983009808
      %v421 = vunpack.c.0.s8 %v420
      %v422 = vlaneseq
      %v423 = vshrl.u32 %v422, 7
      %v424 = vsub.s32 %v421, %v423
      %v425 = vrot.slane %v411, %v424
      %v426 = vcombine.low %v337, %v341
      %v427 = vcombine.high %v337, %v341
      %v429 = vunpack.c.l.s4 1983009808
      %v430 = vunpack.c.0.s8 %v429
      %v431 = vlaneseq
      %v432 = vshrl.u32 %v431, 7
      %v433 = vsub.s32 %v430, %v432
      %v434 = vrot.slane %v426, %v433
      %v436 = vunpack.c.l.s4 1983009808
      %v437 = vunpack.c.0.s8 %v436
      %v438 = vlaneseq
      %v439 = vshrl.u32 %v438, 7
      %v440 = vsub.s32 %v437, %v439
      %v441 = vrot.slane %v427, %v440
      %v442 = vcombine.low %v418, %v434
      %v443 = vcombine.high %v418, %v434
      %v445 = vunpack.c.l.s4 1934713408
      %v446 = vunpack.c.0.s8 %v445
      %v447 = vlaneseq
      %v448 = vshrl.u32 %v447, 7
      %v449 = vsub.s32 %v446, %v448
      %v450 = vrot.slane %v442, %v449
      %v452 = vunpack.c.l.s4 1934713408
      %v453 = vunpack.c.0.s8 %v452
      %v454 = vlaneseq
      %v455 = vshrl.u32 %v454, 7
      %v456 = vsub.s32 %v453, %v455
      %v457 = vrot.slane %v443, %v456
      %v458 = vcombine.low %v425, %v441
      %v459 = vcombine.high %v425, %v441
      %v461 = vunpack.c.l.s4 1934713408
      %v462 = vunpack.c.0.s8 %v461
      %v463 = vlaneseq
      %v464 = vshrl.u32 %v463, 7
      %v465 = vsub.s32 %v462, %v464
      %v466 = vrot.slane %v458, %v465
      %v468 = vunpack.c.l.s4 1934713408
      %v469 = vunpack.c.0.s8 %v468
      %v470 = vlaneseq
      %v471 = vshrl.u32 %v470, 7
      %v472 = vsub.s32 %v469, %v471
      %v473 = vrot.slane %v459, %v472
      %v474 = vcombine.high %v450, 0.0
      %v475 = vcombine.high %v457, 0.0
      %v476 = vcombine.high %v466, 0.0
      %v477 = vcombine.high %v473, 0.0
      %479 = vrot.lane.b32.xlu0 %v406, 16
      %v480 = vpop.permute.xlu0 %479
      %483 = vrot.lane.b32.xlu0 %v389, 32
      %v484 = vpop.permute.xlu0 %483
      %487 = vrot.lane.b32.xlu0 %v407, 48
      %v488 = vpop.permute.xlu0 %487
      %491 = vrot.lane.b32.xlu0 %v398, 64
      %v492 = vpop.permute.xlu0 %491
      %495 = vrot.lane.b32.xlu0 %v408, 80
      %v496 = vpop.permute.xlu0 %495
      %499 = vrot.lane.b32.xlu0 %v405, 96
      %v500 = vpop.permute.xlu0 %499
      %503 = vrot.lane.b32.xlu0 %v409, 112
      %v504 = vpop.permute.xlu0 %503
      %507 = vrot.lane.b32.xlu0 %v474, 16
      %v508 = vpop.permute.xlu0 %507
      %511 = vrot.lane.b32.xlu0 %v457, 32
      %v512 = vpop.permute.xlu0 %511
      %515 = vrot.lane.b32.xlu0 %v475, 48
      %v516 = vpop.permute.xlu0 %515
      %519 = vrot.lane.b32.xlu0 %v466, 64
      %v520 = vpop.permute.xlu0 %519
      %523 = vrot.lane.b32.xlu0 %v476, 80
      %v524 = vpop.permute.xlu0 %523
      %527 = vrot.lane.b32.xlu0 %v473, 96
      %v528 = vpop.permute.xlu0 %527
      %531 = vrot.lane.b32.xlu0 %v477, 112
      %v532 = vpop.permute.xlu0 %531
      %vm534 = vcmask 130048
      %v535 = vsel %vm534, %v382, %v480
      %vm536 = vcmask 261120
      %v537 = vsel %vm536, %v535, %v484
      %vm538 = vcmask 392192
      %v539 = vsel %vm538, %v537, %v488
      %vm540 = vcmask 523264
      %v541 = vsel %vm540, %v539, %v492
      %vm542 = vcmask 654336
      %v543 = vsel %vm542, %v541, %v496
      %vm544 = vcmask 785408
      %v545 = vsel %vm544, %v543, %v500
      %vm546 = vcmask 916480
      %v547 = vsel %vm546, %v545, %v504
      %v548 = vsel %vm534, %v450, %v508
      %v549 = vsel %vm536, %v548, %v512
      %v550 = vsel %vm538, %v549, %v516
      %v551 = vsel %vm540, %v550, %v520
      %v552 = vsel %vm542, %v551, %v524
      %v553 = vsel %vm544, %v552, %v528
      %v554 = vsel %vm546, %v553, %v532
      %v555 = vld [vmem:[%s1] sm:$0xf]
      %v556 = vld [vmem:[%s1 + $0x4] sm:$0xf]
      %v557 = vpack.c.bf16 %v547, %v547
      %v558 = vpack.c.bf16 %v554, %v554
      %v559 = vld [vmem:[%s2] sm:$0xff]
      %v560 = vld [vmem:[%s2 + $0x8] sm:$0xff]
      %562 = vset.pattern.permute.xlu0 0
      %563 = vperm.xlu0 %562, %v559
      %v564 = vpop.permute.xlu0 %563
      %567 = vset.pattern.permute.xlu0 0
      %568 = vperm.xlu0 %567, %v560
      %v569 = vpop.permute.xlu0 %568
      %v573 = vunpack.c.l.b16 %v555
      %v574 = vunpack.c.l.b16 %v556
      %v575 = vpack.c.b16 %v574, %v573
      %vm576 = vcmask 31744
      %v578 = vsel %vm576, %v575, 0
      %vm580 = vcmask 1041408
      %v582 = vsel %vm580, %v557, 0
      %v585 = vsel %vm580, %v558, 0
      %587 = vmatprep.subr.bf16.mxu0 %v585
      %588 = vmatpush1.bf16.msra.mxu0 %v582
      %589 = vmatprep.subr.bf16.mxu0 0
      %590 = vmatpush1.bf16.msra.mxu0 0
      %591 = vmatprep.subr.bf16.mxu0 0
      %592 = vmatpush1.bf16.msra.mxu0 0
      %593 = vmatprep.subr.bf16.mxu0 0
      %594 = vmatpush1.bf16.msra.mxu0 0
      %595 = vmatprep.subr.bf16.mxu0 0
      %596 = vmatpush1.bf16.msra.mxu0 0
      %597 = vmatprep.subr.bf16.mxu0 0
      %598 = vmatpush1.bf16.msra.mxu0 0
      %599 = vmatprep.subr.bf16.mxu0 0
      %600 = vmatpush1.bf16.msra.mxu0 0
      %601 = vmatprep.subr.bf16.mxu0 0
      %602 = vmatpush1.bf16.msra.mxu0 0
      %603 = vmatprep.subr.bf16.mxu0 0
      %604 = vmatpush1.bf16.msra.mxu0 0
      %605 = vmatprep.subr.bf16.mxu0 0
      %606 = vmatpush1.bf16.msra.mxu0 0
      %607 = vmatprep.subr.bf16.mxu0 0
      %608 = vmatpush1.bf16.msra.mxu0 0
      %609 = vmatprep.subr.bf16.mxu0 0
      %610 = vmatpush1.bf16.msra.mxu0 0
      %611 = vmatprep.subr.bf16.mxu0 0
      %612 = vmatpush1.bf16.msra.mxu0 0
      %613 = vmatprep.subr.bf16.mxu0 0
      %614 = vmatpush1.bf16.msra.mxu0 0
      %615 = vmatprep.subr.bf16.mxu0 0
      %616 = vmatpush1.bf16.msra.mxu0 0
      %617 = vmatprep.subr.bf16.mxu0 0
      %618 = vmatpush1.bf16.msra.mxu0 0
      %619 = vmatprep.mubr.bf16.mxu0 0
      %620 = vmatmul.mubr.bf16.gmra.mrb[0].mxu0 %v578
      %v621 = vpop.f32.mrb[0].mxu0
      %v622 = vadd.f32 %v564, %v621
      %v623 = vpop.f32.mrb[0].mxu0
      %v624 = vadd.f32 %v564, %v623
      %v625 = vpop.f32.mrb[0].mxu0
      %v626 = vadd.f32 %v569, %v625
      %v627 = vpop.f32.mrb[0].mxu0
      %v628 = vadd.f32 %v569, %v627
      %629 = vdwg.mxu0
      %v630 = vmax.f32 %v622, 0.0
      %v631 = vmax.f32 %v624, 0.0
      %v632 = vmax.f32 %v626, 0.0
      %v633 = vmax.f32 %v628, 0.0
      %635 = vrot.lane.b32.xlu0 %v632, 112
      %v636 = vpop.permute.xlu0 %635
      %638 = vrot.lane.b32.xlu0 %v632, 96
      %v639 = vpop.permute.xlu0 %638
      %641 = vrot.lane.b32.xlu0 %v632, 80
      %v642 = vpop.permute.xlu0 %641
      %644 = vrot.lane.b32.xlu0 %v632, 64
      %v645 = vpop.permute.xlu0 %644
      %647 = vrot.lane.b32.xlu0 %v632, 48
      %v648 = vpop.permute.xlu0 %647
      %650 = vrot.lane.b32.xlu0 %v632, 32
      %v651 = vpop.permute.xlu0 %650
      %653 = vrot.lane.b32.xlu0 %v632, 16
      %v654 = vpop.permute.xlu0 %653
      %657 = vrot.lane.b32.xlu0 %v633, 112
      %v658 = vpop.permute.xlu0 %657
      %660 = vrot.lane.b32.xlu0 %v633, 96
      %v661 = vpop.permute.xlu0 %660
      %663 = vrot.lane.b32.xlu0 %v633, 80
      %v664 = vpop.permute.xlu0 %663
      %666 = vrot.lane.b32.xlu0 %v633, 64
      %v667 = vpop.permute.xlu0 %666
      %669 = vrot.lane.b32.xlu0 %v633, 48
      %v670 = vpop.permute.xlu0 %669
      %672 = vrot.lane.b32.xlu0 %v633, 32
      %v673 = vpop.permute.xlu0 %672
      %675 = vrot.lane.b32.xlu0 %v633, 16
      %v676 = vpop.permute.xlu0 %675
      %v678 = vcombine.low %v632, %v639
      %v680 = vunpack.c.l.s4 1983009808
      %v681 = vunpack.c.0.s8 %v680
      %v682 = vlaneseq
      %v683 = vshrl.u32 %v682, 7
      %v684 = vsub.s32 %v681, %v683
      %v685 = vrot.slane %v678, %v684
      %v686 = vcombine.low %v636, %v642
      %v688 = vunpack.c.l.s4 1983009808
      %v689 = vunpack.c.0.s8 %v688
      %v690 = vlaneseq
      %v691 = vshrl.u32 %v690, 7
      %v692 = vsub.s32 %v689, %v691
      %v693 = vrot.slane %v686, %v692
      %v694 = vcombine.low %v645, %v651
      %v696 = vunpack.c.l.s4 1983009808
      %v697 = vunpack.c.0.s8 %v696
      %v698 = vlaneseq
      %v699 = vshrl.u32 %v698, 7
      %v700 = vsub.s32 %v697, %v699
      %v701 = vrot.slane %v694, %v700
      %v702 = vcombine.low %v648, %v654
      %v704 = vunpack.c.l.s4 1983009808
      %v705 = vunpack.c.0.s8 %v704
      %v706 = vlaneseq
      %v707 = vshrl.u32 %v706, 7
      %v708 = vsub.s32 %v705, %v707
      %v709 = vrot.slane %v702, %v708
      %v710 = vcombine.low %v685, %v693
      %v711 = vcombine.high %v685, %v693
      %v713 = vunpack.c.l.s4 1934713408
      %v714 = vunpack.c.0.s8 %v713
      %v715 = vlaneseq
      %v716 = vshrl.u32 %v715, 7
      %v717 = vsub.s32 %v714, %v716
      %v718 = vrot.slane %v710, %v717
      %v720 = vunpack.c.l.s4 1934713408
      %v721 = vunpack.c.0.s8 %v720
      %v722 = vlaneseq
      %v723 = vshrl.u32 %v722, 7
      %v724 = vsub.s32 %v721, %v723
      %v725 = vrot.slane %v711, %v724
      %v726 = vcombine.low %v701, %v709
      %v727 = vcombine.high %v701, %v709
      %v729 = vunpack.c.l.s4 1934713408
      %v730 = vunpack.c.0.s8 %v729
      %v731 = vlaneseq
      %v732 = vshrl.u32 %v731, 7
      %v733 = vsub.s32 %v730, %v732
      %v734 = vrot.slane %v726, %v733
      %v736 = vunpack.c.l.s4 1934713408
      %v737 = vunpack.c.0.s8 %v736
      %v738 = vlaneseq
      %v739 = vshrl.u32 %v738, 7
      %v740 = vsub.s32 %v737, %v739
      %v741 = vrot.slane %v727, %v740
      %v742 = vcombine.low %v718, %v734
      %v743 = vcombine.high %v718, %v734
      %v744 = vcombine.low %v725, %v741
      %v745 = vcombine.high %v725, %v741
      %v746 = vcombine.low %v633, %v661
      %v748 = vunpack.c.l.s4 1983009808
      %v749 = vunpack.c.0.s8 %v748
      %v750 = vlaneseq
      %v751 = vshrl.u32 %v750, 7
      %v752 = vsub.s32 %v749, %v751
      %v753 = vrot.slane %v746, %v752
      %v754 = vcombine.low %v658, %v664
      %v756 = vunpack.c.l.s4 1983009808
      %v757 = vunpack.c.0.s8 %v756
      %v758 = vlaneseq
      %v759 = vshrl.u32 %v758, 7
      %v760 = vsub.s32 %v757, %v759
      %v761 = vrot.slane %v754, %v760
      %v762 = vcombine.low %v667, %v673
      %v764 = vunpack.c.l.s4 1983009808
      %v765 = vunpack.c.0.s8 %v764
      %v766 = vlaneseq
      %v767 = vshrl.u32 %v766, 7
      %v768 = vsub.s32 %v765, %v767
      %v769 = vrot.slane %v762, %v768
      %v770 = vcombine.low %v670, %v676
      %v772 = vunpack.c.l.s4 1983009808
      %v773 = vunpack.c.0.s8 %v772
      %v774 = vlaneseq
      %v775 = vshrl.u32 %v774, 7
      %v776 = vsub.s32 %v773, %v775
      %v777 = vrot.slane %v770, %v776
      %v778 = vcombine.low %v753, %v761
      %v779 = vcombine.high %v753, %v761
      %v781 = vunpack.c.l.s4 1934713408
      %v782 = vunpack.c.0.s8 %v781
      %v783 = vlaneseq
      %v784 = vshrl.u32 %v783, 7
      %v785 = vsub.s32 %v782, %v784
      %v786 = vrot.slane %v778, %v785
      %v788 = vunpack.c.l.s4 1934713408
      %v789 = vunpack.c.0.s8 %v788
      %v790 = vlaneseq
      %v791 = vshrl.u32 %v790, 7
      %v792 = vsub.s32 %v789, %v791
      %v793 = vrot.slane %v779, %v792
      %v794 = vcombine.low %v769, %v777
      %v795 = vcombine.high %v769, %v777
      %v797 = vunpack.c.l.s4 1934713408
      %v798 = vunpack.c.0.s8 %v797
      %v799 = vlaneseq
      %v800 = vshrl.u32 %v799, 7
      %v801 = vsub.s32 %v798, %v800
      %v802 = vrot.slane %v794, %v801
      %v804 = vunpack.c.l.s4 1934713408
      %v805 = vunpack.c.0.s8 %v804
      %v806 = vlaneseq
      %v807 = vshrl.u32 %v806, 7
      %v808 = vsub.s32 %v805, %v807
      %v809 = vrot.slane %v795, %v808
      %v810 = vcombine.low %v786, %v802
      %v811 = vcombine.high %v786, %v802
      %v812 = vcombine.low %v793, %v809
      %v813 = vcombine.high %v793, %v809
      %822 = vrot.lane.b32.xlu0 %v742, 1
      %v823 = vpop.permute.xlu0 %822
      %824 = vrot.lane.b32.xlu0 %v810, 1
      %v825 = vpop.permute.xlu0 %824
      %826 = vrot.lane.b32.xlu0 %v743, 1
      %v827 = vpop.permute.xlu0 %826
      %828 = vrot.lane.b32.xlu0 %v811, 1
      %v829 = vpop.permute.xlu0 %828
      %830 = vrot.lane.b32.xlu0 %v744, 1
      %v831 = vpop.permute.xlu0 %830
      %832 = vrot.lane.b32.xlu0 %v812, 1
      %v833 = vpop.permute.xlu0 %832
      %834 = vrot.lane.b32.xlu0 %v745, 1
      %v835 = vpop.permute.xlu0 %834
      %836 = vrot.lane.b32.xlu0 %v813, 1
      %v837 = vpop.permute.xlu0 %836
      %vm846 = vcmask 7168
      %v847 = vsel %vm846, 0.0, %v823
      %v848 = vsel %vm846, 0.0, %v825
      %v849 = vsel %vm846, 0.0, %v827
      %v850 = vsel %vm846, 0.0, %v829
      %v851 = vsel %vm846, 0.0, %v831
      %v852 = vsel %vm846, 0.0, %v833
      %v853 = vsel %vm846, 0.0, %v835
      %v854 = vsel %vm846, 0.0, %v837
      %vm855 = vcmask 138240
      %v856 = vsel %vm855, %v847, 0.0
      %v857 = vsel %vm855, %v848, 0.0
      %v858 = vsel %vm855, %v849, 0.0
      %v859 = vsel %vm855, %v850, 0.0
      %v860 = vsel %vm855, %v851, 0.0
      %v861 = vsel %vm855, %v852, 0.0
      %v862 = vsel %vm855, %v853, 0.0
      %v863 = vsel %vm855, %v854, 0.0
      %vm872 = vcmask 1040384
      %v873 = vrot.slane %v856, 7
      %v874 = vrot.slane %v857, 7
      %v875 = vsel %vm872, %v873, %v874
      %v876 = vrot.slane %v858, 7
      %v877 = vrot.slane %v859, 7
      %v878 = vsel %vm872, %v876, %v877
      %v879 = vrot.slane %v860, 7
      %v880 = vrot.slane %v861, 7
      %v881 = vsel %vm872, %v879, %v880
      %v882 = vrot.slane %v862, 7
      %v883 = vrot.slane %v863, 7
      %v884 = vsel %vm872, %v882, %v883
      %v897 = vsel %vm872, 0.0, %v873
      %v898 = vsel %vm872, 0.0, %v876
      %v899 = vsel %vm872, 0.0, %v879
      %v900 = vsel %vm872, 0.0, %v882
      %v901 = vsel %vm872, %v874, 0.0
      %v902 = vsel %vm872, %v877, 0.0
      %v903 = vsel %vm872, %v880, 0.0
      %v904 = vsel %vm872, %v883, 0.0
      %v905 = vcombine.low %v897, %v899
      %v906 = vcombine.high %v897, %v899
      %v908 = vunpack.c.l.s4 1983009808
      %v909 = vunpack.c.0.s8 %v908
      %v910 = vlaneseq
      %v911 = vshrl.u32 %v910, 7
      %v912 = vsub.s32 %v909, %v911
      %v913 = vrot.slane %v905, %v912
      %v915 = vunpack.c.l.s4 1983009808
      %v916 = vunpack.c.0.s8 %v915
      %v917 = vlaneseq
      %v918 = vshrl.u32 %v917, 7
      %v919 = vsub.s32 %v916, %v918
      %v920 = vrot.slane %v906, %v919
      %v921 = vcombine.low %v898, %v900
      %v922 = vcombine.high %v898, %v900
      %v924 = vunpack.c.l.s4 1983009808
      %v925 = vunpack.c.0.s8 %v924
      %v926 = vlaneseq
      %v927 = vshrl.u32 %v926, 7
      %v928 = vsub.s32 %v925, %v927
      %v929 = vrot.slane %v921, %v928
      %v931 = vunpack.c.l.s4 1983009808
      %v932 = vunpack.c.0.s8 %v931
      %v933 = vlaneseq
      %v934 = vshrl.u32 %v933, 7
      %v935 = vsub.s32 %v932, %v934
      %v936 = vrot.slane %v922, %v935
      %v937 = vcombine.low %v913, %v929
      %v938 = vcombine.high %v913, %v929
      %v940 = vunpack.c.l.s4 1934713408
      %v941 = vunpack.c.0.s8 %v940
      %v942 = vlaneseq
      %v943 = vshrl.u32 %v942, 7
      %v944 = vsub.s32 %v941, %v943
      %v945 = vrot.slane %v937, %v944
      %v947 = vunpack.c.l.s4 1934713408
      %v948 = vunpack.c.0.s8 %v947
      %v949 = vlaneseq
      %v950 = vshrl.u32 %v949, 7
      %v951 = vsub.s32 %v948, %v950
      %v952 = vrot.slane %v938, %v951
      %v953 = vcombine.low %v920, %v936
      %v954 = vcombine.high %v920, %v936
      %v956 = vunpack.c.l.s4 1934713408
      %v957 = vunpack.c.0.s8 %v956
      %v958 = vlaneseq
      %v959 = vshrl.u32 %v958, 7
      %v960 = vsub.s32 %v957, %v959
      %v961 = vrot.slane %v953, %v960
      %v963 = vunpack.c.l.s4 1934713408
      %v964 = vunpack.c.0.s8 %v963
      %v965 = vlaneseq
      %v966 = vshrl.u32 %v965, 7
      %v967 = vsub.s32 %v964, %v966
      %v968 = vrot.slane %v954, %v967
      %v969 = vcombine.high %v945, 0.0
      %v970 = vcombine.high %v952, 0.0
      %v971 = vcombine.high %v961, 0.0
      %v972 = vcombine.high %v968, 0.0
      %v973 = vcombine.low %v875, %v881
      %v974 = vcombine.high %v875, %v881
      %v976 = vunpack.c.l.s4 1983009808
      %v977 = vunpack.c.0.s8 %v976
      %v978 = vlaneseq
      %v979 = vshrl.u32 %v978, 7
      %v980 = vsub.s32 %v977, %v979
      %v981 = vrot.slane %v973, %v980
      %v983 = vunpack.c.l.s4 1983009808
      %v984 = vunpack.c.0.s8 %v983
      %v985 = vlaneseq
      %v986 = vshrl.u32 %v985, 7
      %v987 = vsub.s32 %v984, %v986
      %v988 = vrot.slane %v974, %v987
      %v989 = vcombine.low %v878, %v884
      %v990 = vcombine.high %v878, %v884
      %v992 = vunpack.c.l.s4 1983009808
      %v993 = vunpack.c.0.s8 %v992
      %v994 = vlaneseq
      %v995 = vshrl.u32 %v994, 7
      %v996 = vsub.s32 %v993, %v995
      %v997 = vrot.slane %v989, %v996
      %v999 = vunpack.c.l.s4 1983009808
      %v1000 = vunpack.c.0.s8 %v999
      %v1001 = vlaneseq
      %v1002 = vshrl.u32 %v1001, 7
      %v1003 = vsub.s32 %v1000, %v1002
      %v1004 = vrot.slane %v990, %v1003
      %v1005 = vcombine.low %v981, %v997
      %v1006 = vcombine.high %v981, %v997
      %v1008 = vunpack.c.l.s4 1934713408
      %v1009 = vunpack.c.0.s8 %v1008
      %v1010 = vlaneseq
      %v1011 = vshrl.u32 %v1010, 7
      %v1012 = vsub.s32 %v1009, %v1011
      %v1013 = vrot.slane %v1005, %v1012
      %v1015 = vunpack.c.l.s4 1934713408
      %v1016 = vunpack.c.0.s8 %v1015
      %v1017 = vlaneseq
      %v1018 = vshrl.u32 %v1017, 7
      %v1019 = vsub.s32 %v1016, %v1018
      %v1020 = vrot.slane %v1006, %v1019
      %v1021 = vcombine.low %v988, %v1004
      %v1022 = vcombine.high %v988, %v1004
      %v1024 = vunpack.c.l.s4 1934713408
      %v1025 = vunpack.c.0.s8 %v1024
      %v1026 = vlaneseq
      %v1027 = vshrl.u32 %v1026, 7
      %v1028 = vsub.s32 %v1025, %v1027
      %v1029 = vrot.slane %v1021, %v1028
      %v1031 = vunpack.c.l.s4 1934713408
      %v1032 = vunpack.c.0.s8 %v1031
      %v1033 = vlaneseq
      %v1034 = vshrl.u32 %v1033, 7
      %v1035 = vsub.s32 %v1032, %v1034
      %v1036 = vrot.slane %v1022, %v1035
      %v1037 = vcombine.high %v1013, 0.0
      %v1038 = vcombine.high %v1020, 0.0
      %v1039 = vcombine.high %v1029, 0.0
      %v1040 = vcombine.high %v1036, 0.0
      %1042 = vrot.lane.b32.xlu0 %v969, 16
      %v1043 = vpop.permute.xlu0 %1042
      %1046 = vrot.lane.b32.xlu0 %v952, 32
      %v1047 = vpop.permute.xlu0 %1046
      %1050 = vrot.lane.b32.xlu0 %v970, 48
      %v1051 = vpop.permute.xlu0 %1050
      %1054 = vrot.lane.b32.xlu0 %v961, 64
      %v1055 = vpop.permute.xlu0 %1054
      %1058 = vrot.lane.b32.xlu0 %v971, 80
      %v1059 = vpop.permute.xlu0 %1058
      %1062 = vrot.lane.b32.xlu0 %v968, 96
      %v1063 = vpop.permute.xlu0 %1062
      %1066 = vrot.lane.b32.xlu0 %v972, 112
      %v1067 = vpop.permute.xlu0 %1066
      %1070 = vrot.lane.b32.xlu0 %v1037, 16
      %v1071 = vpop.permute.xlu0 %1070
      %1074 = vrot.lane.b32.xlu0 %v1020, 32
      %v1075 = vpop.permute.xlu0 %1074
      %1078 = vrot.lane.b32.xlu0 %v1038, 48
      %v1079 = vpop.permute.xlu0 %1078
      %1082 = vrot.lane.b32.xlu0 %v1029, 64
      %v1083 = vpop.permute.xlu0 %1082
      %1086 = vrot.lane.b32.xlu0 %v1039, 80
      %v1087 = vpop.permute.xlu0 %1086
      %1090 = vrot.lane.b32.xlu0 %v1036, 96
      %v1091 = vpop.permute.xlu0 %1090
      %1094 = vrot.lane.b32.xlu0 %v1040, 112
      %v1095 = vpop.permute.xlu0 %1094
      %v1097 = vsel %vm534, %v945, %v1043
      %v1098 = vsel %vm536, %v1097, %v1047
      %v1099 = vsel %vm538, %v1098, %v1051
      %v1100 = vsel %vm540, %v1099, %v1055
      %v1101 = vsel %vm542, %v1100, %v1059
      %v1102 = vsel %vm544, %v1101, %v1063
      %v1103 = vsel %vm546, %v1102, %v1067
      %v1104 = vsel %vm534, %v1013, %v1071
      %v1105 = vsel %vm536, %v1104, %v1075
      %v1106 = vsel %vm538, %v1105, %v1079
      %v1107 = vsel %vm540, %v1106, %v1083
      %v1108 = vsel %vm542, %v1107, %v1087
      %v1109 = vsel %vm544, %v1108, %v1091
      %v1110 = vsel %vm546, %v1109, %v1095
      %1115 = vrot.lane.b32.xlu0 %v897, 127
      %v1116 = vpop.permute.xlu0 %1115
      %1117 = vrot.lane.b32.xlu0 %v875, 127
      %v1118 = vpop.permute.xlu0 %1117
      %1119 = vrot.lane.b32.xlu0 %v898, 127
      %v1120 = vpop.permute.xlu0 %1119
      %1121 = vrot.lane.b32.xlu0 %v878, 127
      %v1122 = vpop.permute.xlu0 %1121
      %1123 = vrot.lane.b32.xlu0 %v899, 127
      %v1124 = vpop.permute.xlu0 %1123
      %1125 = vrot.lane.b32.xlu0 %v881, 127
      %v1126 = vpop.permute.xlu0 %1125
      %1127 = vrot.lane.b32.xlu0 %v900, 127
      %v1128 = vpop.permute.xlu0 %1127
      %1129 = vrot.lane.b32.xlu0 %v884, 127
      %v1130 = vpop.permute.xlu0 %1129
      %v1139 = vcombine.low %v1116, %v1124
      %v1140 = vcombine.high %v1116, %v1124
      %v1142 = vunpack.c.l.s4 1983009808
      %v1143 = vunpack.c.0.s8 %v1142
      %v1144 = vlaneseq
      %v1145 = vshrl.u32 %v1144, 7
      %v1146 = vsub.s32 %v1143, %v1145
      %v1147 = vrot.slane %v1139, %v1146
      %v1149 = vunpack.c.l.s4 1983009808
      %v1150 = vunpack.c.0.s8 %v1149
      %v1151 = vlaneseq
      %v1152 = vshrl.u32 %v1151, 7
      %v1153 = vsub.s32 %v1150, %v1152
      %v1154 = vrot.slane %v1140, %v1153
      %v1155 = vcombine.low %v1120, %v1128
      %v1156 = vcombine.high %v1120, %v1128
      %v1158 = vunpack.c.l.s4 1983009808
      %v1159 = vunpack.c.0.s8 %v1158
      %v1160 = vlaneseq
      %v1161 = vshrl.u32 %v1160, 7
      %v1162 = vsub.s32 %v1159, %v1161
      %v1163 = vrot.slane %v1155, %v1162
      %v1165 = vunpack.c.l.s4 1983009808
      %v1166 = vunpack.c.0.s8 %v1165
      %v1167 = vlaneseq
      %v1168 = vshrl.u32 %v1167, 7
      %v1169 = vsub.s32 %v1166, %v1168
      %v1170 = vrot.slane %v1156, %v1169
      %v1171 = vcombine.low %v1147, %v1163
      %v1172 = vcombine.high %v1147, %v1163
      %v1174 = vunpack.c.l.s4 1934713408
      %v1175 = vunpack.c.0.s8 %v1174
      %v1176 = vlaneseq
      %v1177 = vshrl.u32 %v1176, 7
      %v1178 = vsub.s32 %v1175, %v1177
      %v1179 = vrot.slane %v1171, %v1178
      %v1181 = vunpack.c.l.s4 1934713408
      %v1182 = vunpack.c.0.s8 %v1181
      %v1183 = vlaneseq
      %v1184 = vshrl.u32 %v1183, 7
      %v1185 = vsub.s32 %v1182, %v1184
      %v1186 = vrot.slane %v1172, %v1185
      %v1187 = vcombine.low %v1154, %v1170
      %v1188 = vcombine.high %v1154, %v1170
      %v1190 = vunpack.c.l.s4 1934713408
      %v1191 = vunpack.c.0.s8 %v1190
      %v1192 = vlaneseq
      %v1193 = vshrl.u32 %v1192, 7
      %v1194 = vsub.s32 %v1191, %v1193
      %v1195 = vrot.slane %v1187, %v1194
      %v1197 = vunpack.c.l.s4 1934713408
      %v1198 = vunpack.c.0.s8 %v1197
      %v1199 = vlaneseq
      %v1200 = vshrl.u32 %v1199, 7
      %v1201 = vsub.s32 %v1198, %v1200
      %v1202 = vrot.slane %v1188, %v1201
      %v1203 = vcombine.high %v1179, 0.0
      %v1204 = vcombine.high %v1186, 0.0
      %v1205 = vcombine.high %v1195, 0.0
      %v1206 = vcombine.high %v1202, 0.0
      %v1207 = vcombine.low %v1118, %v1126
      %v1208 = vcombine.high %v1118, %v1126
      %v1210 = vunpack.c.l.s4 1983009808
      %v1211 = vunpack.c.0.s8 %v1210
      %v1212 = vlaneseq
      %v1213 = vshrl.u32 %v1212, 7
      %v1214 = vsub.s32 %v1211, %v1213
      %v1215 = vrot.slane %v1207, %v1214
      %v1217 = vunpack.c.l.s4 1983009808
      %v1218 = vunpack.c.0.s8 %v1217
      %v1219 = vlaneseq
      %v1220 = vshrl.u32 %v1219, 7
      %v1221 = vsub.s32 %v1218, %v1220
      %v1222 = vrot.slane %v1208, %v1221
      %v1223 = vcombine.low %v1122, %v1130
      %v1224 = vcombine.high %v1122, %v1130
      %v1226 = vunpack.c.l.s4 1983009808
      %v1227 = vunpack.c.0.s8 %v1226
      %v1228 = vlaneseq
      %v1229 = vshrl.u32 %v1228, 7
      %v1230 = vsub.s32 %v1227, %v1229
      %v1231 = vrot.slane %v1223, %v1230
      %v1233 = vunpack.c.l.s4 1983009808
      %v1234 = vunpack.c.0.s8 %v1233
      %v1235 = vlaneseq
      %v1236 = vshrl.u32 %v1235, 7
      %v1237 = vsub.s32 %v1234, %v1236
      %v1238 = vrot.slane %v1224, %v1237
      %v1239 = vcombine.low %v1215, %v1231
      %v1240 = vcombine.high %v1215, %v1231
      %v1242 = vunpack.c.l.s4 1934713408
      %v1243 = vunpack.c.0.s8 %v1242
      %v1244 = vlaneseq
      %v1245 = vshrl.u32 %v1244, 7
      %v1246 = vsub.s32 %v1243, %v1245
      %v1247 = vrot.slane %v1239, %v1246
      %v1249 = vunpack.c.l.s4 1934713408
      %v1250 = vunpack.c.0.s8 %v1249
      %v1251 = vlaneseq
      %v1252 = vshrl.u32 %v1251, 7
      %v1253 = vsub.s32 %v1250, %v1252
      %v1254 = vrot.slane %v1240, %v1253
      %v1255 = vcombine.low %v1222, %v1238
      %v1256 = vcombine.high %v1222, %v1238
      %v1258 = vunpack.c.l.s4 1934713408
      %v1259 = vunpack.c.0.s8 %v1258
      %v1260 = vlaneseq
      %v1261 = vshrl.u32 %v1260, 7
      %v1262 = vsub.s32 %v1259, %v1261
      %v1263 = vrot.slane %v1255, %v1262
      %v1265 = vunpack.c.l.s4 1934713408
      %v1266 = vunpack.c.0.s8 %v1265
      %v1267 = vlaneseq
      %v1268 = vshrl.u32 %v1267, 7
      %v1269 = vsub.s32 %v1266, %v1268
      %v1270 = vrot.slane %v1256, %v1269
      %v1271 = vcombine.high %v1247, 0.0
      %v1272 = vcombine.high %v1254, 0.0
      %v1273 = vcombine.high %v1263, 0.0
      %v1274 = vcombine.high %v1270, 0.0
      %1276 = vrot.lane.b32.xlu0 %v1203, 16
      %v1277 = vpop.permute.xlu0 %1276
      %1280 = vrot.lane.b32.xlu0 %v1186, 32
      %v1281 = vpop.permute.xlu0 %1280
      %1284 = vrot.lane.b32.xlu0 %v1204, 48
      %v1285 = vpop.permute.xlu0 %1284
      %1288 = vrot.lane.b32.xlu0 %v1195, 64
      %v1289 = vpop.permute.xlu0 %1288
      %1292 = vrot.lane.b32.xlu0 %v1205, 80
      %v1293 = vpop.permute.xlu0 %1292
      %1296 = vrot.lane.b32.xlu0 %v1202, 96
      %v1297 = vpop.permute.xlu0 %1296
      %1300 = vrot.lane.b32.xlu0 %v1206, 112
      %v1301 = vpop.permute.xlu0 %1300
      %1304 = vrot.lane.b32.xlu0 %v1271, 16
      %v1305 = vpop.permute.xlu0 %1304
      %1308 = vrot.lane.b32.xlu0 %v1254, 32
      %v1309 = vpop.permute.xlu0 %1308
      %1312 = vrot.lane.b32.xlu0 %v1272, 48
      %v1313 = vpop.permute.xlu0 %1312
      %1316 = vrot.lane.b32.xlu0 %v1263, 64
      %v1317 = vpop.permute.xlu0 %1316
      %1320 = vrot.lane.b32.xlu0 %v1273, 80
      %v1321 = vpop.permute.xlu0 %1320
      %1324 = vrot.lane.b32.xlu0 %v1270, 96
      %v1325 = vpop.permute.xlu0 %1324
      %1328 = vrot.lane.b32.xlu0 %v1274, 112
      %v1329 = vpop.permute.xlu0 %1328
      %v1331 = vsel %vm534, %v1179, %v1277
      %v1332 = vsel %vm536, %v1331, %v1281
      %v1333 = vsel %vm538, %v1332, %v1285
      %v1334 = vsel %vm540, %v1333, %v1289
      %v1335 = vsel %vm542, %v1334, %v1293
      %v1336 = vsel %vm544, %v1335, %v1297
      %v1337 = vsel %vm546, %v1336, %v1301
      %v1338 = vsel %vm534, %v1247, %v1305
      %v1339 = vsel %vm536, %v1338, %v1309
      %v1340 = vsel %vm538, %v1339, %v1313
      %v1341 = vsel %vm540, %v1340, %v1317
      %v1342 = vsel %vm542, %v1341, %v1321
      %v1343 = vsel %vm544, %v1342, %v1325
      %v1344 = vsel %vm546, %v1343, %v1329
      %1345 = vrot.lane.b32.xlu0 %v897, 126
      %v1346 = vpop.permute.xlu0 %1345
      %1347 = vrot.lane.b32.xlu0 %v875, 126
      %v1348 = vpop.permute.xlu0 %1347
      %1349 = vrot.lane.b32.xlu0 %v898, 126
      %v1350 = vpop.permute.xlu0 %1349
      %1351 = vrot.lane.b32.xlu0 %v878, 126
      %v1352 = vpop.permute.xlu0 %1351
      %1353 = vrot.lane.b32.xlu0 %v899, 126
      %v1354 = vpop.permute.xlu0 %1353
      %1355 = vrot.lane.b32.xlu0 %v881, 126
      %v1356 = vpop.permute.xlu0 %1355
      %1357 = vrot.lane.b32.xlu0 %v900, 126
      %v1358 = vpop.permute.xlu0 %1357
      %1359 = vrot.lane.b32.xlu0 %v884, 126
      %v1360 = vpop.permute.xlu0 %1359
      %v1369 = vcombine.low %v1346, %v1354
      %v1370 = vcombine.high %v1346, %v1354
      %v1372 = vunpack.c.l.s4 1983009808
      %v1373 = vunpack.c.0.s8 %v1372
      %v1374 = vlaneseq
      %v1375 = vshrl.u32 %v1374, 7
      %v1376 = vsub.s32 %v1373, %v1375
      %v1377 = vrot.slane %v1369, %v1376
      %v1379 = vunpack.c.l.s4 1983009808
      %v1380 = vunpack.c.0.s8 %v1379
      %v1381 = vlaneseq
      %v1382 = vshrl.u32 %v1381, 7
      %v1383 = vsub.s32 %v1380, %v1382
      %v1384 = vrot.slane %v1370, %v1383
      %v1385 = vcombine.low %v1350, %v1358
      %v1386 = vcombine.high %v1350, %v1358
      %v1388 = vunpack.c.l.s4 1983009808
      %v1389 = vunpack.c.0.s8 %v1388
      %v1390 = vlaneseq
      %v1391 = vshrl.u32 %v1390, 7
      %v1392 = vsub.s32 %v1389, %v1391
      %v1393 = vrot.slane %v1385, %v1392
      %v1395 = vunpack.c.l.s4 1983009808
      %v1396 = vunpack.c.0.s8 %v1395
      %v1397 = vlaneseq
      %v1398 = vshrl.u32 %v1397, 7
      %v1399 = vsub.s32 %v1396, %v1398
      %v1400 = vrot.slane %v1386, %v1399
      %v1401 = vcombine.low %v1377, %v1393
      %v1402 = vcombine.high %v1377, %v1393
      %v1404 = vunpack.c.l.s4 1934713408
      %v1405 = vunpack.c.0.s8 %v1404
      %v1406 = vlaneseq
      %v1407 = vshrl.u32 %v1406, 7
      %v1408 = vsub.s32 %v1405, %v1407
      %v1409 = vrot.slane %v1401, %v1408
      %v1411 = vunpack.c.l.s4 1934713408
      %v1412 = vunpack.c.0.s8 %v1411
      %v1413 = vlaneseq
      %v1414 = vshrl.u32 %v1413, 7
      %v1415 = vsub.s32 %v1412, %v1414
      %v1416 = vrot.slane %v1402, %v1415
      %v1417 = vcombine.low %v1384, %v1400
      %v1418 = vcombine.high %v1384, %v1400
      %v1420 = vunpack.c.l.s4 1934713408
      %v1421 = vunpack.c.0.s8 %v1420
      %v1422 = vlaneseq
      %v1423 = vshrl.u32 %v1422, 7
      %v1424 = vsub.s32 %v1421, %v1423
      %v1425 = vrot.slane %v1417, %v1424
      %v1427 = vunpack.c.l.s4 1934713408
      %v1428 = vunpack.c.0.s8 %v1427
      %v1429 = vlaneseq
      %v1430 = vshrl.u32 %v1429, 7
      %v1431 = vsub.s32 %v1428, %v1430
      %v1432 = vrot.slane %v1418, %v1431
      %v1433 = vcombine.high %v1409, 0.0
      %v1434 = vcombine.high %v1416, 0.0
      %v1435 = vcombine.high %v1425, 0.0
      %v1436 = vcombine.high %v1432, 0.0
      %v1437 = vcombine.low %v1348, %v1356
      %v1438 = vcombine.high %v1348, %v1356
      %v1440 = vunpack.c.l.s4 1983009808
      %v1441 = vunpack.c.0.s8 %v1440
      %v1442 = vlaneseq
      %v1443 = vshrl.u32 %v1442, 7
      %v1444 = vsub.s32 %v1441, %v1443
      %v1445 = vrot.slane %v1437, %v1444
      %v1447 = vunpack.c.l.s4 1983009808
      %v1448 = vunpack.c.0.s8 %v1447
      %v1449 = vlaneseq
      %v1450 = vshrl.u32 %v1449, 7
      %v1451 = vsub.s32 %v1448, %v1450
      %v1452 = vrot.slane %v1438, %v1451
      %v1453 = vcombine.low %v1352, %v1360
      %v1454 = vcombine.high %v1352, %v1360
      %v1456 = vunpack.c.l.s4 1983009808
      %v1457 = vunpack.c.0.s8 %v1456
      %v1458 = vlaneseq
      %v1459 = vshrl.u32 %v1458, 7
      %v1460 = vsub.s32 %v1457, %v1459
      %v1461 = vrot.slane %v1453, %v1460
      %v1463 = vunpack.c.l.s4 1983009808
      %v1464 = vunpack.c.0.s8 %v1463
      %v1465 = vlaneseq
      %v1466 = vshrl.u32 %v1465, 7
      %v1467 = vsub.s32 %v1464, %v1466
      %v1468 = vrot.slane %v1454, %v1467
      %v1469 = vcombine.low %v1445, %v1461
      %v1470 = vcombine.high %v1445, %v1461
      %v1472 = vunpack.c.l.s4 1934713408
      %v1473 = vunpack.c.0.s8 %v1472
      %v1474 = vlaneseq
      %v1475 = vshrl.u32 %v1474, 7
      %v1476 = vsub.s32 %v1473, %v1475
      %v1477 = vrot.slane %v1469, %v1476
      %v1479 = vunpack.c.l.s4 1934713408
      %v1480 = vunpack.c.0.s8 %v1479
      %v1481 = vlaneseq
      %v1482 = vshrl.u32 %v1481, 7
      %v1483 = vsub.s32 %v1480, %v1482
      %v1484 = vrot.slane %v1470, %v1483
      %v1485 = vcombine.low %v1452, %v1468
      %v1486 = vcombine.high %v1452, %v1468
      %v1488 = vunpack.c.l.s4 1934713408
      %v1489 = vunpack.c.0.s8 %v1488
      %v1490 = vlaneseq
      %v1491 = vshrl.u32 %v1490, 7
      %v1492 = vsub.s32 %v1489, %v1491
      %v1493 = vrot.slane %v1485, %v1492
      %v1495 = vunpack.c.l.s4 1934713408
      %v1496 = vunpack.c.0.s8 %v1495
      %v1497 = vlaneseq
      %v1498 = vshrl.u32 %v1497, 7
      %v1499 = vsub.s32 %v1496, %v1498
      %v1500 = vrot.slane %v1486, %v1499
      %v1501 = vcombine.high %v1477, 0.0
      %v1502 = vcombine.high %v1484, 0.0
      %v1503 = vcombine.high %v1493, 0.0
      %v1504 = vcombine.high %v1500, 0.0
      %1506 = vrot.lane.b32.xlu0 %v1433, 16
      %v1507 = vpop.permute.xlu0 %1506
      %1510 = vrot.lane.b32.xlu0 %v1416, 32
      %v1511 = vpop.permute.xlu0 %1510
      %1514 = vrot.lane.b32.xlu0 %v1434, 48
      %v1515 = vpop.permute.xlu0 %1514
      %1518 = vrot.lane.b32.xlu0 %v1425, 64
      %v1519 = vpop.permute.xlu0 %1518
      %1522 = vrot.lane.b32.xlu0 %v1435, 80
      %v1523 = vpop.permute.xlu0 %1522
      %1526 = vrot.lane.b32.xlu0 %v1432, 96
      %v1527 = vpop.permute.xlu0 %1526
      %1530 = vrot.lane.b32.xlu0 %v1436, 112
      %v1531 = vpop.permute.xlu0 %1530
      %1534 = vrot.lane.b32.xlu0 %v1501, 16
      %v1535 = vpop.permute.xlu0 %1534
      %1538 = vrot.lane.b32.xlu0 %v1484, 32
      %v1539 = vpop.permute.xlu0 %1538
      %1542 = vrot.lane.b32.xlu0 %v1502, 48
      %v1543 = vpop.permute.xlu0 %1542
      %1546 = vrot.lane.b32.xlu0 %v1493, 64
      %v1547 = vpop.permute.xlu0 %1546
      %1550 = vrot.lane.b32.xlu0 %v1503, 80
      %v1551 = vpop.permute.xlu0 %1550
      %1554 = vrot.lane.b32.xlu0 %v1500, 96
      %v1555 = vpop.permute.xlu0 %1554
      %1558 = vrot.lane.b32.xlu0 %v1504, 112
      %v1559 = vpop.permute.xlu0 %1558
      %v1561 = vsel %vm534, %v1409, %v1507
      %v1562 = vsel %vm536, %v1561, %v1511
      %v1563 = vsel %vm538, %v1562, %v1515
      %v1564 = vsel %vm540, %v1563, %v1519
      %v1565 = vsel %vm542, %v1564, %v1523
      %v1566 = vsel %vm544, %v1565, %v1527
      %v1567 = vsel %vm546, %v1566, %v1531
      %v1568 = vsel %vm534, %v1477, %v1535
      %v1569 = vsel %vm536, %v1568, %v1539
      %v1570 = vsel %vm538, %v1569, %v1543
      %v1571 = vsel %vm540, %v1570, %v1547
      %v1572 = vsel %vm542, %v1571, %v1551
      %v1573 = vsel %vm544, %v1572, %v1555
      %v1574 = vsel %vm546, %v1573, %v1559
      %vm1579 = vcmask 1046528
      %v1580 = vrot.slane %v897, 1
      %v1581 = vrot.slane %v875, 1
      %v1582 = vsel %vm1579, %v1580, %v1581
      %v1583 = vrot.slane %v901, 1
      %v1584 = vsel %vm1579, %v1581, %v1583
      %v1585 = vrot.slane %v898, 1
      %v1586 = vrot.slane %v878, 1
      %v1587 = vsel %vm1579, %v1585, %v1586
      %v1588 = vrot.slane %v902, 1
      %v1589 = vsel %vm1579, %v1586, %v1588
      %v1590 = vrot.slane %v899, 1
      %v1591 = vrot.slane %v881, 1
      %v1592 = vsel %vm1579, %v1590, %v1591
      %v1593 = vrot.slane %v903, 1
      %v1594 = vsel %vm1579, %v1591, %v1593
      %v1595 = vrot.slane %v900, 1
      %v1596 = vrot.slane %v884, 1
      %v1597 = vsel %vm1579, %v1595, %v1596
      %v1598 = vrot.slane %v904, 1
      %v1599 = vsel %vm1579, %v1596, %v1598
      %v1608 = vcombine.low %v1582, %v1592
      %v1609 = vcombine.high %v1582, %v1592
      %v1611 = vunpack.c.l.s4 1983009808
      %v1612 = vunpack.c.0.s8 %v1611
      %v1613 = vlaneseq
      %v1614 = vshrl.u32 %v1613, 7
      %v1615 = vsub.s32 %v1612, %v1614
      %v1616 = vrot.slane %v1608, %v1615
      %v1618 = vunpack.c.l.s4 1983009808
      %v1619 = vunpack.c.0.s8 %v1618
      %v1620 = vlaneseq
      %v1621 = vshrl.u32 %v1620, 7
      %v1622 = vsub.s32 %v1619, %v1621
      %v1623 = vrot.slane %v1609, %v1622
      %v1624 = vcombine.low %v1587, %v1597
      %v1625 = vcombine.high %v1587, %v1597
      %v1627 = vunpack.c.l.s4 1983009808
      %v1628 = vunpack.c.0.s8 %v1627
      %v1629 = vlaneseq
      %v1630 = vshrl.u32 %v1629, 7
      %v1631 = vsub.s32 %v1628, %v1630
      %v1632 = vrot.slane %v1624, %v1631
      %v1634 = vunpack.c.l.s4 1983009808
      %v1635 = vunpack.c.0.s8 %v1634
      %v1636 = vlaneseq
      %v1637 = vshrl.u32 %v1636, 7
      %v1638 = vsub.s32 %v1635, %v1637
      %v1639 = vrot.slane %v1625, %v1638
      %v1640 = vcombine.low %v1616, %v1632
      %v1641 = vcombine.high %v1616, %v1632
      %v1643 = vunpack.c.l.s4 1934713408
      %v1644 = vunpack.c.0.s8 %v1643
      %v1645 = vlaneseq
      %v1646 = vshrl.u32 %v1645, 7
      %v1647 = vsub.s32 %v1644, %v1646
      %v1648 = vrot.slane %v1640, %v1647
      %v1650 = vunpack.c.l.s4 1934713408
      %v1651 = vunpack.c.0.s8 %v1650
      %v1652 = vlaneseq
      %v1653 = vshrl.u32 %v1652, 7
      %v1654 = vsub.s32 %v1651, %v1653
      %v1655 = vrot.slane %v1641, %v1654
      %v1656 = vcombine.low %v1623, %v1639
      %v1657 = vcombine.high %v1623, %v1639
      %v1659 = vunpack.c.l.s4 1934713408
      %v1660 = vunpack.c.0.s8 %v1659
      %v1661 = vlaneseq
      %v1662 = vshrl.u32 %v1661, 7
      %v1663 = vsub.s32 %v1660, %v1662
      %v1664 = vrot.slane %v1656, %v1663
      %v1666 = vunpack.c.l.s4 1934713408
      %v1667 = vunpack.c.0.s8 %v1666
      %v1668 = vlaneseq
      %v1669 = vshrl.u32 %v1668, 7
      %v1670 = vsub.s32 %v1667, %v1669
      %v1671 = vrot.slane %v1657, %v1670
      %v1672 = vcombine.high %v1648, 0.0
      %v1673 = vcombine.high %v1655, 0.0
      %v1674 = vcombine.high %v1664, 0.0
      %v1675 = vcombine.high %v1671, 0.0
      %v1676 = vcombine.low %v1584, %v1594
      %v1677 = vcombine.high %v1584, %v1594
      %v1679 = vunpack.c.l.s4 1983009808
      %v1680 = vunpack.c.0.s8 %v1679
      %v1681 = vlaneseq
      %v1682 = vshrl.u32 %v1681, 7
      %v1683 = vsub.s32 %v1680, %v1682
      %v1684 = vrot.slane %v1676, %v1683
      %v1686 = vunpack.c.l.s4 1983009808
      %v1687 = vunpack.c.0.s8 %v1686
      %v1688 = vlaneseq
      %v1689 = vshrl.u32 %v1688, 7
      %v1690 = vsub.s32 %v1687, %v1689
      %v1691 = vrot.slane %v1677, %v1690
      %v1692 = vcombine.low %v1589, %v1599
      %v1693 = vcombine.high %v1589, %v1599
      %v1695 = vunpack.c.l.s4 1983009808
      %v1696 = vunpack.c.0.s8 %v1695
      %v1697 = vlaneseq
      %v1698 = vshrl.u32 %v1697, 7
      %v1699 = vsub.s32 %v1696, %v1698
      %v1700 = vrot.slane %v1692, %v1699
      %v1702 = vunpack.c.l.s4 1983009808
      %v1703 = vunpack.c.0.s8 %v1702
      %v1704 = vlaneseq
      %v1705 = vshrl.u32 %v1704, 7
      %v1706 = vsub.s32 %v1703, %v1705
      %v1707 = vrot.slane %v1693, %v1706
      %v1708 = vcombine.low %v1684, %v1700
      %v1709 = vcombine.high %v1684, %v1700
      %v1711 = vunpack.c.l.s4 1934713408
      %v1712 = vunpack.c.0.s8 %v1711
      %v1713 = vlaneseq
      %v1714 = vshrl.u32 %v1713, 7
      %v1715 = vsub.s32 %v1712, %v1714
      %v1716 = vrot.slane %v1708, %v1715
      %v1718 = vunpack.c.l.s4 1934713408
      %v1719 = vunpack.c.0.s8 %v1718
      %v1720 = vlaneseq
      %v1721 = vshrl.u32 %v1720, 7
      %v1722 = vsub.s32 %v1719, %v1721
      %v1723 = vrot.slane %v1709, %v1722
      %v1724 = vcombine.low %v1691, %v1707
      %v1725 = vcombine.high %v1691, %v1707
      %v1727 = vunpack.c.l.s4 1934713408
      %v1728 = vunpack.c.0.s8 %v1727
      %v1729 = vlaneseq
      %v1730 = vshrl.u32 %v1729, 7
      %v1731 = vsub.s32 %v1728, %v1730
      %v1732 = vrot.slane %v1724, %v1731
      %v1734 = vunpack.c.l.s4 1934713408
      %v1735 = vunpack.c.0.s8 %v1734
      %v1736 = vlaneseq
      %v1737 = vshrl.u32 %v1736, 7
      %v1738 = vsub.s32 %v1735, %v1737
      %v1739 = vrot.slane %v1725, %v1738
      %v1740 = vcombine.high %v1716, 0.0
      %v1741 = vcombine.high %v1723, 0.0
      %v1742 = vcombine.high %v1732, 0.0
      %v1743 = vcombine.high %v1739, 0.0
      %1745 = vrot.lane.b32.xlu0 %v1672, 16
      %v1746 = vpop.permute.xlu0 %1745
      %1749 = vrot.lane.b32.xlu0 %v1655, 32
      %v1750 = vpop.permute.xlu0 %1749
      %1753 = vrot.lane.b32.xlu0 %v1673, 48
      %v1754 = vpop.permute.xlu0 %1753
      %1757 = vrot.lane.b32.xlu0 %v1664, 64
      %v1758 = vpop.permute.xlu0 %1757
      %1761 = vrot.lane.b32.xlu0 %v1674, 80
      %v1762 = vpop.permute.xlu0 %1761
      %1765 = vrot.lane.b32.xlu0 %v1671, 96
      %v1766 = vpop.permute.xlu0 %1765
      %1769 = vrot.lane.b32.xlu0 %v1675, 112
      %v1770 = vpop.permute.xlu0 %1769
      %1773 = vrot.lane.b32.xlu0 %v1740, 16
      %v1774 = vpop.permute.xlu0 %1773
      %1777 = vrot.lane.b32.xlu0 %v1723, 32
      %v1778 = vpop.permute.xlu0 %1777
      %1781 = vrot.lane.b32.xlu0 %v1741, 48
      %v1782 = vpop.permute.xlu0 %1781
      %1785 = vrot.lane.b32.xlu0 %v1732, 64
      %v1786 = vpop.permute.xlu0 %1785
      %1789 = vrot.lane.b32.xlu0 %v1742, 80
      %v1790 = vpop.permute.xlu0 %1789
      %1793 = vrot.lane.b32.xlu0 %v1739, 96
      %v1794 = vpop.permute.xlu0 %1793
      %1797 = vrot.lane.b32.xlu0 %v1743, 112
      %v1798 = vpop.permute.xlu0 %1797
      %v1800 = vsel %vm534, %v1648, %v1746
      %v1801 = vsel %vm536, %v1800, %v1750
      %v1802 = vsel %vm538, %v1801, %v1754
      %v1803 = vsel %vm540, %v1802, %v1758
      %v1804 = vsel %vm542, %v1803, %v1762
      %v1805 = vsel %vm544, %v1804, %v1766
      %v1806 = vsel %vm546, %v1805, %v1770
      %v1807 = vsel %vm534, %v1716, %v1774
      %v1808 = vsel %vm536, %v1807, %v1778
      %v1809 = vsel %vm538, %v1808, %v1782
      %v1810 = vsel %vm540, %v1809, %v1786
      %v1811 = vsel %vm542, %v1810, %v1790
      %v1812 = vsel %vm544, %v1811, %v1794
      %v1813 = vsel %vm546, %v1812, %v1798
      %1814 = vrot.lane.b32.xlu0 %v1582, 127
      %v1815 = vpop.permute.xlu0 %1814
      %1816 = vrot.lane.b32.xlu0 %v1584, 127
      %v1817 = vpop.permute.xlu0 %1816
      %1818 = vrot.lane.b32.xlu0 %v1587, 127
      %v1819 = vpop.permute.xlu0 %1818
      %1820 = vrot.lane.b32.xlu0 %v1589, 127
      %v1821 = vpop.permute.xlu0 %1820
      %1822 = vrot.lane.b32.xlu0 %v1592, 127
      %v1823 = vpop.permute.xlu0 %1822
      %1824 = vrot.lane.b32.xlu0 %v1594, 127
      %v1825 = vpop.permute.xlu0 %1824
      %1826 = vrot.lane.b32.xlu0 %v1597, 127
      %v1827 = vpop.permute.xlu0 %1826
      %1828 = vrot.lane.b32.xlu0 %v1599, 127
      %v1829 = vpop.permute.xlu0 %1828
      %v1838 = vcombine.low %v1815, %v1823
      %v1839 = vcombine.high %v1815, %v1823
      %v1841 = vunpack.c.l.s4 1983009808
      %v1842 = vunpack.c.0.s8 %v1841
      %v1843 = vlaneseq
      %v1844 = vshrl.u32 %v1843, 7
      %v1845 = vsub.s32 %v1842, %v1844
      %v1846 = vrot.slane %v1838, %v1845
      %v1848 = vunpack.c.l.s4 1983009808
      %v1849 = vunpack.c.0.s8 %v1848
      %v1850 = vlaneseq
      %v1851 = vshrl.u32 %v1850, 7
      %v1852 = vsub.s32 %v1849, %v1851
      %v1853 = vrot.slane %v1839, %v1852
      %v1854 = vcombine.low %v1819, %v1827
      %v1855 = vcombine.high %v1819, %v1827
      %v1857 = vunpack.c.l.s4 1983009808
      %v1858 = vunpack.c.0.s8 %v1857
      %v1859 = vlaneseq
      %v1860 = vshrl.u32 %v1859, 7
      %v1861 = vsub.s32 %v1858, %v1860
      %v1862 = vrot.slane %v1854, %v1861
      %v1864 = vunpack.c.l.s4 1983009808
      %v1865 = vunpack.c.0.s8 %v1864
      %v1866 = vlaneseq
      %v1867 = vshrl.u32 %v1866, 7
      %v1868 = vsub.s32 %v1865, %v1867
      %v1869 = vrot.slane %v1855, %v1868
      %v1870 = vcombine.low %v1846, %v1862
      %v1871 = vcombine.high %v1846, %v1862
      %v1873 = vunpack.c.l.s4 1934713408
      %v1874 = vunpack.c.0.s8 %v1873
      %v1875 = vlaneseq
      %v1876 = vshrl.u32 %v1875, 7
      %v1877 = vsub.s32 %v1874, %v1876
      %v1878 = vrot.slane %v1870, %v1877
      %v1880 = vunpack.c.l.s4 1934713408
      %v1881 = vunpack.c.0.s8 %v1880
      %v1882 = vlaneseq
      %v1883 = vshrl.u32 %v1882, 7
      %v1884 = vsub.s32 %v1881, %v1883
      %v1885 = vrot.slane %v1871, %v1884
      %v1886 = vcombine.low %v1853, %v1869
      %v1887 = vcombine.high %v1853, %v1869
      %v1889 = vunpack.c.l.s4 1934713408
      %v1890 = vunpack.c.0.s8 %v1889
      %v1891 = vlaneseq
      %v1892 = vshrl.u32 %v1891, 7
      %v1893 = vsub.s32 %v1890, %v1892
      %v1894 = vrot.slane %v1886, %v1893
      %v1896 = vunpack.c.l.s4 1934713408
      %v1897 = vunpack.c.0.s8 %v1896
      %v1898 = vlaneseq
      %v1899 = vshrl.u32 %v1898, 7
      %v1900 = vsub.s32 %v1897, %v1899
      %v1901 = vrot.slane %v1887, %v1900
      %v1902 = vcombine.high %v1878, 0.0
      %v1903 = vcombine.high %v1885, 0.0
      %v1904 = vcombine.high %v1894, 0.0
      %v1905 = vcombine.high %v1901, 0.0
      %v1906 = vcombine.low %v1817, %v1825
      %v1907 = vcombine.high %v1817, %v1825
      %v1909 = vunpack.c.l.s4 1983009808
      %v1910 = vunpack.c.0.s8 %v1909
      %v1911 = vlaneseq
      %v1912 = vshrl.u32 %v1911, 7
      %v1913 = vsub.s32 %v1910, %v1912
      %v1914 = vrot.slane %v1906, %v1913
      %v1916 = vunpack.c.l.s4 1983009808
      %v1917 = vunpack.c.0.s8 %v1916
      %v1918 = vlaneseq
      %v1919 = vshrl.u32 %v1918, 7
      %v1920 = vsub.s32 %v1917, %v1919
      %v1921 = vrot.slane %v1907, %v1920
      %v1922 = vcombine.low %v1821, %v1829
      %v1923 = vcombine.high %v1821, %v1829
      %v1925 = vunpack.c.l.s4 1983009808
      %v1926 = vunpack.c.0.s8 %v1925
      %v1927 = vlaneseq
      %v1928 = vshrl.u32 %v1927, 7
      %v1929 = vsub.s32 %v1926, %v1928
      %v1930 = vrot.slane %v1922, %v1929
      %v1932 = vunpack.c.l.s4 1983009808
      %v1933 = vunpack.c.0.s8 %v1932
      %v1934 = vlaneseq
      %v1935 = vshrl.u32 %v1934, 7
      %v1936 = vsub.s32 %v1933, %v1935
      %v1937 = vrot.slane %v1923, %v1936
      %v1938 = vcombine.low %v1914, %v1930
      %v1939 = vcombine.high %v1914, %v1930
      %v1941 = vunpack.c.l.s4 1934713408
      %v1942 = vunpack.c.0.s8 %v1941
      %v1943 = vlaneseq
      %v1944 = vshrl.u32 %v1943, 7
      %v1945 = vsub.s32 %v1942, %v1944
      %v1946 = vrot.slane %v1938, %v1945
      %v1948 = vunpack.c.l.s4 1934713408
      %v1949 = vunpack.c.0.s8 %v1948
      %v1950 = vlaneseq
      %v1951 = vshrl.u32 %v1950, 7
      %v1952 = vsub.s32 %v1949, %v1951
      %v1953 = vrot.slane %v1939, %v1952
      %v1954 = vcombine.low %v1921, %v1937
      %v1955 = vcombine.high %v1921, %v1937
      %v1957 = vunpack.c.l.s4 1934713408
      %v1958 = vunpack.c.0.s8 %v1957
      %v1959 = vlaneseq
      %v1960 = vshrl.u32 %v1959, 7
      %v1961 = vsub.s32 %v1958, %v1960
      %v1962 = vrot.slane %v1954, %v1961
      %v1964 = vunpack.c.l.s4 1934713408
      %v1965 = vunpack.c.0.s8 %v1964
      %v1966 = vlaneseq
      %v1967 = vshrl.u32 %v1966, 7
      %v1968 = vsub.s32 %v1965, %v1967
      %v1969 = vrot.slane %v1955, %v1968
      %v1970 = vcombine.high %v1946, 0.0
      %v1971 = vcombine.high %v1953, 0.0
      %v1972 = vcombine.high %v1962, 0.0
      %v1973 = vcombine.high %v1969, 0.0
      %1975 = vrot.lane.b32.xlu0 %v1902, 16
      %v1976 = vpop.permute.xlu0 %1975
      %1979 = vrot.lane.b32.xlu0 %v1885, 32
      %v1980 = vpop.permute.xlu0 %1979
      %1983 = vrot.lane.b32.xlu0 %v1903, 48
      %v1984 = vpop.permute.xlu0 %1983
      %1987 = vrot.lane.b32.xlu0 %v1894, 64
      %v1988 = vpop.permute.xlu0 %1987
      %1991 = vrot.lane.b32.xlu0 %v1904, 80
      %v1992 = vpop.permute.xlu0 %1991
      %1995 = vrot.lane.b32.xlu0 %v1901, 96
      %v1996 = vpop.permute.xlu0 %1995
      %1999 = vrot.lane.b32.xlu0 %v1905, 112
      %v2000 = vpop.permute.xlu0 %1999
      %2003 = vrot.lane.b32.xlu0 %v1970, 16
      %v2004 = vpop.permute.xlu0 %2003
      %2007 = vrot.lane.b32.xlu0 %v1953, 32
      %v2008 = vpop.permute.xlu0 %2007
      %2011 = vrot.lane.b32.xlu0 %v1971, 48
      %v2012 = vpop.permute.xlu0 %2011
      %2015 = vrot.lane.b32.xlu0 %v1962, 64
      %v2016 = vpop.permute.xlu0 %2015
      %2019 = vrot.lane.b32.xlu0 %v1972, 80
      %v2020 = vpop.permute.xlu0 %2019
      %2023 = vrot.lane.b32.xlu0 %v1969, 96
      %v2024 = vpop.permute.xlu0 %2023
      %2027 = vrot.lane.b32.xlu0 %v1973, 112
      %v2028 = vpop.permute.xlu0 %2027
      %v2030 = vsel %vm534, %v1878, %v1976
      %v2031 = vsel %vm536, %v2030, %v1980
      %v2032 = vsel %vm538, %v2031, %v1984
      %v2033 = vsel %vm540, %v2032, %v1988
      %v2034 = vsel %vm542, %v2033, %v1992
      %v2035 = vsel %vm544, %v2034, %v1996
      %v2036 = vsel %vm546, %v2035, %v2000
      %v2037 = vsel %vm534, %v1946, %v2004
      %v2038 = vsel %vm536, %v2037, %v2008
      %v2039 = vsel %vm538, %v2038, %v2012
      %v2040 = vsel %vm540, %v2039, %v2016
      %v2041 = vsel %vm542, %v2040, %v2020
      %v2042 = vsel %vm544, %v2041, %v2024
      %v2043 = vsel %vm546, %v2042, %v2028
      %2044 = vrot.lane.b32.xlu0 %v1582, 126
      %v2045 = vpop.permute.xlu0 %2044
      %2046 = vrot.lane.b32.xlu0 %v1584, 126
      %v2047 = vpop.permute.xlu0 %2046
      %2048 = vrot.lane.b32.xlu0 %v1587, 126
      %v2049 = vpop.permute.xlu0 %2048
      %2050 = vrot.lane.b32.xlu0 %v1589, 126
      %v2051 = vpop.permute.xlu0 %2050
      %2052 = vrot.lane.b32.xlu0 %v1592, 126
      %v2053 = vpop.permute.xlu0 %2052
      %2054 = vrot.lane.b32.xlu0 %v1594, 126
      %v2055 = vpop.permute.xlu0 %2054
      %2056 = vrot.lane.b32.xlu0 %v1597, 126
      %v2057 = vpop.permute.xlu0 %2056
      %2058 = vrot.lane.b32.xlu0 %v1599, 126
      %v2059 = vpop.permute.xlu0 %2058
      %v2068 = vcombine.low %v2045, %v2053
      %v2069 = vcombine.high %v2045, %v2053
      %v2071 = vunpack.c.l.s4 1983009808
      %v2072 = vunpack.c.0.s8 %v2071
      %v2073 = vlaneseq
      %v2074 = vshrl.u32 %v2073, 7
      %v2075 = vsub.s32 %v2072, %v2074
      %v2076 = vrot.slane %v2068, %v2075
      %v2078 = vunpack.c.l.s4 1983009808
      %v2079 = vunpack.c.0.s8 %v2078
      %v2080 = vlaneseq
      %v2081 = vshrl.u32 %v2080, 7
      %v2082 = vsub.s32 %v2079, %v2081
      %v2083 = vrot.slane %v2069, %v2082
      %v2084 = vcombine.low %v2049, %v2057
      %v2085 = vcombine.high %v2049, %v2057
      %v2087 = vunpack.c.l.s4 1983009808
      %v2088 = vunpack.c.0.s8 %v2087
      %v2089 = vlaneseq
      %v2090 = vshrl.u32 %v2089, 7
      %v2091 = vsub.s32 %v2088, %v2090
      %v2092 = vrot.slane %v2084, %v2091
      %v2094 = vunpack.c.l.s4 1983009808
      %v2095 = vunpack.c.0.s8 %v2094
      %v2096 = vlaneseq
      %v2097 = vshrl.u32 %v2096, 7
      %v2098 = vsub.s32 %v2095, %v2097
      %v2099 = vrot.slane %v2085, %v2098
      %v2100 = vcombine.low %v2076, %v2092
      %v2101 = vcombine.high %v2076, %v2092
      %v2103 = vunpack.c.l.s4 1934713408
      %v2104 = vunpack.c.0.s8 %v2103
      %v2105 = vlaneseq
      %v2106 = vshrl.u32 %v2105, 7
      %v2107 = vsub.s32 %v2104, %v2106
      %v2108 = vrot.slane %v2100, %v2107
      %v2110 = vunpack.c.l.s4 1934713408
      %v2111 = vunpack.c.0.s8 %v2110
      %v2112 = vlaneseq
      %v2113 = vshrl.u32 %v2112, 7
      %v2114 = vsub.s32 %v2111, %v2113
      %v2115 = vrot.slane %v2101, %v2114
      %v2116 = vcombine.low %v2083, %v2099
      %v2117 = vcombine.high %v2083, %v2099
      %v2119 = vunpack.c.l.s4 1934713408
      %v2120 = vunpack.c.0.s8 %v2119
      %v2121 = vlaneseq
      %v2122 = vshrl.u32 %v2121, 7
      %v2123 = vsub.s32 %v2120, %v2122
      %v2124 = vrot.slane %v2116, %v2123
      %v2126 = vunpack.c.l.s4 1934713408
      %v2127 = vunpack.c.0.s8 %v2126
      %v2128 = vlaneseq
      %v2129 = vshrl.u32 %v2128, 7
      %v2130 = vsub.s32 %v2127, %v2129
      %v2131 = vrot.slane %v2117, %v2130
      %v2132 = vcombine.high %v2108, 0.0
      %v2133 = vcombine.high %v2115, 0.0
      %v2134 = vcombine.high %v2124, 0.0
      %v2135 = vcombine.high %v2131, 0.0
      %v2136 = vcombine.low %v2047, %v2055
      %v2137 = vcombine.high %v2047, %v2055
      %v2139 = vunpack.c.l.s4 1983009808
      %v2140 = vunpack.c.0.s8 %v2139
      %v2141 = vlaneseq
      %v2142 = vshrl.u32 %v2141, 7
      %v2143 = vsub.s32 %v2140, %v2142
      %v2144 = vrot.slane %v2136, %v2143
      %v2146 = vunpack.c.l.s4 1983009808
      %v2147 = vunpack.c.0.s8 %v2146
      %v2148 = vlaneseq
      %v2149 = vshrl.u32 %v2148, 7
      %v2150 = vsub.s32 %v2147, %v2149
      %v2151 = vrot.slane %v2137, %v2150
      %v2152 = vcombine.low %v2051, %v2059
      %v2153 = vcombine.high %v2051, %v2059
      %v2155 = vunpack.c.l.s4 1983009808
      %v2156 = vunpack.c.0.s8 %v2155
      %v2157 = vlaneseq
      %v2158 = vshrl.u32 %v2157, 7
      %v2159 = vsub.s32 %v2156, %v2158
      %v2160 = vrot.slane %v2152, %v2159
      %v2162 = vunpack.c.l.s4 1983009808
      %v2163 = vunpack.c.0.s8 %v2162
      %v2164 = vlaneseq
      %v2165 = vshrl.u32 %v2164, 7
      %v2166 = vsub.s32 %v2163, %v2165
      %v2167 = vrot.slane %v2153, %v2166
      %v2168 = vcombine.low %v2144, %v2160
      %v2169 = vcombine.high %v2144, %v2160
      %v2171 = vunpack.c.l.s4 1934713408
      %v2172 = vunpack.c.0.s8 %v2171
      %v2173 = vlaneseq
      %v2174 = vshrl.u32 %v2173, 7
      %v2175 = vsub.s32 %v2172, %v2174
      %v2176 = vrot.slane %v2168, %v2175
      %v2178 = vunpack.c.l.s4 1934713408
      %v2179 = vunpack.c.0.s8 %v2178
      %v2180 = vlaneseq
      %v2181 = vshrl.u32 %v2180, 7
      %v2182 = vsub.s32 %v2179, %v2181
      %v2183 = vrot.slane %v2169, %v2182
      %v2184 = vcombine.low %v2151, %v2167
      %v2185 = vcombine.high %v2151, %v2167
      %v2187 = vunpack.c.l.s4 1934713408
      %v2188 = vunpack.c.0.s8 %v2187
      %v2189 = vlaneseq
      %v2190 = vshrl.u32 %v2189, 7
      %v2191 = vsub.s32 %v2188, %v2190
      %v2192 = vrot.slane %v2184, %v2191
      %v2194 = vunpack.c.l.s4 1934713408
      %v2195 = vunpack.c.0.s8 %v2194
      %v2196 = vlaneseq
      %v2197 = vshrl.u32 %v2196, 7
      %v2198 = vsub.s32 %v2195, %v2197
      %v2199 = vrot.slane %v2185, %v2198
      %v2200 = vcombine.high %v2176, 0.0
      %v2201 = vcombine.high %v2183, 0.0
      %v2202 = vcombine.high %v2192, 0.0
      %v2203 = vcombine.high %v2199, 0.0
      %2205 = vrot.lane.b32.xlu0 %v2132, 16
      %v2206 = vpop.permute.xlu0 %2205
      %2209 = vrot.lane.b32.xlu0 %v2115, 32
      %v2210 = vpop.permute.xlu0 %2209
      %2213 = vrot.lane.b32.xlu0 %v2133, 48
      %v2214 = vpop.permute.xlu0 %2213
      %2217 = vrot.lane.b32.xlu0 %v2124, 64
      %v2218 = vpop.permute.xlu0 %2217
      %2221 = vrot.lane.b32.xlu0 %v2134, 80
      %v2222 = vpop.permute.xlu0 %2221
      %2225 = vrot.lane.b32.xlu0 %v2131, 96
      %v2226 = vpop.permute.xlu0 %2225
      %2229 = vrot.lane.b32.xlu0 %v2135, 112
      %v2230 = vpop.permute.xlu0 %2229
      %2233 = vrot.lane.b32.xlu0 %v2200, 16
      %v2234 = vpop.permute.xlu0 %2233
      %2237 = vrot.lane.b32.xlu0 %v2183, 32
      %v2238 = vpop.permute.xlu0 %2237
      %2241 = vrot.lane.b32.xlu0 %v2201, 48
      %v2242 = vpop.permute.xlu0 %2241
      %2245 = vrot.lane.b32.xlu0 %v2192, 64
      %v2246 = vpop.permute.xlu0 %2245
      %2249 = vrot.lane.b32.xlu0 %v2202, 80
      %v2250 = vpop.permute.xlu0 %2249
      %2253 = vrot.lane.b32.xlu0 %v2199, 96
      %v2254 = vpop.permute.xlu0 %2253
      %2257 = vrot.lane.b32.xlu0 %v2203, 112
      %v2258 = vpop.permute.xlu0 %2257
      %v2260 = vsel %vm534, %v2108, %v2206
      %v2261 = vsel %vm536, %v2260, %v2210
      %v2262 = vsel %vm538, %v2261, %v2214
      %v2263 = vsel %vm540, %v2262, %v2218
      %v2264 = vsel %vm542, %v2263, %v2222
      %v2265 = vsel %vm544, %v2264, %v2226
      %v2266 = vsel %vm546, %v2265, %v2230
      %v2267 = vsel %vm534, %v2176, %v2234
      %v2268 = vsel %vm536, %v2267, %v2238
      %v2269 = vsel %vm538, %v2268, %v2242
      %v2270 = vsel %vm540, %v2269, %v2246
      %v2271 = vsel %vm542, %v2270, %v2250
      %v2272 = vsel %vm544, %v2271, %v2254
      %v2273 = vsel %vm546, %v2272, %v2258
      %vm2274 = vcmask 1045504
      %v2275 = vrot.slane %v897, 2
      %v2276 = vrot.slane %v875, 2
      %v2277 = vsel %vm2274, %v2275, %v2276
      %v2278 = vrot.slane %v901, 2
      %v2279 = vsel %vm2274, %v2276, %v2278
      %v2280 = vrot.slane %v898, 2
      %v2281 = vrot.slane %v878, 2
      %v2282 = vsel %vm2274, %v2280, %v2281
      %v2283 = vrot.slane %v902, 2
      %v2284 = vsel %vm2274, %v2281, %v2283
      %v2285 = vrot.slane %v899, 2
      %v2286 = vrot.slane %v881, 2
      %v2287 = vsel %vm2274, %v2285, %v2286
      %v2288 = vrot.slane %v903, 2
      %v2289 = vsel %vm2274, %v2286, %v2288
      %v2290 = vrot.slane %v900, 2
      %v2291 = vrot.slane %v884, 2
      %v2292 = vsel %vm2274, %v2290, %v2291
      %v2293 = vrot.slane %v904, 2
      %v2294 = vsel %vm2274, %v2291, %v2293
      %v2303 = vcombine.low %v2277, %v2287
      %v2304 = vcombine.high %v2277, %v2287
      %v2306 = vunpack.c.l.s4 1983009808
      %v2307 = vunpack.c.0.s8 %v2306
      %v2308 = vlaneseq
      %v2309 = vshrl.u32 %v2308, 7
      %v2310 = vsub.s32 %v2307, %v2309
      %v2311 = vrot.slane %v2303, %v2310
      %v2313 = vunpack.c.l.s4 1983009808
      %v2314 = vunpack.c.0.s8 %v2313
      %v2315 = vlaneseq
      %v2316 = vshrl.u32 %v2315, 7
      %v2317 = vsub.s32 %v2314, %v2316
      %v2318 = vrot.slane %v2304, %v2317
      %v2319 = vcombine.low %v2282, %v2292
      %v2320 = vcombine.high %v2282, %v2292
      %v2322 = vunpack.c.l.s4 1983009808
      %v2323 = vunpack.c.0.s8 %v2322
      %v2324 = vlaneseq
      %v2325 = vshrl.u32 %v2324, 7
      %v2326 = vsub.s32 %v2323, %v2325
      %v2327 = vrot.slane %v2319, %v2326
      %v2329 = vunpack.c.l.s4 1983009808
      %v2330 = vunpack.c.0.s8 %v2329
      %v2331 = vlaneseq
      %v2332 = vshrl.u32 %v2331, 7
      %v2333 = vsub.s32 %v2330, %v2332
      %v2334 = vrot.slane %v2320, %v2333
      %v2335 = vcombine.low %v2311, %v2327
      %v2336 = vcombine.high %v2311, %v2327
      %v2338 = vunpack.c.l.s4 1934713408
      %v2339 = vunpack.c.0.s8 %v2338
      %v2340 = vlaneseq
      %v2341 = vshrl.u32 %v2340, 7
      %v2342 = vsub.s32 %v2339, %v2341
      %v2343 = vrot.slane %v2335, %v2342
      %v2345 = vunpack.c.l.s4 1934713408
      %v2346 = vunpack.c.0.s8 %v2345
      %v2347 = vlaneseq
      %v2348 = vshrl.u32 %v2347, 7
      %v2349 = vsub.s32 %v2346, %v2348
      %v2350 = vrot.slane %v2336, %v2349
      %v2351 = vcombine.low %v2318, %v2334
      %v2352 = vcombine.high %v2318, %v2334
      %v2354 = vunpack.c.l.s4 1934713408
      %v2355 = vunpack.c.0.s8 %v2354
      %v2356 = vlaneseq
      %v2357 = vshrl.u32 %v2356, 7
      %v2358 = vsub.s32 %v2355, %v2357
      %v2359 = vrot.slane %v2351, %v2358
      %v2361 = vunpack.c.l.s4 1934713408
      %v2362 = vunpack.c.0.s8 %v2361
      %v2363 = vlaneseq
      %v2364 = vshrl.u32 %v2363, 7
      %v2365 = vsub.s32 %v2362, %v2364
      %v2366 = vrot.slane %v2352, %v2365
      %v2367 = vcombine.high %v2343, 0.0
      %v2368 = vcombine.high %v2350, 0.0
      %v2369 = vcombine.high %v2359, 0.0
      %v2370 = vcombine.high %v2366, 0.0
      %v2371 = vcombine.low %v2279, %v2289
      %v2372 = vcombine.high %v2279, %v2289
      %v2374 = vunpack.c.l.s4 1983009808
      %v2375 = vunpack.c.0.s8 %v2374
      %v2376 = vlaneseq
      %v2377 = vshrl.u32 %v2376, 7
      %v2378 = vsub.s32 %v2375, %v2377
      %v2379 = vrot.slane %v2371, %v2378
      %v2381 = vunpack.c.l.s4 1983009808
      %v2382 = vunpack.c.0.s8 %v2381
      %v2383 = vlaneseq
      %v2384 = vshrl.u32 %v2383, 7
      %v2385 = vsub.s32 %v2382, %v2384
      %v2386 = vrot.slane %v2372, %v2385
      %v2387 = vcombine.low %v2284, %v2294
      %v2388 = vcombine.high %v2284, %v2294
      %v2390 = vunpack.c.l.s4 1983009808
      %v2391 = vunpack.c.0.s8 %v2390
      %v2392 = vlaneseq
      %v2393 = vshrl.u32 %v2392, 7
      %v2394 = vsub.s32 %v2391, %v2393
      %v2395 = vrot.slane %v2387, %v2394
      %v2397 = vunpack.c.l.s4 1983009808
      %v2398 = vunpack.c.0.s8 %v2397
      %v2399 = vlaneseq
      %v2400 = vshrl.u32 %v2399, 7
      %v2401 = vsub.s32 %v2398, %v2400
      %v2402 = vrot.slane %v2388, %v2401
      %v2403 = vcombine.low %v2379, %v2395
      %v2404 = vcombine.high %v2379, %v2395
      %v2406 = vunpack.c.l.s4 1934713408
      %v2407 = vunpack.c.0.s8 %v2406
      %v2408 = vlaneseq
      %v2409 = vshrl.u32 %v2408, 7
      %v2410 = vsub.s32 %v2407, %v2409
      %v2411 = vrot.slane %v2403, %v2410
      %v2413 = vunpack.c.l.s4 1934713408
      %v2414 = vunpack.c.0.s8 %v2413
      %v2415 = vlaneseq
      %v2416 = vshrl.u32 %v2415, 7
      %v2417 = vsub.s32 %v2414, %v2416
      %v2418 = vrot.slane %v2404, %v2417
      %v2419 = vcombine.low %v2386, %v2402
      %v2420 = vcombine.high %v2386, %v2402
      %v2422 = vunpack.c.l.s4 1934713408
      %v2423 = vunpack.c.0.s8 %v2422
      %v2424 = vlaneseq
      %v2425 = vshrl.u32 %v2424, 7
      %v2426 = vsub.s32 %v2423, %v2425
      %v2427 = vrot.slane %v2419, %v2426
      %v2429 = vunpack.c.l.s4 1934713408
      %v2430 = vunpack.c.0.s8 %v2429
      %v2431 = vlaneseq
      %v2432 = vshrl.u32 %v2431, 7
      %v2433 = vsub.s32 %v2430, %v2432
      %v2434 = vrot.slane %v2420, %v2433
      %v2435 = vcombine.high %v2411, 0.0
      %v2436 = vcombine.high %v2418, 0.0
      %v2437 = vcombine.high %v2427, 0.0
      %v2438 = vcombine.high %v2434, 0.0
      %2440 = vrot.lane.b32.xlu0 %v2367, 16
      %v2441 = vpop.permute.xlu0 %2440
      %2444 = vrot.lane.b32.xlu0 %v2350, 32
      %v2445 = vpop.permute.xlu0 %2444
      %2448 = vrot.lane.b32.xlu0 %v2368, 48
      %v2449 = vpop.permute.xlu0 %2448
      %2452 = vrot.lane.b32.xlu0 %v2359, 64
      %v2453 = vpop.permute.xlu0 %2452
      %2456 = vrot.lane.b32.xlu0 %v2369, 80
      %v2457 = vpop.permute.xlu0 %2456
      %2460 = vrot.lane.b32.xlu0 %v2366, 96
      %v2461 = vpop.permute.xlu0 %2460
      %2464 = vrot.lane.b32.xlu0 %v2370, 112
      %v2465 = vpop.permute.xlu0 %2464
      %2468 = vrot.lane.b32.xlu0 %v2435, 16
      %v2469 = vpop.permute.xlu0 %2468
      %2472 = vrot.lane.b32.xlu0 %v2418, 32
      %v2473 = vpop.permute.xlu0 %2472
      %2476 = vrot.lane.b32.xlu0 %v2436, 48
      %v2477 = vpop.permute.xlu0 %2476
      %2480 = vrot.lane.b32.xlu0 %v2427, 64
      %v2481 = vpop.permute.xlu0 %2480
      %2484 = vrot.lane.b32.xlu0 %v2437, 80
      %v2485 = vpop.permute.xlu0 %2484
      %2488 = vrot.lane.b32.xlu0 %v2434, 96
      %v2489 = vpop.permute.xlu0 %2488
      %2492 = vrot.lane.b32.xlu0 %v2438, 112
      %v2493 = vpop.permute.xlu0 %2492
      %v2495 = vsel %vm534, %v2343, %v2441
      %v2496 = vsel %vm536, %v2495, %v2445
      %v2497 = vsel %vm538, %v2496, %v2449
      %v2498 = vsel %vm540, %v2497, %v2453
      %v2499 = vsel %vm542, %v2498, %v2457
      %v2500 = vsel %vm544, %v2499, %v2461
      %v2501 = vsel %vm546, %v2500, %v2465
      %v2502 = vsel %vm534, %v2411, %v2469
      %v2503 = vsel %vm536, %v2502, %v2473
      %v2504 = vsel %vm538, %v2503, %v2477
      %v2505 = vsel %vm540, %v2504, %v2481
      %v2506 = vsel %vm542, %v2505, %v2485
      %v2507 = vsel %vm544, %v2506, %v2489
      %v2508 = vsel %vm546, %v2507, %v2493
      %2509 = vrot.lane.b32.xlu0 %v2277, 127
      %v2510 = vpop.permute.xlu0 %2509
      %2511 = vrot.lane.b32.xlu0 %v2279, 127
      %v2512 = vpop.permute.xlu0 %2511
      %2513 = vrot.lane.b32.xlu0 %v2282, 127
      %v2514 = vpop.permute.xlu0 %2513
      %2515 = vrot.lane.b32.xlu0 %v2284, 127
      %v2516 = vpop.permute.xlu0 %2515
      %2517 = vrot.lane.b32.xlu0 %v2287, 127
      %v2518 = vpop.permute.xlu0 %2517
      %2519 = vrot.lane.b32.xlu0 %v2289, 127
      %v2520 = vpop.permute.xlu0 %2519
      %2521 = vrot.lane.b32.xlu0 %v2292, 127
      %v2522 = vpop.permute.xlu0 %2521
      %2523 = vrot.lane.b32.xlu0 %v2294, 127
      %v2524 = vpop.permute.xlu0 %2523
      %v2533 = vcombine.low %v2510, %v2518
      %v2534 = vcombine.high %v2510, %v2518
      %v2536 = vunpack.c.l.s4 1983009808
      %v2537 = vunpack.c.0.s8 %v2536
      %v2538 = vlaneseq
      %v2539 = vshrl.u32 %v2538, 7
      %v2540 = vsub.s32 %v2537, %v2539
      %v2541 = vrot.slane %v2533, %v2540
      %v2543 = vunpack.c.l.s4 1983009808
      %v2544 = vunpack.c.0.s8 %v2543
      %v2545 = vlaneseq
      %v2546 = vshrl.u32 %v2545, 7
      %v2547 = vsub.s32 %v2544, %v2546
      %v2548 = vrot.slane %v2534, %v2547
      %v2549 = vcombine.low %v2514, %v2522
      %v2550 = vcombine.high %v2514, %v2522
      %v2552 = vunpack.c.l.s4 1983009808
      %v2553 = vunpack.c.0.s8 %v2552
      %v2554 = vlaneseq
      %v2555 = vshrl.u32 %v2554, 7
      %v2556 = vsub.s32 %v2553, %v2555
      %v2557 = vrot.slane %v2549, %v2556
      %v2559 = vunpack.c.l.s4 1983009808
      %v2560 = vunpack.c.0.s8 %v2559
      %v2561 = vlaneseq
      %v2562 = vshrl.u32 %v2561, 7
      %v2563 = vsub.s32 %v2560, %v2562
      %v2564 = vrot.slane %v2550, %v2563
      %v2565 = vcombine.low %v2541, %v2557
      %v2566 = vcombine.high %v2541, %v2557
      %v2568 = vunpack.c.l.s4 1934713408
      %v2569 = vunpack.c.0.s8 %v2568
      %v2570 = vlaneseq
      %v2571 = vshrl.u32 %v2570, 7
      %v2572 = vsub.s32 %v2569, %v2571
      %v2573 = vrot.slane %v2565, %v2572
      %v2575 = vunpack.c.l.s4 1934713408
      %v2576 = vunpack.c.0.s8 %v2575
      %v2577 = vlaneseq
      %v2578 = vshrl.u32 %v2577, 7
      %v2579 = vsub.s32 %v2576, %v2578
      %v2580 = vrot.slane %v2566, %v2579
      %v2581 = vcombine.low %v2548, %v2564
      %v2582 = vcombine.high %v2548, %v2564
      %v2584 = vunpack.c.l.s4 1934713408
      %v2585 = vunpack.c.0.s8 %v2584
      %v2586 = vlaneseq
      %v2587 = vshrl.u32 %v2586, 7
      %v2588 = vsub.s32 %v2585, %v2587
      %v2589 = vrot.slane %v2581, %v2588
      %v2591 = vunpack.c.l.s4 1934713408
      %v2592 = vunpack.c.0.s8 %v2591
      %v2593 = vlaneseq
      %v2594 = vshrl.u32 %v2593, 7
      %v2595 = vsub.s32 %v2592, %v2594
      %v2596 = vrot.slane %v2582, %v2595
      %v2597 = vcombine.high %v2573, 0.0
      %v2598 = vcombine.high %v2580, 0.0
      %v2599 = vcombine.high %v2589, 0.0
      %v2600 = vcombine.high %v2596, 0.0
      %v2601 = vcombine.low %v2512, %v2520
      %v2602 = vcombine.high %v2512, %v2520
      %v2604 = vunpack.c.l.s4 1983009808
      %v2605 = vunpack.c.0.s8 %v2604
      %v2606 = vlaneseq
      %v2607 = vshrl.u32 %v2606, 7
      %v2608 = vsub.s32 %v2605, %v2607
      %v2609 = vrot.slane %v2601, %v2608
      %v2611 = vunpack.c.l.s4 1983009808
      %v2612 = vunpack.c.0.s8 %v2611
      %v2613 = vlaneseq
      %v2614 = vshrl.u32 %v2613, 7
      %v2615 = vsub.s32 %v2612, %v2614
      %v2616 = vrot.slane %v2602, %v2615
      %v2617 = vcombine.low %v2516, %v2524
      %v2618 = vcombine.high %v2516, %v2524
      %v2620 = vunpack.c.l.s4 1983009808
      %v2621 = vunpack.c.0.s8 %v2620
      %v2622 = vlaneseq
      %v2623 = vshrl.u32 %v2622, 7
      %v2624 = vsub.s32 %v2621, %v2623
      %v2625 = vrot.slane %v2617, %v2624
      %v2627 = vunpack.c.l.s4 1983009808
      %v2628 = vunpack.c.0.s8 %v2627
      %v2629 = vlaneseq
      %v2630 = vshrl.u32 %v2629, 7
      %v2631 = vsub.s32 %v2628, %v2630
      %v2632 = vrot.slane %v2618, %v2631
      %v2633 = vcombine.low %v2609, %v2625
      %v2634 = vcombine.high %v2609, %v2625
      %v2636 = vunpack.c.l.s4 1934713408
      %v2637 = vunpack.c.0.s8 %v2636
      %v2638 = vlaneseq
      %v2639 = vshrl.u32 %v2638, 7
      %v2640 = vsub.s32 %v2637, %v2639
      %v2641 = vrot.slane %v2633, %v2640
      %v2643 = vunpack.c.l.s4 1934713408
      %v2644 = vunpack.c.0.s8 %v2643
      %v2645 = vlaneseq
      %v2646 = vshrl.u32 %v2645, 7
      %v2647 = vsub.s32 %v2644, %v2646
      %v2648 = vrot.slane %v2634, %v2647
      %v2649 = vcombine.low %v2616, %v2632
      %v2650 = vcombine.high %v2616, %v2632
      %v2652 = vunpack.c.l.s4 1934713408
      %v2653 = vunpack.c.0.s8 %v2652
      %v2654 = vlaneseq
      %v2655 = vshrl.u32 %v2654, 7
      %v2656 = vsub.s32 %v2653, %v2655
      %v2657 = vrot.slane %v2649, %v2656
      %v2659 = vunpack.c.l.s4 1934713408
      %v2660 = vunpack.c.0.s8 %v2659
      %v2661 = vlaneseq
      %v2662 = vshrl.u32 %v2661, 7
      %v2663 = vsub.s32 %v2660, %v2662
      %v2664 = vrot.slane %v2650, %v2663
      %v2665 = vcombine.high %v2641, 0.0
      %v2666 = vcombine.high %v2648, 0.0
      %v2667 = vcombine.high %v2657, 0.0
      %v2668 = vcombine.high %v2664, 0.0
      %2670 = vrot.lane.b32.xlu0 %v2597, 16
      %v2671 = vpop.permute.xlu0 %2670
      %2674 = vrot.lane.b32.xlu0 %v2580, 32
      %v2675 = vpop.permute.xlu0 %2674
      %2678 = vrot.lane.b32.xlu0 %v2598, 48
      %v2679 = vpop.permute.xlu0 %2678
      %2682 = vrot.lane.b32.xlu0 %v2589, 64
      %v2683 = vpop.permute.xlu0 %2682
      %2686 = vrot.lane.b32.xlu0 %v2599, 80
      %v2687 = vpop.permute.xlu0 %2686
      %2690 = vrot.lane.b32.xlu0 %v2596, 96
      %v2691 = vpop.permute.xlu0 %2690
      %2694 = vrot.lane.b32.xlu0 %v2600, 112
      %v2695 = vpop.permute.xlu0 %2694
      %2698 = vrot.lane.b32.xlu0 %v2665, 16
      %v2699 = vpop.permute.xlu0 %2698
      %2702 = vrot.lane.b32.xlu0 %v2648, 32
      %v2703 = vpop.permute.xlu0 %2702
      %2706 = vrot.lane.b32.xlu0 %v2666, 48
      %v2707 = vpop.permute.xlu0 %2706
      %2710 = vrot.lane.b32.xlu0 %v2657, 64
      %v2711 = vpop.permute.xlu0 %2710
      %2714 = vrot.lane.b32.xlu0 %v2667, 80
      %v2715 = vpop.permute.xlu0 %2714
      %2718 = vrot.lane.b32.xlu0 %v2664, 96
      %v2719 = vpop.permute.xlu0 %2718
      %2722 = vrot.lane.b32.xlu0 %v2668, 112
      %v2723 = vpop.permute.xlu0 %2722
      %v2725 = vsel %vm534, %v2573, %v2671
      %v2726 = vsel %vm536, %v2725, %v2675
      %v2727 = vsel %vm538, %v2726, %v2679
      %v2728 = vsel %vm540, %v2727, %v2683
      %v2729 = vsel %vm542, %v2728, %v2687
      %v2730 = vsel %vm544, %v2729, %v2691
      %v2731 = vsel %vm546, %v2730, %v2695
      %v2732 = vsel %vm534, %v2641, %v2699
      %v2733 = vsel %vm536, %v2732, %v2703
      %v2734 = vsel %vm538, %v2733, %v2707
      %v2735 = vsel %vm540, %v2734, %v2711
      %v2736 = vsel %vm542, %v2735, %v2715
      %v2737 = vsel %vm544, %v2736, %v2719
      %v2738 = vsel %vm546, %v2737, %v2723
      %2739 = vrot.lane.b32.xlu0 %v2277, 126
      %v2740 = vpop.permute.xlu0 %2739
      %2741 = vrot.lane.b32.xlu0 %v2279, 126
      %v2742 = vpop.permute.xlu0 %2741
      %2743 = vrot.lane.b32.xlu0 %v2282, 126
      %v2744 = vpop.permute.xlu0 %2743
      %2745 = vrot.lane.b32.xlu0 %v2284, 126
      %v2746 = vpop.permute.xlu0 %2745
      %2747 = vrot.lane.b32.xlu0 %v2287, 126
      %v2748 = vpop.permute.xlu0 %2747
      %2749 = vrot.lane.b32.xlu0 %v2289, 126
      %v2750 = vpop.permute.xlu0 %2749
      %2751 = vrot.lane.b32.xlu0 %v2292, 126
      %v2752 = vpop.permute.xlu0 %2751
      %2753 = vrot.lane.b32.xlu0 %v2294, 126
      %v2754 = vpop.permute.xlu0 %2753
      %v2763 = vcombine.low %v2740, %v2748
      %v2764 = vcombine.high %v2740, %v2748
      %v2766 = vunpack.c.l.s4 1983009808
      %v2767 = vunpack.c.0.s8 %v2766
      %v2768 = vlaneseq
      %v2769 = vshrl.u32 %v2768, 7
      %v2770 = vsub.s32 %v2767, %v2769
      %v2771 = vrot.slane %v2763, %v2770
      %v2773 = vunpack.c.l.s4 1983009808
      %v2774 = vunpack.c.0.s8 %v2773
      %v2775 = vlaneseq
      %v2776 = vshrl.u32 %v2775, 7
      %v2777 = vsub.s32 %v2774, %v2776
      %v2778 = vrot.slane %v2764, %v2777
      %v2779 = vcombine.low %v2744, %v2752
      %v2780 = vcombine.high %v2744, %v2752
      %v2782 = vunpack.c.l.s4 1983009808
      %v2783 = vunpack.c.0.s8 %v2782
      %v2784 = vlaneseq
      %v2785 = vshrl.u32 %v2784, 7
      %v2786 = vsub.s32 %v2783, %v2785
      %v2787 = vrot.slane %v2779, %v2786
      %v2789 = vunpack.c.l.s4 1983009808
      %v2790 = vunpack.c.0.s8 %v2789
      %v2791 = vlaneseq
      %v2792 = vshrl.u32 %v2791, 7
      %v2793 = vsub.s32 %v2790, %v2792
      %v2794 = vrot.slane %v2780, %v2793
      %v2795 = vcombine.low %v2771, %v2787
      %v2796 = vcombine.high %v2771, %v2787
      %v2798 = vunpack.c.l.s4 1934713408
      %v2799 = vunpack.c.0.s8 %v2798
      %v2800 = vlaneseq
      %v2801 = vshrl.u32 %v2800, 7
      %v2802 = vsub.s32 %v2799, %v2801
      %v2803 = vrot.slane %v2795, %v2802
      %v2805 = vunpack.c.l.s4 1934713408
      %v2806 = vunpack.c.0.s8 %v2805
      %v2807 = vlaneseq
      %v2808 = vshrl.u32 %v2807, 7
      %v2809 = vsub.s32 %v2806, %v2808
      %v2810 = vrot.slane %v2796, %v2809
      %v2811 = vcombine.low %v2778, %v2794
      %v2812 = vcombine.high %v2778, %v2794
      %v2814 = vunpack.c.l.s4 1934713408
      %v2815 = vunpack.c.0.s8 %v2814
      %v2816 = vlaneseq
      %v2817 = vshrl.u32 %v2816, 7
      %v2818 = vsub.s32 %v2815, %v2817
      %v2819 = vrot.slane %v2811, %v2818
      %v2821 = vunpack.c.l.s4 1934713408
      %v2822 = vunpack.c.0.s8 %v2821
      %v2823 = vlaneseq
      %v2824 = vshrl.u32 %v2823, 7
      %v2825 = vsub.s32 %v2822, %v2824
      %v2826 = vrot.slane %v2812, %v2825
      %v2827 = vcombine.high %v2803, 0.0
      %v2828 = vcombine.high %v2810, 0.0
      %v2829 = vcombine.high %v2819, 0.0
      %v2830 = vcombine.high %v2826, 0.0
      %v2831 = vcombine.low %v2742, %v2750
      %v2832 = vcombine.high %v2742, %v2750
      %v2834 = vunpack.c.l.s4 1983009808
      %v2835 = vunpack.c.0.s8 %v2834
      %v2836 = vlaneseq
      %v2837 = vshrl.u32 %v2836, 7
      %v2838 = vsub.s32 %v2835, %v2837
      %v2839 = vrot.slane %v2831, %v2838
      %v2841 = vunpack.c.l.s4 1983009808
      %v2842 = vunpack.c.0.s8 %v2841
      %v2843 = vlaneseq
      %v2844 = vshrl.u32 %v2843, 7
      %v2845 = vsub.s32 %v2842, %v2844
      %v2846 = vrot.slane %v2832, %v2845
      %v2847 = vcombine.low %v2746, %v2754
      %v2848 = vcombine.high %v2746, %v2754
      %v2850 = vunpack.c.l.s4 1983009808
      %v2851 = vunpack.c.0.s8 %v2850
      %v2852 = vlaneseq
      %v2853 = vshrl.u32 %v2852, 7
      %v2854 = vsub.s32 %v2851, %v2853
      %v2855 = vrot.slane %v2847, %v2854
      %v2857 = vunpack.c.l.s4 1983009808
      %v2858 = vunpack.c.0.s8 %v2857
      %v2859 = vlaneseq
      %v2860 = vshrl.u32 %v2859, 7
      %v2861 = vsub.s32 %v2858, %v2860
      %v2862 = vrot.slane %v2848, %v2861
      %v2863 = vcombine.low %v2839, %v2855
      %v2864 = vcombine.high %v2839, %v2855
      %v2866 = vunpack.c.l.s4 1934713408
      %v2867 = vunpack.c.0.s8 %v2866
      %v2868 = vlaneseq
      %v2869 = vshrl.u32 %v2868, 7
      %v2870 = vsub.s32 %v2867, %v2869
      %v2871 = vrot.slane %v2863, %v2870
      %v2873 = vunpack.c.l.s4 1934713408
      %v2874 = vunpack.c.0.s8 %v2873
      %v2875 = vlaneseq
      %v2876 = vshrl.u32 %v2875, 7
      %v2877 = vsub.s32 %v2874, %v2876
      %v2878 = vrot.slane %v2864, %v2877
      %v2879 = vcombine.low %v2846, %v2862
      %v2880 = vcombine.high %v2846, %v2862
      %v2882 = vunpack.c.l.s4 1934713408
      %v2883 = vunpack.c.0.s8 %v2882
      %v2884 = vlaneseq
      %v2885 = vshrl.u32 %v2884, 7
      %v2886 = vsub.s32 %v2883, %v2885
      %v2887 = vrot.slane %v2879, %v2886
      %v2889 = vunpack.c.l.s4 1934713408
      %v2890 = vunpack.c.0.s8 %v2889
      %v2891 = vlaneseq
      %v2892 = vshrl.u32 %v2891, 7
      %v2893 = vsub.s32 %v2890, %v2892
      %v2894 = vrot.slane %v2880, %v2893
      %v2895 = vcombine.high %v2871, 0.0
      %v2896 = vcombine.high %v2878, 0.0
      %v2897 = vcombine.high %v2887, 0.0
      %v2898 = vcombine.high %v2894, 0.0
      %2900 = vrot.lane.b32.xlu0 %v2827, 16
      %v2901 = vpop.permute.xlu0 %2900
      %2904 = vrot.lane.b32.xlu0 %v2810, 32
      %v2905 = vpop.permute.xlu0 %2904
      %2908 = vrot.lane.b32.xlu0 %v2828, 48
      %v2909 = vpop.permute.xlu0 %2908
      %2912 = vrot.lane.b32.xlu0 %v2819, 64
      %v2913 = vpop.permute.xlu0 %2912
      %2916 = vrot.lane.b32.xlu0 %v2829, 80
      %v2917 = vpop.permute.xlu0 %2916
      %2920 = vrot.lane.b32.xlu0 %v2826, 96
      %v2921 = vpop.permute.xlu0 %2920
      %2924 = vrot.lane.b32.xlu0 %v2830, 112
      %v2925 = vpop.permute.xlu0 %2924
      %2928 = vrot.lane.b32.xlu0 %v2895, 16
      %v2929 = vpop.permute.xlu0 %2928
      %2932 = vrot.lane.b32.xlu0 %v2878, 32
      %v2933 = vpop.permute.xlu0 %2932
      %2936 = vrot.lane.b32.xlu0 %v2896, 48
      %v2937 = vpop.permute.xlu0 %2936
      %2940 = vrot.lane.b32.xlu0 %v2887, 64
      %v2941 = vpop.permute.xlu0 %2940
      %2944 = vrot.lane.b32.xlu0 %v2897, 80
      %v2945 = vpop.permute.xlu0 %2944
      %2948 = vrot.lane.b32.xlu0 %v2894, 96
      %v2949 = vpop.permute.xlu0 %2948
      %2952 = vrot.lane.b32.xlu0 %v2898, 112
      %v2953 = vpop.permute.xlu0 %2952
      %v2955 = vsel %vm534, %v2803, %v2901
      %v2956 = vsel %vm536, %v2955, %v2905
      %v2957 = vsel %vm538, %v2956, %v2909
      %v2958 = vsel %vm540, %v2957, %v2913
      %v2959 = vsel %vm542, %v2958, %v2917
      %v2960 = vsel %vm544, %v2959, %v2921
      %v2961 = vsel %vm546, %v2960, %v2925
      %v2962 = vsel %vm534, %v2871, %v2929
      %v2963 = vsel %vm536, %v2962, %v2933
      %v2964 = vsel %vm538, %v2963, %v2937
      %v2965 = vsel %vm540, %v2964, %v2941
      %v2966 = vsel %vm542, %v2965, %v2945
      %v2967 = vsel %vm544, %v2966, %v2949
      %v2968 = vsel %vm546, %v2967, %v2953
      %v2971 = vrot.slane %v1337, 4
      %v2972 = vrot.slane %v1344, 4
      %v2977 = vrot.slane %v1806, 4
      %v2978 = vrot.slane %v1813, 4
      %v2983 = vrot.slane %v2266, 4
      %v2984 = vrot.slane %v2273, 4
      %v2989 = vrot.slane %v2731, 4
      %v2990 = vrot.slane %v2738, 4
      %vm2993 = vcmask 1043456
      %v2994 = vsel %vm2993, %v1103, %v2971
      %v2995 = vsel %vm2993, %v1110, %v2972
      %v2996 = vsel %vm2993, %v1567, %v2977
      %v2997 = vsel %vm2993, %v1574, %v2978
      %v2998 = vsel %vm2993, %v2036, %v2983
      %v2999 = vsel %vm2993, %v2043, %v2984
      %v3000 = vsel %vm2993, %v2501, %v2989
      %v3001 = vsel %vm2993, %v2508, %v2990
      %v3002 = vld [vmem:[%s3] sm:$0xf]
      %v3003 = vpack.c.bf16 %v2996, %v2994
      %v3004 = vpack.c.bf16 %v2997, %v2995
      %v3005 = vpack.c.bf16 %v3000, %v2998
      %v3006 = vpack.c.bf16 %v3001, %v2999
      %v3007 = vpack.c.bf16 %v2961, %v2961
      %v3008 = vpack.c.bf16 %v2968, %v2968
      %v3009 = vld [vmem:[%s4] sm:$0xff]
      %3011 = vset.pattern.permute.xlu0 0
      %3012 = vperm.xlu0 %3011, %v3009
      %v3013 = vpop.permute.xlu0 %3012
      %vm3015 = vcmask 293888
      %v3017 = vsel %vm3015, %v3002, 0
      %v3020 = vsel %vm580, %v3007, 0
      %v3023 = vsel %vm580, %v3008, 0
      %3025 = vmatprep.subr.bf16.mxu0 %v3004
      %3026 = vmatpush1.bf16.msra.mxu0 %v3003
      %3027 = vmatprep.subr.bf16.mxu0 %v3006
      %3028 = vmatpush1.bf16.msra.mxu0 %v3005
      %3029 = vmatprep.subr.bf16.mxu0 %v3023
      %3030 = vmatpush1.bf16.msra.mxu0 %v3020
      %3031 = vmatprep.subr.bf16.mxu0 0
      %3032 = vmatpush1.bf16.msra.mxu0 0
      %3033 = vmatprep.subr.bf16.mxu0 0
      %3034 = vmatpush1.bf16.msra.mxu0 0
      %3035 = vmatprep.subr.bf16.mxu0 0
      %3036 = vmatpush1.bf16.msra.mxu0 0
      %3037 = vmatprep.subr.bf16.mxu0 0
      %3038 = vmatpush1.bf16.msra.mxu0 0
      %3039 = vmatprep.subr.bf16.mxu0 0
      %3040 = vmatpush1.bf16.msra.mxu0 0
      %3041 = vmatprep.subr.bf16.mxu0 0
      %3042 = vmatpush1.bf16.msra.mxu0 0
      %3043 = vmatprep.subr.bf16.mxu0 0
      %3044 = vmatpush1.bf16.msra.mxu0 0
      %3045 = vmatprep.subr.bf16.mxu0 0
      %3046 = vmatpush1.bf16.msra.mxu0 0
      %3047 = vmatprep.subr.bf16.mxu0 0
      %3048 = vmatpush1.bf16.msra.mxu0 0
      %3049 = vmatprep.subr.bf16.mxu0 0
      %3050 = vmatpush1.bf16.msra.mxu0 0
      %3051 = vmatprep.subr.bf16.mxu0 0
      %3052 = vmatpush1.bf16.msra.mxu0 0
      %3053 = vmatprep.subr.bf16.mxu0 0
      %3054 = vmatpush1.bf16.msra.mxu0 0
      %3055 = vmatprep.subr.bf16.mxu0 0
      %3056 = vmatpush1.bf16.msra.mxu0 0
      %3057 = vmatprep.mubr.bf16.mxu0 0
      %3058 = vmatmul.mubr.bf16.gmra.mrb[0].mxu0 %v3017
      %v3059 = vpop.f32.mrb[0].mxu0
      %v3060 = vadd.f32 %v3013, %v3059
      %v3061 = vpop.f32.mrb[0].mxu0
      %v3062 = vadd.f32 %v3013, %v3061
      %v3063 = vpop.f32.mrb[0].mxu0
      %v3064 = vpop.f32.mrb[0].mxu0
      %3065 = vdwg.mxu0
      %v3066 = vmax.f32 %v3060, 0.0
      %v3067 = vmax.f32 %v3062, 0.0
      %v3068 = vrot.slane %v632, 4
      %v3069 = vrot.slane %v636, 4
      %v3070 = vrot.slane %v639, 4
      %v3071 = vrot.slane %v642, 4
      %v3072 = vrot.slane %v645, 4
      %v3073 = vrot.slane %v648, 4
      %v3074 = vrot.slane %v651, 4
      %v3075 = vrot.slane %v654, 4
      %v3076 = vrot.slane %v633, 4
      %v3077 = vrot.slane %v658, 4
      %v3078 = vrot.slane %v661, 4
      %v3079 = vrot.slane %v664, 4
      %v3080 = vrot.slane %v667, 4
      %v3081 = vrot.slane %v670, 4
      %v3082 = vrot.slane %v673, 4
      %v3083 = vrot.slane %v676, 4
      %v3100 = vcombine.low %v3068, %v3070
      %v3102 = vunpack.c.l.s4 1983009808
      %v3103 = vunpack.c.0.s8 %v3102
      %v3104 = vlaneseq
      %v3105 = vshrl.u32 %v3104, 7
      %v3106 = vsub.s32 %v3103, %v3105
      %v3107 = vrot.slane %v3100, %v3106
      %v3108 = vcombine.low %v3069, %v3071
      %v3110 = vunpack.c.l.s4 1983009808
      %v3111 = vunpack.c.0.s8 %v3110
      %v3112 = vlaneseq
      %v3113 = vshrl.u32 %v3112, 7
      %v3114 = vsub.s32 %v3111, %v3113
      %v3115 = vrot.slane %v3108, %v3114
      %v3116 = vcombine.low %v3072, %v3074
      %v3118 = vunpack.c.l.s4 1983009808
      %v3119 = vunpack.c.0.s8 %v3118
      %v3120 = vlaneseq
      %v3121 = vshrl.u32 %v3120, 7
      %v3122 = vsub.s32 %v3119, %v3121
      %v3123 = vrot.slane %v3116, %v3122
      %v3124 = vcombine.low %v3073, %v3075
      %v3126 = vunpack.c.l.s4 1983009808
      %v3127 = vunpack.c.0.s8 %v3126
      %v3128 = vlaneseq
      %v3129 = vshrl.u32 %v3128, 7
      %v3130 = vsub.s32 %v3127, %v3129
      %v3131 = vrot.slane %v3124, %v3130
      %v3132 = vcombine.low %v3107, %v3115
      %v3133 = vcombine.high %v3107, %v3115
      %v3135 = vunpack.c.l.s4 1934713408
      %v3136 = vunpack.c.0.s8 %v3135
      %v3137 = vlaneseq
      %v3138 = vshrl.u32 %v3137, 7
      %v3139 = vsub.s32 %v3136, %v3138
      %v3140 = vrot.slane %v3132, %v3139
      %v3142 = vunpack.c.l.s4 1934713408
      %v3143 = vunpack.c.0.s8 %v3142
      %v3144 = vlaneseq
      %v3145 = vshrl.u32 %v3144, 7
      %v3146 = vsub.s32 %v3143, %v3145
      %v3147 = vrot.slane %v3133, %v3146
      %v3148 = vcombine.low %v3123, %v3131
      %v3149 = vcombine.high %v3123, %v3131
      %v3151 = vunpack.c.l.s4 1934713408
      %v3152 = vunpack.c.0.s8 %v3151
      %v3153 = vlaneseq
      %v3154 = vshrl.u32 %v3153, 7
      %v3155 = vsub.s32 %v3152, %v3154
      %v3156 = vrot.slane %v3148, %v3155
      %v3158 = vunpack.c.l.s4 1934713408
      %v3159 = vunpack.c.0.s8 %v3158
      %v3160 = vlaneseq
      %v3161 = vshrl.u32 %v3160, 7
      %v3162 = vsub.s32 %v3159, %v3161
      %v3163 = vrot.slane %v3149, %v3162
      %v3164 = vcombine.low %v3140, %v3156
      %v3165 = vcombine.high %v3140, %v3156
      %v3166 = vcombine.low %v3147, %v3163
      %v3167 = vcombine.high %v3147, %v3163
      %v3168 = vcombine.low %v3076, %v3078
      %v3170 = vunpack.c.l.s4 1983009808
      %v3171 = vunpack.c.0.s8 %v3170
      %v3172 = vlaneseq
      %v3173 = vshrl.u32 %v3172, 7
      %v3174 = vsub.s32 %v3171, %v3173
      %v3175 = vrot.slane %v3168, %v3174
      %v3176 = vcombine.low %v3077, %v3079
      %v3178 = vunpack.c.l.s4 1983009808
      %v3179 = vunpack.c.0.s8 %v3178
      %v3180 = vlaneseq
      %v3181 = vshrl.u32 %v3180, 7
      %v3182 = vsub.s32 %v3179, %v3181
      %v3183 = vrot.slane %v3176, %v3182
      %v3184 = vcombine.low %v3080, %v3082
      %v3186 = vunpack.c.l.s4 1983009808
      %v3187 = vunpack.c.0.s8 %v3186
      %v3188 = vlaneseq
      %v3189 = vshrl.u32 %v3188, 7
      %v3190 = vsub.s32 %v3187, %v3189
      %v3191 = vrot.slane %v3184, %v3190
      %v3192 = vcombine.low %v3081, %v3083
      %v3194 = vunpack.c.l.s4 1983009808
      %v3195 = vunpack.c.0.s8 %v3194
      %v3196 = vlaneseq
      %v3197 = vshrl.u32 %v3196, 7
      %v3198 = vsub.s32 %v3195, %v3197
      %v3199 = vrot.slane %v3192, %v3198
      %v3200 = vcombine.low %v3175, %v3183
      %v3201 = vcombine.high %v3175, %v3183
      %v3203 = vunpack.c.l.s4 1934713408
      %v3204 = vunpack.c.0.s8 %v3203
      %v3205 = vlaneseq
      %v3206 = vshrl.u32 %v3205, 7
      %v3207 = vsub.s32 %v3204, %v3206
      %v3208 = vrot.slane %v3200, %v3207
      %v3210 = vunpack.c.l.s4 1934713408
      %v3211 = vunpack.c.0.s8 %v3210
      %v3212 = vlaneseq
      %v3213 = vshrl.u32 %v3212, 7
      %v3214 = vsub.s32 %v3211, %v3213
      %v3215 = vrot.slane %v3201, %v3214
      %v3216 = vcombine.low %v3191, %v3199
      %v3217 = vcombine.high %v3191, %v3199
      %v3219 = vunpack.c.l.s4 1934713408
      %v3220 = vunpack.c.0.s8 %v3219
      %v3221 = vlaneseq
      %v3222 = vshrl.u32 %v3221, 7
      %v3223 = vsub.s32 %v3220, %v3222
      %v3224 = vrot.slane %v3216, %v3223
      %v3226 = vunpack.c.l.s4 1934713408
      %v3227 = vunpack.c.0.s8 %v3226
      %v3228 = vlaneseq
      %v3229 = vshrl.u32 %v3228, 7
      %v3230 = vsub.s32 %v3227, %v3229
      %v3231 = vrot.slane %v3217, %v3230
      %v3232 = vcombine.low %v3208, %v3224
      %v3233 = vcombine.high %v3208, %v3224
      %v3234 = vcombine.low %v3215, %v3231
      %v3235 = vcombine.high %v3215, %v3231
      %3244 = vrot.lane.b32.xlu0 %v3164, 2
      %v3245 = vpop.permute.xlu0 %3244
      %3246 = vrot.lane.b32.xlu0 %v3232, 2
      %v3247 = vpop.permute.xlu0 %3246
      %3248 = vrot.lane.b32.xlu0 %v3165, 2
      %v3249 = vpop.permute.xlu0 %3248
      %3250 = vrot.lane.b32.xlu0 %v3233, 2
      %v3251 = vpop.permute.xlu0 %3250
      %3252 = vrot.lane.b32.xlu0 %v3166, 2
      %v3253 = vpop.permute.xlu0 %3252
      %3254 = vrot.lane.b32.xlu0 %v3234, 2
      %v3255 = vpop.permute.xlu0 %3254
      %3256 = vrot.lane.b32.xlu0 %v3167, 2
      %v3257 = vpop.permute.xlu0 %3256
      %3258 = vrot.lane.b32.xlu0 %v3235, 2
      %v3259 = vpop.permute.xlu0 %3258
      %vm3268 = vcmask 15360
      %v3269 = vsel %vm3268, 0.0, %v3245
      %v3270 = vsel %vm3268, 0.0, %v3247
      %v3271 = vsel %vm3268, 0.0, %v3249
      %v3272 = vsel %vm3268, 0.0, %v3251
      %v3273 = vsel %vm3268, 0.0, %v3253
      %v3274 = vsel %vm3268, 0.0, %v3255
      %v3275 = vsel %vm3268, 0.0, %v3257
      %v3276 = vsel %vm3268, 0.0, %v3259
      %vm3277 = vcmask 146432
      %v3278 = vsel %vm3277, %v3269, 0.0
      %v3279 = vsel %vm3277, %v3270, 0.0
      %v3280 = vsel %vm3277, %v3271, 0.0
      %v3281 = vsel %vm3277, %v3272, 0.0
      %v3282 = vsel %vm3277, %v3273, 0.0
      %v3283 = vsel %vm3277, %v3274, 0.0
      %v3284 = vsel %vm3277, %v3275, 0.0
      %v3285 = vsel %vm3277, %v3276, 0.0
      %v3294 = vrot.slane %v3278, 6
      %v3295 = vrot.slane %v3279, 6
      %v3296 = vsel %vm580, %v3294, %v3295
      %v3297 = vrot.slane %v3280, 6
      %v3298 = vrot.slane %v3281, 6
      %v3299 = vsel %vm580, %v3297, %v3298
      %v3300 = vrot.slane %v3282, 6
      %v3301 = vrot.slane %v3283, 6
      %v3302 = vsel %vm580, %v3300, %v3301
      %v3303 = vrot.slane %v3284, 6
      %v3304 = vrot.slane %v3285, 6
      %v3305 = vsel %vm580, %v3303, %v3304
      %v3318 = vsel %vm580, 0.0, %v3294
      %v3319 = vsel %vm580, 0.0, %v3297
      %v3320 = vsel %vm580, 0.0, %v3300
      %v3321 = vsel %vm580, 0.0, %v3303
      %v3322 = vsel %vm580, %v3295, 0.0
      %v3323 = vsel %vm580, %v3298, 0.0
      %v3324 = vsel %vm580, %v3301, 0.0
      %v3325 = vsel %vm580, %v3304, 0.0
      %v3326 = vcombine.low %v3318, %v3320
      %v3327 = vcombine.high %v3318, %v3320
      %v3329 = vunpack.c.l.s4 1983009808
      %v3330 = vunpack.c.0.s8 %v3329
      %v3331 = vlaneseq
      %v3332 = vshrl.u32 %v3331, 7
      %v3333 = vsub.s32 %v3330, %v3332
      %v3334 = vrot.slane %v3326, %v3333
      %v3336 = vunpack.c.l.s4 1983009808
      %v3337 = vunpack.c.0.s8 %v3336
      %v3338 = vlaneseq
      %v3339 = vshrl.u32 %v3338, 7
      %v3340 = vsub.s32 %v3337, %v3339
      %v3341 = vrot.slane %v3327, %v3340
      %v3342 = vcombine.low %v3319, %v3321
      %v3343 = vcombine.high %v3319, %v3321
      %v3345 = vunpack.c.l.s4 1983009808
      %v3346 = vunpack.c.0.s8 %v3345
      %v3347 = vlaneseq
      %v3348 = vshrl.u32 %v3347, 7
      %v3349 = vsub.s32 %v3346, %v3348
      %v3350 = vrot.slane %v3342, %v3349
      %v3352 = vunpack.c.l.s4 1983009808
      %v3353 = vunpack.c.0.s8 %v3352
      %v3354 = vlaneseq
      %v3355 = vshrl.u32 %v3354, 7
      %v3356 = vsub.s32 %v3353, %v3355
      %v3357 = vrot.slane %v3343, %v3356
      %v3358 = vcombine.low %v3334, %v3350
      %v3359 = vcombine.high %v3334, %v3350
      %v3361 = vunpack.c.l.s4 1934713408
      %v3362 = vunpack.c.0.s8 %v3361
      %v3363 = vlaneseq
      %v3364 = vshrl.u32 %v3363, 7
      %v3365 = vsub.s32 %v3362, %v3364
      %v3366 = vrot.slane %v3358, %v3365
      %v3368 = vunpack.c.l.s4 1934713408
      %v3369 = vunpack.c.0.s8 %v3368
      %v3370 = vlaneseq
      %v3371 = vshrl.u32 %v3370, 7
      %v3372 = vsub.s32 %v3369, %v3371
      %v3373 = vrot.slane %v3359, %v3372
      %v3374 = vcombine.low %v3341, %v3357
      %v3375 = vcombine.high %v3341, %v3357
      %v3377 = vunpack.c.l.s4 1934713408
      %v3378 = vunpack.c.0.s8 %v3377
      %v3379 = vlaneseq
      %v3380 = vshrl.u32 %v3379, 7
      %v3381 = vsub.s32 %v3378, %v3380
      %v3382 = vrot.slane %v3374, %v3381
      %v3384 = vunpack.c.l.s4 1934713408
      %v3385 = vunpack.c.0.s8 %v3384
      %v3386 = vlaneseq
      %v3387 = vshrl.u32 %v3386, 7
      %v3388 = vsub.s32 %v3385, %v3387
      %v3389 = vrot.slane %v3375, %v3388
      %v3390 = vcombine.high %v3366, 0.0
      %v3391 = vcombine.high %v3373, 0.0
      %v3392 = vcombine.high %v3382, 0.0
      %v3393 = vcombine.high %v3389, 0.0
      %v3394 = vcombine.low %v3296, %v3302
      %v3395 = vcombine.high %v3296, %v3302
      %v3397 = vunpack.c.l.s4 1983009808
      %v3398 = vunpack.c.0.s8 %v3397
      %v3399 = vlaneseq
      %v3400 = vshrl.u32 %v3399, 7
      %v3401 = vsub.s32 %v3398, %v3400
      %v3402 = vrot.slane %v3394, %v3401
      %v3404 = vunpack.c.l.s4 1983009808
      %v3405 = vunpack.c.0.s8 %v3404
      %v3406 = vlaneseq
      %v3407 = vshrl.u32 %v3406, 7
      %v3408 = vsub.s32 %v3405, %v3407
      %v3409 = vrot.slane %v3395, %v3408
      %v3410 = vcombine.low %v3299, %v3305
      %v3411 = vcombine.high %v3299, %v3305
      %v3413 = vunpack.c.l.s4 1983009808
      %v3414 = vunpack.c.0.s8 %v3413
      %v3415 = vlaneseq
      %v3416 = vshrl.u32 %v3415, 7
      %v3417 = vsub.s32 %v3414, %v3416
      %v3418 = vrot.slane %v3410, %v3417
      %v3420 = vunpack.c.l.s4 1983009808
      %v3421 = vunpack.c.0.s8 %v3420
      %v3422 = vlaneseq
      %v3423 = vshrl.u32 %v3422, 7
      %v3424 = vsub.s32 %v3421, %v3423
      %v3425 = vrot.slane %v3411, %v3424
      %v3426 = vcombine.low %v3402, %v3418
      %v3427 = vcombine.high %v3402, %v3418
      %v3429 = vunpack.c.l.s4 1934713408
      %v3430 = vunpack.c.0.s8 %v3429
      %v3431 = vlaneseq
      %v3432 = vshrl.u32 %v3431, 7
      %v3433 = vsub.s32 %v3430, %v3432
      %v3434 = vrot.slane %v3426, %v3433
      %v3436 = vunpack.c.l.s4 1934713408
      %v3437 = vunpack.c.0.s8 %v3436
      %v3438 = vlaneseq
      %v3439 = vshrl.u32 %v3438, 7
      %v3440 = vsub.s32 %v3437, %v3439
      %v3441 = vrot.slane %v3427, %v3440
      %v3442 = vcombine.low %v3409, %v3425
      %v3443 = vcombine.high %v3409, %v3425
      %v3445 = vunpack.c.l.s4 1934713408
      %v3446 = vunpack.c.0.s8 %v3445
      %v3447 = vlaneseq
      %v3448 = vshrl.u32 %v3447, 7
      %v3449 = vsub.s32 %v3446, %v3448
      %v3450 = vrot.slane %v3442, %v3449
      %v3452 = vunpack.c.l.s4 1934713408
      %v3453 = vunpack.c.0.s8 %v3452
      %v3454 = vlaneseq
      %v3455 = vshrl.u32 %v3454, 7
      %v3456 = vsub.s32 %v3453, %v3455
      %v3457 = vrot.slane %v3443, %v3456
      %v3458 = vcombine.high %v3434, 0.0
      %v3459 = vcombine.high %v3441, 0.0
      %v3460 = vcombine.high %v3450, 0.0
      %v3461 = vcombine.high %v3457, 0.0
      %3463 = vrot.lane.b32.xlu0 %v3390, 16
      %v3464 = vpop.permute.xlu0 %3463
      %3467 = vrot.lane.b32.xlu0 %v3373, 32
      %v3468 = vpop.permute.xlu0 %3467
      %3471 = vrot.lane.b32.xlu0 %v3391, 48
      %v3472 = vpop.permute.xlu0 %3471
      %3475 = vrot.lane.b32.xlu0 %v3382, 64
      %v3476 = vpop.permute.xlu0 %3475
      %3479 = vrot.lane.b32.xlu0 %v3392, 80
      %v3480 = vpop.permute.xlu0 %3479
      %3483 = vrot.lane.b32.xlu0 %v3389, 96
      %v3484 = vpop.permute.xlu0 %3483
      %3487 = vrot.lane.b32.xlu0 %v3393, 112
      %v3488 = vpop.permute.xlu0 %3487
      %3491 = vrot.lane.b32.xlu0 %v3458, 16
      %v3492 = vpop.permute.xlu0 %3491
      %3495 = vrot.lane.b32.xlu0 %v3441, 32
      %v3496 = vpop.permute.xlu0 %3495
      %3499 = vrot.lane.b32.xlu0 %v3459, 48
      %v3500 = vpop.permute.xlu0 %3499
      %3503 = vrot.lane.b32.xlu0 %v3450, 64
      %v3504 = vpop.permute.xlu0 %3503
      %3507 = vrot.lane.b32.xlu0 %v3460, 80
      %v3508 = vpop.permute.xlu0 %3507
      %3511 = vrot.lane.b32.xlu0 %v3457, 96
      %v3512 = vpop.permute.xlu0 %3511
      %3515 = vrot.lane.b32.xlu0 %v3461, 112
      %v3516 = vpop.permute.xlu0 %3515
      %v3518 = vsel %vm534, %v3366, %v3464
      %v3519 = vsel %vm536, %v3518, %v3468
      %v3520 = vsel %vm538, %v3519, %v3472
      %v3521 = vsel %vm540, %v3520, %v3476
      %v3522 = vsel %vm542, %v3521, %v3480
      %v3523 = vsel %vm544, %v3522, %v3484
      %v3524 = vsel %vm546, %v3523, %v3488
      %v3525 = vsel %vm534, %v3434, %v3492
      %v3526 = vsel %vm536, %v3525, %v3496
      %v3527 = vsel %vm538, %v3526, %v3500
      %v3528 = vsel %vm540, %v3527, %v3504
      %v3529 = vsel %vm542, %v3528, %v3508
      %v3530 = vsel %vm544, %v3529, %v3512
      %v3531 = vsel %vm546, %v3530, %v3516
      %3536 = vrot.lane.b32.xlu0 %v3318, 127
      %v3537 = vpop.permute.xlu0 %3536
      %3538 = vrot.lane.b32.xlu0 %v3296, 127
      %v3539 = vpop.permute.xlu0 %3538
      %3540 = vrot.lane.b32.xlu0 %v3319, 127
      %v3541 = vpop.permute.xlu0 %3540
      %3542 = vrot.lane.b32.xlu0 %v3299, 127
      %v3543 = vpop.permute.xlu0 %3542
      %3544 = vrot.lane.b32.xlu0 %v3320, 127
      %v3545 = vpop.permute.xlu0 %3544
      %3546 = vrot.lane.b32.xlu0 %v3302, 127
      %v3547 = vpop.permute.xlu0 %3546
      %3548 = vrot.lane.b32.xlu0 %v3321, 127
      %v3549 = vpop.permute.xlu0 %3548
      %3550 = vrot.lane.b32.xlu0 %v3305, 127
      %v3551 = vpop.permute.xlu0 %3550
      %v3560 = vcombine.low %v3537, %v3545
      %v3561 = vcombine.high %v3537, %v3545
      %v3563 = vunpack.c.l.s4 1983009808
      %v3564 = vunpack.c.0.s8 %v3563
      %v3565 = vlaneseq
      %v3566 = vshrl.u32 %v3565, 7
      %v3567 = vsub.s32 %v3564, %v3566
      %v3568 = vrot.slane %v3560, %v3567
      %v3570 = vunpack.c.l.s4 1983009808
      %v3571 = vunpack.c.0.s8 %v3570
      %v3572 = vlaneseq
      %v3573 = vshrl.u32 %v3572, 7
      %v3574 = vsub.s32 %v3571, %v3573
      %v3575 = vrot.slane %v3561, %v3574
      %v3576 = vcombine.low %v3541, %v3549
      %v3577 = vcombine.high %v3541, %v3549
      %v3579 = vunpack.c.l.s4 1983009808
      %v3580 = vunpack.c.0.s8 %v3579
      %v3581 = vlaneseq
      %v3582 = vshrl.u32 %v3581, 7
      %v3583 = vsub.s32 %v3580, %v3582
      %v3584 = vrot.slane %v3576, %v3583
      %v3586 = vunpack.c.l.s4 1983009808
      %v3587 = vunpack.c.0.s8 %v3586
      %v3588 = vlaneseq
      %v3589 = vshrl.u32 %v3588, 7
      %v3590 = vsub.s32 %v3587, %v3589
      %v3591 = vrot.slane %v3577, %v3590
      %v3592 = vcombine.low %v3568, %v3584
      %v3593 = vcombine.high %v3568, %v3584
      %v3595 = vunpack.c.l.s4 1934713408
      %v3596 = vunpack.c.0.s8 %v3595
      %v3597 = vlaneseq
      %v3598 = vshrl.u32 %v3597, 7
      %v3599 = vsub.s32 %v3596, %v3598
      %v3600 = vrot.slane %v3592, %v3599
      %v3602 = vunpack.c.l.s4 1934713408
      %v3603 = vunpack.c.0.s8 %v3602
      %v3604 = vlaneseq
      %v3605 = vshrl.u32 %v3604, 7
      %v3606 = vsub.s32 %v3603, %v3605
      %v3607 = vrot.slane %v3593, %v3606
      %v3608 = vcombine.low %v3575, %v3591
      %v3609 = vcombine.high %v3575, %v3591
      %v3611 = vunpack.c.l.s4 1934713408
      %v3612 = vunpack.c.0.s8 %v3611
      %v3613 = vlaneseq
      %v3614 = vshrl.u32 %v3613, 7
      %v3615 = vsub.s32 %v3612, %v3614
      %v3616 = vrot.slane %v3608, %v3615
      %v3618 = vunpack.c.l.s4 1934713408
      %v3619 = vunpack.c.0.s8 %v3618
      %v3620 = vlaneseq
      %v3621 = vshrl.u32 %v3620, 7
      %v3622 = vsub.s32 %v3619, %v3621
      %v3623 = vrot.slane %v3609, %v3622
      %v3624 = vcombine.high %v3600, 0.0
      %v3625 = vcombine.high %v3607, 0.0
      %v3626 = vcombine.high %v3616, 0.0
      %v3627 = vcombine.high %v3623, 0.0
      %v3628 = vcombine.low %v3539, %v3547
      %v3629 = vcombine.high %v3539, %v3547
      %v3631 = vunpack.c.l.s4 1983009808
      %v3632 = vunpack.c.0.s8 %v3631
      %v3633 = vlaneseq
      %v3634 = vshrl.u32 %v3633, 7
      %v3635 = vsub.s32 %v3632, %v3634
      %v3636 = vrot.slane %v3628, %v3635
      %v3638 = vunpack.c.l.s4 1983009808
      %v3639 = vunpack.c.0.s8 %v3638
      %v3640 = vlaneseq
      %v3641 = vshrl.u32 %v3640, 7
      %v3642 = vsub.s32 %v3639, %v3641
      %v3643 = vrot.slane %v3629, %v3642
      %v3644 = vcombine.low %v3543, %v3551
      %v3645 = vcombine.high %v3543, %v3551
      %v3647 = vunpack.c.l.s4 1983009808
      %v3648 = vunpack.c.0.s8 %v3647
      %v3649 = vlaneseq
      %v3650 = vshrl.u32 %v3649, 7
      %v3651 = vsub.s32 %v3648, %v3650
      %v3652 = vrot.slane %v3644, %v3651
      %v3654 = vunpack.c.l.s4 1983009808
      %v3655 = vunpack.c.0.s8 %v3654
      %v3656 = vlaneseq
      %v3657 = vshrl.u32 %v3656, 7
      %v3658 = vsub.s32 %v3655, %v3657
      %v3659 = vrot.slane %v3645, %v3658
      %v3660 = vcombine.low %v3636, %v3652
      %v3661 = vcombine.high %v3636, %v3652
      %v3663 = vunpack.c.l.s4 1934713408
      %v3664 = vunpack.c.0.s8 %v3663
      %v3665 = vlaneseq
      %v3666 = vshrl.u32 %v3665, 7
      %v3667 = vsub.s32 %v3664, %v3666
      %v3668 = vrot.slane %v3660, %v3667
      %v3670 = vunpack.c.l.s4 1934713408
      %v3671 = vunpack.c.0.s8 %v3670
      %v3672 = vlaneseq
      %v3673 = vshrl.u32 %v3672, 7
      %v3674 = vsub.s32 %v3671, %v3673
      %v3675 = vrot.slane %v3661, %v3674
      %v3676 = vcombine.low %v3643, %v3659
      %v3677 = vcombine.high %v3643, %v3659
      %v3679 = vunpack.c.l.s4 1934713408
      %v3680 = vunpack.c.0.s8 %v3679
      %v3681 = vlaneseq
      %v3682 = vshrl.u32 %v3681, 7
      %v3683 = vsub.s32 %v3680, %v3682
      %v3684 = vrot.slane %v3676, %v3683
      %v3686 = vunpack.c.l.s4 1934713408
      %v3687 = vunpack.c.0.s8 %v3686
      %v3688 = vlaneseq
      %v3689 = vshrl.u32 %v3688, 7
      %v3690 = vsub.s32 %v3687, %v3689
      %v3691 = vrot.slane %v3677, %v3690
      %v3692 = vcombine.high %v3668, 0.0
      %v3693 = vcombine.high %v3675, 0.0
      %v3694 = vcombine.high %v3684, 0.0
      %v3695 = vcombine.high %v3691, 0.0
      %3697 = vrot.lane.b32.xlu0 %v3624, 16
      %v3698 = vpop.permute.xlu0 %3697
      %3701 = vrot.lane.b32.xlu0 %v3607, 32
      %v3702 = vpop.permute.xlu0 %3701
      %3705 = vrot.lane.b32.xlu0 %v3625, 48
      %v3706 = vpop.permute.xlu0 %3705
      %3709 = vrot.lane.b32.xlu0 %v3616, 64
      %v3710 = vpop.permute.xlu0 %3709
      %3713 = vrot.lane.b32.xlu0 %v3626, 80
      %v3714 = vpop.permute.xlu0 %3713
      %3717 = vrot.lane.b32.xlu0 %v3623, 96
      %v3718 = vpop.permute.xlu0 %3717
      %3721 = vrot.lane.b32.xlu0 %v3627, 112
      %v3722 = vpop.permute.xlu0 %3721
      %3725 = vrot.lane.b32.xlu0 %v3692, 16
      %v3726 = vpop.permute.xlu0 %3725
      %3729 = vrot.lane.b32.xlu0 %v3675, 32
      %v3730 = vpop.permute.xlu0 %3729
      %3733 = vrot.lane.b32.xlu0 %v3693, 48
      %v3734 = vpop.permute.xlu0 %3733
      %3737 = vrot.lane.b32.xlu0 %v3684, 64
      %v3738 = vpop.permute.xlu0 %3737
      %3741 = vrot.lane.b32.xlu0 %v3694, 80
      %v3742 = vpop.permute.xlu0 %3741
      %3745 = vrot.lane.b32.xlu0 %v3691, 96
      %v3746 = vpop.permute.xlu0 %3745
      %3749 = vrot.lane.b32.xlu0 %v3695, 112
      %v3750 = vpop.permute.xlu0 %3749
      %v3752 = vsel %vm534, %v3600, %v3698
      %v3753 = vsel %vm536, %v3752, %v3702
      %v3754 = vsel %vm538, %v3753, %v3706
      %v3755 = vsel %vm540, %v3754, %v3710
      %v3756 = vsel %vm542, %v3755, %v3714
      %v3757 = vsel %vm544, %v3756, %v3718
      %v3758 = vsel %vm546, %v3757, %v3722
      %v3759 = vsel %vm534, %v3668, %v3726
      %v3760 = vsel %vm536, %v3759, %v3730
      %v3761 = vsel %vm538, %v3760, %v3734
      %v3762 = vsel %vm540, %v3761, %v3738
      %v3763 = vsel %vm542, %v3762, %v3742
      %v3764 = vsel %vm544, %v3763, %v3746
      %v3765 = vsel %vm546, %v3764, %v3750
      %3766 = vrot.lane.b32.xlu0 %v3318, 126
      %v3767 = vpop.permute.xlu0 %3766
      %3768 = vrot.lane.b32.xlu0 %v3296, 126
      %v3769 = vpop.permute.xlu0 %3768
      %3770 = vrot.lane.b32.xlu0 %v3319, 126
      %v3771 = vpop.permute.xlu0 %3770
      %3772 = vrot.lane.b32.xlu0 %v3299, 126
      %v3773 = vpop.permute.xlu0 %3772
      %3774 = vrot.lane.b32.xlu0 %v3320, 126
      %v3775 = vpop.permute.xlu0 %3774
      %3776 = vrot.lane.b32.xlu0 %v3302, 126
      %v3777 = vpop.permute.xlu0 %3776
      %3778 = vrot.lane.b32.xlu0 %v3321, 126
      %v3779 = vpop.permute.xlu0 %3778
      %3780 = vrot.lane.b32.xlu0 %v3305, 126
      %v3781 = vpop.permute.xlu0 %3780
      %v3790 = vcombine.low %v3767, %v3775
      %v3791 = vcombine.high %v3767, %v3775
      %v3793 = vunpack.c.l.s4 1983009808
      %v3794 = vunpack.c.0.s8 %v3793
      %v3795 = vlaneseq
      %v3796 = vshrl.u32 %v3795, 7
      %v3797 = vsub.s32 %v3794, %v3796
      %v3798 = vrot.slane %v3790, %v3797
      %v3800 = vunpack.c.l.s4 1983009808
      %v3801 = vunpack.c.0.s8 %v3800
      %v3802 = vlaneseq
      %v3803 = vshrl.u32 %v3802, 7
      %v3804 = vsub.s32 %v3801, %v3803
      %v3805 = vrot.slane %v3791, %v3804
      %v3806 = vcombine.low %v3771, %v3779
      %v3807 = vcombine.high %v3771, %v3779
      %v3809 = vunpack.c.l.s4 1983009808
      %v3810 = vunpack.c.0.s8 %v3809
      %v3811 = vlaneseq
      %v3812 = vshrl.u32 %v3811, 7
      %v3813 = vsub.s32 %v3810, %v3812
      %v3814 = vrot.slane %v3806, %v3813
      %v3816 = vunpack.c.l.s4 1983009808
      %v3817 = vunpack.c.0.s8 %v3816
      %v3818 = vlaneseq
      %v3819 = vshrl.u32 %v3818, 7
      %v3820 = vsub.s32 %v3817, %v3819
      %v3821 = vrot.slane %v3807, %v3820
      %v3822 = vcombine.low %v3798, %v3814
      %v3823 = vcombine.high %v3798, %v3814
      %v3825 = vunpack.c.l.s4 1934713408
      %v3826 = vunpack.c.0.s8 %v3825
      %v3827 = vlaneseq
      %v3828 = vshrl.u32 %v3827, 7
      %v3829 = vsub.s32 %v3826, %v3828
      %v3830 = vrot.slane %v3822, %v3829
      %v3832 = vunpack.c.l.s4 1934713408
      %v3833 = vunpack.c.0.s8 %v3832
      %v3834 = vlaneseq
      %v3835 = vshrl.u32 %v3834, 7
      %v3836 = vsub.s32 %v3833, %v3835
      %v3837 = vrot.slane %v3823, %v3836
      %v3838 = vcombine.low %v3805, %v3821
      %v3839 = vcombine.high %v3805, %v3821
      %v3841 = vunpack.c.l.s4 1934713408
      %v3842 = vunpack.c.0.s8 %v3841
      %v3843 = vlaneseq
      %v3844 = vshrl.u32 %v3843, 7
      %v3845 = vsub.s32 %v3842, %v3844
      %v3846 = vrot.slane %v3838, %v3845
      %v3848 = vunpack.c.l.s4 1934713408
      %v3849 = vunpack.c.0.s8 %v3848
      %v3850 = vlaneseq
      %v3851 = vshrl.u32 %v3850, 7
      %v3852 = vsub.s32 %v3849, %v3851
      %v3853 = vrot.slane %v3839, %v3852
      %v3854 = vcombine.high %v3830, 0.0
      %v3855 = vcombine.high %v3837, 0.0
      %v3856 = vcombine.high %v3846, 0.0
      %v3857 = vcombine.high %v3853, 0.0
      %v3858 = vcombine.low %v3769, %v3777
      %v3859 = vcombine.high %v3769, %v3777
      %v3861 = vunpack.c.l.s4 1983009808
      %v3862 = vunpack.c.0.s8 %v3861
      %v3863 = vlaneseq
      %v3864 = vshrl.u32 %v3863, 7
      %v3865 = vsub.s32 %v3862, %v3864
      %v3866 = vrot.slane %v3858, %v3865
      %v3868 = vunpack.c.l.s4 1983009808
      %v3869 = vunpack.c.0.s8 %v3868
      %v3870 = vlaneseq
      %v3871 = vshrl.u32 %v3870, 7
      %v3872 = vsub.s32 %v3869, %v3871
      %v3873 = vrot.slane %v3859, %v3872
      %v3874 = vcombine.low %v3773, %v3781
      %v3875 = vcombine.high %v3773, %v3781
      %v3877 = vunpack.c.l.s4 1983009808
      %v3878 = vunpack.c.0.s8 %v3877
      %v3879 = vlaneseq
      %v3880 = vshrl.u32 %v3879, 7
      %v3881 = vsub.s32 %v3878, %v3880
      %v3882 = vrot.slane %v3874, %v3881
      %v3884 = vunpack.c.l.s4 1983009808
      %v3885 = vunpack.c.0.s8 %v3884
      %v3886 = vlaneseq
      %v3887 = vshrl.u32 %v3886, 7
      %v3888 = vsub.s32 %v3885, %v3887
      %v3889 = vrot.slane %v3875, %v3888
      %v3890 = vcombine.low %v3866, %v3882
      %v3891 = vcombine.high %v3866, %v3882
      %v3893 = vunpack.c.l.s4 1934713408
      %v3894 = vunpack.c.0.s8 %v3893
      %v3895 = vlaneseq
      %v3896 = vshrl.u32 %v3895, 7
      %v3897 = vsub.s32 %v3894, %v3896
      %v3898 = vrot.slane %v3890, %v3897
      %v3900 = vunpack.c.l.s4 1934713408
      %v3901 = vunpack.c.0.s8 %v3900
      %v3902 = vlaneseq
      %v3903 = vshrl.u32 %v3902, 7
      %v3904 = vsub.s32 %v3901, %v3903
      %v3905 = vrot.slane %v3891, %v3904
      %v3906 = vcombine.low %v3873, %v3889
      %v3907 = vcombine.high %v3873, %v3889
      %v3909 = vunpack.c.l.s4 1934713408
      %v3910 = vunpack.c.0.s8 %v3909
      %v3911 = vlaneseq
      %v3912 = vshrl.u32 %v3911, 7
      %v3913 = vsub.s32 %v3910, %v3912
      %v3914 = vrot.slane %v3906, %v3913
      %v3916 = vunpack.c.l.s4 1934713408
      %v3917 = vunpack.c.0.s8 %v3916
      %v3918 = vlaneseq
      %v3919 = vshrl.u32 %v3918, 7
      %v3920 = vsub.s32 %v3917, %v3919
      %v3921 = vrot.slane %v3907, %v3920
      %v3922 = vcombine.high %v3898, 0.0
      %v3923 = vcombine.high %v3905, 0.0
      %v3924 = vcombine.high %v3914, 0.0
      %v3925 = vcombine.high %v3921, 0.0
      %3927 = vrot.lane.b32.xlu0 %v3854, 16
      %v3928 = vpop.permute.xlu0 %3927
      %3931 = vrot.lane.b32.xlu0 %v3837, 32
      %v3932 = vpop.permute.xlu0 %3931
      %3935 = vrot.lane.b32.xlu0 %v3855, 48
      %v3936 = vpop.permute.xlu0 %3935
      %3939 = vrot.lane.b32.xlu0 %v3846, 64
      %v3940 = vpop.permute.xlu0 %3939
      %3943 = vrot.lane.b32.xlu0 %v3856, 80
      %v3944 = vpop.permute.xlu0 %3943
      %3947 = vrot.lane.b32.xlu0 %v3853, 96
      %v3948 = vpop.permute.xlu0 %3947
      %3951 = vrot.lane.b32.xlu0 %v3857, 112
      %v3952 = vpop.permute.xlu0 %3951
      %3955 = vrot.lane.b32.xlu0 %v3922, 16
      %v3956 = vpop.permute.xlu0 %3955
      %3959 = vrot.lane.b32.xlu0 %v3905, 32
      %v3960 = vpop.permute.xlu0 %3959
      %3963 = vrot.lane.b32.xlu0 %v3923, 48
      %v3964 = vpop.permute.xlu0 %3963
      %3967 = vrot.lane.b32.xlu0 %v3914, 64
      %v3968 = vpop.permute.xlu0 %3967
      %3971 = vrot.lane.b32.xlu0 %v3924, 80
      %v3972 = vpop.permute.xlu0 %3971
      %3975 = vrot.lane.b32.xlu0 %v3921, 96
      %v3976 = vpop.permute.xlu0 %3975
      %3979 = vrot.lane.b32.xlu0 %v3925, 112
      %v3980 = vpop.permute.xlu0 %3979
      %v3982 = vsel %vm534, %v3830, %v3928
      %v3983 = vsel %vm536, %v3982, %v3932
      %v3984 = vsel %vm538, %v3983, %v3936
      %v3985 = vsel %vm540, %v3984, %v3940
      %v3986 = vsel %vm542, %v3985, %v3944
      %v3987 = vsel %vm544, %v3986, %v3948
      %v3988 = vsel %vm546, %v3987, %v3952
      %v3989 = vsel %vm534, %v3898, %v3956
      %v3990 = vsel %vm536, %v3989, %v3960
      %v3991 = vsel %vm538, %v3990, %v3964
      %v3992 = vsel %vm540, %v3991, %v3968
      %v3993 = vsel %vm542, %v3992, %v3972
      %v3994 = vsel %vm544, %v3993, %v3976
      %v3995 = vsel %vm546, %v3994, %v3980
      %3996 = vrot.lane.b32.xlu0 %v3318, 125
      %v3997 = vpop.permute.xlu0 %3996
      %3998 = vrot.lane.b32.xlu0 %v3296, 125
      %v3999 = vpop.permute.xlu0 %3998
      %4000 = vrot.lane.b32.xlu0 %v3319, 125
      %v4001 = vpop.permute.xlu0 %4000
      %4002 = vrot.lane.b32.xlu0 %v3299, 125
      %v4003 = vpop.permute.xlu0 %4002
      %4004 = vrot.lane.b32.xlu0 %v3320, 125
      %v4005 = vpop.permute.xlu0 %4004
      %4006 = vrot.lane.b32.xlu0 %v3302, 125
      %v4007 = vpop.permute.xlu0 %4006
      %4008 = vrot.lane.b32.xlu0 %v3321, 125
      %v4009 = vpop.permute.xlu0 %4008
      %4010 = vrot.lane.b32.xlu0 %v3305, 125
      %v4011 = vpop.permute.xlu0 %4010
      %v4020 = vcombine.low %v3997, %v4005
      %v4021 = vcombine.high %v3997, %v4005
      %v4023 = vunpack.c.l.s4 1983009808
      %v4024 = vunpack.c.0.s8 %v4023
      %v4025 = vlaneseq
      %v4026 = vshrl.u32 %v4025, 7
      %v4027 = vsub.s32 %v4024, %v4026
      %v4028 = vrot.slane %v4020, %v4027
      %v4030 = vunpack.c.l.s4 1983009808
      %v4031 = vunpack.c.0.s8 %v4030
      %v4032 = vlaneseq
      %v4033 = vshrl.u32 %v4032, 7
      %v4034 = vsub.s32 %v4031, %v4033
      %v4035 = vrot.slane %v4021, %v4034
      %v4036 = vcombine.low %v4001, %v4009
      %v4037 = vcombine.high %v4001, %v4009
      %v4039 = vunpack.c.l.s4 1983009808
      %v4040 = vunpack.c.0.s8 %v4039
      %v4041 = vlaneseq
      %v4042 = vshrl.u32 %v4041, 7
      %v4043 = vsub.s32 %v4040, %v4042
      %v4044 = vrot.slane %v4036, %v4043
      %v4046 = vunpack.c.l.s4 1983009808
      %v4047 = vunpack.c.0.s8 %v4046
      %v4048 = vlaneseq
      %v4049 = vshrl.u32 %v4048, 7
      %v4050 = vsub.s32 %v4047, %v4049
      %v4051 = vrot.slane %v4037, %v4050
      %v4052 = vcombine.low %v4028, %v4044
      %v4053 = vcombine.high %v4028, %v4044
      %v4055 = vunpack.c.l.s4 1934713408
      %v4056 = vunpack.c.0.s8 %v4055
      %v4057 = vlaneseq
      %v4058 = vshrl.u32 %v4057, 7
      %v4059 = vsub.s32 %v4056, %v4058
      %v4060 = vrot.slane %v4052, %v4059
      %v4062 = vunpack.c.l.s4 1934713408
      %v4063 = vunpack.c.0.s8 %v4062
      %v4064 = vlaneseq
      %v4065 = vshrl.u32 %v4064, 7
      %v4066 = vsub.s32 %v4063, %v4065
      %v4067 = vrot.slane %v4053, %v4066
      %v4068 = vcombine.low %v4035, %v4051
      %v4069 = vcombine.high %v4035, %v4051
      %v4071 = vunpack.c.l.s4 1934713408
      %v4072 = vunpack.c.0.s8 %v4071
      %v4073 = vlaneseq
      %v4074 = vshrl.u32 %v4073, 7
      %v4075 = vsub.s32 %v4072, %v4074
      %v4076 = vrot.slane %v4068, %v4075
      %v4078 = vunpack.c.l.s4 1934713408
      %v4079 = vunpack.c.0.s8 %v4078
      %v4080 = vlaneseq
      %v4081 = vshrl.u32 %v4080, 7
      %v4082 = vsub.s32 %v4079, %v4081
      %v4083 = vrot.slane %v4069, %v4082
      %v4084 = vcombine.high %v4060, 0.0
      %v4085 = vcombine.high %v4067, 0.0
      %v4086 = vcombine.high %v4076, 0.0
      %v4087 = vcombine.high %v4083, 0.0
      %v4088 = vcombine.low %v3999, %v4007
      %v4089 = vcombine.high %v3999, %v4007
      %v4091 = vunpack.c.l.s4 1983009808
      %v4092 = vunpack.c.0.s8 %v4091
      %v4093 = vlaneseq
      %v4094 = vshrl.u32 %v4093, 7
      %v4095 = vsub.s32 %v4092, %v4094
      %v4096 = vrot.slane %v4088, %v4095
      %v4098 = vunpack.c.l.s4 1983009808
      %v4099 = vunpack.c.0.s8 %v4098
      %v4100 = vlaneseq
      %v4101 = vshrl.u32 %v4100, 7
      %v4102 = vsub.s32 %v4099, %v4101
      %v4103 = vrot.slane %v4089, %v4102
      %v4104 = vcombine.low %v4003, %v4011
      %v4105 = vcombine.high %v4003, %v4011
      %v4107 = vunpack.c.l.s4 1983009808
      %v4108 = vunpack.c.0.s8 %v4107
      %v4109 = vlaneseq
      %v4110 = vshrl.u32 %v4109, 7
      %v4111 = vsub.s32 %v4108, %v4110
      %v4112 = vrot.slane %v4104, %v4111
      %v4114 = vunpack.c.l.s4 1983009808
      %v4115 = vunpack.c.0.s8 %v4114
      %v4116 = vlaneseq
      %v4117 = vshrl.u32 %v4116, 7
      %v4118 = vsub.s32 %v4115, %v4117
      %v4119 = vrot.slane %v4105, %v4118
      %v4120 = vcombine.low %v4096, %v4112
      %v4121 = vcombine.high %v4096, %v4112
      %v4123 = vunpack.c.l.s4 1934713408
      %v4124 = vunpack.c.0.s8 %v4123
      %v4125 = vlaneseq
      %v4126 = vshrl.u32 %v4125, 7
      %v4127 = vsub.s32 %v4124, %v4126
      %v4128 = vrot.slane %v4120, %v4127
      %v4130 = vunpack.c.l.s4 1934713408
      %v4131 = vunpack.c.0.s8 %v4130
      %v4132 = vlaneseq
      %v4133 = vshrl.u32 %v4132, 7
      %v4134 = vsub.s32 %v4131, %v4133
      %v4135 = vrot.slane %v4121, %v4134
      %v4136 = vcombine.low %v4103, %v4119
      %v4137 = vcombine.high %v4103, %v4119
      %v4139 = vunpack.c.l.s4 1934713408
      %v4140 = vunpack.c.0.s8 %v4139
      %v4141 = vlaneseq
      %v4142 = vshrl.u32 %v4141, 7
      %v4143 = vsub.s32 %v4140, %v4142
      %v4144 = vrot.slane %v4136, %v4143
      %v4146 = vunpack.c.l.s4 1934713408
      %v4147 = vunpack.c.0.s8 %v4146
      %v4148 = vlaneseq
      %v4149 = vshrl.u32 %v4148, 7
      %v4150 = vsub.s32 %v4147, %v4149
      %v4151 = vrot.slane %v4137, %v4150
      %v4152 = vcombine.high %v4128, 0.0
      %v4153 = vcombine.high %v4135, 0.0
      %v4154 = vcombine.high %v4144, 0.0
      %v4155 = vcombine.high %v4151, 0.0
      %4157 = vrot.lane.b32.xlu0 %v4084, 16
      %v4158 = vpop.permute.xlu0 %4157
      %4161 = vrot.lane.b32.xlu0 %v4067, 32
      %v4162 = vpop.permute.xlu0 %4161
      %4165 = vrot.lane.b32.xlu0 %v4085, 48
      %v4166 = vpop.permute.xlu0 %4165
      %4169 = vrot.lane.b32.xlu0 %v4076, 64
      %v4170 = vpop.permute.xlu0 %4169
      %4173 = vrot.lane.b32.xlu0 %v4086, 80
      %v4174 = vpop.permute.xlu0 %4173
      %4177 = vrot.lane.b32.xlu0 %v4083, 96
      %v4178 = vpop.permute.xlu0 %4177
      %4181 = vrot.lane.b32.xlu0 %v4087, 112
      %v4182 = vpop.permute.xlu0 %4181
      %4185 = vrot.lane.b32.xlu0 %v4152, 16
      %v4186 = vpop.permute.xlu0 %4185
      %4189 = vrot.lane.b32.xlu0 %v4135, 32
      %v4190 = vpop.permute.xlu0 %4189
      %4193 = vrot.lane.b32.xlu0 %v4153, 48
      %v4194 = vpop.permute.xlu0 %4193
      %4197 = vrot.lane.b32.xlu0 %v4144, 64
      %v4198 = vpop.permute.xlu0 %4197
      %4201 = vrot.lane.b32.xlu0 %v4154, 80
      %v4202 = vpop.permute.xlu0 %4201
      %4205 = vrot.lane.b32.xlu0 %v4151, 96
      %v4206 = vpop.permute.xlu0 %4205
      %4209 = vrot.lane.b32.xlu0 %v4155, 112
      %v4210 = vpop.permute.xlu0 %4209
      %v4212 = vsel %vm534, %v4060, %v4158
      %v4213 = vsel %vm536, %v4212, %v4162
      %v4214 = vsel %vm538, %v4213, %v4166
      %v4215 = vsel %vm540, %v4214, %v4170
      %v4216 = vsel %vm542, %v4215, %v4174
      %v4217 = vsel %vm544, %v4216, %v4178
      %v4218 = vsel %vm546, %v4217, %v4182
      %v4219 = vsel %vm534, %v4128, %v4186
      %v4220 = vsel %vm536, %v4219, %v4190
      %v4221 = vsel %vm538, %v4220, %v4194
      %v4222 = vsel %vm540, %v4221, %v4198
      %v4223 = vsel %vm542, %v4222, %v4202
      %v4224 = vsel %vm544, %v4223, %v4206
      %v4225 = vsel %vm546, %v4224, %v4210
      %4226 = vrot.lane.b32.xlu0 %v3318, 124
      %v4227 = vpop.permute.xlu0 %4226
      %4228 = vrot.lane.b32.xlu0 %v3296, 124
      %v4229 = vpop.permute.xlu0 %4228
      %4230 = vrot.lane.b32.xlu0 %v3319, 124
      %v4231 = vpop.permute.xlu0 %4230
      %4232 = vrot.lane.b32.xlu0 %v3299, 124
      %v4233 = vpop.permute.xlu0 %4232
      %4234 = vrot.lane.b32.xlu0 %v3320, 124
      %v4235 = vpop.permute.xlu0 %4234
      %4236 = vrot.lane.b32.xlu0 %v3302, 124
      %v4237 = vpop.permute.xlu0 %4236
      %4238 = vrot.lane.b32.xlu0 %v3321, 124
      %v4239 = vpop.permute.xlu0 %4238
      %4240 = vrot.lane.b32.xlu0 %v3305, 124
      %v4241 = vpop.permute.xlu0 %4240
      %v4250 = vcombine.low %v4227, %v4235
      %v4251 = vcombine.high %v4227, %v4235
      %v4253 = vunpack.c.l.s4 1983009808
      %v4254 = vunpack.c.0.s8 %v4253
      %v4255 = vlaneseq
      %v4256 = vshrl.u32 %v4255, 7
      %v4257 = vsub.s32 %v4254, %v4256
      %v4258 = vrot.slane %v4250, %v4257
      %v4260 = vunpack.c.l.s4 1983009808
      %v4261 = vunpack.c.0.s8 %v4260
      %v4262 = vlaneseq
      %v4263 = vshrl.u32 %v4262, 7
      %v4264 = vsub.s32 %v4261, %v4263
      %v4265 = vrot.slane %v4251, %v4264
      %v4266 = vcombine.low %v4231, %v4239
      %v4267 = vcombine.high %v4231, %v4239
      %v4269 = vunpack.c.l.s4 1983009808
      %v4270 = vunpack.c.0.s8 %v4269
      %v4271 = vlaneseq
      %v4272 = vshrl.u32 %v4271, 7
      %v4273 = vsub.s32 %v4270, %v4272
      %v4274 = vrot.slane %v4266, %v4273
      %v4276 = vunpack.c.l.s4 1983009808
      %v4277 = vunpack.c.0.s8 %v4276
      %v4278 = vlaneseq
      %v4279 = vshrl.u32 %v4278, 7
      %v4280 = vsub.s32 %v4277, %v4279
      %v4281 = vrot.slane %v4267, %v4280
      %v4282 = vcombine.low %v4258, %v4274
      %v4283 = vcombine.high %v4258, %v4274
      %v4285 = vunpack.c.l.s4 1934713408
      %v4286 = vunpack.c.0.s8 %v4285
      %v4287 = vlaneseq
      %v4288 = vshrl.u32 %v4287, 7
      %v4289 = vsub.s32 %v4286, %v4288
      %v4290 = vrot.slane %v4282, %v4289
      %v4292 = vunpack.c.l.s4 1934713408
      %v4293 = vunpack.c.0.s8 %v4292
      %v4294 = vlaneseq
      %v4295 = vshrl.u32 %v4294, 7
      %v4296 = vsub.s32 %v4293, %v4295
      %v4297 = vrot.slane %v4283, %v4296
      %v4298 = vcombine.low %v4265, %v4281
      %v4299 = vcombine.high %v4265, %v4281
      %v4301 = vunpack.c.l.s4 1934713408
      %v4302 = vunpack.c.0.s8 %v4301
      %v4303 = vlaneseq
      %v4304 = vshrl.u32 %v4303, 7
      %v4305 = vsub.s32 %v4302, %v4304
      %v4306 = vrot.slane %v4298, %v4305
      %v4308 = vunpack.c.l.s4 1934713408
      %v4309 = vunpack.c.0.s8 %v4308
      %v4310 = vlaneseq
      %v4311 = vshrl.u32 %v4310, 7
      %v4312 = vsub.s32 %v4309, %v4311
      %v4313 = vrot.slane %v4299, %v4312
      %v4314 = vcombine.high %v4290, 0.0
      %v4315 = vcombine.high %v4297, 0.0
      %v4316 = vcombine.high %v4306, 0.0
      %v4317 = vcombine.high %v4313, 0.0
      %v4318 = vcombine.low %v4229, %v4237
      %v4319 = vcombine.high %v4229, %v4237
      %v4321 = vunpack.c.l.s4 1983009808
      %v4322 = vunpack.c.0.s8 %v4321
      %v4323 = vlaneseq
      %v4324 = vshrl.u32 %v4323, 7
      %v4325 = vsub.s32 %v4322, %v4324
      %v4326 = vrot.slane %v4318, %v4325
      %v4328 = vunpack.c.l.s4 1983009808
      %v4329 = vunpack.c.0.s8 %v4328
      %v4330 = vlaneseq
      %v4331 = vshrl.u32 %v4330, 7
      %v4332 = vsub.s32 %v4329, %v4331
      %v4333 = vrot.slane %v4319, %v4332
      %v4334 = vcombine.low %v4233, %v4241
      %v4335 = vcombine.high %v4233, %v4241
      %v4337 = vunpack.c.l.s4 1983009808
      %v4338 = vunpack.c.0.s8 %v4337
      %v4339 = vlaneseq
      %v4340 = vshrl.u32 %v4339, 7
      %v4341 = vsub.s32 %v4338, %v4340
      %v4342 = vrot.slane %v4334, %v4341
      %v4344 = vunpack.c.l.s4 1983009808
      %v4345 = vunpack.c.0.s8 %v4344
      %v4346 = vlaneseq
      %v4347 = vshrl.u32 %v4346, 7
      %v4348 = vsub.s32 %v4345, %v4347
      %v4349 = vrot.slane %v4335, %v4348
      %v4350 = vcombine.low %v4326, %v4342
      %v4351 = vcombine.high %v4326, %v4342
      %v4353 = vunpack.c.l.s4 1934713408
      %v4354 = vunpack.c.0.s8 %v4353
      %v4355 = vlaneseq
      %v4356 = vshrl.u32 %v4355, 7
      %v4357 = vsub.s32 %v4354, %v4356
      %v4358 = vrot.slane %v4350, %v4357
      %v4360 = vunpack.c.l.s4 1934713408
      %v4361 = vunpack.c.0.s8 %v4360
      %v4362 = vlaneseq
      %v4363 = vshrl.u32 %v4362, 7
      %v4364 = vsub.s32 %v4361, %v4363
      %v4365 = vrot.slane %v4351, %v4364
      %v4366 = vcombine.low %v4333, %v4349
      %v4367 = vcombine.high %v4333, %v4349
      %v4369 = vunpack.c.l.s4 1934713408
      %v4370 = vunpack.c.0.s8 %v4369
      %v4371 = vlaneseq
      %v4372 = vshrl.u32 %v4371, 7
      %v4373 = vsub.s32 %v4370, %v4372
      %v4374 = vrot.slane %v4366, %v4373
      %v4376 = vunpack.c.l.s4 1934713408
      %v4377 = vunpack.c.0.s8 %v4376
      %v4378 = vlaneseq
      %v4379 = vshrl.u32 %v4378, 7
      %v4380 = vsub.s32 %v4377, %v4379
      %v4381 = vrot.slane %v4367, %v4380
      %v4382 = vcombine.high %v4358, 0.0
      %v4383 = vcombine.high %v4365, 0.0
      %v4384 = vcombine.high %v4374, 0.0
      %v4385 = vcombine.high %v4381, 0.0
      %4387 = vrot.lane.b32.xlu0 %v4314, 16
      %v4388 = vpop.permute.xlu0 %4387
      %4391 = vrot.lane.b32.xlu0 %v4297, 32
      %v4392 = vpop.permute.xlu0 %4391
      %4395 = vrot.lane.b32.xlu0 %v4315, 48
      %v4396 = vpop.permute.xlu0 %4395
      %4399 = vrot.lane.b32.xlu0 %v4306, 64
      %v4400 = vpop.permute.xlu0 %4399
      %4403 = vrot.lane.b32.xlu0 %v4316, 80
      %v4404 = vpop.permute.xlu0 %4403
      %4407 = vrot.lane.b32.xlu0 %v4313, 96
      %v4408 = vpop.permute.xlu0 %4407
      %4411 = vrot.lane.b32.xlu0 %v4317, 112
      %v4412 = vpop.permute.xlu0 %4411
      %4415 = vrot.lane.b32.xlu0 %v4382, 16
      %v4416 = vpop.permute.xlu0 %4415
      %4419 = vrot.lane.b32.xlu0 %v4365, 32
      %v4420 = vpop.permute.xlu0 %4419
      %4423 = vrot.lane.b32.xlu0 %v4383, 48
      %v4424 = vpop.permute.xlu0 %4423
      %4427 = vrot.lane.b32.xlu0 %v4374, 64
      %v4428 = vpop.permute.xlu0 %4427
      %4431 = vrot.lane.b32.xlu0 %v4384, 80
      %v4432 = vpop.permute.xlu0 %4431
      %4435 = vrot.lane.b32.xlu0 %v4381, 96
      %v4436 = vpop.permute.xlu0 %4435
      %4439 = vrot.lane.b32.xlu0 %v4385, 112
      %v4440 = vpop.permute.xlu0 %4439
      %v4442 = vsel %vm534, %v4290, %v4388
      %v4443 = vsel %vm536, %v4442, %v4392
      %v4444 = vsel %vm538, %v4443, %v4396
      %v4445 = vsel %vm540, %v4444, %v4400
      %v4446 = vsel %vm542, %v4445, %v4404
      %v4447 = vsel %vm544, %v4446, %v4408
      %v4448 = vsel %vm546, %v4447, %v4412
      %v4449 = vsel %vm534, %v4358, %v4416
      %v4450 = vsel %vm536, %v4449, %v4420
      %v4451 = vsel %vm538, %v4450, %v4424
      %v4452 = vsel %vm540, %v4451, %v4428
      %v4453 = vsel %vm542, %v4452, %v4432
      %v4454 = vsel %vm544, %v4453, %v4436
      %v4455 = vsel %vm546, %v4454, %v4440
      %v4460 = vrot.slane %v3318, 1
      %v4461 = vrot.slane %v3296, 1
      %v4462 = vsel %vm1579, %v4460, %v4461
      %v4463 = vrot.slane %v3322, 1
      %v4464 = vsel %vm1579, %v4461, %v4463
      %v4465 = vrot.slane %v3319, 1
      %v4466 = vrot.slane %v3299, 1
      %v4467 = vsel %vm1579, %v4465, %v4466
      %v4468 = vrot.slane %v3323, 1
      %v4469 = vsel %vm1579, %v4466, %v4468
      %v4470 = vrot.slane %v3320, 1
      %v4471 = vrot.slane %v3302, 1
      %v4472 = vsel %vm1579, %v4470, %v4471
      %v4473 = vrot.slane %v3324, 1
      %v4474 = vsel %vm1579, %v4471, %v4473
      %v4475 = vrot.slane %v3321, 1
      %v4476 = vrot.slane %v3305, 1
      %v4477 = vsel %vm1579, %v4475, %v4476
      %v4478 = vrot.slane %v3325, 1
      %v4479 = vsel %vm1579, %v4476, %v4478
      %v4488 = vcombine.low %v4462, %v4472
      %v4489 = vcombine.high %v4462, %v4472
      %v4491 = vunpack.c.l.s4 1983009808
      %v4492 = vunpack.c.0.s8 %v4491
      %v4493 = vlaneseq
      %v4494 = vshrl.u32 %v4493, 7
      %v4495 = vsub.s32 %v4492, %v4494
      %v4496 = vrot.slane %v4488, %v4495
      %v4498 = vunpack.c.l.s4 1983009808
      %v4499 = vunpack.c.0.s8 %v4498
      %v4500 = vlaneseq
      %v4501 = vshrl.u32 %v4500, 7
      %v4502 = vsub.s32 %v4499, %v4501
      %v4503 = vrot.slane %v4489, %v4502
      %v4504 = vcombine.low %v4467, %v4477
      %v4505 = vcombine.high %v4467, %v4477
      %v4507 = vunpack.c.l.s4 1983009808
      %v4508 = vunpack.c.0.s8 %v4507
      %v4509 = vlaneseq
      %v4510 = vshrl.u32 %v4509, 7
      %v4511 = vsub.s32 %v4508, %v4510
      %v4512 = vrot.slane %v4504, %v4511
      %v4514 = vunpack.c.l.s4 1983009808
      %v4515 = vunpack.c.0.s8 %v4514
      %v4516 = vlaneseq
      %v4517 = vshrl.u32 %v4516, 7
      %v4518 = vsub.s32 %v4515, %v4517
      %v4519 = vrot.slane %v4505, %v4518
      %v4520 = vcombine.low %v4496, %v4512
      %v4521 = vcombine.high %v4496, %v4512
      %v4523 = vunpack.c.l.s4 1934713408
      %v4524 = vunpack.c.0.s8 %v4523
      %v4525 = vlaneseq
      %v4526 = vshrl.u32 %v4525, 7
      %v4527 = vsub.s32 %v4524, %v4526
      %v4528 = vrot.slane %v4520, %v4527
      %v4530 = vunpack.c.l.s4 1934713408
      %v4531 = vunpack.c.0.s8 %v4530
      %v4532 = vlaneseq
      %v4533 = vshrl.u32 %v4532, 7
      %v4534 = vsub.s32 %v4531, %v4533
      %v4535 = vrot.slane %v4521, %v4534
      %v4536 = vcombine.low %v4503, %v4519
      %v4537 = vcombine.high %v4503, %v4519
      %v4539 = vunpack.c.l.s4 1934713408
      %v4540 = vunpack.c.0.s8 %v4539
      %v4541 = vlaneseq
      %v4542 = vshrl.u32 %v4541, 7
      %v4543 = vsub.s32 %v4540, %v4542
      %v4544 = vrot.slane %v4536, %v4543
      %v4546 = vunpack.c.l.s4 1934713408
      %v4547 = vunpack.c.0.s8 %v4546
      %v4548 = vlaneseq
      %v4549 = vshrl.u32 %v4548, 7
      %v4550 = vsub.s32 %v4547, %v4549
      %v4551 = vrot.slane %v4537, %v4550
      %v4552 = vcombine.high %v4528, 0.0
      %v4553 = vcombine.high %v4535, 0.0
      %v4554 = vcombine.high %v4544, 0.0
      %v4555 = vcombine.high %v4551, 0.0
      %v4556 = vcombine.low %v4464, %v4474
      %v4557 = vcombine.high %v4464, %v4474
      %v4559 = vunpack.c.l.s4 1983009808
      %v4560 = vunpack.c.0.s8 %v4559
      %v4561 = vlaneseq
      %v4562 = vshrl.u32 %v4561, 7
      %v4563 = vsub.s32 %v4560, %v4562
      %v4564 = vrot.slane %v4556, %v4563
      %v4566 = vunpack.c.l.s4 1983009808
      %v4567 = vunpack.c.0.s8 %v4566
      %v4568 = vlaneseq
      %v4569 = vshrl.u32 %v4568, 7
      %v4570 = vsub.s32 %v4567, %v4569
      %v4571 = vrot.slane %v4557, %v4570
      %v4572 = vcombine.low %v4469, %v4479
      %v4573 = vcombine.high %v4469, %v4479
      %v4575 = vunpack.c.l.s4 1983009808
      %v4576 = vunpack.c.0.s8 %v4575
      %v4577 = vlaneseq
      %v4578 = vshrl.u32 %v4577, 7
      %v4579 = vsub.s32 %v4576, %v4578
      %v4580 = vrot.slane %v4572, %v4579
      %v4582 = vunpack.c.l.s4 1983009808
      %v4583 = vunpack.c.0.s8 %v4582
      %v4584 = vlaneseq
      %v4585 = vshrl.u32 %v4584, 7
      %v4586 = vsub.s32 %v4583, %v4585
      %v4587 = vrot.slane %v4573, %v4586
      %v4588 = vcombine.low %v4564, %v4580
      %v4589 = vcombine.high %v4564, %v4580
      %v4591 = vunpack.c.l.s4 1934713408
      %v4592 = vunpack.c.0.s8 %v4591
      %v4593 = vlaneseq
      %v4594 = vshrl.u32 %v4593, 7
      %v4595 = vsub.s32 %v4592, %v4594
      %v4596 = vrot.slane %v4588, %v4595
      %v4598 = vunpack.c.l.s4 1934713408
      %v4599 = vunpack.c.0.s8 %v4598
      %v4600 = vlaneseq
      %v4601 = vshrl.u32 %v4600, 7
      %v4602 = vsub.s32 %v4599, %v4601
      %v4603 = vrot.slane %v4589, %v4602
      %v4604 = vcombine.low %v4571, %v4587
      %v4605 = vcombine.high %v4571, %v4587
      %v4607 = vunpack.c.l.s4 1934713408
      %v4608 = vunpack.c.0.s8 %v4607
      %v4609 = vlaneseq
      %v4610 = vshrl.u32 %v4609, 7
      %v4611 = vsub.s32 %v4608, %v4610
      %v4612 = vrot.slane %v4604, %v4611
      %v4614 = vunpack.c.l.s4 1934713408
      %v4615 = vunpack.c.0.s8 %v4614
      %v4616 = vlaneseq
      %v4617 = vshrl.u32 %v4616, 7
      %v4618 = vsub.s32 %v4615, %v4617
      %v4619 = vrot.slane %v4605, %v4618
      %v4620 = vcombine.high %v4596, 0.0
      %v4621 = vcombine.high %v4603, 0.0
      %v4622 = vcombine.high %v4612, 0.0
      %v4623 = vcombine.high %v4619, 0.0
      %4625 = vrot.lane.b32.xlu0 %v4552, 16
      %v4626 = vpop.permute.xlu0 %4625
      %4629 = vrot.lane.b32.xlu0 %v4535, 32
      %v4630 = vpop.permute.xlu0 %4629
      %4633 = vrot.lane.b32.xlu0 %v4553, 48
      %v4634 = vpop.permute.xlu0 %4633
      %4637 = vrot.lane.b32.xlu0 %v4544, 64
      %v4638 = vpop.permute.xlu0 %4637
      %4641 = vrot.lane.b32.xlu0 %v4554, 80
      %v4642 = vpop.permute.xlu0 %4641
      %4645 = vrot.lane.b32.xlu0 %v4551, 96
      %v4646 = vpop.permute.xlu0 %4645
      %4649 = vrot.lane.b32.xlu0 %v4555, 112
      %v4650 = vpop.permute.xlu0 %4649
      %4653 = vrot.lane.b32.xlu0 %v4620, 16
      %v4654 = vpop.permute.xlu0 %4653
      %4657 = vrot.lane.b32.xlu0 %v4603, 32
      %v4658 = vpop.permute.xlu0 %4657
      %4661 = vrot.lane.b32.xlu0 %v4621, 48
      %v4662 = vpop.permute.xlu0 %4661
      %4665 = vrot.lane.b32.xlu0 %v4612, 64
      %v4666 = vpop.permute.xlu0 %4665
      %4669 = vrot.lane.b32.xlu0 %v4622, 80
      %v4670 = vpop.permute.xlu0 %4669
      %4673 = vrot.lane.b32.xlu0 %v4619, 96
      %v4674 = vpop.permute.xlu0 %4673
      %4677 = vrot.lane.b32.xlu0 %v4623, 112
      %v4678 = vpop.permute.xlu0 %4677
      %v4680 = vsel %vm534, %v4528, %v4626
      %v4681 = vsel %vm536, %v4680, %v4630
      %v4682 = vsel %vm538, %v4681, %v4634
      %v4683 = vsel %vm540, %v4682, %v4638
      %v4684 = vsel %vm542, %v4683, %v4642
      %v4685 = vsel %vm544, %v4684, %v4646
      %v4686 = vsel %vm546, %v4685, %v4650
      %v4687 = vsel %vm534, %v4596, %v4654
      %v4688 = vsel %vm536, %v4687, %v4658
      %v4689 = vsel %vm538, %v4688, %v4662
      %v4690 = vsel %vm540, %v4689, %v4666
      %v4691 = vsel %vm542, %v4690, %v4670
      %v4692 = vsel %vm544, %v4691, %v4674
      %v4693 = vsel %vm546, %v4692, %v4678
      %4694 = vrot.lane.b32.xlu0 %v4462, 127
      %v4695 = vpop.permute.xlu0 %4694
      %4696 = vrot.lane.b32.xlu0 %v4464, 127
      %v4697 = vpop.permute.xlu0 %4696
      %4698 = vrot.lane.b32.xlu0 %v4467, 127
      %v4699 = vpop.permute.xlu0 %4698
      %4700 = vrot.lane.b32.xlu0 %v4469, 127
      %v4701 = vpop.permute.xlu0 %4700
      %4702 = vrot.lane.b32.xlu0 %v4472, 127
      %v4703 = vpop.permute.xlu0 %4702
      %4704 = vrot.lane.b32.xlu0 %v4474, 127
      %v4705 = vpop.permute.xlu0 %4704
      %4706 = vrot.lane.b32.xlu0 %v4477, 127
      %v4707 = vpop.permute.xlu0 %4706
      %4708 = vrot.lane.b32.xlu0 %v4479, 127
      %v4709 = vpop.permute.xlu0 %4708
      %v4718 = vcombine.low %v4695, %v4703
      %v4719 = vcombine.high %v4695, %v4703
      %v4721 = vunpack.c.l.s4 1983009808
      %v4722 = vunpack.c.0.s8 %v4721
      %v4723 = vlaneseq
      %v4724 = vshrl.u32 %v4723, 7
      %v4725 = vsub.s32 %v4722, %v4724
      %v4726 = vrot.slane %v4718, %v4725
      %v4728 = vunpack.c.l.s4 1983009808
      %v4729 = vunpack.c.0.s8 %v4728
      %v4730 = vlaneseq
      %v4731 = vshrl.u32 %v4730, 7
      %v4732 = vsub.s32 %v4729, %v4731
      %v4733 = vrot.slane %v4719, %v4732
      %v4734 = vcombine.low %v4699, %v4707
      %v4735 = vcombine.high %v4699, %v4707
      %v4737 = vunpack.c.l.s4 1983009808
      %v4738 = vunpack.c.0.s8 %v4737
      %v4739 = vlaneseq
      %v4740 = vshrl.u32 %v4739, 7
      %v4741 = vsub.s32 %v4738, %v4740
      %v4742 = vrot.slane %v4734, %v4741
      %v4744 = vunpack.c.l.s4 1983009808
      %v4745 = vunpack.c.0.s8 %v4744
      %v4746 = vlaneseq
      %v4747 = vshrl.u32 %v4746, 7
      %v4748 = vsub.s32 %v4745, %v4747
      %v4749 = vrot.slane %v4735, %v4748
      %v4750 = vcombine.low %v4726, %v4742
      %v4751 = vcombine.high %v4726, %v4742
      %v4753 = vunpack.c.l.s4 1934713408
      %v4754 = vunpack.c.0.s8 %v4753
      %v4755 = vlaneseq
      %v4756 = vshrl.u32 %v4755, 7
      %v4757 = vsub.s32 %v4754, %v4756
      %v4758 = vrot.slane %v4750, %v4757
      %v4760 = vunpack.c.l.s4 1934713408
      %v4761 = vunpack.c.0.s8 %v4760
      %v4762 = vlaneseq
      %v4763 = vshrl.u32 %v4762, 7
      %v4764 = vsub.s32 %v4761, %v4763
      %v4765 = vrot.slane %v4751, %v4764
      %v4766 = vcombine.low %v4733, %v4749
      %v4767 = vcombine.high %v4733, %v4749
      %v4769 = vunpack.c.l.s4 1934713408
      %v4770 = vunpack.c.0.s8 %v4769
      %v4771 = vlaneseq
      %v4772 = vshrl.u32 %v4771, 7
      %v4773 = vsub.s32 %v4770, %v4772
      %v4774 = vrot.slane %v4766, %v4773
      %v4776 = vunpack.c.l.s4 1934713408
      %v4777 = vunpack.c.0.s8 %v4776
      %v4778 = vlaneseq
      %v4779 = vshrl.u32 %v4778, 7
      %v4780 = vsub.s32 %v4777, %v4779
      %v4781 = vrot.slane %v4767, %v4780
      %v4782 = vcombine.high %v4758, 0.0
      %v4783 = vcombine.high %v4765, 0.0
      %v4784 = vcombine.high %v4774, 0.0
      %v4785 = vcombine.high %v4781, 0.0
      %v4786 = vcombine.low %v4697, %v4705
      %v4787 = vcombine.high %v4697, %v4705
      %v4789 = vunpack.c.l.s4 1983009808
      %v4790 = vunpack.c.0.s8 %v4789
      %v4791 = vlaneseq
      %v4792 = vshrl.u32 %v4791, 7
      %v4793 = vsub.s32 %v4790, %v4792
      %v4794 = vrot.slane %v4786, %v4793
      %v4796 = vunpack.c.l.s4 1983009808
      %v4797 = vunpack.c.0.s8 %v4796
      %v4798 = vlaneseq
      %v4799 = vshrl.u32 %v4798, 7
      %v4800 = vsub.s32 %v4797, %v4799
      %v4801 = vrot.slane %v4787, %v4800
      %v4802 = vcombine.low %v4701, %v4709
      %v4803 = vcombine.high %v4701, %v4709
      %v4805 = vunpack.c.l.s4 1983009808
      %v4806 = vunpack.c.0.s8 %v4805
      %v4807 = vlaneseq
      %v4808 = vshrl.u32 %v4807, 7
      %v4809 = vsub.s32 %v4806, %v4808
      %v4810 = vrot.slane %v4802, %v4809
      %v4812 = vunpack.c.l.s4 1983009808
      %v4813 = vunpack.c.0.s8 %v4812
      %v4814 = vlaneseq
      %v4815 = vshrl.u32 %v4814, 7
      %v4816 = vsub.s32 %v4813, %v4815
      %v4817 = vrot.slane %v4803, %v4816
      %v4818 = vcombine.low %v4794, %v4810
      %v4819 = vcombine.high %v4794, %v4810
      %v4821 = vunpack.c.l.s4 1934713408
      %v4822 = vunpack.c.0.s8 %v4821
      %v4823 = vlaneseq
      %v4824 = vshrl.u32 %v4823, 7
      %v4825 = vsub.s32 %v4822, %v4824
      %v4826 = vrot.slane %v4818, %v4825
      %v4828 = vunpack.c.l.s4 1934713408
      %v4829 = vunpack.c.0.s8 %v4828
      %v4830 = vlaneseq
      %v4831 = vshrl.u32 %v4830, 7
      %v4832 = vsub.s32 %v4829, %v4831
      %v4833 = vrot.slane %v4819, %v4832
      %v4834 = vcombine.low %v4801, %v4817
      %v4835 = vcombine.high %v4801, %v4817
      %v4837 = vunpack.c.l.s4 1934713408
      %v4838 = vunpack.c.0.s8 %v4837
      %v4839 = vlaneseq
      %v4840 = vshrl.u32 %v4839, 7
      %v4841 = vsub.s32 %v4838, %v4840
      %v4842 = vrot.slane %v4834, %v4841
      %v4844 = vunpack.c.l.s4 1934713408
      %v4845 = vunpack.c.0.s8 %v4844
      %v4846 = vlaneseq
      %v4847 = vshrl.u32 %v4846, 7
      %v4848 = vsub.s32 %v4845, %v4847
      %v4849 = vrot.slane %v4835, %v4848
      %v4850 = vcombine.high %v4826, 0.0
      %v4851 = vcombine.high %v4833, 0.0
      %v4852 = vcombine.high %v4842, 0.0
      %v4853 = vcombine.high %v4849, 0.0
      %4855 = vrot.lane.b32.xlu0 %v4782, 16
      %v4856 = vpop.permute.xlu0 %4855
      %4859 = vrot.lane.b32.xlu0 %v4765, 32
      %v4860 = vpop.permute.xlu0 %4859
      %4863 = vrot.lane.b32.xlu0 %v4783, 48
      %v4864 = vpop.permute.xlu0 %4863
      %4867 = vrot.lane.b32.xlu0 %v4774, 64
      %v4868 = vpop.permute.xlu0 %4867
      %4871 = vrot.lane.b32.xlu0 %v4784, 80
      %v4872 = vpop.permute.xlu0 %4871
      %4875 = vrot.lane.b32.xlu0 %v4781, 96
      %v4876 = vpop.permute.xlu0 %4875
      %4879 = vrot.lane.b32.xlu0 %v4785, 112
      %v4880 = vpop.permute.xlu0 %4879
      %4883 = vrot.lane.b32.xlu0 %v4850, 16
      %v4884 = vpop.permute.xlu0 %4883
      %4887 = vrot.lane.b32.xlu0 %v4833, 32
      %v4888 = vpop.permute.xlu0 %4887
      %4891 = vrot.lane.b32.xlu0 %v4851, 48
      %v4892 = vpop.permute.xlu0 %4891
      %4895 = vrot.lane.b32.xlu0 %v4842, 64
      %v4896 = vpop.permute.xlu0 %4895
      %4899 = vrot.lane.b32.xlu0 %v4852, 80
      %v4900 = vpop.permute.xlu0 %4899
      %4903 = vrot.lane.b32.xlu0 %v4849, 96
      %v4904 = vpop.permute.xlu0 %4903
      %4907 = vrot.lane.b32.xlu0 %v4853, 112
      %v4908 = vpop.permute.xlu0 %4907
      %v4910 = vsel %vm534, %v4758, %v4856
      %v4911 = vsel %vm536, %v4910, %v4860
      %v4912 = vsel %vm538, %v4911, %v4864
      %v4913 = vsel %vm540, %v4912, %v4868
      %v4914 = vsel %vm542, %v4913, %v4872
      %v4915 = vsel %vm544, %v4914, %v4876
      %v4916 = vsel %vm546, %v4915, %v4880
      %v4917 = vsel %vm534, %v4826, %v4884
      %v4918 = vsel %vm536, %v4917, %v4888
      %v4919 = vsel %vm538, %v4918, %v4892
      %v4920 = vsel %vm540, %v4919, %v4896
      %v4921 = vsel %vm542, %v4920, %v4900
      %v4922 = vsel %vm544, %v4921, %v4904
      %v4923 = vsel %vm546, %v4922, %v4908
      %4924 = vrot.lane.b32.xlu0 %v4462, 126
      %v4925 = vpop.permute.xlu0 %4924
      %4926 = vrot.lane.b32.xlu0 %v4464, 126
      %v4927 = vpop.permute.xlu0 %4926
      %4928 = vrot.lane.b32.xlu0 %v4467, 126
      %v4929 = vpop.permute.xlu0 %4928
      %4930 = vrot.lane.b32.xlu0 %v4469, 126
      %v4931 = vpop.permute.xlu0 %4930
      %4932 = vrot.lane.b32.xlu0 %v4472, 126
      %v4933 = vpop.permute.xlu0 %4932
      %4934 = vrot.lane.b32.xlu0 %v4474, 126
      %v4935 = vpop.permute.xlu0 %4934
      %4936 = vrot.lane.b32.xlu0 %v4477, 126
      %v4937 = vpop.permute.xlu0 %4936
      %4938 = vrot.lane.b32.xlu0 %v4479, 126
      %v4939 = vpop.permute.xlu0 %4938
      %v4948 = vcombine.low %v4925, %v4933
      %v4949 = vcombine.high %v4925, %v4933
      %v4951 = vunpack.c.l.s4 1983009808
      %v4952 = vunpack.c.0.s8 %v4951
      %v4953 = vlaneseq
      %v4954 = vshrl.u32 %v4953, 7
      %v4955 = vsub.s32 %v4952, %v4954
      %v4956 = vrot.slane %v4948, %v4955
      %v4958 = vunpack.c.l.s4 1983009808
      %v4959 = vunpack.c.0.s8 %v4958
      %v4960 = vlaneseq
      %v4961 = vshrl.u32 %v4960, 7
      %v4962 = vsub.s32 %v4959, %v4961
      %v4963 = vrot.slane %v4949, %v4962
      %v4964 = vcombine.low %v4929, %v4937
      %v4965 = vcombine.high %v4929, %v4937
      %v4967 = vunpack.c.l.s4 1983009808
      %v4968 = vunpack.c.0.s8 %v4967
      %v4969 = vlaneseq
      %v4970 = vshrl.u32 %v4969, 7
      %v4971 = vsub.s32 %v4968, %v4970
      %v4972 = vrot.slane %v4964, %v4971
      %v4974 = vunpack.c.l.s4 1983009808
      %v4975 = vunpack.c.0.s8 %v4974
      %v4976 = vlaneseq
      %v4977 = vshrl.u32 %v4976, 7
      %v4978 = vsub.s32 %v4975, %v4977
      %v4979 = vrot.slane %v4965, %v4978
      %v4980 = vcombine.low %v4956, %v4972
      %v4981 = vcombine.high %v4956, %v4972
      %v4983 = vunpack.c.l.s4 1934713408
      %v4984 = vunpack.c.0.s8 %v4983
      %v4985 = vlaneseq
      %v4986 = vshrl.u32 %v4985, 7
      %v4987 = vsub.s32 %v4984, %v4986
      %v4988 = vrot.slane %v4980, %v4987
      %v4990 = vunpack.c.l.s4 1934713408
      %v4991 = vunpack.c.0.s8 %v4990
      %v4992 = vlaneseq
      %v4993 = vshrl.u32 %v4992, 7
      %v4994 = vsub.s32 %v4991, %v4993
      %v4995 = vrot.slane %v4981, %v4994
      %v4996 = vcombine.low %v4963, %v4979
      %v4997 = vcombine.high %v4963, %v4979
      %v4999 = vunpack.c.l.s4 1934713408
      %v5000 = vunpack.c.0.s8 %v4999
      %v5001 = vlaneseq
      %v5002 = vshrl.u32 %v5001, 7
      %v5003 = vsub.s32 %v5000, %v5002
      %v5004 = vrot.slane %v4996, %v5003
      %v5006 = vunpack.c.l.s4 1934713408
      %v5007 = vunpack.c.0.s8 %v5006
      %v5008 = vlaneseq
      %v5009 = vshrl.u32 %v5008, 7
      %v5010 = vsub.s32 %v5007, %v5009
      %v5011 = vrot.slane %v4997, %v5010
      %v5012 = vcombine.high %v4988, 0.0
      %v5013 = vcombine.high %v4995, 0.0
      %v5014 = vcombine.high %v5004, 0.0
      %v5015 = vcombine.high %v5011, 0.0
      %v5016 = vcombine.low %v4927, %v4935
      %v5017 = vcombine.high %v4927, %v4935
      %v5019 = vunpack.c.l.s4 1983009808
      %v5020 = vunpack.c.0.s8 %v5019
      %v5021 = vlaneseq
      %v5022 = vshrl.u32 %v5021, 7
      %v5023 = vsub.s32 %v5020, %v5022
      %v5024 = vrot.slane %v5016, %v5023
      %v5026 = vunpack.c.l.s4 1983009808
      %v5027 = vunpack.c.0.s8 %v5026
      %v5028 = vlaneseq
      %v5029 = vshrl.u32 %v5028, 7
      %v5030 = vsub.s32 %v5027, %v5029
      %v5031 = vrot.slane %v5017, %v5030
      %v5032 = vcombine.low %v4931, %v4939
      %v5033 = vcombine.high %v4931, %v4939
      %v5035 = vunpack.c.l.s4 1983009808
      %v5036 = vunpack.c.0.s8 %v5035
      %v5037 = vlaneseq
      %v5038 = vshrl.u32 %v5037, 7
      %v5039 = vsub.s32 %v5036, %v5038
      %v5040 = vrot.slane %v5032, %v5039
      %v5042 = vunpack.c.l.s4 1983009808
      %v5043 = vunpack.c.0.s8 %v5042
      %v5044 = vlaneseq
      %v5045 = vshrl.u32 %v5044, 7
      %v5046 = vsub.s32 %v5043, %v5045
      %v5047 = vrot.slane %v5033, %v5046
      %v5048 = vcombine.low %v5024, %v5040
      %v5049 = vcombine.high %v5024, %v5040
      %v5051 = vunpack.c.l.s4 1934713408
      %v5052 = vunpack.c.0.s8 %v5051
      %v5053 = vlaneseq
      %v5054 = vshrl.u32 %v5053, 7
      %v5055 = vsub.s32 %v5052, %v5054
      %v5056 = vrot.slane %v5048, %v5055
      %v5058 = vunpack.c.l.s4 1934713408
      %v5059 = vunpack.c.0.s8 %v5058
      %v5060 = vlaneseq
      %v5061 = vshrl.u32 %v5060, 7
      %v5062 = vsub.s32 %v5059, %v5061
      %v5063 = vrot.slane %v5049, %v5062
      %v5064 = vcombine.low %v5031, %v5047
      %v5065 = vcombine.high %v5031, %v5047
      %v5067 = vunpack.c.l.s4 1934713408
      %v5068 = vunpack.c.0.s8 %v5067
      %v5069 = vlaneseq
      %v5070 = vshrl.u32 %v5069, 7
      %v5071 = vsub.s32 %v5068, %v5070
      %v5072 = vrot.slane %v5064, %v5071
      %v5074 = vunpack.c.l.s4 1934713408
      %v5075 = vunpack.c.0.s8 %v5074
      %v5076 = vlaneseq
      %v5077 = vshrl.u32 %v5076, 7
      %v5078 = vsub.s32 %v5075, %v5077
      %v5079 = vrot.slane %v5065, %v5078
      %v5080 = vcombine.high %v5056, 0.0
      %v5081 = vcombine.high %v5063, 0.0
      %v5082 = vcombine.high %v5072, 0.0
      %v5083 = vcombine.high %v5079, 0.0
      %5085 = vrot.lane.b32.xlu0 %v5012, 16
      %v5086 = vpop.permute.xlu0 %5085
      %5089 = vrot.lane.b32.xlu0 %v4995, 32
      %v5090 = vpop.permute.xlu0 %5089
      %5093 = vrot.lane.b32.xlu0 %v5013, 48
      %v5094 = vpop.permute.xlu0 %5093
      %5097 = vrot.lane.b32.xlu0 %v5004, 64
      %v5098 = vpop.permute.xlu0 %5097
      %5101 = vrot.lane.b32.xlu0 %v5014, 80
      %v5102 = vpop.permute.xlu0 %5101
      %5105 = vrot.lane.b32.xlu0 %v5011, 96
      %v5106 = vpop.permute.xlu0 %5105
      %5109 = vrot.lane.b32.xlu0 %v5015, 112
      %v5110 = vpop.permute.xlu0 %5109
      %5113 = vrot.lane.b32.xlu0 %v5080, 16
      %v5114 = vpop.permute.xlu0 %5113
      %5117 = vrot.lane.b32.xlu0 %v5063, 32
      %v5118 = vpop.permute.xlu0 %5117
      %5121 = vrot.lane.b32.xlu0 %v5081, 48
      %v5122 = vpop.permute.xlu0 %5121
      %5125 = vrot.lane.b32.xlu0 %v5072, 64
      %v5126 = vpop.permute.xlu0 %5125
      %5129 = vrot.lane.b32.xlu0 %v5082, 80
      %v5130 = vpop.permute.xlu0 %5129
      %5133 = vrot.lane.b32.xlu0 %v5079, 96
      %v5134 = vpop.permute.xlu0 %5133
      %5137 = vrot.lane.b32.xlu0 %v5083, 112
      %v5138 = vpop.permute.xlu0 %5137
      %v5140 = vsel %vm534, %v4988, %v5086
      %v5141 = vsel %vm536, %v5140, %v5090
      %v5142 = vsel %vm538, %v5141, %v5094
      %v5143 = vsel %vm540, %v5142, %v5098
      %v5144 = vsel %vm542, %v5143, %v5102
      %v5145 = vsel %vm544, %v5144, %v5106
      %v5146 = vsel %vm546, %v5145, %v5110
      %v5147 = vsel %vm534, %v5056, %v5114
      %v5148 = vsel %vm536, %v5147, %v5118
      %v5149 = vsel %vm538, %v5148, %v5122
      %v5150 = vsel %vm540, %v5149, %v5126
      %v5151 = vsel %vm542, %v5150, %v5130
      %v5152 = vsel %vm544, %v5151, %v5134
      %v5153 = vsel %vm546, %v5152, %v5138
      %5154 = vrot.lane.b32.xlu0 %v4462, 125
      %v5155 = vpop.permute.xlu0 %5154
      %5156 = vrot.lane.b32.xlu0 %v4464, 125
      %v5157 = vpop.permute.xlu0 %5156
      %5158 = vrot.lane.b32.xlu0 %v4467, 125
      %v5159 = vpop.permute.xlu0 %5158
      %5160 = vrot.lane.b32.xlu0 %v4469, 125
      %v5161 = vpop.permute.xlu0 %5160
      %5162 = vrot.lane.b32.xlu0 %v4472, 125
      %v5163 = vpop.permute.xlu0 %5162
      %5164 = vrot.lane.b32.xlu0 %v4474, 125
      %v5165 = vpop.permute.xlu0 %5164
      %5166 = vrot.lane.b32.xlu0 %v4477, 125
      %v5167 = vpop.permute.xlu0 %5166
      %5168 = vrot.lane.b32.xlu0 %v4479, 125
      %v5169 = vpop.permute.xlu0 %5168
      %v5178 = vcombine.low %v5155, %v5163
      %v5179 = vcombine.high %v5155, %v5163
      %v5181 = vunpack.c.l.s4 1983009808
      %v5182 = vunpack.c.0.s8 %v5181
      %v5183 = vlaneseq
      %v5184 = vshrl.u32 %v5183, 7
      %v5185 = vsub.s32 %v5182, %v5184
      %v5186 = vrot.slane %v5178, %v5185
      %v5188 = vunpack.c.l.s4 1983009808
      %v5189 = vunpack.c.0.s8 %v5188
      %v5190 = vlaneseq
      %v5191 = vshrl.u32 %v5190, 7
      %v5192 = vsub.s32 %v5189, %v5191
      %v5193 = vrot.slane %v5179, %v5192
      %v5194 = vcombine.low %v5159, %v5167
      %v5195 = vcombine.high %v5159, %v5167
      %v5197 = vunpack.c.l.s4 1983009808
      %v5198 = vunpack.c.0.s8 %v5197
      %v5199 = vlaneseq
      %v5200 = vshrl.u32 %v5199, 7
      %v5201 = vsub.s32 %v5198, %v5200
      %v5202 = vrot.slane %v5194, %v5201
      %v5204 = vunpack.c.l.s4 1983009808
      %v5205 = vunpack.c.0.s8 %v5204
      %v5206 = vlaneseq
      %v5207 = vshrl.u32 %v5206, 7
      %v5208 = vsub.s32 %v5205, %v5207
      %v5209 = vrot.slane %v5195, %v5208
      %v5210 = vcombine.low %v5186, %v5202
      %v5211 = vcombine.high %v5186, %v5202
      %v5213 = vunpack.c.l.s4 1934713408
      %v5214 = vunpack.c.0.s8 %v5213
      %v5215 = vlaneseq
      %v5216 = vshrl.u32 %v5215, 7
      %v5217 = vsub.s32 %v5214, %v5216
      %v5218 = vrot.slane %v5210, %v5217
      %v5220 = vunpack.c.l.s4 1934713408
      %v5221 = vunpack.c.0.s8 %v5220
      %v5222 = vlaneseq
      %v5223 = vshrl.u32 %v5222, 7
      %v5224 = vsub.s32 %v5221, %v5223
      %v5225 = vrot.slane %v5211, %v5224
      %v5226 = vcombine.low %v5193, %v5209
      %v5227 = vcombine.high %v5193, %v5209
      %v5229 = vunpack.c.l.s4 1934713408
      %v5230 = vunpack.c.0.s8 %v5229
      %v5231 = vlaneseq
      %v5232 = vshrl.u32 %v5231, 7
      %v5233 = vsub.s32 %v5230, %v5232
      %v5234 = vrot.slane %v5226, %v5233
      %v5236 = vunpack.c.l.s4 1934713408
      %v5237 = vunpack.c.0.s8 %v5236
      %v5238 = vlaneseq
      %v5239 = vshrl.u32 %v5238, 7
      %v5240 = vsub.s32 %v5237, %v5239
      %v5241 = vrot.slane %v5227, %v5240
      %v5242 = vcombine.high %v5218, 0.0
      %v5243 = vcombine.high %v5225, 0.0
      %v5244 = vcombine.high %v5234, 0.0
      %v5245 = vcombine.high %v5241, 0.0
      %v5246 = vcombine.low %v5157, %v5165
      %v5247 = vcombine.high %v5157, %v5165
      %v5249 = vunpack.c.l.s4 1983009808
      %v5250 = vunpack.c.0.s8 %v5249
      %v5251 = vlaneseq
      %v5252 = vshrl.u32 %v5251, 7
      %v5253 = vsub.s32 %v5250, %v5252
      %v5254 = vrot.slane %v5246, %v5253
      %v5256 = vunpack.c.l.s4 1983009808
      %v5257 = vunpack.c.0.s8 %v5256
      %v5258 = vlaneseq
      %v5259 = vshrl.u32 %v5258, 7
      %v5260 = vsub.s32 %v5257, %v5259
      %v5261 = vrot.slane %v5247, %v5260
      %v5262 = vcombine.low %v5161, %v5169
      %v5263 = vcombine.high %v5161, %v5169
      %v5265 = vunpack.c.l.s4 1983009808
      %v5266 = vunpack.c.0.s8 %v5265
      %v5267 = vlaneseq
      %v5268 = vshrl.u32 %v5267, 7
      %v5269 = vsub.s32 %v5266, %v5268
      %v5270 = vrot.slane %v5262, %v5269
      %v5272 = vunpack.c.l.s4 1983009808
      %v5273 = vunpack.c.0.s8 %v5272
      %v5274 = vlaneseq
      %v5275 = vshrl.u32 %v5274, 7
      %v5276 = vsub.s32 %v5273, %v5275
      %v5277 = vrot.slane %v5263, %v5276
      %v5278 = vcombine.low %v5254, %v5270
      %v5279 = vcombine.high %v5254, %v5270
      %v5281 = vunpack.c.l.s4 1934713408
      %v5282 = vunpack.c.0.s8 %v5281
      %v5283 = vlaneseq
      %v5284 = vshrl.u32 %v5283, 7
      %v5285 = vsub.s32 %v5282, %v5284
      %v5286 = vrot.slane %v5278, %v5285
      %v5288 = vunpack.c.l.s4 1934713408
      %v5289 = vunpack.c.0.s8 %v5288
      %v5290 = vlaneseq
      %v5291 = vshrl.u32 %v5290, 7
      %v5292 = vsub.s32 %v5289, %v5291
      %v5293 = vrot.slane %v5279, %v5292
      %v5294 = vcombine.low %v5261, %v5277
      %v5295 = vcombine.high %v5261, %v5277
      %v5297 = vunpack.c.l.s4 1934713408
      %v5298 = vunpack.c.0.s8 %v5297
      %v5299 = vlaneseq
      %v5300 = vshrl.u32 %v5299, 7
      %v5301 = vsub.s32 %v5298, %v5300
      %v5302 = vrot.slane %v5294, %v5301
      %v5304 = vunpack.c.l.s4 1934713408
      %v5305 = vunpack.c.0.s8 %v5304
      %v5306 = vlaneseq
      %v5307 = vshrl.u32 %v5306, 7
      %v5308 = vsub.s32 %v5305, %v5307
      %v5309 = vrot.slane %v5295, %v5308
      %v5310 = vcombine.high %v5286, 0.0
      %v5311 = vcombine.high %v5293, 0.0
      %v5312 = vcombine.high %v5302, 0.0
      %v5313 = vcombine.high %v5309, 0.0
      %5315 = vrot.lane.b32.xlu0 %v5242, 16
      %v5316 = vpop.permute.xlu0 %5315
      %5319 = vrot.lane.b32.xlu0 %v5225, 32
      %v5320 = vpop.permute.xlu0 %5319
      %5323 = vrot.lane.b32.xlu0 %v5243, 48
      %v5324 = vpop.permute.xlu0 %5323
      %5327 = vrot.lane.b32.xlu0 %v5234, 64
      %v5328 = vpop.permute.xlu0 %5327
      %5331 = vrot.lane.b32.xlu0 %v5244, 80
      %v5332 = vpop.permute.xlu0 %5331
      %5335 = vrot.lane.b32.xlu0 %v5241, 96
      %v5336 = vpop.permute.xlu0 %5335
      %5339 = vrot.lane.b32.xlu0 %v5245, 112
      %v5340 = vpop.permute.xlu0 %5339
      %5343 = vrot.lane.b32.xlu0 %v5310, 16
      %v5344 = vpop.permute.xlu0 %5343
      %5347 = vrot.lane.b32.xlu0 %v5293, 32
      %v5348 = vpop.permute.xlu0 %5347
      %5351 = vrot.lane.b32.xlu0 %v5311, 48
      %v5352 = vpop.permute.xlu0 %5351
      %5355 = vrot.lane.b32.xlu0 %v5302, 64
      %v5356 = vpop.permute.xlu0 %5355
      %5359 = vrot.lane.b32.xlu0 %v5312, 80
      %v5360 = vpop.permute.xlu0 %5359
      %5363 = vrot.lane.b32.xlu0 %v5309, 96
      %v5364 = vpop.permute.xlu0 %5363
      %5367 = vrot.lane.b32.xlu0 %v5313, 112
      %v5368 = vpop.permute.xlu0 %5367
      %v5370 = vsel %vm534, %v5218, %v5316
      %v5371 = vsel %vm536, %v5370, %v5320
      %v5372 = vsel %vm538, %v5371, %v5324
      %v5373 = vsel %vm540, %v5372, %v5328
      %v5374 = vsel %vm542, %v5373, %v5332
      %v5375 = vsel %vm544, %v5374, %v5336
      %v5376 = vsel %vm546, %v5375, %v5340
      %v5377 = vsel %vm534, %v5286, %v5344
      %v5378 = vsel %vm536, %v5377, %v5348
      %v5379 = vsel %vm538, %v5378, %v5352
      %v5380 = vsel %vm540, %v5379, %v5356
      %v5381 = vsel %vm542, %v5380, %v5360
      %v5382 = vsel %vm544, %v5381, %v5364
      %v5383 = vsel %vm546, %v5382, %v5368
      %5384 = vrot.lane.b32.xlu0 %v4462, 124
      %v5385 = vpop.permute.xlu0 %5384
      %5386 = vrot.lane.b32.xlu0 %v4464, 124
      %v5387 = vpop.permute.xlu0 %5386
      %5388 = vrot.lane.b32.xlu0 %v4467, 124
      %v5389 = vpop.permute.xlu0 %5388
      %5390 = vrot.lane.b32.xlu0 %v4469, 124
      %v5391 = vpop.permute.xlu0 %5390
      %5392 = vrot.lane.b32.xlu0 %v4472, 124
      %v5393 = vpop.permute.xlu0 %5392
      %5394 = vrot.lane.b32.xlu0 %v4474, 124
      %v5395 = vpop.permute.xlu0 %5394
      %5396 = vrot.lane.b32.xlu0 %v4477, 124
      %v5397 = vpop.permute.xlu0 %5396
      %5398 = vrot.lane.b32.xlu0 %v4479, 124
      %v5399 = vpop.permute.xlu0 %5398
      %v5408 = vcombine.low %v5385, %v5393
      %v5409 = vcombine.high %v5385, %v5393
      %v5411 = vunpack.c.l.s4 1983009808
      %v5412 = vunpack.c.0.s8 %v5411
      %v5413 = vlaneseq
      %v5414 = vshrl.u32 %v5413, 7
      %v5415 = vsub.s32 %v5412, %v5414
      %v5416 = vrot.slane %v5408, %v5415
      %v5418 = vunpack.c.l.s4 1983009808
      %v5419 = vunpack.c.0.s8 %v5418
      %v5420 = vlaneseq
      %v5421 = vshrl.u32 %v5420, 7
      %v5422 = vsub.s32 %v5419, %v5421
      %v5423 = vrot.slane %v5409, %v5422
      %v5424 = vcombine.low %v5389, %v5397
      %v5425 = vcombine.high %v5389, %v5397
      %v5427 = vunpack.c.l.s4 1983009808
      %v5428 = vunpack.c.0.s8 %v5427
      %v5429 = vlaneseq
      %v5430 = vshrl.u32 %v5429, 7
      %v5431 = vsub.s32 %v5428, %v5430
      %v5432 = vrot.slane %v5424, %v5431
      %v5434 = vunpack.c.l.s4 1983009808
      %v5435 = vunpack.c.0.s8 %v5434
      %v5436 = vlaneseq
      %v5437 = vshrl.u32 %v5436, 7
      %v5438 = vsub.s32 %v5435, %v5437
      %v5439 = vrot.slane %v5425, %v5438
      %v5440 = vcombine.low %v5416, %v5432
      %v5441 = vcombine.high %v5416, %v5432
      %v5443 = vunpack.c.l.s4 1934713408
      %v5444 = vunpack.c.0.s8 %v5443
      %v5445 = vlaneseq
      %v5446 = vshrl.u32 %v5445, 7
      %v5447 = vsub.s32 %v5444, %v5446
      %v5448 = vrot.slane %v5440, %v5447
      %v5450 = vunpack.c.l.s4 1934713408
      %v5451 = vunpack.c.0.s8 %v5450
      %v5452 = vlaneseq
      %v5453 = vshrl.u32 %v5452, 7
      %v5454 = vsub.s32 %v5451, %v5453
      %v5455 = vrot.slane %v5441, %v5454
      %v5456 = vcombine.low %v5423, %v5439
      %v5457 = vcombine.high %v5423, %v5439
      %v5459 = vunpack.c.l.s4 1934713408
      %v5460 = vunpack.c.0.s8 %v5459
      %v5461 = vlaneseq
      %v5462 = vshrl.u32 %v5461, 7
      %v5463 = vsub.s32 %v5460, %v5462
      %v5464 = vrot.slane %v5456, %v5463
      %v5466 = vunpack.c.l.s4 1934713408
      %v5467 = vunpack.c.0.s8 %v5466
      %v5468 = vlaneseq
      %v5469 = vshrl.u32 %v5468, 7
      %v5470 = vsub.s32 %v5467, %v5469
      %v5471 = vrot.slane %v5457, %v5470
      %v5472 = vcombine.high %v5448, 0.0
      %v5473 = vcombine.high %v5455, 0.0
      %v5474 = vcombine.high %v5464, 0.0
      %v5475 = vcombine.high %v5471, 0.0
      %v5476 = vcombine.low %v5387, %v5395
      %v5477 = vcombine.high %v5387, %v5395
      %v5479 = vunpack.c.l.s4 1983009808
      %v5480 = vunpack.c.0.s8 %v5479
      %v5481 = vlaneseq
      %v5482 = vshrl.u32 %v5481, 7
      %v5483 = vsub.s32 %v5480, %v5482
      %v5484 = vrot.slane %v5476, %v5483
      %v5486 = vunpack.c.l.s4 1983009808
      %v5487 = vunpack.c.0.s8 %v5486
      %v5488 = vlaneseq
      %v5489 = vshrl.u32 %v5488, 7
      %v5490 = vsub.s32 %v5487, %v5489
      %v5491 = vrot.slane %v5477, %v5490
      %v5492 = vcombine.low %v5391, %v5399
      %v5493 = vcombine.high %v5391, %v5399
      %v5495 = vunpack.c.l.s4 1983009808
      %v5496 = vunpack.c.0.s8 %v5495
      %v5497 = vlaneseq
      %v5498 = vshrl.u32 %v5497, 7
      %v5499 = vsub.s32 %v5496, %v5498
      %v5500 = vrot.slane %v5492, %v5499
      %v5502 = vunpack.c.l.s4 1983009808
      %v5503 = vunpack.c.0.s8 %v5502
      %v5504 = vlaneseq
      %v5505 = vshrl.u32 %v5504, 7
      %v5506 = vsub.s32 %v5503, %v5505
      %v5507 = vrot.slane %v5493, %v5506
      %v5508 = vcombine.low %v5484, %v5500
      %v5509 = vcombine.high %v5484, %v5500
      %v5511 = vunpack.c.l.s4 1934713408
      %v5512 = vunpack.c.0.s8 %v5511
      %v5513 = vlaneseq
      %v5514 = vshrl.u32 %v5513, 7
      %v5515 = vsub.s32 %v5512, %v5514
      %v5516 = vrot.slane %v5508, %v5515
      %v5518 = vunpack.c.l.s4 1934713408
      %v5519 = vunpack.c.0.s8 %v5518
      %v5520 = vlaneseq
      %v5521 = vshrl.u32 %v5520, 7
      %v5522 = vsub.s32 %v5519, %v5521
      %v5523 = vrot.slane %v5509, %v5522
      %v5524 = vcombine.low %v5491, %v5507
      %v5525 = vcombine.high %v5491, %v5507
      %v5527 = vunpack.c.l.s4 1934713408
      %v5528 = vunpack.c.0.s8 %v5527
      %v5529 = vlaneseq
      %v5530 = vshrl.u32 %v5529, 7
      %v5531 = vsub.s32 %v5528, %v5530
      %v5532 = vrot.slane %v5524, %v5531
      %v5534 = vunpack.c.l.s4 1934713408
      %v5535 = vunpack.c.0.s8 %v5534
      %v5536 = vlaneseq
      %v5537 = vshrl.u32 %v5536, 7
      %v5538 = vsub.s32 %v5535, %v5537
      %v5539 = vrot.slane %v5525, %v5538
      %v5540 = vcombine.high %v5516, 0.0
      %v5541 = vcombine.high %v5523, 0.0
      %v5542 = vcombine.high %v5532, 0.0
      %v5543 = vcombine.high %v5539, 0.0
      %5545 = vrot.lane.b32.xlu0 %v5472, 16
      %v5546 = vpop.permute.xlu0 %5545
      %5549 = vrot.lane.b32.xlu0 %v5455, 32
      %v5550 = vpop.permute.xlu0 %5549
      %5553 = vrot.lane.b32.xlu0 %v5473, 48
      %v5554 = vpop.permute.xlu0 %5553
      %5557 = vrot.lane.b32.xlu0 %v5464, 64
      %v5558 = vpop.permute.xlu0 %5557
      %5561 = vrot.lane.b32.xlu0 %v5474, 80
      %v5562 = vpop.permute.xlu0 %5561
      %5565 = vrot.lane.b32.xlu0 %v5471, 96
      %v5566 = vpop.permute.xlu0 %5565
      %5569 = vrot.lane.b32.xlu0 %v5475, 112
      %v5570 = vpop.permute.xlu0 %5569
      %5573 = vrot.lane.b32.xlu0 %v5540, 16
      %v5574 = vpop.permute.xlu0 %5573
      %5577 = vrot.lane.b32.xlu0 %v5523, 32
      %v5578 = vpop.permute.xlu0 %5577
      %5581 = vrot.lane.b32.xlu0 %v5541, 48
      %v5582 = vpop.permute.xlu0 %5581
      %5585 = vrot.lane.b32.xlu0 %v5532, 64
      %v5586 = vpop.permute.xlu0 %5585
      %5589 = vrot.lane.b32.xlu0 %v5542, 80
      %v5590 = vpop.permute.xlu0 %5589
      %5593 = vrot.lane.b32.xlu0 %v5539, 96
      %v5594 = vpop.permute.xlu0 %5593
      %5597 = vrot.lane.b32.xlu0 %v5543, 112
      %v5598 = vpop.permute.xlu0 %5597
      %v5600 = vsel %vm534, %v5448, %v5546
      %v5601 = vsel %vm536, %v5600, %v5550
      %v5602 = vsel %vm538, %v5601, %v5554
      %v5603 = vsel %vm540, %v5602, %v5558
      %v5604 = vsel %vm542, %v5603, %v5562
      %v5605 = vsel %vm544, %v5604, %v5566
      %v5606 = vsel %vm546, %v5605, %v5570
      %v5607 = vsel %vm534, %v5516, %v5574
      %v5608 = vsel %vm536, %v5607, %v5578
      %v5609 = vsel %vm538, %v5608, %v5582
      %v5610 = vsel %vm540, %v5609, %v5586
      %v5611 = vsel %vm542, %v5610, %v5590
      %v5612 = vsel %vm544, %v5611, %v5594
      %v5613 = vsel %vm546, %v5612, %v5598
      %v5614 = vrot.slane %v3318, 2
      %v5615 = vrot.slane %v3296, 2
      %v5616 = vsel %vm2274, %v5614, %v5615
      %v5617 = vrot.slane %v3322, 2
      %v5618 = vsel %vm2274, %v5615, %v5617
      %v5619 = vrot.slane %v3319, 2
      %v5620 = vrot.slane %v3299, 2
      %v5621 = vsel %vm2274, %v5619, %v5620
      %v5622 = vrot.slane %v3323, 2
      %v5623 = vsel %vm2274, %v5620, %v5622
      %v5624 = vrot.slane %v3320, 2
      %v5625 = vrot.slane %v3302, 2
      %v5626 = vsel %vm2274, %v5624, %v5625
      %v5627 = vrot.slane %v3324, 2
      %v5628 = vsel %vm2274, %v5625, %v5627
      %v5629 = vrot.slane %v3321, 2
      %v5630 = vrot.slane %v3305, 2
      %v5631 = vsel %vm2274, %v5629, %v5630
      %v5632 = vrot.slane %v3325, 2
      %v5633 = vsel %vm2274, %v5630, %v5632
      %v5642 = vcombine.low %v5616, %v5626
      %v5643 = vcombine.high %v5616, %v5626
      %v5645 = vunpack.c.l.s4 1983009808
      %v5646 = vunpack.c.0.s8 %v5645
      %v5647 = vlaneseq
      %v5648 = vshrl.u32 %v5647, 7
      %v5649 = vsub.s32 %v5646, %v5648
      %v5650 = vrot.slane %v5642, %v5649
      %v5652 = vunpack.c.l.s4 1983009808
      %v5653 = vunpack.c.0.s8 %v5652
      %v5654 = vlaneseq
      %v5655 = vshrl.u32 %v5654, 7
      %v5656 = vsub.s32 %v5653, %v5655
      %v5657 = vrot.slane %v5643, %v5656
      %v5658 = vcombine.low %v5621, %v5631
      %v5659 = vcombine.high %v5621, %v5631
      %v5661 = vunpack.c.l.s4 1983009808
      %v5662 = vunpack.c.0.s8 %v5661
      %v5663 = vlaneseq
      %v5664 = vshrl.u32 %v5663, 7
      %v5665 = vsub.s32 %v5662, %v5664
      %v5666 = vrot.slane %v5658, %v5665
      %v5668 = vunpack.c.l.s4 1983009808
      %v5669 = vunpack.c.0.s8 %v5668
      %v5670 = vlaneseq
      %v5671 = vshrl.u32 %v5670, 7
      %v5672 = vsub.s32 %v5669, %v5671
      %v5673 = vrot.slane %v5659, %v5672
      %v5674 = vcombine.low %v5650, %v5666
      %v5675 = vcombine.high %v5650, %v5666
      %v5677 = vunpack.c.l.s4 1934713408
      %v5678 = vunpack.c.0.s8 %v5677
      %v5679 = vlaneseq
      %v5680 = vshrl.u32 %v5679, 7
      %v5681 = vsub.s32 %v5678, %v5680
      %v5682 = vrot.slane %v5674, %v5681
      %v5684 = vunpack.c.l.s4 1934713408
      %v5685 = vunpack.c.0.s8 %v5684
      %v5686 = vlaneseq
      %v5687 = vshrl.u32 %v5686, 7
      %v5688 = vsub.s32 %v5685, %v5687
      %v5689 = vrot.slane %v5675, %v5688
      %v5690 = vcombine.low %v5657, %v5673
      %v5691 = vcombine.high %v5657, %v5673
      %v5693 = vunpack.c.l.s4 1934713408
      %v5694 = vunpack.c.0.s8 %v5693
      %v5695 = vlaneseq
      %v5696 = vshrl.u32 %v5695, 7
      %v5697 = vsub.s32 %v5694, %v5696
      %v5698 = vrot.slane %v5690, %v5697
      %v5700 = vunpack.c.l.s4 1934713408
      %v5701 = vunpack.c.0.s8 %v5700
      %v5702 = vlaneseq
      %v5703 = vshrl.u32 %v5702, 7
      %v5704 = vsub.s32 %v5701, %v5703
      %v5705 = vrot.slane %v5691, %v5704
      %v5706 = vcombine.high %v5682, 0.0
      %v5707 = vcombine.high %v5689, 0.0
      %v5708 = vcombine.high %v5698, 0.0
      %v5709 = vcombine.high %v5705, 0.0
      %v5710 = vcombine.low %v5618, %v5628
      %v5711 = vcombine.high %v5618, %v5628
      %v5713 = vunpack.c.l.s4 1983009808
      %v5714 = vunpack.c.0.s8 %v5713
      %v5715 = vlaneseq
      %v5716 = vshrl.u32 %v5715, 7
      %v5717 = vsub.s32 %v5714, %v5716
      %v5718 = vrot.slane %v5710, %v5717
      %v5720 = vunpack.c.l.s4 1983009808
      %v5721 = vunpack.c.0.s8 %v5720
      %v5722 = vlaneseq
      %v5723 = vshrl.u32 %v5722, 7
      %v5724 = vsub.s32 %v5721, %v5723
      %v5725 = vrot.slane %v5711, %v5724
      %v5726 = vcombine.low %v5623, %v5633
      %v5727 = vcombine.high %v5623, %v5633
      %v5729 = vunpack.c.l.s4 1983009808
      %v5730 = vunpack.c.0.s8 %v5729
      %v5731 = vlaneseq
      %v5732 = vshrl.u32 %v5731, 7
      %v5733 = vsub.s32 %v5730, %v5732
      %v5734 = vrot.slane %v5726, %v5733
      %v5736 = vunpack.c.l.s4 1983009808
      %v5737 = vunpack.c.0.s8 %v5736
      %v5738 = vlaneseq
      %v5739 = vshrl.u32 %v5738, 7
      %v5740 = vsub.s32 %v5737, %v5739
      %v5741 = vrot.slane %v5727, %v5740
      %v5742 = vcombine.low %v5718, %v5734
      %v5743 = vcombine.high %v5718, %v5734
      %v5745 = vunpack.c.l.s4 1934713408
      %v5746 = vunpack.c.0.s8 %v5745
      %v5747 = vlaneseq
      %v5748 = vshrl.u32 %v5747, 7
      %v5749 = vsub.s32 %v5746, %v5748
      %v5750 = vrot.slane %v5742, %v5749
      %v5752 = vunpack.c.l.s4 1934713408
      %v5753 = vunpack.c.0.s8 %v5752
      %v5754 = vlaneseq
      %v5755 = vshrl.u32 %v5754, 7
      %v5756 = vsub.s32 %v5753, %v5755
      %v5757 = vrot.slane %v5743, %v5756
      %v5758 = vcombine.low %v5725, %v5741
      %v5759 = vcombine.high %v5725, %v5741
      %v5761 = vunpack.c.l.s4 1934713408
      %v5762 = vunpack.c.0.s8 %v5761
      %v5763 = vlaneseq
      %v5764 = vshrl.u32 %v5763, 7
      %v5765 = vsub.s32 %v5762, %v5764
      %v5766 = vrot.slane %v5758, %v5765
      %v5768 = vunpack.c.l.s4 1934713408
      %v5769 = vunpack.c.0.s8 %v5768
      %v5770 = vlaneseq
      %v5771 = vshrl.u32 %v5770, 7
      %v5772 = vsub.s32 %v5769, %v5771
      %v5773 = vrot.slane %v5759, %v5772
      %v5774 = vcombine.high %v5750, 0.0
      %v5775 = vcombine.high %v5757, 0.0
      %v5776 = vcombine.high %v5766, 0.0
      %v5777 = vcombine.high %v5773, 0.0
      %5779 = vrot.lane.b32.xlu0 %v5706, 16
      %v5780 = vpop.permute.xlu0 %5779
      %5783 = vrot.lane.b32.xlu0 %v5689, 32
      %v5784 = vpop.permute.xlu0 %5783
      %5787 = vrot.lane.b32.xlu0 %v5707, 48
      %v5788 = vpop.permute.xlu0 %5787
      %5791 = vrot.lane.b32.xlu0 %v5698, 64
      %v5792 = vpop.permute.xlu0 %5791
      %5795 = vrot.lane.b32.xlu0 %v5708, 80
      %v5796 = vpop.permute.xlu0 %5795
      %5799 = vrot.lane.b32.xlu0 %v5705, 96
      %v5800 = vpop.permute.xlu0 %5799
      %5803 = vrot.lane.b32.xlu0 %v5709, 112
      %v5804 = vpop.permute.xlu0 %5803
      %5807 = vrot.lane.b32.xlu0 %v5774, 16
      %v5808 = vpop.permute.xlu0 %5807
      %5811 = vrot.lane.b32.xlu0 %v5757, 32
      %v5812 = vpop.permute.xlu0 %5811
      %5815 = vrot.lane.b32.xlu0 %v5775, 48
      %v5816 = vpop.permute.xlu0 %5815
      %5819 = vrot.lane.b32.xlu0 %v5766, 64
      %v5820 = vpop.permute.xlu0 %5819
      %5823 = vrot.lane.b32.xlu0 %v5776, 80
      %v5824 = vpop.permute.xlu0 %5823
      %5827 = vrot.lane.b32.xlu0 %v5773, 96
      %v5828 = vpop.permute.xlu0 %5827
      %5831 = vrot.lane.b32.xlu0 %v5777, 112
      %v5832 = vpop.permute.xlu0 %5831
      %v5834 = vsel %vm534, %v5682, %v5780
      %v5835 = vsel %vm536, %v5834, %v5784
      %v5836 = vsel %vm538, %v5835, %v5788
      %v5837 = vsel %vm540, %v5836, %v5792
      %v5838 = vsel %vm542, %v5837, %v5796
      %v5839 = vsel %vm544, %v5838, %v5800
      %v5840 = vsel %vm546, %v5839, %v5804
      %v5841 = vsel %vm534, %v5750, %v5808
      %v5842 = vsel %vm536, %v5841, %v5812
      %v5843 = vsel %vm538, %v5842, %v5816
      %v5844 = vsel %vm540, %v5843, %v5820
      %v5845 = vsel %vm542, %v5844, %v5824
      %v5846 = vsel %vm544, %v5845, %v5828
      %v5847 = vsel %vm546, %v5846, %v5832
      %5848 = vrot.lane.b32.xlu0 %v5616, 127
      %v5849 = vpop.permute.xlu0 %5848
      %5850 = vrot.lane.b32.xlu0 %v5618, 127
      %v5851 = vpop.permute.xlu0 %5850
      %5852 = vrot.lane.b32.xlu0 %v5621, 127
      %v5853 = vpop.permute.xlu0 %5852
      %5854 = vrot.lane.b32.xlu0 %v5623, 127
      %v5855 = vpop.permute.xlu0 %5854
      %5856 = vrot.lane.b32.xlu0 %v5626, 127
      %v5857 = vpop.permute.xlu0 %5856
      %5858 = vrot.lane.b32.xlu0 %v5628, 127
      %v5859 = vpop.permute.xlu0 %5858
      %5860 = vrot.lane.b32.xlu0 %v5631, 127
      %v5861 = vpop.permute.xlu0 %5860
      %5862 = vrot.lane.b32.xlu0 %v5633, 127
      %v5863 = vpop.permute.xlu0 %5862
      %v5872 = vcombine.low %v5849, %v5857
      %v5873 = vcombine.high %v5849, %v5857
      %v5875 = vunpack.c.l.s4 1983009808
      %v5876 = vunpack.c.0.s8 %v5875
      %v5877 = vlaneseq
      %v5878 = vshrl.u32 %v5877, 7
      %v5879 = vsub.s32 %v5876, %v5878
      %v5880 = vrot.slane %v5872, %v5879
      %v5882 = vunpack.c.l.s4 1983009808
      %v5883 = vunpack.c.0.s8 %v5882
      %v5884 = vlaneseq
      %v5885 = vshrl.u32 %v5884, 7
      %v5886 = vsub.s32 %v5883, %v5885
      %v5887 = vrot.slane %v5873, %v5886
      %v5888 = vcombine.low %v5853, %v5861
      %v5889 = vcombine.high %v5853, %v5861
      %v5891 = vunpack.c.l.s4 1983009808
      %v5892 = vunpack.c.0.s8 %v5891
      %v5893 = vlaneseq
      %v5894 = vshrl.u32 %v5893, 7
      %v5895 = vsub.s32 %v5892, %v5894
      %v5896 = vrot.slane %v5888, %v5895
      %v5898 = vunpack.c.l.s4 1983009808
      %v5899 = vunpack.c.0.s8 %v5898
      %v5900 = vlaneseq
      %v5901 = vshrl.u32 %v5900, 7
      %v5902 = vsub.s32 %v5899, %v5901
      %v5903 = vrot.slane %v5889, %v5902
      %v5904 = vcombine.low %v5880, %v5896
      %v5905 = vcombine.high %v5880, %v5896
      %v5907 = vunpack.c.l.s4 1934713408
      %v5908 = vunpack.c.0.s8 %v5907
      %v5909 = vlaneseq
      %v5910 = vshrl.u32 %v5909, 7
      %v5911 = vsub.s32 %v5908, %v5910
      %v5912 = vrot.slane %v5904, %v5911
      %v5914 = vunpack.c.l.s4 1934713408
      %v5915 = vunpack.c.0.s8 %v5914
      %v5916 = vlaneseq
      %v5917 = vshrl.u32 %v5916, 7
      %v5918 = vsub.s32 %v5915, %v5917
      %v5919 = vrot.slane %v5905, %v5918
      %v5920 = vcombine.low %v5887, %v5903
      %v5921 = vcombine.high %v5887, %v5903
      %v5923 = vunpack.c.l.s4 1934713408
      %v5924 = vunpack.c.0.s8 %v5923
      %v5925 = vlaneseq
      %v5926 = vshrl.u32 %v5925, 7
      %v5927 = vsub.s32 %v5924, %v5926
      %v5928 = vrot.slane %v5920, %v5927
      %v5930 = vunpack.c.l.s4 1934713408
      %v5931 = vunpack.c.0.s8 %v5930
      %v5932 = vlaneseq
      %v5933 = vshrl.u32 %v5932, 7
      %v5934 = vsub.s32 %v5931, %v5933
      %v5935 = vrot.slane %v5921, %v5934
      %v5936 = vcombine.high %v5912, 0.0
      %v5937 = vcombine.high %v5919, 0.0
      %v5938 = vcombine.high %v5928, 0.0
      %v5939 = vcombine.high %v5935, 0.0
      %v5940 = vcombine.low %v5851, %v5859
      %v5941 = vcombine.high %v5851, %v5859
      %v5943 = vunpack.c.l.s4 1983009808
      %v5944 = vunpack.c.0.s8 %v5943
      %v5945 = vlaneseq
      %v5946 = vshrl.u32 %v5945, 7
      %v5947 = vsub.s32 %v5944, %v5946
      %v5948 = vrot.slane %v5940, %v5947
      %v5950 = vunpack.c.l.s4 1983009808
      %v5951 = vunpack.c.0.s8 %v5950
      %v5952 = vlaneseq
      %v5953 = vshrl.u32 %v5952, 7
      %v5954 = vsub.s32 %v5951, %v5953
      %v5955 = vrot.slane %v5941, %v5954
      %v5956 = vcombine.low %v5855, %v5863
      %v5957 = vcombine.high %v5855, %v5863
      %v5959 = vunpack.c.l.s4 1983009808
      %v5960 = vunpack.c.0.s8 %v5959
      %v5961 = vlaneseq
      %v5962 = vshrl.u32 %v5961, 7
      %v5963 = vsub.s32 %v5960, %v5962
      %v5964 = vrot.slane %v5956, %v5963
      %v5966 = vunpack.c.l.s4 1983009808
      %v5967 = vunpack.c.0.s8 %v5966
      %v5968 = vlaneseq
      %v5969 = vshrl.u32 %v5968, 7
      %v5970 = vsub.s32 %v5967, %v5969
      %v5971 = vrot.slane %v5957, %v5970
      %v5972 = vcombine.low %v5948, %v5964
      %v5973 = vcombine.high %v5948, %v5964
      %v5975 = vunpack.c.l.s4 1934713408
      %v5976 = vunpack.c.0.s8 %v5975
      %v5977 = vlaneseq
      %v5978 = vshrl.u32 %v5977, 7
      %v5979 = vsub.s32 %v5976, %v5978
      %v5980 = vrot.slane %v5972, %v5979
      %v5982 = vunpack.c.l.s4 1934713408
      %v5983 = vunpack.c.0.s8 %v5982
      %v5984 = vlaneseq
      %v5985 = vshrl.u32 %v5984, 7
      %v5986 = vsub.s32 %v5983, %v5985
      %v5987 = vrot.slane %v5973, %v5986
      %v5988 = vcombine.low %v5955, %v5971
      %v5989 = vcombine.high %v5955, %v5971
      %v5991 = vunpack.c.l.s4 1934713408
      %v5992 = vunpack.c.0.s8 %v5991
      %v5993 = vlaneseq
      %v5994 = vshrl.u32 %v5993, 7
      %v5995 = vsub.s32 %v5992, %v5994
      %v5996 = vrot.slane %v5988, %v5995
      %v5998 = vunpack.c.l.s4 1934713408
      %v5999 = vunpack.c.0.s8 %v5998
      %v6000 = vlaneseq
      %v6001 = vshrl.u32 %v6000, 7
      %v6002 = vsub.s32 %v5999, %v6001
      %v6003 = vrot.slane %v5989, %v6002
      %v6004 = vcombine.high %v5980, 0.0
      %v6005 = vcombine.high %v5987, 0.0
      %v6006 = vcombine.high %v5996, 0.0
      %v6007 = vcombine.high %v6003, 0.0
      %6009 = vrot.lane.b32.xlu0 %v5936, 16
      %v6010 = vpop.permute.xlu0 %6009
      %6013 = vrot.lane.b32.xlu0 %v5919, 32
      %v6014 = vpop.permute.xlu0 %6013
      %6017 = vrot.lane.b32.xlu0 %v5937, 48
      %v6018 = vpop.permute.xlu0 %6017
      %6021 = vrot.lane.b32.xlu0 %v5928, 64
      %v6022 = vpop.permute.xlu0 %6021
      %6025 = vrot.lane.b32.xlu0 %v5938, 80
      %v6026 = vpop.permute.xlu0 %6025
      %6029 = vrot.lane.b32.xlu0 %v5935, 96
      %v6030 = vpop.permute.xlu0 %6029
      %6033 = vrot.lane.b32.xlu0 %v5939, 112
      %v6034 = vpop.permute.xlu0 %6033
      %6037 = vrot.lane.b32.xlu0 %v6004, 16
      %v6038 = vpop.permute.xlu0 %6037
      %6041 = vrot.lane.b32.xlu0 %v5987, 32
      %v6042 = vpop.permute.xlu0 %6041
      %6045 = vrot.lane.b32.xlu0 %v6005, 48
      %v6046 = vpop.permute.xlu0 %6045
      %6049 = vrot.lane.b32.xlu0 %v5996, 64
      %v6050 = vpop.permute.xlu0 %6049
      %6053 = vrot.lane.b32.xlu0 %v6006, 80
      %v6054 = vpop.permute.xlu0 %6053
      %6057 = vrot.lane.b32.xlu0 %v6003, 96
      %v6058 = vpop.permute.xlu0 %6057
      %6061 = vrot.lane.b32.xlu0 %v6007, 112
      %v6062 = vpop.permute.xlu0 %6061
      %v6064 = vsel %vm534, %v5912, %v6010
      %v6065 = vsel %vm536, %v6064, %v6014
      %v6066 = vsel %vm538, %v6065, %v6018
      %v6067 = vsel %vm540, %v6066, %v6022
      %v6068 = vsel %vm542, %v6067, %v6026
      %v6069 = vsel %vm544, %v6068, %v6030
      %v6070 = vsel %vm546, %v6069, %v6034
      %v6071 = vsel %vm534, %v5980, %v6038
      %v6072 = vsel %vm536, %v6071, %v6042
      %v6073 = vsel %vm538, %v6072, %v6046
      %v6074 = vsel %vm540, %v6073, %v6050
      %v6075 = vsel %vm542, %v6074, %v6054
      %v6076 = vsel %vm544, %v6075, %v6058
      %v6077 = vsel %vm546, %v6076, %v6062
      %6078 = vrot.lane.b32.xlu0 %v5616, 126
      %v6079 = vpop.permute.xlu0 %6078
      %6080 = vrot.lane.b32.xlu0 %v5618, 126
      %v6081 = vpop.permute.xlu0 %6080
      %6082 = vrot.lane.b32.xlu0 %v5621, 126
      %v6083 = vpop.permute.xlu0 %6082
      %6084 = vrot.lane.b32.xlu0 %v5623, 126
      %v6085 = vpop.permute.xlu0 %6084
      %6086 = vrot.lane.b32.xlu0 %v5626, 126
      %v6087 = vpop.permute.xlu0 %6086
      %6088 = vrot.lane.b32.xlu0 %v5628, 126
      %v6089 = vpop.permute.xlu0 %6088
      %6090 = vrot.lane.b32.xlu0 %v5631, 126
      %v6091 = vpop.permute.xlu0 %6090
      %6092 = vrot.lane.b32.xlu0 %v5633, 126
      %v6093 = vpop.permute.xlu0 %6092
      %v6102 = vcombine.low %v6079, %v6087
      %v6103 = vcombine.high %v6079, %v6087
      %v6105 = vunpack.c.l.s4 1983009808
      %v6106 = vunpack.c.0.s8 %v6105
      %v6107 = vlaneseq
      %v6108 = vshrl.u32 %v6107, 7
      %v6109 = vsub.s32 %v6106, %v6108
      %v6110 = vrot.slane %v6102, %v6109
      %v6112 = vunpack.c.l.s4 1983009808
      %v6113 = vunpack.c.0.s8 %v6112
      %v6114 = vlaneseq
      %v6115 = vshrl.u32 %v6114, 7
      %v6116 = vsub.s32 %v6113, %v6115
      %v6117 = vrot.slane %v6103, %v6116
      %v6118 = vcombine.low %v6083, %v6091
      %v6119 = vcombine.high %v6083, %v6091
      %v6121 = vunpack.c.l.s4 1983009808
      %v6122 = vunpack.c.0.s8 %v6121
      %v6123 = vlaneseq
      %v6124 = vshrl.u32 %v6123, 7
      %v6125 = vsub.s32 %v6122, %v6124
      %v6126 = vrot.slane %v6118, %v6125
      %v6128 = vunpack.c.l.s4 1983009808
      %v6129 = vunpack.c.0.s8 %v6128
      %v6130 = vlaneseq
      %v6131 = vshrl.u32 %v6130, 7
      %v6132 = vsub.s32 %v6129, %v6131
      %v6133 = vrot.slane %v6119, %v6132
      %v6134 = vcombine.low %v6110, %v6126
      %v6135 = vcombine.high %v6110, %v6126
      %v6137 = vunpack.c.l.s4 1934713408
      %v6138 = vunpack.c.0.s8 %v6137
      %v6139 = vlaneseq
      %v6140 = vshrl.u32 %v6139, 7
      %v6141 = vsub.s32 %v6138, %v6140
      %v6142 = vrot.slane %v6134, %v6141
      %v6144 = vunpack.c.l.s4 1934713408
      %v6145 = vunpack.c.0.s8 %v6144
      %v6146 = vlaneseq
      %v6147 = vshrl.u32 %v6146, 7
      %v6148 = vsub.s32 %v6145, %v6147
      %v6149 = vrot.slane %v6135, %v6148
      %v6150 = vcombine.low %v6117, %v6133
      %v6151 = vcombine.high %v6117, %v6133
      %v6153 = vunpack.c.l.s4 1934713408
      %v6154 = vunpack.c.0.s8 %v6153
      %v6155 = vlaneseq
      %v6156 = vshrl.u32 %v6155, 7
      %v6157 = vsub.s32 %v6154, %v6156
      %v6158 = vrot.slane %v6150, %v6157
      %v6160 = vunpack.c.l.s4 1934713408
      %v6161 = vunpack.c.0.s8 %v6160
      %v6162 = vlaneseq
      %v6163 = vshrl.u32 %v6162, 7
      %v6164 = vsub.s32 %v6161, %v6163
      %v6165 = vrot.slane %v6151, %v6164
      %v6166 = vcombine.high %v6142, 0.0
      %v6167 = vcombine.high %v6149, 0.0
      %v6168 = vcombine.high %v6158, 0.0
      %v6169 = vcombine.high %v6165, 0.0
      %v6170 = vcombine.low %v6081, %v6089
      %v6171 = vcombine.high %v6081, %v6089
      %v6173 = vunpack.c.l.s4 1983009808
      %v6174 = vunpack.c.0.s8 %v6173
      %v6175 = vlaneseq
      %v6176 = vshrl.u32 %v6175, 7
      %v6177 = vsub.s32 %v6174, %v6176
      %v6178 = vrot.slane %v6170, %v6177
      %v6180 = vunpack.c.l.s4 1983009808
      %v6181 = vunpack.c.0.s8 %v6180
      %v6182 = vlaneseq
      %v6183 = vshrl.u32 %v6182, 7
      %v6184 = vsub.s32 %v6181, %v6183
      %v6185 = vrot.slane %v6171, %v6184
      %v6186 = vcombine.low %v6085, %v6093
      %v6187 = vcombine.high %v6085, %v6093
      %v6189 = vunpack.c.l.s4 1983009808
      %v6190 = vunpack.c.0.s8 %v6189
      %v6191 = vlaneseq
      %v6192 = vshrl.u32 %v6191, 7
      %v6193 = vsub.s32 %v6190, %v6192
      %v6194 = vrot.slane %v6186, %v6193
      %v6196 = vunpack.c.l.s4 1983009808
      %v6197 = vunpack.c.0.s8 %v6196
      %v6198 = vlaneseq
      %v6199 = vshrl.u32 %v6198, 7
      %v6200 = vsub.s32 %v6197, %v6199
      %v6201 = vrot.slane %v6187, %v6200
      %v6202 = vcombine.low %v6178, %v6194
      %v6203 = vcombine.high %v6178, %v6194
      %v6205 = vunpack.c.l.s4 1934713408
      %v6206 = vunpack.c.0.s8 %v6205
      %v6207 = vlaneseq
      %v6208 = vshrl.u32 %v6207, 7
      %v6209 = vsub.s32 %v6206, %v6208
      %v6210 = vrot.slane %v6202, %v6209
      %v6212 = vunpack.c.l.s4 1934713408
      %v6213 = vunpack.c.0.s8 %v6212
      %v6214 = vlaneseq
      %v6215 = vshrl.u32 %v6214, 7
      %v6216 = vsub.s32 %v6213, %v6215
      %v6217 = vrot.slane %v6203, %v6216
      %v6218 = vcombine.low %v6185, %v6201
      %v6219 = vcombine.high %v6185, %v6201
      %v6221 = vunpack.c.l.s4 1934713408
      %v6222 = vunpack.c.0.s8 %v6221
      %v6223 = vlaneseq
      %v6224 = vshrl.u32 %v6223, 7
      %v6225 = vsub.s32 %v6222, %v6224
      %v6226 = vrot.slane %v6218, %v6225
      %v6228 = vunpack.c.l.s4 1934713408
      %v6229 = vunpack.c.0.s8 %v6228
      %v6230 = vlaneseq
      %v6231 = vshrl.u32 %v6230, 7
      %v6232 = vsub.s32 %v6229, %v6231
      %v6233 = vrot.slane %v6219, %v6232
      %v6234 = vcombine.high %v6210, 0.0
      %v6235 = vcombine.high %v6217, 0.0
      %v6236 = vcombine.high %v6226, 0.0
      %v6237 = vcombine.high %v6233, 0.0
      %6239 = vrot.lane.b32.xlu0 %v6166, 16
      %v6240 = vpop.permute.xlu0 %6239
      %6243 = vrot.lane.b32.xlu0 %v6149, 32
      %v6244 = vpop.permute.xlu0 %6243
      %6247 = vrot.lane.b32.xlu0 %v6167, 48
      %v6248 = vpop.permute.xlu0 %6247
      %6251 = vrot.lane.b32.xlu0 %v6158, 64
      %v6252 = vpop.permute.xlu0 %6251
      %6255 = vrot.lane.b32.xlu0 %v6168, 80
      %v6256 = vpop.permute.xlu0 %6255
      %6259 = vrot.lane.b32.xlu0 %v6165, 96
      %v6260 = vpop.permute.xlu0 %6259
      %6263 = vrot.lane.b32.xlu0 %v6169, 112
      %v6264 = vpop.permute.xlu0 %6263
      %6267 = vrot.lane.b32.xlu0 %v6234, 16
      %v6268 = vpop.permute.xlu0 %6267
      %6271 = vrot.lane.b32.xlu0 %v6217, 32
      %v6272 = vpop.permute.xlu0 %6271
      %6275 = vrot.lane.b32.xlu0 %v6235, 48
      %v6276 = vpop.permute.xlu0 %6275
      %6279 = vrot.lane.b32.xlu0 %v6226, 64
      %v6280 = vpop.permute.xlu0 %6279
      %6283 = vrot.lane.b32.xlu0 %v6236, 80
      %v6284 = vpop.permute.xlu0 %6283
      %6287 = vrot.lane.b32.xlu0 %v6233, 96
      %v6288 = vpop.permute.xlu0 %6287
      %6291 = vrot.lane.b32.xlu0 %v6237, 112
      %v6292 = vpop.permute.xlu0 %6291
      %v6294 = vsel %vm534, %v6142, %v6240
      %v6295 = vsel %vm536, %v6294, %v6244
      %v6296 = vsel %vm538, %v6295, %v6248
      %v6297 = vsel %vm540, %v6296, %v6252
      %v6298 = vsel %vm542, %v6297, %v6256
      %v6299 = vsel %vm544, %v6298, %v6260
      %v6300 = vsel %vm546, %v6299, %v6264
      %v6301 = vsel %vm534, %v6210, %v6268
      %v6302 = vsel %vm536, %v6301, %v6272
      %v6303 = vsel %vm538, %v6302, %v6276
      %v6304 = vsel %vm540, %v6303, %v6280
      %v6305 = vsel %vm542, %v6304, %v6284
      %v6306 = vsel %vm544, %v6305, %v6288
      %v6307 = vsel %vm546, %v6306, %v6292
      %6308 = vrot.lane.b32.xlu0 %v5616, 125
      %v6309 = vpop.permute.xlu0 %6308
      %6310 = vrot.lane.b32.xlu0 %v5618, 125
      %v6311 = vpop.permute.xlu0 %6310
      %6312 = vrot.lane.b32.xlu0 %v5621, 125
      %v6313 = vpop.permute.xlu0 %6312
      %6314 = vrot.lane.b32.xlu0 %v5623, 125
      %v6315 = vpop.permute.xlu0 %6314
      %6316 = vrot.lane.b32.xlu0 %v5626, 125
      %v6317 = vpop.permute.xlu0 %6316
      %6318 = vrot.lane.b32.xlu0 %v5628, 125
      %v6319 = vpop.permute.xlu0 %6318
      %6320 = vrot.lane.b32.xlu0 %v5631, 125
      %v6321 = vpop.permute.xlu0 %6320
      %6322 = vrot.lane.b32.xlu0 %v5633, 125
      %v6323 = vpop.permute.xlu0 %6322
      %v6332 = vcombine.low %v6309, %v6317
      %v6333 = vcombine.high %v6309, %v6317
      %v6335 = vunpack.c.l.s4 1983009808
      %v6336 = vunpack.c.0.s8 %v6335
      %v6337 = vlaneseq
      %v6338 = vshrl.u32 %v6337, 7
      %v6339 = vsub.s32 %v6336, %v6338
      %v6340 = vrot.slane %v6332, %v6339
      %v6342 = vunpack.c.l.s4 1983009808
      %v6343 = vunpack.c.0.s8 %v6342
      %v6344 = vlaneseq
      %v6345 = vshrl.u32 %v6344, 7
      %v6346 = vsub.s32 %v6343, %v6345
      %v6347 = vrot.slane %v6333, %v6346
      %v6348 = vcombine.low %v6313, %v6321
      %v6349 = vcombine.high %v6313, %v6321
      %v6351 = vunpack.c.l.s4 1983009808
      %v6352 = vunpack.c.0.s8 %v6351
      %v6353 = vlaneseq
      %v6354 = vshrl.u32 %v6353, 7
      %v6355 = vsub.s32 %v6352, %v6354
      %v6356 = vrot.slane %v6348, %v6355
      %v6358 = vunpack.c.l.s4 1983009808
      %v6359 = vunpack.c.0.s8 %v6358
      %v6360 = vlaneseq
      %v6361 = vshrl.u32 %v6360, 7
      %v6362 = vsub.s32 %v6359, %v6361
      %v6363 = vrot.slane %v6349, %v6362
      %v6364 = vcombine.low %v6340, %v6356
      %v6365 = vcombine.high %v6340, %v6356
      %v6367 = vunpack.c.l.s4 1934713408
      %v6368 = vunpack.c.0.s8 %v6367
      %v6369 = vlaneseq
      %v6370 = vshrl.u32 %v6369, 7
      %v6371 = vsub.s32 %v6368, %v6370
      %v6372 = vrot.slane %v6364, %v6371
      %v6374 = vunpack.c.l.s4 1934713408
      %v6375 = vunpack.c.0.s8 %v6374
      %v6376 = vlaneseq
      %v6377 = vshrl.u32 %v6376, 7
      %v6378 = vsub.s32 %v6375, %v6377
      %v6379 = vrot.slane %v6365, %v6378
      %v6380 = vcombine.low %v6347, %v6363
      %v6381 = vcombine.high %v6347, %v6363
      %v6383 = vunpack.c.l.s4 1934713408
      %v6384 = vunpack.c.0.s8 %v6383
      %v6385 = vlaneseq
      %v6386 = vshrl.u32 %v6385, 7
      %v6387 = vsub.s32 %v6384, %v6386
      %v6388 = vrot.slane %v6380, %v6387
      %v6390 = vunpack.c.l.s4 1934713408
      %v6391 = vunpack.c.0.s8 %v6390
      %v6392 = vlaneseq
      %v6393 = vshrl.u32 %v6392, 7
      %v6394 = vsub.s32 %v6391, %v6393
      %v6395 = vrot.slane %v6381, %v6394
      %v6396 = vcombine.high %v6372, 0.0
      %v6397 = vcombine.high %v6379, 0.0
      %v6398 = vcombine.high %v6388, 0.0
      %v6399 = vcombine.high %v6395, 0.0
      %v6400 = vcombine.low %v6311, %v6319
      %v6401 = vcombine.high %v6311, %v6319
      %v6403 = vunpack.c.l.s4 1983009808
      %v6404 = vunpack.c.0.s8 %v6403
      %v6405 = vlaneseq
      %v6406 = vshrl.u32 %v6405, 7
      %v6407 = vsub.s32 %v6404, %v6406
      %v6408 = vrot.slane %v6400, %v6407
      %v6410 = vunpack.c.l.s4 1983009808
      %v6411 = vunpack.c.0.s8 %v6410
      %v6412 = vlaneseq
      %v6413 = vshrl.u32 %v6412, 7
      %v6414 = vsub.s32 %v6411, %v6413
      %v6415 = vrot.slane %v6401, %v6414
      %v6416 = vcombine.low %v6315, %v6323
      %v6417 = vcombine.high %v6315, %v6323
      %v6419 = vunpack.c.l.s4 1983009808
      %v6420 = vunpack.c.0.s8 %v6419
      %v6421 = vlaneseq
      %v6422 = vshrl.u32 %v6421, 7
      %v6423 = vsub.s32 %v6420, %v6422
      %v6424 = vrot.slane %v6416, %v6423
      %v6426 = vunpack.c.l.s4 1983009808
      %v6427 = vunpack.c.0.s8 %v6426
      %v6428 = vlaneseq
      %v6429 = vshrl.u32 %v6428, 7
      %v6430 = vsub.s32 %v6427, %v6429
      %v6431 = vrot.slane %v6417, %v6430
      %v6432 = vcombine.low %v6408, %v6424
      %v6433 = vcombine.high %v6408, %v6424
      %v6435 = vunpack.c.l.s4 1934713408
      %v6436 = vunpack.c.0.s8 %v6435
      %v6437 = vlaneseq
      %v6438 = vshrl.u32 %v6437, 7
      %v6439 = vsub.s32 %v6436, %v6438
      %v6440 = vrot.slane %v6432, %v6439
      %v6442 = vunpack.c.l.s4 1934713408
      %v6443 = vunpack.c.0.s8 %v6442
      %v6444 = vlaneseq
      %v6445 = vshrl.u32 %v6444, 7
      %v6446 = vsub.s32 %v6443, %v6445
      %v6447 = vrot.slane %v6433, %v6446
      %v6448 = vcombine.low %v6415, %v6431
      %v6449 = vcombine.high %v6415, %v6431
      %v6451 = vunpack.c.l.s4 1934713408
      %v6452 = vunpack.c.0.s8 %v6451
      %v6453 = vlaneseq
      %v6454 = vshrl.u32 %v6453, 7
      %v6455 = vsub.s32 %v6452, %v6454
      %v6456 = vrot.slane %v6448, %v6455
      %v6458 = vunpack.c.l.s4 1934713408
      %v6459 = vunpack.c.0.s8 %v6458
      %v6460 = vlaneseq
      %v6461 = vshrl.u32 %v6460, 7
      %v6462 = vsub.s32 %v6459, %v6461
      %v6463 = vrot.slane %v6449, %v6462
      %v6464 = vcombine.high %v6440, 0.0
      %v6465 = vcombine.high %v6447, 0.0
      %v6466 = vcombine.high %v6456, 0.0
      %v6467 = vcombine.high %v6463, 0.0
      %6469 = vrot.lane.b32.xlu0 %v6396, 16
      %v6470 = vpop.permute.xlu0 %6469
      %6473 = vrot.lane.b32.xlu0 %v6379, 32
      %v6474 = vpop.permute.xlu0 %6473
      %6477 = vrot.lane.b32.xlu0 %v6397, 48
      %v6478 = vpop.permute.xlu0 %6477
      %6481 = vrot.lane.b32.xlu0 %v6388, 64
      %v6482 = vpop.permute.xlu0 %6481
      %6485 = vrot.lane.b32.xlu0 %v6398, 80
      %v6486 = vpop.permute.xlu0 %6485
      %6489 = vrot.lane.b32.xlu0 %v6395, 96
      %v6490 = vpop.permute.xlu0 %6489
      %6493 = vrot.lane.b32.xlu0 %v6399, 112
      %v6494 = vpop.permute.xlu0 %6493
      %6497 = vrot.lane.b32.xlu0 %v6464, 16
      %v6498 = vpop.permute.xlu0 %6497
      %6501 = vrot.lane.b32.xlu0 %v6447, 32
      %v6502 = vpop.permute.xlu0 %6501
      %6505 = vrot.lane.b32.xlu0 %v6465, 48
      %v6506 = vpop.permute.xlu0 %6505
      %6509 = vrot.lane.b32.xlu0 %v6456, 64
      %v6510 = vpop.permute.xlu0 %6509
      %6513 = vrot.lane.b32.xlu0 %v6466, 80
      %v6514 = vpop.permute.xlu0 %6513
      %6517 = vrot.lane.b32.xlu0 %v6463, 96
      %v6518 = vpop.permute.xlu0 %6517
      %6521 = vrot.lane.b32.xlu0 %v6467, 112
      %v6522 = vpop.permute.xlu0 %6521
      %v6524 = vsel %vm534, %v6372, %v6470
      %v6525 = vsel %vm536, %v6524, %v6474
      %v6526 = vsel %vm538, %v6525, %v6478
      %v6527 = vsel %vm540, %v6526, %v6482
      %v6528 = vsel %vm542, %v6527, %v6486
      %v6529 = vsel %vm544, %v6528, %v6490
      %v6530 = vsel %vm546, %v6529, %v6494
      %v6531 = vsel %vm534, %v6440, %v6498
      %v6532 = vsel %vm536, %v6531, %v6502
      %v6533 = vsel %vm538, %v6532, %v6506
      %v6534 = vsel %vm540, %v6533, %v6510
      %v6535 = vsel %vm542, %v6534, %v6514
      %v6536 = vsel %vm544, %v6535, %v6518
      %v6537 = vsel %vm546, %v6536, %v6522
      %6538 = vrot.lane.b32.xlu0 %v5616, 124
      %v6539 = vpop.permute.xlu0 %6538
      %6540 = vrot.lane.b32.xlu0 %v5618, 124
      %v6541 = vpop.permute.xlu0 %6540
      %6542 = vrot.lane.b32.xlu0 %v5621, 124
      %v6543 = vpop.permute.xlu0 %6542
      %6544 = vrot.lane.b32.xlu0 %v5623, 124
      %v6545 = vpop.permute.xlu0 %6544
      %6546 = vrot.lane.b32.xlu0 %v5626, 124
      %v6547 = vpop.permute.xlu0 %6546
      %6548 = vrot.lane.b32.xlu0 %v5628, 124
      %v6549 = vpop.permute.xlu0 %6548
      %6550 = vrot.lane.b32.xlu0 %v5631, 124
      %v6551 = vpop.permute.xlu0 %6550
      %6552 = vrot.lane.b32.xlu0 %v5633, 124
      %v6553 = vpop.permute.xlu0 %6552
      %v6562 = vcombine.low %v6539, %v6547
      %v6563 = vcombine.high %v6539, %v6547
      %v6565 = vunpack.c.l.s4 1983009808
      %v6566 = vunpack.c.0.s8 %v6565
      %v6567 = vlaneseq
      %v6568 = vshrl.u32 %v6567, 7
      %v6569 = vsub.s32 %v6566, %v6568
      %v6570 = vrot.slane %v6562, %v6569
      %v6572 = vunpack.c.l.s4 1983009808
      %v6573 = vunpack.c.0.s8 %v6572
      %v6574 = vlaneseq
      %v6575 = vshrl.u32 %v6574, 7
      %v6576 = vsub.s32 %v6573, %v6575
      %v6577 = vrot.slane %v6563, %v6576
      %v6578 = vcombine.low %v6543, %v6551
      %v6579 = vcombine.high %v6543, %v6551
      %v6581 = vunpack.c.l.s4 1983009808
      %v6582 = vunpack.c.0.s8 %v6581
      %v6583 = vlaneseq
      %v6584 = vshrl.u32 %v6583, 7
      %v6585 = vsub.s32 %v6582, %v6584
      %v6586 = vrot.slane %v6578, %v6585
      %v6588 = vunpack.c.l.s4 1983009808
      %v6589 = vunpack.c.0.s8 %v6588
      %v6590 = vlaneseq
      %v6591 = vshrl.u32 %v6590, 7
      %v6592 = vsub.s32 %v6589, %v6591
      %v6593 = vrot.slane %v6579, %v6592
      %v6594 = vcombine.low %v6570, %v6586
      %v6595 = vcombine.high %v6570, %v6586
      %v6597 = vunpack.c.l.s4 1934713408
      %v6598 = vunpack.c.0.s8 %v6597
      %v6599 = vlaneseq
      %v6600 = vshrl.u32 %v6599, 7
      %v6601 = vsub.s32 %v6598, %v6600
      %v6602 = vrot.slane %v6594, %v6601
      %v6604 = vunpack.c.l.s4 1934713408
      %v6605 = vunpack.c.0.s8 %v6604
      %v6606 = vlaneseq
      %v6607 = vshrl.u32 %v6606, 7
      %v6608 = vsub.s32 %v6605, %v6607
      %v6609 = vrot.slane %v6595, %v6608
      %v6610 = vcombine.low %v6577, %v6593
      %v6611 = vcombine.high %v6577, %v6593
      %v6613 = vunpack.c.l.s4 1934713408
      %v6614 = vunpack.c.0.s8 %v6613
      %v6615 = vlaneseq
      %v6616 = vshrl.u32 %v6615, 7
      %v6617 = vsub.s32 %v6614, %v6616
      %v6618 = vrot.slane %v6610, %v6617
      %v6620 = vunpack.c.l.s4 1934713408
      %v6621 = vunpack.c.0.s8 %v6620
      %v6622 = vlaneseq
      %v6623 = vshrl.u32 %v6622, 7
      %v6624 = vsub.s32 %v6621, %v6623
      %v6625 = vrot.slane %v6611, %v6624
      %v6626 = vcombine.high %v6602, 0.0
      %v6627 = vcombine.high %v6609, 0.0
      %v6628 = vcombine.high %v6618, 0.0
      %v6629 = vcombine.high %v6625, 0.0
      %v6630 = vcombine.low %v6541, %v6549
      %v6631 = vcombine.high %v6541, %v6549
      %v6633 = vunpack.c.l.s4 1983009808
      %v6634 = vunpack.c.0.s8 %v6633
      %v6635 = vlaneseq
      %v6636 = vshrl.u32 %v6635, 7
      %v6637 = vsub.s32 %v6634, %v6636
      %v6638 = vrot.slane %v6630, %v6637
      %v6640 = vunpack.c.l.s4 1983009808
      %v6641 = vunpack.c.0.s8 %v6640
      %v6642 = vlaneseq
      %v6643 = vshrl.u32 %v6642, 7
      %v6644 = vsub.s32 %v6641, %v6643
      %v6645 = vrot.slane %v6631, %v6644
      %v6646 = vcombine.low %v6545, %v6553
      %v6647 = vcombine.high %v6545, %v6553
      %v6649 = vunpack.c.l.s4 1983009808
      %v6650 = vunpack.c.0.s8 %v6649
      %v6651 = vlaneseq
      %v6652 = vshrl.u32 %v6651, 7
      %v6653 = vsub.s32 %v6650, %v6652
      %v6654 = vrot.slane %v6646, %v6653
      %v6656 = vunpack.c.l.s4 1983009808
      %v6657 = vunpack.c.0.s8 %v6656
      %v6658 = vlaneseq
      %v6659 = vshrl.u32 %v6658, 7
      %v6660 = vsub.s32 %v6657, %v6659
      %v6661 = vrot.slane %v6647, %v6660
      %v6662 = vcombine.low %v6638, %v6654
      %v6663 = vcombine.high %v6638, %v6654
      %v6665 = vunpack.c.l.s4 1934713408
      %v6666 = vunpack.c.0.s8 %v6665
      %v6667 = vlaneseq
      %v6668 = vshrl.u32 %v6667, 7
      %v6669 = vsub.s32 %v6666, %v6668
      %v6670 = vrot.slane %v6662, %v6669
      %v6672 = vunpack.c.l.s4 1934713408
      %v6673 = vunpack.c.0.s8 %v6672
      %v6674 = vlaneseq
      %v6675 = vshrl.u32 %v6674, 7
      %v6676 = vsub.s32 %v6673, %v6675
      %v6677 = vrot.slane %v6663, %v6676
      %v6678 = vcombine.low %v6645, %v6661
      %v6679 = vcombine.high %v6645, %v6661
      %v6681 = vunpack.c.l.s4 1934713408
      %v6682 = vunpack.c.0.s8 %v6681
      %v6683 = vlaneseq
      %v6684 = vshrl.u32 %v6683, 7
      %v6685 = vsub.s32 %v6682, %v6684
      %v6686 = vrot.slane %v6678, %v6685
      %v6688 = vunpack.c.l.s4 1934713408
      %v6689 = vunpack.c.0.s8 %v6688
      %v6690 = vlaneseq
      %v6691 = vshrl.u32 %v6690, 7
      %v6692 = vsub.s32 %v6689, %v6691
      %v6693 = vrot.slane %v6679, %v6692
      %v6694 = vcombine.high %v6670, 0.0
      %v6695 = vcombine.high %v6677, 0.0
      %v6696 = vcombine.high %v6686, 0.0
      %v6697 = vcombine.high %v6693, 0.0
      %6699 = vrot.lane.b32.xlu0 %v6626, 16
      %v6700 = vpop.permute.xlu0 %6699
      %6703 = vrot.lane.b32.xlu0 %v6609, 32
      %v6704 = vpop.permute.xlu0 %6703
      %6707 = vrot.lane.b32.xlu0 %v6627, 48
      %v6708 = vpop.permute.xlu0 %6707
      %6711 = vrot.lane.b32.xlu0 %v6618, 64
      %v6712 = vpop.permute.xlu0 %6711
      %6715 = vrot.lane.b32.xlu0 %v6628, 80
      %v6716 = vpop.permute.xlu0 %6715
      %6719 = vrot.lane.b32.xlu0 %v6625, 96
      %v6720 = vpop.permute.xlu0 %6719
      %6723 = vrot.lane.b32.xlu0 %v6629, 112
      %v6724 = vpop.permute.xlu0 %6723
      %6727 = vrot.lane.b32.xlu0 %v6694, 16
      %v6728 = vpop.permute.xlu0 %6727
      %6731 = vrot.lane.b32.xlu0 %v6677, 32
      %v6732 = vpop.permute.xlu0 %6731
      %6735 = vrot.lane.b32.xlu0 %v6695, 48
      %v6736 = vpop.permute.xlu0 %6735
      %6739 = vrot.lane.b32.xlu0 %v6686, 64
      %v6740 = vpop.permute.xlu0 %6739
      %6743 = vrot.lane.b32.xlu0 %v6696, 80
      %v6744 = vpop.permute.xlu0 %6743
      %6747 = vrot.lane.b32.xlu0 %v6693, 96
      %v6748 = vpop.permute.xlu0 %6747
      %6751 = vrot.lane.b32.xlu0 %v6697, 112
      %v6752 = vpop.permute.xlu0 %6751
      %v6754 = vsel %vm534, %v6602, %v6700
      %v6755 = vsel %vm536, %v6754, %v6704
      %v6756 = vsel %vm538, %v6755, %v6708
      %v6757 = vsel %vm540, %v6756, %v6712
      %v6758 = vsel %vm542, %v6757, %v6716
      %v6759 = vsel %vm544, %v6758, %v6720
      %v6760 = vsel %vm546, %v6759, %v6724
      %v6761 = vsel %vm534, %v6670, %v6728
      %v6762 = vsel %vm536, %v6761, %v6732
      %v6763 = vsel %vm538, %v6762, %v6736
      %v6764 = vsel %vm540, %v6763, %v6740
      %v6765 = vsel %vm542, %v6764, %v6744
      %v6766 = vsel %vm544, %v6765, %v6748
      %v6767 = vsel %vm546, %v6766, %v6752
      %vm6768 = vcmask 1044480
      %v6769 = vrot.slane %v3318, 3
      %v6770 = vrot.slane %v3296, 3
      %v6771 = vsel %vm6768, %v6769, %v6770
      %v6772 = vrot.slane %v3322, 3
      %v6773 = vsel %vm6768, %v6770, %v6772
      %v6774 = vrot.slane %v3319, 3
      %v6775 = vrot.slane %v3299, 3
      %v6776 = vsel %vm6768, %v6774, %v6775
      %v6777 = vrot.slane %v3323, 3
      %v6778 = vsel %vm6768, %v6775, %v6777
      %v6779 = vrot.slane %v3320, 3
      %v6780 = vrot.slane %v3302, 3
      %v6781 = vsel %vm6768, %v6779, %v6780
      %v6782 = vrot.slane %v3324, 3
      %v6783 = vsel %vm6768, %v6780, %v6782
      %v6784 = vrot.slane %v3321, 3
      %v6785 = vrot.slane %v3305, 3
      %v6786 = vsel %vm6768, %v6784, %v6785
      %v6787 = vrot.slane %v3325, 3
      %v6788 = vsel %vm6768, %v6785, %v6787
      %v6797 = vcombine.low %v6771, %v6781
      %v6798 = vcombine.high %v6771, %v6781
      %v6800 = vunpack.c.l.s4 1983009808
      %v6801 = vunpack.c.0.s8 %v6800
      %v6802 = vlaneseq
      %v6803 = vshrl.u32 %v6802, 7
      %v6804 = vsub.s32 %v6801, %v6803
      %v6805 = vrot.slane %v6797, %v6804
      %v6807 = vunpack.c.l.s4 1983009808
      %v6808 = vunpack.c.0.s8 %v6807
      %v6809 = vlaneseq
      %v6810 = vshrl.u32 %v6809, 7
      %v6811 = vsub.s32 %v6808, %v6810
      %v6812 = vrot.slane %v6798, %v6811
      %v6813 = vcombine.low %v6776, %v6786
      %v6814 = vcombine.high %v6776, %v6786
      %v6816 = vunpack.c.l.s4 1983009808
      %v6817 = vunpack.c.0.s8 %v6816
      %v6818 = vlaneseq
      %v6819 = vshrl.u32 %v6818, 7
      %v6820 = vsub.s32 %v6817, %v6819
      %v6821 = vrot.slane %v6813, %v6820
      %v6823 = vunpack.c.l.s4 1983009808
      %v6824 = vunpack.c.0.s8 %v6823
      %v6825 = vlaneseq
      %v6826 = vshrl.u32 %v6825, 7
      %v6827 = vsub.s32 %v6824, %v6826
      %v6828 = vrot.slane %v6814, %v6827
      %v6829 = vcombine.low %v6805, %v6821
      %v6830 = vcombine.high %v6805, %v6821
      %v6832 = vunpack.c.l.s4 1934713408
      %v6833 = vunpack.c.0.s8 %v6832
      %v6834 = vlaneseq
      %v6835 = vshrl.u32 %v6834, 7
      %v6836 = vsub.s32 %v6833, %v6835
      %v6837 = vrot.slane %v6829, %v6836
      %v6839 = vunpack.c.l.s4 1934713408
      %v6840 = vunpack.c.0.s8 %v6839
      %v6841 = vlaneseq
      %v6842 = vshrl.u32 %v6841, 7
      %v6843 = vsub.s32 %v6840, %v6842
      %v6844 = vrot.slane %v6830, %v6843
      %v6845 = vcombine.low %v6812, %v6828
      %v6846 = vcombine.high %v6812, %v6828
      %v6848 = vunpack.c.l.s4 1934713408
      %v6849 = vunpack.c.0.s8 %v6848
      %v6850 = vlaneseq
      %v6851 = vshrl.u32 %v6850, 7
      %v6852 = vsub.s32 %v6849, %v6851
      %v6853 = vrot.slane %v6845, %v6852
      %v6855 = vunpack.c.l.s4 1934713408
      %v6856 = vunpack.c.0.s8 %v6855
      %v6857 = vlaneseq
      %v6858 = vshrl.u32 %v6857, 7
      %v6859 = vsub.s32 %v6856, %v6858
      %v6860 = vrot.slane %v6846, %v6859
      %v6861 = vcombine.high %v6837, 0.0
      %v6862 = vcombine.high %v6844, 0.0
      %v6863 = vcombine.high %v6853, 0.0
      %v6864 = vcombine.high %v6860, 0.0
      %v6865 = vcombine.low %v6773, %v6783
      %v6866 = vcombine.high %v6773, %v6783
      %v6868 = vunpack.c.l.s4 1983009808
      %v6869 = vunpack.c.0.s8 %v6868
      %v6870 = vlaneseq
      %v6871 = vshrl.u32 %v6870, 7
      %v6872 = vsub.s32 %v6869, %v6871
      %v6873 = vrot.slane %v6865, %v6872
      %v6875 = vunpack.c.l.s4 1983009808
      %v6876 = vunpack.c.0.s8 %v6875
      %v6877 = vlaneseq
      %v6878 = vshrl.u32 %v6877, 7
      %v6879 = vsub.s32 %v6876, %v6878
      %v6880 = vrot.slane %v6866, %v6879
      %v6881 = vcombine.low %v6778, %v6788
      %v6882 = vcombine.high %v6778, %v6788
      %v6884 = vunpack.c.l.s4 1983009808
      %v6885 = vunpack.c.0.s8 %v6884
      %v6886 = vlaneseq
      %v6887 = vshrl.u32 %v6886, 7
      %v6888 = vsub.s32 %v6885, %v6887
      %v6889 = vrot.slane %v6881, %v6888
      %v6891 = vunpack.c.l.s4 1983009808
      %v6892 = vunpack.c.0.s8 %v6891
      %v6893 = vlaneseq
      %v6894 = vshrl.u32 %v6893, 7
      %v6895 = vsub.s32 %v6892, %v6894
      %v6896 = vrot.slane %v6882, %v6895
      %v6897 = vcombine.low %v6873, %v6889
      %v6898 = vcombine.high %v6873, %v6889
      %v6900 = vunpack.c.l.s4 1934713408
      %v6901 = vunpack.c.0.s8 %v6900
      %v6902 = vlaneseq
      %v6903 = vshrl.u32 %v6902, 7
      %v6904 = vsub.s32 %v6901, %v6903
      %v6905 = vrot.slane %v6897, %v6904
      %v6907 = vunpack.c.l.s4 1934713408
      %v6908 = vunpack.c.0.s8 %v6907
      %v6909 = vlaneseq
      %v6910 = vshrl.u32 %v6909, 7
      %v6911 = vsub.s32 %v6908, %v6910
      %v6912 = vrot.slane %v6898, %v6911
      %v6913 = vcombine.low %v6880, %v6896
      %v6914 = vcombine.high %v6880, %v6896
      %v6916 = vunpack.c.l.s4 1934713408
      %v6917 = vunpack.c.0.s8 %v6916
      %v6918 = vlaneseq
      %v6919 = vshrl.u32 %v6918, 7
      %v6920 = vsub.s32 %v6917, %v6919
      %v6921 = vrot.slane %v6913, %v6920
      %v6923 = vunpack.c.l.s4 1934713408
      %v6924 = vunpack.c.0.s8 %v6923
      %v6925 = vlaneseq
      %v6926 = vshrl.u32 %v6925, 7
      %v6927 = vsub.s32 %v6924, %v6926
      %v6928 = vrot.slane %v6914, %v6927
      %v6929 = vcombine.high %v6905, 0.0
      %v6930 = vcombine.high %v6912, 0.0
      %v6931 = vcombine.high %v6921, 0.0
      %v6932 = vcombine.high %v6928, 0.0
      %6934 = vrot.lane.b32.xlu0 %v6861, 16
      %v6935 = vpop.permute.xlu0 %6934
      %6938 = vrot.lane.b32.xlu0 %v6844, 32
      %v6939 = vpop.permute.xlu0 %6938
      %6942 = vrot.lane.b32.xlu0 %v6862, 48
      %v6943 = vpop.permute.xlu0 %6942
      %6946 = vrot.lane.b32.xlu0 %v6853, 64
      %v6947 = vpop.permute.xlu0 %6946
      %6950 = vrot.lane.b32.xlu0 %v6863, 80
      %v6951 = vpop.permute.xlu0 %6950
      %6954 = vrot.lane.b32.xlu0 %v6860, 96
      %v6955 = vpop.permute.xlu0 %6954
      %6958 = vrot.lane.b32.xlu0 %v6864, 112
      %v6959 = vpop.permute.xlu0 %6958
      %6962 = vrot.lane.b32.xlu0 %v6929, 16
      %v6963 = vpop.permute.xlu0 %6962
      %6966 = vrot.lane.b32.xlu0 %v6912, 32
      %v6967 = vpop.permute.xlu0 %6966
      %6970 = vrot.lane.b32.xlu0 %v6930, 48
      %v6971 = vpop.permute.xlu0 %6970
      %6974 = vrot.lane.b32.xlu0 %v6921, 64
      %v6975 = vpop.permute.xlu0 %6974
      %6978 = vrot.lane.b32.xlu0 %v6931, 80
      %v6979 = vpop.permute.xlu0 %6978
      %6982 = vrot.lane.b32.xlu0 %v6928, 96
      %v6983 = vpop.permute.xlu0 %6982
      %6986 = vrot.lane.b32.xlu0 %v6932, 112
      %v6987 = vpop.permute.xlu0 %6986
      %v6989 = vsel %vm534, %v6837, %v6935
      %v6990 = vsel %vm536, %v6989, %v6939
      %v6991 = vsel %vm538, %v6990, %v6943
      %v6992 = vsel %vm540, %v6991, %v6947
      %v6993 = vsel %vm542, %v6992, %v6951
      %v6994 = vsel %vm544, %v6993, %v6955
      %v6995 = vsel %vm546, %v6994, %v6959
      %v6996 = vsel %vm534, %v6905, %v6963
      %v6997 = vsel %vm536, %v6996, %v6967
      %v6998 = vsel %vm538, %v6997, %v6971
      %v6999 = vsel %vm540, %v6998, %v6975
      %v7000 = vsel %vm542, %v6999, %v6979
      %v7001 = vsel %vm544, %v7000, %v6983
      %v7002 = vsel %vm546, %v7001, %v6987
      %7003 = vrot.lane.b32.xlu0 %v6771, 127
      %v7004 = vpop.permute.xlu0 %7003
      %7005 = vrot.lane.b32.xlu0 %v6773, 127
      %v7006 = vpop.permute.xlu0 %7005
      %7007 = vrot.lane.b32.xlu0 %v6776, 127
      %v7008 = vpop.permute.xlu0 %7007
      %7009 = vrot.lane.b32.xlu0 %v6778, 127
      %v7010 = vpop.permute.xlu0 %7009
      %7011 = vrot.lane.b32.xlu0 %v6781, 127
      %v7012 = vpop.permute.xlu0 %7011
      %7013 = vrot.lane.b32.xlu0 %v6783, 127
      %v7014 = vpop.permute.xlu0 %7013
      %7015 = vrot.lane.b32.xlu0 %v6786, 127
      %v7016 = vpop.permute.xlu0 %7015
      %7017 = vrot.lane.b32.xlu0 %v6788, 127
      %v7018 = vpop.permute.xlu0 %7017
      %v7027 = vcombine.low %v7004, %v7012
      %v7028 = vcombine.high %v7004, %v7012
      %v7030 = vunpack.c.l.s4 1983009808
      %v7031 = vunpack.c.0.s8 %v7030
      %v7032 = vlaneseq
      %v7033 = vshrl.u32 %v7032, 7
      %v7034 = vsub.s32 %v7031, %v7033
      %v7035 = vrot.slane %v7027, %v7034
      %v7037 = vunpack.c.l.s4 1983009808
      %v7038 = vunpack.c.0.s8 %v7037
      %v7039 = vlaneseq
      %v7040 = vshrl.u32 %v7039, 7
      %v7041 = vsub.s32 %v7038, %v7040
      %v7042 = vrot.slane %v7028, %v7041
      %v7043 = vcombine.low %v7008, %v7016
      %v7044 = vcombine.high %v7008, %v7016
      %v7046 = vunpack.c.l.s4 1983009808
      %v7047 = vunpack.c.0.s8 %v7046
      %v7048 = vlaneseq
      %v7049 = vshrl.u32 %v7048, 7
      %v7050 = vsub.s32 %v7047, %v7049
      %v7051 = vrot.slane %v7043, %v7050
      %v7053 = vunpack.c.l.s4 1983009808
      %v7054 = vunpack.c.0.s8 %v7053
      %v7055 = vlaneseq
      %v7056 = vshrl.u32 %v7055, 7
      %v7057 = vsub.s32 %v7054, %v7056
      %v7058 = vrot.slane %v7044, %v7057
      %v7059 = vcombine.low %v7035, %v7051
      %v7060 = vcombine.high %v7035, %v7051
      %v7062 = vunpack.c.l.s4 1934713408
      %v7063 = vunpack.c.0.s8 %v7062
      %v7064 = vlaneseq
      %v7065 = vshrl.u32 %v7064, 7
      %v7066 = vsub.s32 %v7063, %v7065
      %v7067 = vrot.slane %v7059, %v7066
      %v7069 = vunpack.c.l.s4 1934713408
      %v7070 = vunpack.c.0.s8 %v7069
      %v7071 = vlaneseq
      %v7072 = vshrl.u32 %v7071, 7
      %v7073 = vsub.s32 %v7070, %v7072
      %v7074 = vrot.slane %v7060, %v7073
      %v7075 = vcombine.low %v7042, %v7058
      %v7076 = vcombine.high %v7042, %v7058
      %v7078 = vunpack.c.l.s4 1934713408
      %v7079 = vunpack.c.0.s8 %v7078
      %v7080 = vlaneseq
      %v7081 = vshrl.u32 %v7080, 7
      %v7082 = vsub.s32 %v7079, %v7081
      %v7083 = vrot.slane %v7075, %v7082
      %v7085 = vunpack.c.l.s4 1934713408
      %v7086 = vunpack.c.0.s8 %v7085
      %v7087 = vlaneseq
      %v7088 = vshrl.u32 %v7087, 7
      %v7089 = vsub.s32 %v7086, %v7088
      %v7090 = vrot.slane %v7076, %v7089
      %v7091 = vcombine.high %v7067, 0.0
      %v7092 = vcombine.high %v7074, 0.0
      %v7093 = vcombine.high %v7083, 0.0
      %v7094 = vcombine.high %v7090, 0.0
      %v7095 = vcombine.low %v7006, %v7014
      %v7096 = vcombine.high %v7006, %v7014
      %v7098 = vunpack.c.l.s4 1983009808
      %v7099 = vunpack.c.0.s8 %v7098
      %v7100 = vlaneseq
      %v7101 = vshrl.u32 %v7100, 7
      %v7102 = vsub.s32 %v7099, %v7101
      %v7103 = vrot.slane %v7095, %v7102
      %v7105 = vunpack.c.l.s4 1983009808
      %v7106 = vunpack.c.0.s8 %v7105
      %v7107 = vlaneseq
      %v7108 = vshrl.u32 %v7107, 7
      %v7109 = vsub.s32 %v7106, %v7108
      %v7110 = vrot.slane %v7096, %v7109
      %v7111 = vcombine.low %v7010, %v7018
      %v7112 = vcombine.high %v7010, %v7018
      %v7114 = vunpack.c.l.s4 1983009808
      %v7115 = vunpack.c.0.s8 %v7114
      %v7116 = vlaneseq
      %v7117 = vshrl.u32 %v7116, 7
      %v7118 = vsub.s32 %v7115, %v7117
      %v7119 = vrot.slane %v7111, %v7118
      %v7121 = vunpack.c.l.s4 1983009808
      %v7122 = vunpack.c.0.s8 %v7121
      %v7123 = vlaneseq
      %v7124 = vshrl.u32 %v7123, 7
      %v7125 = vsub.s32 %v7122, %v7124
      %v7126 = vrot.slane %v7112, %v7125
      %v7127 = vcombine.low %v7103, %v7119
      %v7128 = vcombine.high %v7103, %v7119
      %v7130 = vunpack.c.l.s4 1934713408
      %v7131 = vunpack.c.0.s8 %v7130
      %v7132 = vlaneseq
      %v7133 = vshrl.u32 %v7132, 7
      %v7134 = vsub.s32 %v7131, %v7133
      %v7135 = vrot.slane %v7127, %v7134
      %v7137 = vunpack.c.l.s4 1934713408
      %v7138 = vunpack.c.0.s8 %v7137
      %v7139 = vlaneseq
      %v7140 = vshrl.u32 %v7139, 7
      %v7141 = vsub.s32 %v7138, %v7140
      %v7142 = vrot.slane %v7128, %v7141
      %v7143 = vcombine.low %v7110, %v7126
      %v7144 = vcombine.high %v7110, %v7126
      %v7146 = vunpack.c.l.s4 1934713408
      %v7147 = vunpack.c.0.s8 %v7146
      %v7148 = vlaneseq
      %v7149 = vshrl.u32 %v7148, 7
      %v7150 = vsub.s32 %v7147, %v7149
      %v7151 = vrot.slane %v7143, %v7150
      %v7153 = vunpack.c.l.s4 1934713408
      %v7154 = vunpack.c.0.s8 %v7153
      %v7155 = vlaneseq
      %v7156 = vshrl.u32 %v7155, 7
      %v7157 = vsub.s32 %v7154, %v7156
      %v7158 = vrot.slane %v7144, %v7157
      %v7159 = vcombine.high %v7135, 0.0
      %v7160 = vcombine.high %v7142, 0.0
      %v7161 = vcombine.high %v7151, 0.0
      %v7162 = vcombine.high %v7158, 0.0
      %7164 = vrot.lane.b32.xlu0 %v7091, 16
      %v7165 = vpop.permute.xlu0 %7164
      %7168 = vrot.lane.b32.xlu0 %v7074, 32
      %v7169 = vpop.permute.xlu0 %7168
      %7172 = vrot.lane.b32.xlu0 %v7092, 48
      %v7173 = vpop.permute.xlu0 %7172
      %7176 = vrot.lane.b32.xlu0 %v7083, 64
      %v7177 = vpop.permute.xlu0 %7176
      %7180 = vrot.lane.b32.xlu0 %v7093, 80
      %v7181 = vpop.permute.xlu0 %7180
      %7184 = vrot.lane.b32.xlu0 %v7090, 96
      %v7185 = vpop.permute.xlu0 %7184
      %7188 = vrot.lane.b32.xlu0 %v7094, 112
      %v7189 = vpop.permute.xlu0 %7188
      %7192 = vrot.lane.b32.xlu0 %v7159, 16
      %v7193 = vpop.permute.xlu0 %7192
      %7196 = vrot.lane.b32.xlu0 %v7142, 32
      %v7197 = vpop.permute.xlu0 %7196
      %7200 = vrot.lane.b32.xlu0 %v7160, 48
      %v7201 = vpop.permute.xlu0 %7200
      %7204 = vrot.lane.b32.xlu0 %v7151, 64
      %v7205 = vpop.permute.xlu0 %7204
      %7208 = vrot.lane.b32.xlu0 %v7161, 80
      %v7209 = vpop.permute.xlu0 %7208
      %7212 = vrot.lane.b32.xlu0 %v7158, 96
      %v7213 = vpop.permute.xlu0 %7212
      %7216 = vrot.lane.b32.xlu0 %v7162, 112
      %v7217 = vpop.permute.xlu0 %7216
      %v7219 = vsel %vm534, %v7067, %v7165
      %v7220 = vsel %vm536, %v7219, %v7169
      %v7221 = vsel %vm538, %v7220, %v7173
      %v7222 = vsel %vm540, %v7221, %v7177
      %v7223 = vsel %vm542, %v7222, %v7181
      %v7224 = vsel %vm544, %v7223, %v7185
      %v7225 = vsel %vm546, %v7224, %v7189
      %v7226 = vsel %vm534, %v7135, %v7193
      %v7227 = vsel %vm536, %v7226, %v7197
      %v7228 = vsel %vm538, %v7227, %v7201
      %v7229 = vsel %vm540, %v7228, %v7205
      %v7230 = vsel %vm542, %v7229, %v7209
      %v7231 = vsel %vm544, %v7230, %v7213
      %v7232 = vsel %vm546, %v7231, %v7217
      %7233 = vrot.lane.b32.xlu0 %v6771, 126
      %v7234 = vpop.permute.xlu0 %7233
      %7235 = vrot.lane.b32.xlu0 %v6773, 126
      %v7236 = vpop.permute.xlu0 %7235
      %7237 = vrot.lane.b32.xlu0 %v6776, 126
      %v7238 = vpop.permute.xlu0 %7237
      %7239 = vrot.lane.b32.xlu0 %v6778, 126
      %v7240 = vpop.permute.xlu0 %7239
      %7241 = vrot.lane.b32.xlu0 %v6781, 126
      %v7242 = vpop.permute.xlu0 %7241
      %7243 = vrot.lane.b32.xlu0 %v6783, 126
      %v7244 = vpop.permute.xlu0 %7243
      %7245 = vrot.lane.b32.xlu0 %v6786, 126
      %v7246 = vpop.permute.xlu0 %7245
      %7247 = vrot.lane.b32.xlu0 %v6788, 126
      %v7248 = vpop.permute.xlu0 %7247
      %v7257 = vcombine.low %v7234, %v7242
      %v7258 = vcombine.high %v7234, %v7242
      %v7260 = vunpack.c.l.s4 1983009808
      %v7261 = vunpack.c.0.s8 %v7260
      %v7262 = vlaneseq
      %v7263 = vshrl.u32 %v7262, 7
      %v7264 = vsub.s32 %v7261, %v7263
      %v7265 = vrot.slane %v7257, %v7264
      %v7267 = vunpack.c.l.s4 1983009808
      %v7268 = vunpack.c.0.s8 %v7267
      %v7269 = vlaneseq
      %v7270 = vshrl.u32 %v7269, 7
      %v7271 = vsub.s32 %v7268, %v7270
      %v7272 = vrot.slane %v7258, %v7271
      %v7273 = vcombine.low %v7238, %v7246
      %v7274 = vcombine.high %v7238, %v7246
      %v7276 = vunpack.c.l.s4 1983009808
      %v7277 = vunpack.c.0.s8 %v7276
      %v7278 = vlaneseq
      %v7279 = vshrl.u32 %v7278, 7
      %v7280 = vsub.s32 %v7277, %v7279
      %v7281 = vrot.slane %v7273, %v7280
      %v7283 = vunpack.c.l.s4 1983009808
      %v7284 = vunpack.c.0.s8 %v7283
      %v7285 = vlaneseq
      %v7286 = vshrl.u32 %v7285, 7
      %v7287 = vsub.s32 %v7284, %v7286
      %v7288 = vrot.slane %v7274, %v7287
      %v7289 = vcombine.low %v7265, %v7281
      %v7290 = vcombine.high %v7265, %v7281
      %v7292 = vunpack.c.l.s4 1934713408
      %v7293 = vunpack.c.0.s8 %v7292
      %v7294 = vlaneseq
      %v7295 = vshrl.u32 %v7294, 7
      %v7296 = vsub.s32 %v7293, %v7295
      %v7297 = vrot.slane %v7289, %v7296
      %v7299 = vunpack.c.l.s4 1934713408
      %v7300 = vunpack.c.0.s8 %v7299
      %v7301 = vlaneseq
      %v7302 = vshrl.u32 %v7301, 7
      %v7303 = vsub.s32 %v7300, %v7302
      %v7304 = vrot.slane %v7290, %v7303
      %v7305 = vcombine.low %v7272, %v7288
      %v7306 = vcombine.high %v7272, %v7288
      %v7308 = vunpack.c.l.s4 1934713408
      %v7309 = vunpack.c.0.s8 %v7308
      %v7310 = vlaneseq
      %v7311 = vshrl.u32 %v7310, 7
      %v7312 = vsub.s32 %v7309, %v7311
      %v7313 = vrot.slane %v7305, %v7312
      %v7315 = vunpack.c.l.s4 1934713408
      %v7316 = vunpack.c.0.s8 %v7315
      %v7317 = vlaneseq
      %v7318 = vshrl.u32 %v7317, 7
      %v7319 = vsub.s32 %v7316, %v7318
      %v7320 = vrot.slane %v7306, %v7319
      %v7321 = vcombine.high %v7297, 0.0
      %v7322 = vcombine.high %v7304, 0.0
      %v7323 = vcombine.high %v7313, 0.0
      %v7324 = vcombine.high %v7320, 0.0
      %v7325 = vcombine.low %v7236, %v7244
      %v7326 = vcombine.high %v7236, %v7244
      %v7328 = vunpack.c.l.s4 1983009808
      %v7329 = vunpack.c.0.s8 %v7328
      %v7330 = vlaneseq
      %v7331 = vshrl.u32 %v7330, 7
      %v7332 = vsub.s32 %v7329, %v7331
      %v7333 = vrot.slane %v7325, %v7332
      %v7335 = vunpack.c.l.s4 1983009808
      %v7336 = vunpack.c.0.s8 %v7335
      %v7337 = vlaneseq
      %v7338 = vshrl.u32 %v7337, 7
      %v7339 = vsub.s32 %v7336, %v7338
      %v7340 = vrot.slane %v7326, %v7339
      %v7341 = vcombine.low %v7240, %v7248
      %v7342 = vcombine.high %v7240, %v7248
      %v7344 = vunpack.c.l.s4 1983009808
      %v7345 = vunpack.c.0.s8 %v7344
      %v7346 = vlaneseq
      %v7347 = vshrl.u32 %v7346, 7
      %v7348 = vsub.s32 %v7345, %v7347
      %v7349 = vrot.slane %v7341, %v7348
      %v7351 = vunpack.c.l.s4 1983009808
      %v7352 = vunpack.c.0.s8 %v7351
      %v7353 = vlaneseq
      %v7354 = vshrl.u32 %v7353, 7
      %v7355 = vsub.s32 %v7352, %v7354
      %v7356 = vrot.slane %v7342, %v7355
      %v7357 = vcombine.low %v7333, %v7349
      %v7358 = vcombine.high %v7333, %v7349
      %v7360 = vunpack.c.l.s4 1934713408
      %v7361 = vunpack.c.0.s8 %v7360
      %v7362 = vlaneseq
      %v7363 = vshrl.u32 %v7362, 7
      %v7364 = vsub.s32 %v7361, %v7363
      %v7365 = vrot.slane %v7357, %v7364
      %v7367 = vunpack.c.l.s4 1934713408
      %v7368 = vunpack.c.0.s8 %v7367
      %v7369 = vlaneseq
      %v7370 = vshrl.u32 %v7369, 7
      %v7371 = vsub.s32 %v7368, %v7370
      %v7372 = vrot.slane %v7358, %v7371
      %v7373 = vcombine.low %v7340, %v7356
      %v7374 = vcombine.high %v7340, %v7356
      %v7376 = vunpack.c.l.s4 1934713408
      %v7377 = vunpack.c.0.s8 %v7376
      %v7378 = vlaneseq
      %v7379 = vshrl.u32 %v7378, 7
      %v7380 = vsub.s32 %v7377, %v7379
      %v7381 = vrot.slane %v7373, %v7380
      %v7383 = vunpack.c.l.s4 1934713408
      %v7384 = vunpack.c.0.s8 %v7383
      %v7385 = vlaneseq
      %v7386 = vshrl.u32 %v7385, 7
      %v7387 = vsub.s32 %v7384, %v7386
      %v7388 = vrot.slane %v7374, %v7387
      %v7389 = vcombine.high %v7365, 0.0
      %v7390 = vcombine.high %v7372, 0.0
      %v7391 = vcombine.high %v7381, 0.0
      %v7392 = vcombine.high %v7388, 0.0
      %7394 = vrot.lane.b32.xlu0 %v7321, 16
      %v7395 = vpop.permute.xlu0 %7394
      %7398 = vrot.lane.b32.xlu0 %v7304, 32
      %v7399 = vpop.permute.xlu0 %7398
      %7402 = vrot.lane.b32.xlu0 %v7322, 48
      %v7403 = vpop.permute.xlu0 %7402
      %7406 = vrot.lane.b32.xlu0 %v7313, 64
      %v7407 = vpop.permute.xlu0 %7406
      %7410 = vrot.lane.b32.xlu0 %v7323, 80
      %v7411 = vpop.permute.xlu0 %7410
      %7414 = vrot.lane.b32.xlu0 %v7320, 96
      %v7415 = vpop.permute.xlu0 %7414
      %7418 = vrot.lane.b32.xlu0 %v7324, 112
      %v7419 = vpop.permute.xlu0 %7418
      %7422 = vrot.lane.b32.xlu0 %v7389, 16
      %v7423 = vpop.permute.xlu0 %7422
      %7426 = vrot.lane.b32.xlu0 %v7372, 32
      %v7427 = vpop.permute.xlu0 %7426
      %7430 = vrot.lane.b32.xlu0 %v7390, 48
      %v7431 = vpop.permute.xlu0 %7430
      %7434 = vrot.lane.b32.xlu0 %v7381, 64
      %v7435 = vpop.permute.xlu0 %7434
      %7438 = vrot.lane.b32.xlu0 %v7391, 80
      %v7439 = vpop.permute.xlu0 %7438
      %7442 = vrot.lane.b32.xlu0 %v7388, 96
      %v7443 = vpop.permute.xlu0 %7442
      %7446 = vrot.lane.b32.xlu0 %v7392, 112
      %v7447 = vpop.permute.xlu0 %7446
      %v7449 = vsel %vm534, %v7297, %v7395
      %v7450 = vsel %vm536, %v7449, %v7399
      %v7451 = vsel %vm538, %v7450, %v7403
      %v7452 = vsel %vm540, %v7451, %v7407
      %v7453 = vsel %vm542, %v7452, %v7411
      %v7454 = vsel %vm544, %v7453, %v7415
      %v7455 = vsel %vm546, %v7454, %v7419
      %v7456 = vsel %vm534, %v7365, %v7423
      %v7457 = vsel %vm536, %v7456, %v7427
      %v7458 = vsel %vm538, %v7457, %v7431
      %v7459 = vsel %vm540, %v7458, %v7435
      %v7460 = vsel %vm542, %v7459, %v7439
      %v7461 = vsel %vm544, %v7460, %v7443
      %v7462 = vsel %vm546, %v7461, %v7447
      %7463 = vrot.lane.b32.xlu0 %v6771, 125
      %v7464 = vpop.permute.xlu0 %7463
      %7465 = vrot.lane.b32.xlu0 %v6773, 125
      %v7466 = vpop.permute.xlu0 %7465
      %7467 = vrot.lane.b32.xlu0 %v6776, 125
      %v7468 = vpop.permute.xlu0 %7467
      %7469 = vrot.lane.b32.xlu0 %v6778, 125
      %v7470 = vpop.permute.xlu0 %7469
      %7471 = vrot.lane.b32.xlu0 %v6781, 125
      %v7472 = vpop.permute.xlu0 %7471
      %7473 = vrot.lane.b32.xlu0 %v6783, 125
      %v7474 = vpop.permute.xlu0 %7473
      %7475 = vrot.lane.b32.xlu0 %v6786, 125
      %v7476 = vpop.permute.xlu0 %7475
      %7477 = vrot.lane.b32.xlu0 %v6788, 125
      %v7478 = vpop.permute.xlu0 %7477
      %v7487 = vcombine.low %v7464, %v7472
      %v7488 = vcombine.high %v7464, %v7472
      %v7490 = vunpack.c.l.s4 1983009808
      %v7491 = vunpack.c.0.s8 %v7490
      %v7492 = vlaneseq
      %v7493 = vshrl.u32 %v7492, 7
      %v7494 = vsub.s32 %v7491, %v7493
      %v7495 = vrot.slane %v7487, %v7494
      %v7497 = vunpack.c.l.s4 1983009808
      %v7498 = vunpack.c.0.s8 %v7497
      %v7499 = vlaneseq
      %v7500 = vshrl.u32 %v7499, 7
      %v7501 = vsub.s32 %v7498, %v7500
      %v7502 = vrot.slane %v7488, %v7501
      %v7503 = vcombine.low %v7468, %v7476
      %v7504 = vcombine.high %v7468, %v7476
      %v7506 = vunpack.c.l.s4 1983009808
      %v7507 = vunpack.c.0.s8 %v7506
      %v7508 = vlaneseq
      %v7509 = vshrl.u32 %v7508, 7
      %v7510 = vsub.s32 %v7507, %v7509
      %v7511 = vrot.slane %v7503, %v7510
      %v7513 = vunpack.c.l.s4 1983009808
      %v7514 = vunpack.c.0.s8 %v7513
      %v7515 = vlaneseq
      %v7516 = vshrl.u32 %v7515, 7
      %v7517 = vsub.s32 %v7514, %v7516
      %v7518 = vrot.slane %v7504, %v7517
      %v7519 = vcombine.low %v7495, %v7511
      %v7520 = vcombine.high %v7495, %v7511
      %v7522 = vunpack.c.l.s4 1934713408
      %v7523 = vunpack.c.0.s8 %v7522
      %v7524 = vlaneseq
      %v7525 = vshrl.u32 %v7524, 7
      %v7526 = vsub.s32 %v7523, %v7525
      %v7527 = vrot.slane %v7519, %v7526
      %v7529 = vunpack.c.l.s4 1934713408
      %v7530 = vunpack.c.0.s8 %v7529
      %v7531 = vlaneseq
      %v7532 = vshrl.u32 %v7531, 7
      %v7533 = vsub.s32 %v7530, %v7532
      %v7534 = vrot.slane %v7520, %v7533
      %v7535 = vcombine.low %v7502, %v7518
      %v7536 = vcombine.high %v7502, %v7518
      %v7538 = vunpack.c.l.s4 1934713408
      %v7539 = vunpack.c.0.s8 %v7538
      %v7540 = vlaneseq
      %v7541 = vshrl.u32 %v7540, 7
      %v7542 = vsub.s32 %v7539, %v7541
      %v7543 = vrot.slane %v7535, %v7542
      %v7545 = vunpack.c.l.s4 1934713408
      %v7546 = vunpack.c.0.s8 %v7545
      %v7547 = vlaneseq
      %v7548 = vshrl.u32 %v7547, 7
      %v7549 = vsub.s32 %v7546, %v7548
      %v7550 = vrot.slane %v7536, %v7549
      %v7551 = vcombine.high %v7527, 0.0
      %v7552 = vcombine.high %v7534, 0.0
      %v7553 = vcombine.high %v7543, 0.0
      %v7554 = vcombine.high %v7550, 0.0
      %v7555 = vcombine.low %v7466, %v7474
      %v7556 = vcombine.high %v7466, %v7474
      %v7558 = vunpack.c.l.s4 1983009808
      %v7559 = vunpack.c.0.s8 %v7558
      %v7560 = vlaneseq
      %v7561 = vshrl.u32 %v7560, 7
      %v7562 = vsub.s32 %v7559, %v7561
      %v7563 = vrot.slane %v7555, %v7562
      %v7565 = vunpack.c.l.s4 1983009808
      %v7566 = vunpack.c.0.s8 %v7565
      %v7567 = vlaneseq
      %v7568 = vshrl.u32 %v7567, 7
      %v7569 = vsub.s32 %v7566, %v7568
      %v7570 = vrot.slane %v7556, %v7569
      %v7571 = vcombine.low %v7470, %v7478
      %v7572 = vcombine.high %v7470, %v7478
      %v7574 = vunpack.c.l.s4 1983009808
      %v7575 = vunpack.c.0.s8 %v7574
      %v7576 = vlaneseq
      %v7577 = vshrl.u32 %v7576, 7
      %v7578 = vsub.s32 %v7575, %v7577
      %v7579 = vrot.slane %v7571, %v7578
      %v7581 = vunpack.c.l.s4 1983009808
      %v7582 = vunpack.c.0.s8 %v7581
      %v7583 = vlaneseq
      %v7584 = vshrl.u32 %v7583, 7
      %v7585 = vsub.s32 %v7582, %v7584
      %v7586 = vrot.slane %v7572, %v7585
      %v7587 = vcombine.low %v7563, %v7579
      %v7588 = vcombine.high %v7563, %v7579
      %v7590 = vunpack.c.l.s4 1934713408
      %v7591 = vunpack.c.0.s8 %v7590
      %v7592 = vlaneseq
      %v7593 = vshrl.u32 %v7592, 7
      %v7594 = vsub.s32 %v7591, %v7593
      %v7595 = vrot.slane %v7587, %v7594
      %v7597 = vunpack.c.l.s4 1934713408
      %v7598 = vunpack.c.0.s8 %v7597
      %v7599 = vlaneseq
      %v7600 = vshrl.u32 %v7599, 7
      %v7601 = vsub.s32 %v7598, %v7600
      %v7602 = vrot.slane %v7588, %v7601
      %v7603 = vcombine.low %v7570, %v7586
      %v7604 = vcombine.high %v7570, %v7586
      %v7606 = vunpack.c.l.s4 1934713408
      %v7607 = vunpack.c.0.s8 %v7606
      %v7608 = vlaneseq
      %v7609 = vshrl.u32 %v7608, 7
      %v7610 = vsub.s32 %v7607, %v7609
      %v7611 = vrot.slane %v7603, %v7610
      %v7613 = vunpack.c.l.s4 1934713408
      %v7614 = vunpack.c.0.s8 %v7613
      %v7615 = vlaneseq
      %v7616 = vshrl.u32 %v7615, 7
      %v7617 = vsub.s32 %v7614, %v7616
      %v7618 = vrot.slane %v7604, %v7617
      %v7619 = vcombine.high %v7595, 0.0
      %v7620 = vcombine.high %v7602, 0.0
      %v7621 = vcombine.high %v7611, 0.0
      %v7622 = vcombine.high %v7618, 0.0
      %7624 = vrot.lane.b32.xlu0 %v7551, 16
      %v7625 = vpop.permute.xlu0 %7624
      %7628 = vrot.lane.b32.xlu0 %v7534, 32
      %v7629 = vpop.permute.xlu0 %7628
      %7632 = vrot.lane.b32.xlu0 %v7552, 48
      %v7633 = vpop.permute.xlu0 %7632
      %7636 = vrot.lane.b32.xlu0 %v7543, 64
      %v7637 = vpop.permute.xlu0 %7636
      %7640 = vrot.lane.b32.xlu0 %v7553, 80
      %v7641 = vpop.permute.xlu0 %7640
      %7644 = vrot.lane.b32.xlu0 %v7550, 96
      %v7645 = vpop.permute.xlu0 %7644
      %7648 = vrot.lane.b32.xlu0 %v7554, 112
      %v7649 = vpop.permute.xlu0 %7648
      %7652 = vrot.lane.b32.xlu0 %v7619, 16
      %v7653 = vpop.permute.xlu0 %7652
      %7656 = vrot.lane.b32.xlu0 %v7602, 32
      %v7657 = vpop.permute.xlu0 %7656
      %7660 = vrot.lane.b32.xlu0 %v7620, 48
      %v7661 = vpop.permute.xlu0 %7660
      %7664 = vrot.lane.b32.xlu0 %v7611, 64
      %v7665 = vpop.permute.xlu0 %7664
      %7668 = vrot.lane.b32.xlu0 %v7621, 80
      %v7669 = vpop.permute.xlu0 %7668
      %7672 = vrot.lane.b32.xlu0 %v7618, 96
      %v7673 = vpop.permute.xlu0 %7672
      %7676 = vrot.lane.b32.xlu0 %v7622, 112
      %v7677 = vpop.permute.xlu0 %7676
      %v7679 = vsel %vm534, %v7527, %v7625
      %v7680 = vsel %vm536, %v7679, %v7629
      %v7681 = vsel %vm538, %v7680, %v7633
      %v7682 = vsel %vm540, %v7681, %v7637
      %v7683 = vsel %vm542, %v7682, %v7641
      %v7684 = vsel %vm544, %v7683, %v7645
      %v7685 = vsel %vm546, %v7684, %v7649
      %v7686 = vsel %vm534, %v7595, %v7653
      %v7687 = vsel %vm536, %v7686, %v7657
      %v7688 = vsel %vm538, %v7687, %v7661
      %v7689 = vsel %vm540, %v7688, %v7665
      %v7690 = vsel %vm542, %v7689, %v7669
      %v7691 = vsel %vm544, %v7690, %v7673
      %v7692 = vsel %vm546, %v7691, %v7677
      %7693 = vrot.lane.b32.xlu0 %v6771, 124
      %v7694 = vpop.permute.xlu0 %7693
      %7695 = vrot.lane.b32.xlu0 %v6773, 124
      %v7696 = vpop.permute.xlu0 %7695
      %7697 = vrot.lane.b32.xlu0 %v6776, 124
      %v7698 = vpop.permute.xlu0 %7697
      %7699 = vrot.lane.b32.xlu0 %v6778, 124
      %v7700 = vpop.permute.xlu0 %7699
      %7701 = vrot.lane.b32.xlu0 %v6781, 124
      %v7702 = vpop.permute.xlu0 %7701
      %7703 = vrot.lane.b32.xlu0 %v6783, 124
      %v7704 = vpop.permute.xlu0 %7703
      %7705 = vrot.lane.b32.xlu0 %v6786, 124
      %v7706 = vpop.permute.xlu0 %7705
      %7707 = vrot.lane.b32.xlu0 %v6788, 124
      %v7708 = vpop.permute.xlu0 %7707
      %v7717 = vcombine.low %v7694, %v7702
      %v7718 = vcombine.high %v7694, %v7702
      %v7720 = vunpack.c.l.s4 1983009808
      %v7721 = vunpack.c.0.s8 %v7720
      %v7722 = vlaneseq
      %v7723 = vshrl.u32 %v7722, 7
      %v7724 = vsub.s32 %v7721, %v7723
      %v7725 = vrot.slane %v7717, %v7724
      %v7727 = vunpack.c.l.s4 1983009808
      %v7728 = vunpack.c.0.s8 %v7727
      %v7729 = vlaneseq
      %v7730 = vshrl.u32 %v7729, 7
      %v7731 = vsub.s32 %v7728, %v7730
      %v7732 = vrot.slane %v7718, %v7731
      %v7733 = vcombine.low %v7698, %v7706
      %v7734 = vcombine.high %v7698, %v7706
      %v7736 = vunpack.c.l.s4 1983009808
      %v7737 = vunpack.c.0.s8 %v7736
      %v7738 = vlaneseq
      %v7739 = vshrl.u32 %v7738, 7
      %v7740 = vsub.s32 %v7737, %v7739
      %v7741 = vrot.slane %v7733, %v7740
      %v7743 = vunpack.c.l.s4 1983009808
      %v7744 = vunpack.c.0.s8 %v7743
      %v7745 = vlaneseq
      %v7746 = vshrl.u32 %v7745, 7
      %v7747 = vsub.s32 %v7744, %v7746
      %v7748 = vrot.slane %v7734, %v7747
      %v7749 = vcombine.low %v7725, %v7741
      %v7750 = vcombine.high %v7725, %v7741
      %v7752 = vunpack.c.l.s4 1934713408
      %v7753 = vunpack.c.0.s8 %v7752
      %v7754 = vlaneseq
      %v7755 = vshrl.u32 %v7754, 7
      %v7756 = vsub.s32 %v7753, %v7755
      %v7757 = vrot.slane %v7749, %v7756
      %v7759 = vunpack.c.l.s4 1934713408
      %v7760 = vunpack.c.0.s8 %v7759
      %v7761 = vlaneseq
      %v7762 = vshrl.u32 %v7761, 7
      %v7763 = vsub.s32 %v7760, %v7762
      %v7764 = vrot.slane %v7750, %v7763
      %v7765 = vcombine.low %v7732, %v7748
      %v7766 = vcombine.high %v7732, %v7748
      %v7768 = vunpack.c.l.s4 1934713408
      %v7769 = vunpack.c.0.s8 %v7768
      %v7770 = vlaneseq
      %v7771 = vshrl.u32 %v7770, 7
      %v7772 = vsub.s32 %v7769, %v7771
      %v7773 = vrot.slane %v7765, %v7772
      %v7775 = vunpack.c.l.s4 1934713408
      %v7776 = vunpack.c.0.s8 %v7775
      %v7777 = vlaneseq
      %v7778 = vshrl.u32 %v7777, 7
      %v7779 = vsub.s32 %v7776, %v7778
      %v7780 = vrot.slane %v7766, %v7779
      %v7781 = vcombine.high %v7757, 0.0
      %v7782 = vcombine.high %v7764, 0.0
      %v7783 = vcombine.high %v7773, 0.0
      %v7784 = vcombine.high %v7780, 0.0
      %v7785 = vcombine.low %v7696, %v7704
      %v7786 = vcombine.high %v7696, %v7704
      %v7788 = vunpack.c.l.s4 1983009808
      %v7789 = vunpack.c.0.s8 %v7788
      %v7790 = vlaneseq
      %v7791 = vshrl.u32 %v7790, 7
      %v7792 = vsub.s32 %v7789, %v7791
      %v7793 = vrot.slane %v7785, %v7792
      %v7795 = vunpack.c.l.s4 1983009808
      %v7796 = vunpack.c.0.s8 %v7795
      %v7797 = vlaneseq
      %v7798 = vshrl.u32 %v7797, 7
      %v7799 = vsub.s32 %v7796, %v7798
      %v7800 = vrot.slane %v7786, %v7799
      %v7801 = vcombine.low %v7700, %v7708
      %v7802 = vcombine.high %v7700, %v7708
      %v7804 = vunpack.c.l.s4 1983009808
      %v7805 = vunpack.c.0.s8 %v7804
      %v7806 = vlaneseq
      %v7807 = vshrl.u32 %v7806, 7
      %v7808 = vsub.s32 %v7805, %v7807
      %v7809 = vrot.slane %v7801, %v7808
      %v7811 = vunpack.c.l.s4 1983009808
      %v7812 = vunpack.c.0.s8 %v7811
      %v7813 = vlaneseq
      %v7814 = vshrl.u32 %v7813, 7
      %v7815 = vsub.s32 %v7812, %v7814
      %v7816 = vrot.slane %v7802, %v7815
      %v7817 = vcombine.low %v7793, %v7809
      %v7818 = vcombine.high %v7793, %v7809
      %v7820 = vunpack.c.l.s4 1934713408
      %v7821 = vunpack.c.0.s8 %v7820
      %v7822 = vlaneseq
      %v7823 = vshrl.u32 %v7822, 7
      %v7824 = vsub.s32 %v7821, %v7823
      %v7825 = vrot.slane %v7817, %v7824
      %v7827 = vunpack.c.l.s4 1934713408
      %v7828 = vunpack.c.0.s8 %v7827
      %v7829 = vlaneseq
      %v7830 = vshrl.u32 %v7829, 7
      %v7831 = vsub.s32 %v7828, %v7830
      %v7832 = vrot.slane %v7818, %v7831
      %v7833 = vcombine.low %v7800, %v7816
      %v7834 = vcombine.high %v7800, %v7816
      %v7836 = vunpack.c.l.s4 1934713408
      %v7837 = vunpack.c.0.s8 %v7836
      %v7838 = vlaneseq
      %v7839 = vshrl.u32 %v7838, 7
      %v7840 = vsub.s32 %v7837, %v7839
      %v7841 = vrot.slane %v7833, %v7840
      %v7843 = vunpack.c.l.s4 1934713408
      %v7844 = vunpack.c.0.s8 %v7843
      %v7845 = vlaneseq
      %v7846 = vshrl.u32 %v7845, 7
      %v7847 = vsub.s32 %v7844, %v7846
      %v7848 = vrot.slane %v7834, %v7847
      %v7849 = vcombine.high %v7825, 0.0
      %v7850 = vcombine.high %v7832, 0.0
      %v7851 = vcombine.high %v7841, 0.0
      %v7852 = vcombine.high %v7848, 0.0
      %7854 = vrot.lane.b32.xlu0 %v7781, 16
      %v7855 = vpop.permute.xlu0 %7854
      %7858 = vrot.lane.b32.xlu0 %v7764, 32
      %v7859 = vpop.permute.xlu0 %7858
      %7862 = vrot.lane.b32.xlu0 %v7782, 48
      %v7863 = vpop.permute.xlu0 %7862
      %7866 = vrot.lane.b32.xlu0 %v7773, 64
      %v7867 = vpop.permute.xlu0 %7866
      %7870 = vrot.lane.b32.xlu0 %v7783, 80
      %v7871 = vpop.permute.xlu0 %7870
      %7874 = vrot.lane.b32.xlu0 %v7780, 96
      %v7875 = vpop.permute.xlu0 %7874
      %7878 = vrot.lane.b32.xlu0 %v7784, 112
      %v7879 = vpop.permute.xlu0 %7878
      %7882 = vrot.lane.b32.xlu0 %v7849, 16
      %v7883 = vpop.permute.xlu0 %7882
      %7886 = vrot.lane.b32.xlu0 %v7832, 32
      %v7887 = vpop.permute.xlu0 %7886
      %7890 = vrot.lane.b32.xlu0 %v7850, 48
      %v7891 = vpop.permute.xlu0 %7890
      %7894 = vrot.lane.b32.xlu0 %v7841, 64
      %v7895 = vpop.permute.xlu0 %7894
      %7898 = vrot.lane.b32.xlu0 %v7851, 80
      %v7899 = vpop.permute.xlu0 %7898
      %7902 = vrot.lane.b32.xlu0 %v7848, 96
      %v7903 = vpop.permute.xlu0 %7902
      %7906 = vrot.lane.b32.xlu0 %v7852, 112
      %v7907 = vpop.permute.xlu0 %7906
      %v7909 = vsel %vm534, %v7757, %v7855
      %v7910 = vsel %vm536, %v7909, %v7859
      %v7911 = vsel %vm538, %v7910, %v7863
      %v7912 = vsel %vm540, %v7911, %v7867
      %v7913 = vsel %vm542, %v7912, %v7871
      %v7914 = vsel %vm544, %v7913, %v7875
      %v7915 = vsel %vm546, %v7914, %v7879
      %v7916 = vsel %vm534, %v7825, %v7883
      %v7917 = vsel %vm536, %v7916, %v7887
      %v7918 = vsel %vm538, %v7917, %v7891
      %v7919 = vsel %vm540, %v7918, %v7895
      %v7920 = vsel %vm542, %v7919, %v7899
      %v7921 = vsel %vm544, %v7920, %v7903
      %v7922 = vsel %vm546, %v7921, %v7907
      %v7923 = vrot.slane %v3318, 4
      %v7924 = vrot.slane %v3296, 4
      %v7925 = vsel %vm2993, %v7923, %v7924
      %v7926 = vrot.slane %v3322, 4
      %v7927 = vsel %vm2993, %v7924, %v7926
      %v7928 = vrot.slane %v3319, 4
      %v7929 = vrot.slane %v3299, 4
      %v7930 = vsel %vm2993, %v7928, %v7929
      %v7931 = vrot.slane %v3323, 4
      %v7932 = vsel %vm2993, %v7929, %v7931
      %v7933 = vrot.slane %v3320, 4
      %v7934 = vrot.slane %v3302, 4
      %v7935 = vsel %vm2993, %v7933, %v7934
      %v7936 = vrot.slane %v3324, 4
      %v7937 = vsel %vm2993, %v7934, %v7936
      %v7938 = vrot.slane %v3321, 4
      %v7939 = vrot.slane %v3305, 4
      %v7940 = vsel %vm2993, %v7938, %v7939
      %v7941 = vrot.slane %v3325, 4
      %v7942 = vsel %vm2993, %v7939, %v7941
      %v7951 = vcombine.low %v7925, %v7935
      %v7952 = vcombine.high %v7925, %v7935
      %v7954 = vunpack.c.l.s4 1983009808
      %v7955 = vunpack.c.0.s8 %v7954
      %v7956 = vlaneseq
      %v7957 = vshrl.u32 %v7956, 7
      %v7958 = vsub.s32 %v7955, %v7957
      %v7959 = vrot.slane %v7951, %v7958
      %v7961 = vunpack.c.l.s4 1983009808
      %v7962 = vunpack.c.0.s8 %v7961
      %v7963 = vlaneseq
      %v7964 = vshrl.u32 %v7963, 7
      %v7965 = vsub.s32 %v7962, %v7964
      %v7966 = vrot.slane %v7952, %v7965
      %v7967 = vcombine.low %v7930, %v7940
      %v7968 = vcombine.high %v7930, %v7940
      %v7970 = vunpack.c.l.s4 1983009808
      %v7971 = vunpack.c.0.s8 %v7970
      %v7972 = vlaneseq
      %v7973 = vshrl.u32 %v7972, 7
      %v7974 = vsub.s32 %v7971, %v7973
      %v7975 = vrot.slane %v7967, %v7974
      %v7977 = vunpack.c.l.s4 1983009808
      %v7978 = vunpack.c.0.s8 %v7977
      %v7979 = vlaneseq
      %v7980 = vshrl.u32 %v7979, 7
      %v7981 = vsub.s32 %v7978, %v7980
      %v7982 = vrot.slane %v7968, %v7981
      %v7983 = vcombine.low %v7959, %v7975
      %v7984 = vcombine.high %v7959, %v7975
      %v7986 = vunpack.c.l.s4 1934713408
      %v7987 = vunpack.c.0.s8 %v7986
      %v7988 = vlaneseq
      %v7989 = vshrl.u32 %v7988, 7
      %v7990 = vsub.s32 %v7987, %v7989
      %v7991 = vrot.slane %v7983, %v7990
      %v7993 = vunpack.c.l.s4 1934713408
      %v7994 = vunpack.c.0.s8 %v7993
      %v7995 = vlaneseq
      %v7996 = vshrl.u32 %v7995, 7
      %v7997 = vsub.s32 %v7994, %v7996
      %v7998 = vrot.slane %v7984, %v7997
      %v7999 = vcombine.low %v7966, %v7982
      %v8000 = vcombine.high %v7966, %v7982
      %v8002 = vunpack.c.l.s4 1934713408
      %v8003 = vunpack.c.0.s8 %v8002
      %v8004 = vlaneseq
      %v8005 = vshrl.u32 %v8004, 7
      %v8006 = vsub.s32 %v8003, %v8005
      %v8007 = vrot.slane %v7999, %v8006
      %v8009 = vunpack.c.l.s4 1934713408
      %v8010 = vunpack.c.0.s8 %v8009
      %v8011 = vlaneseq
      %v8012 = vshrl.u32 %v8011, 7
      %v8013 = vsub.s32 %v8010, %v8012
      %v8014 = vrot.slane %v8000, %v8013
      %v8015 = vcombine.high %v7991, 0.0
      %v8016 = vcombine.high %v7998, 0.0
      %v8017 = vcombine.high %v8007, 0.0
      %v8018 = vcombine.high %v8014, 0.0
      %v8019 = vcombine.low %v7927, %v7937
      %v8020 = vcombine.high %v7927, %v7937
      %v8022 = vunpack.c.l.s4 1983009808
      %v8023 = vunpack.c.0.s8 %v8022
      %v8024 = vlaneseq
      %v8025 = vshrl.u32 %v8024, 7
      %v8026 = vsub.s32 %v8023, %v8025
      %v8027 = vrot.slane %v8019, %v8026
      %v8029 = vunpack.c.l.s4 1983009808
      %v8030 = vunpack.c.0.s8 %v8029
      %v8031 = vlaneseq
      %v8032 = vshrl.u32 %v8031, 7
      %v8033 = vsub.s32 %v8030, %v8032
      %v8034 = vrot.slane %v8020, %v8033
      %v8035 = vcombine.low %v7932, %v7942
      %v8036 = vcombine.high %v7932, %v7942
      %v8038 = vunpack.c.l.s4 1983009808
      %v8039 = vunpack.c.0.s8 %v8038
      %v8040 = vlaneseq
      %v8041 = vshrl.u32 %v8040, 7
      %v8042 = vsub.s32 %v8039, %v8041
      %v8043 = vrot.slane %v8035, %v8042
      %v8045 = vunpack.c.l.s4 1983009808
      %v8046 = vunpack.c.0.s8 %v8045
      %v8047 = vlaneseq
      %v8048 = vshrl.u32 %v8047, 7
      %v8049 = vsub.s32 %v8046, %v8048
      %v8050 = vrot.slane %v8036, %v8049
      %v8051 = vcombine.low %v8027, %v8043
      %v8052 = vcombine.high %v8027, %v8043
      %v8054 = vunpack.c.l.s4 1934713408
      %v8055 = vunpack.c.0.s8 %v8054
      %v8056 = vlaneseq
      %v8057 = vshrl.u32 %v8056, 7
      %v8058 = vsub.s32 %v8055, %v8057
      %v8059 = vrot.slane %v8051, %v8058
      %v8061 = vunpack.c.l.s4 1934713408
      %v8062 = vunpack.c.0.s8 %v8061
      %v8063 = vlaneseq
      %v8064 = vshrl.u32 %v8063, 7
      %v8065 = vsub.s32 %v8062, %v8064
      %v8066 = vrot.slane %v8052, %v8065
      %v8067 = vcombine.low %v8034, %v8050
      %v8068 = vcombine.high %v8034, %v8050
      %v8070 = vunpack.c.l.s4 1934713408
      %v8071 = vunpack.c.0.s8 %v8070
      %v8072 = vlaneseq
      %v8073 = vshrl.u32 %v8072, 7
      %v8074 = vsub.s32 %v8071, %v8073
      %v8075 = vrot.slane %v8067, %v8074
      %v8077 = vunpack.c.l.s4 1934713408
      %v8078 = vunpack.c.0.s8 %v8077
      %v8079 = vlaneseq
      %v8080 = vshrl.u32 %v8079, 7
      %v8081 = vsub.s32 %v8078, %v8080
      %v8082 = vrot.slane %v8068, %v8081
      %v8083 = vcombine.high %v8059, 0.0
      %v8084 = vcombine.high %v8066, 0.0
      %v8085 = vcombine.high %v8075, 0.0
      %v8086 = vcombine.high %v8082, 0.0
      %8088 = vrot.lane.b32.xlu0 %v8015, 16
      %v8089 = vpop.permute.xlu0 %8088
      %8092 = vrot.lane.b32.xlu0 %v7998, 32
      %v8093 = vpop.permute.xlu0 %8092
      %8096 = vrot.lane.b32.xlu0 %v8016, 48
      %v8097 = vpop.permute.xlu0 %8096
      %8100 = vrot.lane.b32.xlu0 %v8007, 64
      %v8101 = vpop.permute.xlu0 %8100
      %8104 = vrot.lane.b32.xlu0 %v8017, 80
      %v8105 = vpop.permute.xlu0 %8104
      %8108 = vrot.lane.b32.xlu0 %v8014, 96
      %v8109 = vpop.permute.xlu0 %8108
      %8112 = vrot.lane.b32.xlu0 %v8018, 112
      %v8113 = vpop.permute.xlu0 %8112
      %8116 = vrot.lane.b32.xlu0 %v8083, 16
      %v8117 = vpop.permute.xlu0 %8116
      %8120 = vrot.lane.b32.xlu0 %v8066, 32
      %v8121 = vpop.permute.xlu0 %8120
      %8124 = vrot.lane.b32.xlu0 %v8084, 48
      %v8125 = vpop.permute.xlu0 %8124
      %8128 = vrot.lane.b32.xlu0 %v8075, 64
      %v8129 = vpop.permute.xlu0 %8128
      %8132 = vrot.lane.b32.xlu0 %v8085, 80
      %v8133 = vpop.permute.xlu0 %8132
      %8136 = vrot.lane.b32.xlu0 %v8082, 96
      %v8137 = vpop.permute.xlu0 %8136
      %8140 = vrot.lane.b32.xlu0 %v8086, 112
      %v8141 = vpop.permute.xlu0 %8140
      %v8143 = vsel %vm534, %v7991, %v8089
      %v8144 = vsel %vm536, %v8143, %v8093
      %v8145 = vsel %vm538, %v8144, %v8097
      %v8146 = vsel %vm540, %v8145, %v8101
      %v8147 = vsel %vm542, %v8146, %v8105
      %v8148 = vsel %vm544, %v8147, %v8109
      %v8149 = vsel %vm546, %v8148, %v8113
      %v8150 = vsel %vm534, %v8059, %v8117
      %v8151 = vsel %vm536, %v8150, %v8121
      %v8152 = vsel %vm538, %v8151, %v8125
      %v8153 = vsel %vm540, %v8152, %v8129
      %v8154 = vsel %vm542, %v8153, %v8133
      %v8155 = vsel %vm544, %v8154, %v8137
      %v8156 = vsel %vm546, %v8155, %v8141
      %8157 = vrot.lane.b32.xlu0 %v7925, 127
      %v8158 = vpop.permute.xlu0 %8157
      %8159 = vrot.lane.b32.xlu0 %v7927, 127
      %v8160 = vpop.permute.xlu0 %8159
      %8161 = vrot.lane.b32.xlu0 %v7930, 127
      %v8162 = vpop.permute.xlu0 %8161
      %8163 = vrot.lane.b32.xlu0 %v7932, 127
      %v8164 = vpop.permute.xlu0 %8163
      %8165 = vrot.lane.b32.xlu0 %v7935, 127
      %v8166 = vpop.permute.xlu0 %8165
      %8167 = vrot.lane.b32.xlu0 %v7937, 127
      %v8168 = vpop.permute.xlu0 %8167
      %8169 = vrot.lane.b32.xlu0 %v7940, 127
      %v8170 = vpop.permute.xlu0 %8169
      %8171 = vrot.lane.b32.xlu0 %v7942, 127
      %v8172 = vpop.permute.xlu0 %8171
      %v8181 = vcombine.low %v8158, %v8166
      %v8182 = vcombine.high %v8158, %v8166
      %v8184 = vunpack.c.l.s4 1983009808
      %v8185 = vunpack.c.0.s8 %v8184
      %v8186 = vlaneseq
      %v8187 = vshrl.u32 %v8186, 7
      %v8188 = vsub.s32 %v8185, %v8187
      %v8189 = vrot.slane %v8181, %v8188
      %v8191 = vunpack.c.l.s4 1983009808
      %v8192 = vunpack.c.0.s8 %v8191
      %v8193 = vlaneseq
      %v8194 = vshrl.u32 %v8193, 7
      %v8195 = vsub.s32 %v8192, %v8194
      %v8196 = vrot.slane %v8182, %v8195
      %v8197 = vcombine.low %v8162, %v8170
      %v8198 = vcombine.high %v8162, %v8170
      %v8200 = vunpack.c.l.s4 1983009808
      %v8201 = vunpack.c.0.s8 %v8200
      %v8202 = vlaneseq
      %v8203 = vshrl.u32 %v8202, 7
      %v8204 = vsub.s32 %v8201, %v8203
      %v8205 = vrot.slane %v8197, %v8204
      %v8207 = vunpack.c.l.s4 1983009808
      %v8208 = vunpack.c.0.s8 %v8207
      %v8209 = vlaneseq
      %v8210 = vshrl.u32 %v8209, 7
      %v8211 = vsub.s32 %v8208, %v8210
      %v8212 = vrot.slane %v8198, %v8211
      %v8213 = vcombine.low %v8189, %v8205
      %v8214 = vcombine.high %v8189, %v8205
      %v8216 = vunpack.c.l.s4 1934713408
      %v8217 = vunpack.c.0.s8 %v8216
      %v8218 = vlaneseq
      %v8219 = vshrl.u32 %v8218, 7
      %v8220 = vsub.s32 %v8217, %v8219
      %v8221 = vrot.slane %v8213, %v8220
      %v8223 = vunpack.c.l.s4 1934713408
      %v8224 = vunpack.c.0.s8 %v8223
      %v8225 = vlaneseq
      %v8226 = vshrl.u32 %v8225, 7
      %v8227 = vsub.s32 %v8224, %v8226
      %v8228 = vrot.slane %v8214, %v8227
      %v8229 = vcombine.low %v8196, %v8212
      %v8230 = vcombine.high %v8196, %v8212
      %v8232 = vunpack.c.l.s4 1934713408
      %v8233 = vunpack.c.0.s8 %v8232
      %v8234 = vlaneseq
      %v8235 = vshrl.u32 %v8234, 7
      %v8236 = vsub.s32 %v8233, %v8235
      %v8237 = vrot.slane %v8229, %v8236
      %v8239 = vunpack.c.l.s4 1934713408
      %v8240 = vunpack.c.0.s8 %v8239
      %v8241 = vlaneseq
      %v8242 = vshrl.u32 %v8241, 7
      %v8243 = vsub.s32 %v8240, %v8242
      %v8244 = vrot.slane %v8230, %v8243
      %v8245 = vcombine.high %v8221, 0.0
      %v8246 = vcombine.high %v8228, 0.0
      %v8247 = vcombine.high %v8237, 0.0
      %v8248 = vcombine.high %v8244, 0.0
      %v8249 = vcombine.low %v8160, %v8168
      %v8250 = vcombine.high %v8160, %v8168
      %v8252 = vunpack.c.l.s4 1983009808
      %v8253 = vunpack.c.0.s8 %v8252
      %v8254 = vlaneseq
      %v8255 = vshrl.u32 %v8254, 7
      %v8256 = vsub.s32 %v8253, %v8255
      %v8257 = vrot.slane %v8249, %v8256
      %v8259 = vunpack.c.l.s4 1983009808
      %v8260 = vunpack.c.0.s8 %v8259
      %v8261 = vlaneseq
      %v8262 = vshrl.u32 %v8261, 7
      %v8263 = vsub.s32 %v8260, %v8262
      %v8264 = vrot.slane %v8250, %v8263
      %v8265 = vcombine.low %v8164, %v8172
      %v8266 = vcombine.high %v8164, %v8172
      %v8268 = vunpack.c.l.s4 1983009808
      %v8269 = vunpack.c.0.s8 %v8268
      %v8270 = vlaneseq
      %v8271 = vshrl.u32 %v8270, 7
      %v8272 = vsub.s32 %v8269, %v8271
      %v8273 = vrot.slane %v8265, %v8272
      %v8275 = vunpack.c.l.s4 1983009808
      %v8276 = vunpack.c.0.s8 %v8275
      %v8277 = vlaneseq
      %v8278 = vshrl.u32 %v8277, 7
      %v8279 = vsub.s32 %v8276, %v8278
      %v8280 = vrot.slane %v8266, %v8279
      %v8281 = vcombine.low %v8257, %v8273
      %v8282 = vcombine.high %v8257, %v8273
      %v8284 = vunpack.c.l.s4 1934713408
      %v8285 = vunpack.c.0.s8 %v8284
      %v8286 = vlaneseq
      %v8287 = vshrl.u32 %v8286, 7
      %v8288 = vsub.s32 %v8285, %v8287
      %v8289 = vrot.slane %v8281, %v8288
      %v8291 = vunpack.c.l.s4 1934713408
      %v8292 = vunpack.c.0.s8 %v8291
      %v8293 = vlaneseq
      %v8294 = vshrl.u32 %v8293, 7
      %v8295 = vsub.s32 %v8292, %v8294
      %v8296 = vrot.slane %v8282, %v8295
      %v8297 = vcombine.low %v8264, %v8280
      %v8298 = vcombine.high %v8264, %v8280
      %v8300 = vunpack.c.l.s4 1934713408
      %v8301 = vunpack.c.0.s8 %v8300
      %v8302 = vlaneseq
      %v8303 = vshrl.u32 %v8302, 7
      %v8304 = vsub.s32 %v8301, %v8303
      %v8305 = vrot.slane %v8297, %v8304
      %v8307 = vunpack.c.l.s4 1934713408
      %v8308 = vunpack.c.0.s8 %v8307
      %v8309 = vlaneseq
      %v8310 = vshrl.u32 %v8309, 7
      %v8311 = vsub.s32 %v8308, %v8310
      %v8312 = vrot.slane %v8298, %v8311
      %v8313 = vcombine.high %v8289, 0.0
      %v8314 = vcombine.high %v8296, 0.0
      %v8315 = vcombine.high %v8305, 0.0
      %v8316 = vcombine.high %v8312, 0.0
      %8318 = vrot.lane.b32.xlu0 %v8245, 16
      %v8319 = vpop.permute.xlu0 %8318
      %8322 = vrot.lane.b32.xlu0 %v8228, 32
      %v8323 = vpop.permute.xlu0 %8322
      %8326 = vrot.lane.b32.xlu0 %v8246, 48
      %v8327 = vpop.permute.xlu0 %8326
      %8330 = vrot.lane.b32.xlu0 %v8237, 64
      %v8331 = vpop.permute.xlu0 %8330
      %8334 = vrot.lane.b32.xlu0 %v8247, 80
      %v8335 = vpop.permute.xlu0 %8334
      %8338 = vrot.lane.b32.xlu0 %v8244, 96
      %v8339 = vpop.permute.xlu0 %8338
      %8342 = vrot.lane.b32.xlu0 %v8248, 112
      %v8343 = vpop.permute.xlu0 %8342
      %8346 = vrot.lane.b32.xlu0 %v8313, 16
      %v8347 = vpop.permute.xlu0 %8346
      %8350 = vrot.lane.b32.xlu0 %v8296, 32
      %v8351 = vpop.permute.xlu0 %8350
      %8354 = vrot.lane.b32.xlu0 %v8314, 48
      %v8355 = vpop.permute.xlu0 %8354
      %8358 = vrot.lane.b32.xlu0 %v8305, 64
      %v8359 = vpop.permute.xlu0 %8358
      %8362 = vrot.lane.b32.xlu0 %v8315, 80
      %v8363 = vpop.permute.xlu0 %8362
      %8366 = vrot.lane.b32.xlu0 %v8312, 96
      %v8367 = vpop.permute.xlu0 %8366
      %8370 = vrot.lane.b32.xlu0 %v8316, 112
      %v8371 = vpop.permute.xlu0 %8370
      %v8373 = vsel %vm534, %v8221, %v8319
      %v8374 = vsel %vm536, %v8373, %v8323
      %v8375 = vsel %vm538, %v8374, %v8327
      %v8376 = vsel %vm540, %v8375, %v8331
      %v8377 = vsel %vm542, %v8376, %v8335
      %v8378 = vsel %vm544, %v8377, %v8339
      %v8379 = vsel %vm546, %v8378, %v8343
      %v8380 = vsel %vm534, %v8289, %v8347
      %v8381 = vsel %vm536, %v8380, %v8351
      %v8382 = vsel %vm538, %v8381, %v8355
      %v8383 = vsel %vm540, %v8382, %v8359
      %v8384 = vsel %vm542, %v8383, %v8363
      %v8385 = vsel %vm544, %v8384, %v8367
      %v8386 = vsel %vm546, %v8385, %v8371
      %8387 = vrot.lane.b32.xlu0 %v7925, 126
      %v8388 = vpop.permute.xlu0 %8387
      %8389 = vrot.lane.b32.xlu0 %v7927, 126
      %v8390 = vpop.permute.xlu0 %8389
      %8391 = vrot.lane.b32.xlu0 %v7930, 126
      %v8392 = vpop.permute.xlu0 %8391
      %8393 = vrot.lane.b32.xlu0 %v7932, 126
      %v8394 = vpop.permute.xlu0 %8393
      %8395 = vrot.lane.b32.xlu0 %v7935, 126
      %v8396 = vpop.permute.xlu0 %8395
      %8397 = vrot.lane.b32.xlu0 %v7937, 126
      %v8398 = vpop.permute.xlu0 %8397
      %8399 = vrot.lane.b32.xlu0 %v7940, 126
      %v8400 = vpop.permute.xlu0 %8399
      %8401 = vrot.lane.b32.xlu0 %v7942, 126
      %v8402 = vpop.permute.xlu0 %8401
      %v8411 = vcombine.low %v8388, %v8396
      %v8412 = vcombine.high %v8388, %v8396
      %v8414 = vunpack.c.l.s4 1983009808
      %v8415 = vunpack.c.0.s8 %v8414
      %v8416 = vlaneseq
      %v8417 = vshrl.u32 %v8416, 7
      %v8418 = vsub.s32 %v8415, %v8417
      %v8419 = vrot.slane %v8411, %v8418
      %v8421 = vunpack.c.l.s4 1983009808
      %v8422 = vunpack.c.0.s8 %v8421
      %v8423 = vlaneseq
      %v8424 = vshrl.u32 %v8423, 7
      %v8425 = vsub.s32 %v8422, %v8424
      %v8426 = vrot.slane %v8412, %v8425
      %v8427 = vcombine.low %v8392, %v8400
      %v8428 = vcombine.high %v8392, %v8400
      %v8430 = vunpack.c.l.s4 1983009808
      %v8431 = vunpack.c.0.s8 %v8430
      %v8432 = vlaneseq
      %v8433 = vshrl.u32 %v8432, 7
      %v8434 = vsub.s32 %v8431, %v8433
      %v8435 = vrot.slane %v8427, %v8434
      %v8437 = vunpack.c.l.s4 1983009808
      %v8438 = vunpack.c.0.s8 %v8437
      %v8439 = vlaneseq
      %v8440 = vshrl.u32 %v8439, 7
      %v8441 = vsub.s32 %v8438, %v8440
      %v8442 = vrot.slane %v8428, %v8441
      %v8443 = vcombine.low %v8419, %v8435
      %v8444 = vcombine.high %v8419, %v8435
      %v8446 = vunpack.c.l.s4 1934713408
      %v8447 = vunpack.c.0.s8 %v8446
      %v8448 = vlaneseq
      %v8449 = vshrl.u32 %v8448, 7
      %v8450 = vsub.s32 %v8447, %v8449
      %v8451 = vrot.slane %v8443, %v8450
      %v8453 = vunpack.c.l.s4 1934713408
      %v8454 = vunpack.c.0.s8 %v8453
      %v8455 = vlaneseq
      %v8456 = vshrl.u32 %v8455, 7
      %v8457 = vsub.s32 %v8454, %v8456
      %v8458 = vrot.slane %v8444, %v8457
      %v8459 = vcombine.low %v8426, %v8442
      %v8460 = vcombine.high %v8426, %v8442
      %v8462 = vunpack.c.l.s4 1934713408
      %v8463 = vunpack.c.0.s8 %v8462
      %v8464 = vlaneseq
      %v8465 = vshrl.u32 %v8464, 7
      %v8466 = vsub.s32 %v8463, %v8465
      %v8467 = vrot.slane %v8459, %v8466
      %v8469 = vunpack.c.l.s4 1934713408
      %v8470 = vunpack.c.0.s8 %v8469
      %v8471 = vlaneseq
      %v8472 = vshrl.u32 %v8471, 7
      %v8473 = vsub.s32 %v8470, %v8472
      %v8474 = vrot.slane %v8460, %v8473
      %v8475 = vcombine.high %v8451, 0.0
      %v8476 = vcombine.high %v8458, 0.0
      %v8477 = vcombine.high %v8467, 0.0
      %v8478 = vcombine.high %v8474, 0.0
      %v8479 = vcombine.low %v8390, %v8398
      %v8480 = vcombine.high %v8390, %v8398
      %v8482 = vunpack.c.l.s4 1983009808
      %v8483 = vunpack.c.0.s8 %v8482
      %v8484 = vlaneseq
      %v8485 = vshrl.u32 %v8484, 7
      %v8486 = vsub.s32 %v8483, %v8485
      %v8487 = vrot.slane %v8479, %v8486
      %v8489 = vunpack.c.l.s4 1983009808
      %v8490 = vunpack.c.0.s8 %v8489
      %v8491 = vlaneseq
      %v8492 = vshrl.u32 %v8491, 7
      %v8493 = vsub.s32 %v8490, %v8492
      %v8494 = vrot.slane %v8480, %v8493
      %v8495 = vcombine.low %v8394, %v8402
      %v8496 = vcombine.high %v8394, %v8402
      %v8498 = vunpack.c.l.s4 1983009808
      %v8499 = vunpack.c.0.s8 %v8498
      %v8500 = vlaneseq
      %v8501 = vshrl.u32 %v8500, 7
      %v8502 = vsub.s32 %v8499, %v8501
      %v8503 = vrot.slane %v8495, %v8502
      %v8505 = vunpack.c.l.s4 1983009808
      %v8506 = vunpack.c.0.s8 %v8505
      %v8507 = vlaneseq
      %v8508 = vshrl.u32 %v8507, 7
      %v8509 = vsub.s32 %v8506, %v8508
      %v8510 = vrot.slane %v8496, %v8509
      %v8511 = vcombine.low %v8487, %v8503
      %v8512 = vcombine.high %v8487, %v8503
      %v8514 = vunpack.c.l.s4 1934713408
      %v8515 = vunpack.c.0.s8 %v8514
      %v8516 = vlaneseq
      %v8517 = vshrl.u32 %v8516, 7
      %v8518 = vsub.s32 %v8515, %v8517
      %v8519 = vrot.slane %v8511, %v8518
      %v8521 = vunpack.c.l.s4 1934713408
      %v8522 = vunpack.c.0.s8 %v8521
      %v8523 = vlaneseq
      %v8524 = vshrl.u32 %v8523, 7
      %v8525 = vsub.s32 %v8522, %v8524
      %v8526 = vrot.slane %v8512, %v8525
      %v8527 = vcombine.low %v8494, %v8510
      %v8528 = vcombine.high %v8494, %v8510
      %v8530 = vunpack.c.l.s4 1934713408
      %v8531 = vunpack.c.0.s8 %v8530
      %v8532 = vlaneseq
      %v8533 = vshrl.u32 %v8532, 7
      %v8534 = vsub.s32 %v8531, %v8533
      %v8535 = vrot.slane %v8527, %v8534
      %v8537 = vunpack.c.l.s4 1934713408
      %v8538 = vunpack.c.0.s8 %v8537
      %v8539 = vlaneseq
      %v8540 = vshrl.u32 %v8539, 7
      %v8541 = vsub.s32 %v8538, %v8540
      %v8542 = vrot.slane %v8528, %v8541
      %v8543 = vcombine.high %v8519, 0.0
      %v8544 = vcombine.high %v8526, 0.0
      %v8545 = vcombine.high %v8535, 0.0
      %v8546 = vcombine.high %v8542, 0.0
      %8548 = vrot.lane.b32.xlu0 %v8475, 16
      %v8549 = vpop.permute.xlu0 %8548
      %8552 = vrot.lane.b32.xlu0 %v8458, 32
      %v8553 = vpop.permute.xlu0 %8552
      %8556 = vrot.lane.b32.xlu0 %v8476, 48
      %v8557 = vpop.permute.xlu0 %8556
      %8560 = vrot.lane.b32.xlu0 %v8467, 64
      %v8561 = vpop.permute.xlu0 %8560
      %8564 = vrot.lane.b32.xlu0 %v8477, 80
      %v8565 = vpop.permute.xlu0 %8564
      %8568 = vrot.lane.b32.xlu0 %v8474, 96
      %v8569 = vpop.permute.xlu0 %8568
      %8572 = vrot.lane.b32.xlu0 %v8478, 112
      %v8573 = vpop.permute.xlu0 %8572
      %8576 = vrot.lane.b32.xlu0 %v8543, 16
      %v8577 = vpop.permute.xlu0 %8576
      %8580 = vrot.lane.b32.xlu0 %v8526, 32
      %v8581 = vpop.permute.xlu0 %8580
      %8584 = vrot.lane.b32.xlu0 %v8544, 48
      %v8585 = vpop.permute.xlu0 %8584
      %8588 = vrot.lane.b32.xlu0 %v8535, 64
      %v8589 = vpop.permute.xlu0 %8588
      %8592 = vrot.lane.b32.xlu0 %v8545, 80
      %v8593 = vpop.permute.xlu0 %8592
      %8596 = vrot.lane.b32.xlu0 %v8542, 96
      %v8597 = vpop.permute.xlu0 %8596
      %8600 = vrot.lane.b32.xlu0 %v8546, 112
      %v8601 = vpop.permute.xlu0 %8600
      %v8603 = vsel %vm534, %v8451, %v8549
      %v8604 = vsel %vm536, %v8603, %v8553
      %v8605 = vsel %vm538, %v8604, %v8557
      %v8606 = vsel %vm540, %v8605, %v8561
      %v8607 = vsel %vm542, %v8606, %v8565
      %v8608 = vsel %vm544, %v8607, %v8569
      %v8609 = vsel %vm546, %v8608, %v8573
      %v8610 = vsel %vm534, %v8519, %v8577
      %v8611 = vsel %vm536, %v8610, %v8581
      %v8612 = vsel %vm538, %v8611, %v8585
      %v8613 = vsel %vm540, %v8612, %v8589
      %v8614 = vsel %vm542, %v8613, %v8593
      %v8615 = vsel %vm544, %v8614, %v8597
      %v8616 = vsel %vm546, %v8615, %v8601
      %8617 = vrot.lane.b32.xlu0 %v7925, 125
      %v8618 = vpop.permute.xlu0 %8617
      %8619 = vrot.lane.b32.xlu0 %v7927, 125
      %v8620 = vpop.permute.xlu0 %8619
      %8621 = vrot.lane.b32.xlu0 %v7930, 125
      %v8622 = vpop.permute.xlu0 %8621
      %8623 = vrot.lane.b32.xlu0 %v7932, 125
      %v8624 = vpop.permute.xlu0 %8623
      %8625 = vrot.lane.b32.xlu0 %v7935, 125
      %v8626 = vpop.permute.xlu0 %8625
      %8627 = vrot.lane.b32.xlu0 %v7937, 125
      %v8628 = vpop.permute.xlu0 %8627
      %8629 = vrot.lane.b32.xlu0 %v7940, 125
      %v8630 = vpop.permute.xlu0 %8629
      %8631 = vrot.lane.b32.xlu0 %v7942, 125
      %v8632 = vpop.permute.xlu0 %8631
      %v8641 = vcombine.low %v8618, %v8626
      %v8642 = vcombine.high %v8618, %v8626
      %v8644 = vunpack.c.l.s4 1983009808
      %v8645 = vunpack.c.0.s8 %v8644
      %v8646 = vlaneseq
      %v8647 = vshrl.u32 %v8646, 7
      %v8648 = vsub.s32 %v8645, %v8647
      %v8649 = vrot.slane %v8641, %v8648
      %v8651 = vunpack.c.l.s4 1983009808
      %v8652 = vunpack.c.0.s8 %v8651
      %v8653 = vlaneseq
      %v8654 = vshrl.u32 %v8653, 7
      %v8655 = vsub.s32 %v8652, %v8654
      %v8656 = vrot.slane %v8642, %v8655
      %v8657 = vcombine.low %v8622, %v8630
      %v8658 = vcombine.high %v8622, %v8630
      %v8660 = vunpack.c.l.s4 1983009808
      %v8661 = vunpack.c.0.s8 %v8660
      %v8662 = vlaneseq
      %v8663 = vshrl.u32 %v8662, 7
      %v8664 = vsub.s32 %v8661, %v8663
      %v8665 = vrot.slane %v8657, %v8664
      %v8667 = vunpack.c.l.s4 1983009808
      %v8668 = vunpack.c.0.s8 %v8667
      %v8669 = vlaneseq
      %v8670 = vshrl.u32 %v8669, 7
      %v8671 = vsub.s32 %v8668, %v8670
      %v8672 = vrot.slane %v8658, %v8671
      %v8673 = vcombine.low %v8649, %v8665
      %v8674 = vcombine.high %v8649, %v8665
      %v8676 = vunpack.c.l.s4 1934713408
      %v8677 = vunpack.c.0.s8 %v8676
      %v8678 = vlaneseq
      %v8679 = vshrl.u32 %v8678, 7
      %v8680 = vsub.s32 %v8677, %v8679
      %v8681 = vrot.slane %v8673, %v8680
      %v8683 = vunpack.c.l.s4 1934713408
      %v8684 = vunpack.c.0.s8 %v8683
      %v8685 = vlaneseq
      %v8686 = vshrl.u32 %v8685, 7
      %v8687 = vsub.s32 %v8684, %v8686
      %v8688 = vrot.slane %v8674, %v8687
      %v8689 = vcombine.low %v8656, %v8672
      %v8690 = vcombine.high %v8656, %v8672
      %v8692 = vunpack.c.l.s4 1934713408
      %v8693 = vunpack.c.0.s8 %v8692
      %v8694 = vlaneseq
      %v8695 = vshrl.u32 %v8694, 7
      %v8696 = vsub.s32 %v8693, %v8695
      %v8697 = vrot.slane %v8689, %v8696
      %v8699 = vunpack.c.l.s4 1934713408
      %v8700 = vunpack.c.0.s8 %v8699
      %v8701 = vlaneseq
      %v8702 = vshrl.u32 %v8701, 7
      %v8703 = vsub.s32 %v8700, %v8702
      %v8704 = vrot.slane %v8690, %v8703
      %v8705 = vcombine.high %v8681, 0.0
      %v8706 = vcombine.high %v8688, 0.0
      %v8707 = vcombine.high %v8697, 0.0
      %v8708 = vcombine.high %v8704, 0.0
      %v8709 = vcombine.low %v8620, %v8628
      %v8710 = vcombine.high %v8620, %v8628
      %v8712 = vunpack.c.l.s4 1983009808
      %v8713 = vunpack.c.0.s8 %v8712
      %v8714 = vlaneseq
      %v8715 = vshrl.u32 %v8714, 7
      %v8716 = vsub.s32 %v8713, %v8715
      %v8717 = vrot.slane %v8709, %v8716
      %v8719 = vunpack.c.l.s4 1983009808
      %v8720 = vunpack.c.0.s8 %v8719
      %v8721 = vlaneseq
      %v8722 = vshrl.u32 %v8721, 7
      %v8723 = vsub.s32 %v8720, %v8722
      %v8724 = vrot.slane %v8710, %v8723
      %v8725 = vcombine.low %v8624, %v8632
      %v8726 = vcombine.high %v8624, %v8632
      %v8728 = vunpack.c.l.s4 1983009808
      %v8729 = vunpack.c.0.s8 %v8728
      %v8730 = vlaneseq
      %v8731 = vshrl.u32 %v8730, 7
      %v8732 = vsub.s32 %v8729, %v8731
      %v8733 = vrot.slane %v8725, %v8732
      %v8735 = vunpack.c.l.s4 1983009808
      %v8736 = vunpack.c.0.s8 %v8735
      %v8737 = vlaneseq
      %v8738 = vshrl.u32 %v8737, 7
      %v8739 = vsub.s32 %v8736, %v8738
      %v8740 = vrot.slane %v8726, %v8739
      %v8741 = vcombine.low %v8717, %v8733
      %v8742 = vcombine.high %v8717, %v8733
      %v8744 = vunpack.c.l.s4 1934713408
      %v8745 = vunpack.c.0.s8 %v8744
      %v8746 = vlaneseq
      %v8747 = vshrl.u32 %v8746, 7
      %v8748 = vsub.s32 %v8745, %v8747
      %v8749 = vrot.slane %v8741, %v8748
      %v8751 = vunpack.c.l.s4 1934713408
      %v8752 = vunpack.c.0.s8 %v8751
      %v8753 = vlaneseq
      %v8754 = vshrl.u32 %v8753, 7
      %v8755 = vsub.s32 %v8752, %v8754
      %v8756 = vrot.slane %v8742, %v8755
      %v8757 = vcombine.low %v8724, %v8740
      %v8758 = vcombine.high %v8724, %v8740
      %v8760 = vunpack.c.l.s4 1934713408
      %v8761 = vunpack.c.0.s8 %v8760
      %v8762 = vlaneseq
      %v8763 = vshrl.u32 %v8762, 7
      %v8764 = vsub.s32 %v8761, %v8763
      %v8765 = vrot.slane %v8757, %v8764
      %v8767 = vunpack.c.l.s4 1934713408
      %v8768 = vunpack.c.0.s8 %v8767
      %v8769 = vlaneseq
      %v8770 = vshrl.u32 %v8769, 7
      %v8771 = vsub.s32 %v8768, %v8770
      %v8772 = vrot.slane %v8758, %v8771
      %v8773 = vcombine.high %v8749, 0.0
      %v8774 = vcombine.high %v8756, 0.0
      %v8775 = vcombine.high %v8765, 0.0
      %v8776 = vcombine.high %v8772, 0.0
      %8778 = vrot.lane.b32.xlu0 %v8705, 16
      %v8779 = vpop.permute.xlu0 %8778
      %8782 = vrot.lane.b32.xlu0 %v8688, 32
      %v8783 = vpop.permute.xlu0 %8782
      %8786 = vrot.lane.b32.xlu0 %v8706, 48
      %v8787 = vpop.permute.xlu0 %8786
      %8790 = vrot.lane.b32.xlu0 %v8697, 64
      %v8791 = vpop.permute.xlu0 %8790
      %8794 = vrot.lane.b32.xlu0 %v8707, 80
      %v8795 = vpop.permute.xlu0 %8794
      %8798 = vrot.lane.b32.xlu0 %v8704, 96
      %v8799 = vpop.permute.xlu0 %8798
      %8802 = vrot.lane.b32.xlu0 %v8708, 112
      %v8803 = vpop.permute.xlu0 %8802
      %8806 = vrot.lane.b32.xlu0 %v8773, 16
      %v8807 = vpop.permute.xlu0 %8806
      %8810 = vrot.lane.b32.xlu0 %v8756, 32
      %v8811 = vpop.permute.xlu0 %8810
      %8814 = vrot.lane.b32.xlu0 %v8774, 48
      %v8815 = vpop.permute.xlu0 %8814
      %8818 = vrot.lane.b32.xlu0 %v8765, 64
      %v8819 = vpop.permute.xlu0 %8818
      %8822 = vrot.lane.b32.xlu0 %v8775, 80
      %v8823 = vpop.permute.xlu0 %8822
      %8826 = vrot.lane.b32.xlu0 %v8772, 96
      %v8827 = vpop.permute.xlu0 %8826
      %8830 = vrot.lane.b32.xlu0 %v8776, 112
      %v8831 = vpop.permute.xlu0 %8830
      %v8833 = vsel %vm534, %v8681, %v8779
      %v8834 = vsel %vm536, %v8833, %v8783
      %v8835 = vsel %vm538, %v8834, %v8787
      %v8836 = vsel %vm540, %v8835, %v8791
      %v8837 = vsel %vm542, %v8836, %v8795
      %v8838 = vsel %vm544, %v8837, %v8799
      %v8839 = vsel %vm546, %v8838, %v8803
      %v8840 = vsel %vm534, %v8749, %v8807
      %v8841 = vsel %vm536, %v8840, %v8811
      %v8842 = vsel %vm538, %v8841, %v8815
      %v8843 = vsel %vm540, %v8842, %v8819
      %v8844 = vsel %vm542, %v8843, %v8823
      %v8845 = vsel %vm544, %v8844, %v8827
      %v8846 = vsel %vm546, %v8845, %v8831
      %8847 = vrot.lane.b32.xlu0 %v7925, 124
      %v8848 = vpop.permute.xlu0 %8847
      %8849 = vrot.lane.b32.xlu0 %v7927, 124
      %v8850 = vpop.permute.xlu0 %8849
      %8851 = vrot.lane.b32.xlu0 %v7930, 124
      %v8852 = vpop.permute.xlu0 %8851
      %8853 = vrot.lane.b32.xlu0 %v7932, 124
      %v8854 = vpop.permute.xlu0 %8853
      %8855 = vrot.lane.b32.xlu0 %v7935, 124
      %v8856 = vpop.permute.xlu0 %8855
      %8857 = vrot.lane.b32.xlu0 %v7937, 124
      %v8858 = vpop.permute.xlu0 %8857
      %8859 = vrot.lane.b32.xlu0 %v7940, 124
      %v8860 = vpop.permute.xlu0 %8859
      %8861 = vrot.lane.b32.xlu0 %v7942, 124
      %v8862 = vpop.permute.xlu0 %8861
      %v8871 = vcombine.low %v8848, %v8856
      %v8872 = vcombine.high %v8848, %v8856
      %v8874 = vunpack.c.l.s4 1983009808
      %v8875 = vunpack.c.0.s8 %v8874
      %v8876 = vlaneseq
      %v8877 = vshrl.u32 %v8876, 7
      %v8878 = vsub.s32 %v8875, %v8877
      %v8879 = vrot.slane %v8871, %v8878
      %v8881 = vunpack.c.l.s4 1983009808
      %v8882 = vunpack.c.0.s8 %v8881
      %v8883 = vlaneseq
      %v8884 = vshrl.u32 %v8883, 7
      %v8885 = vsub.s32 %v8882, %v8884
      %v8886 = vrot.slane %v8872, %v8885
      %v8887 = vcombine.low %v8852, %v8860
      %v8888 = vcombine.high %v8852, %v8860
      %v8890 = vunpack.c.l.s4 1983009808
      %v8891 = vunpack.c.0.s8 %v8890
      %v8892 = vlaneseq
      %v8893 = vshrl.u32 %v8892, 7
      %v8894 = vsub.s32 %v8891, %v8893
      %v8895 = vrot.slane %v8887, %v8894
      %v8897 = vunpack.c.l.s4 1983009808
      %v8898 = vunpack.c.0.s8 %v8897
      %v8899 = vlaneseq
      %v8900 = vshrl.u32 %v8899, 7
      %v8901 = vsub.s32 %v8898, %v8900
      %v8902 = vrot.slane %v8888, %v8901
      %v8903 = vcombine.low %v8879, %v8895
      %v8904 = vcombine.high %v8879, %v8895
      %v8906 = vunpack.c.l.s4 1934713408
      %v8907 = vunpack.c.0.s8 %v8906
      %v8908 = vlaneseq
      %v8909 = vshrl.u32 %v8908, 7
      %v8910 = vsub.s32 %v8907, %v8909
      %v8911 = vrot.slane %v8903, %v8910
      %v8913 = vunpack.c.l.s4 1934713408
      %v8914 = vunpack.c.0.s8 %v8913
      %v8915 = vlaneseq
      %v8916 = vshrl.u32 %v8915, 7
      %v8917 = vsub.s32 %v8914, %v8916
      %v8918 = vrot.slane %v8904, %v8917
      %v8919 = vcombine.low %v8886, %v8902
      %v8920 = vcombine.high %v8886, %v8902
      %v8922 = vunpack.c.l.s4 1934713408
      %v8923 = vunpack.c.0.s8 %v8922
      %v8924 = vlaneseq
      %v8925 = vshrl.u32 %v8924, 7
      %v8926 = vsub.s32 %v8923, %v8925
      %v8927 = vrot.slane %v8919, %v8926
      %v8929 = vunpack.c.l.s4 1934713408
      %v8930 = vunpack.c.0.s8 %v8929
      %v8931 = vlaneseq
      %v8932 = vshrl.u32 %v8931, 7
      %v8933 = vsub.s32 %v8930, %v8932
      %v8934 = vrot.slane %v8920, %v8933
      %v8935 = vcombine.high %v8911, 0.0
      %v8936 = vcombine.high %v8918, 0.0
      %v8937 = vcombine.high %v8927, 0.0
      %v8938 = vcombine.high %v8934, 0.0
      %v8939 = vcombine.low %v8850, %v8858
      %v8940 = vcombine.high %v8850, %v8858
      %v8942 = vunpack.c.l.s4 1983009808
      %v8943 = vunpack.c.0.s8 %v8942
      %v8944 = vlaneseq
      %v8945 = vshrl.u32 %v8944, 7
      %v8946 = vsub.s32 %v8943, %v8945
      %v8947 = vrot.slane %v8939, %v8946
      %v8949 = vunpack.c.l.s4 1983009808
      %v8950 = vunpack.c.0.s8 %v8949
      %v8951 = vlaneseq
      %v8952 = vshrl.u32 %v8951, 7
      %v8953 = vsub.s32 %v8950, %v8952
      %v8954 = vrot.slane %v8940, %v8953
      %v8955 = vcombine.low %v8854, %v8862
      %v8956 = vcombine.high %v8854, %v8862
      %v8958 = vunpack.c.l.s4 1983009808
      %v8959 = vunpack.c.0.s8 %v8958
      %v8960 = vlaneseq
      %v8961 = vshrl.u32 %v8960, 7
      %v8962 = vsub.s32 %v8959, %v8961
      %v8963 = vrot.slane %v8955, %v8962
      %v8965 = vunpack.c.l.s4 1983009808
      %v8966 = vunpack.c.0.s8 %v8965
      %v8967 = vlaneseq
      %v8968 = vshrl.u32 %v8967, 7
      %v8969 = vsub.s32 %v8966, %v8968
      %v8970 = vrot.slane %v8956, %v8969
      %v8971 = vcombine.low %v8947, %v8963
      %v8972 = vcombine.high %v8947, %v8963
      %v8974 = vunpack.c.l.s4 1934713408
      %v8975 = vunpack.c.0.s8 %v8974
      %v8976 = vlaneseq
      %v8977 = vshrl.u32 %v8976, 7
      %v8978 = vsub.s32 %v8975, %v8977
      %v8979 = vrot.slane %v8971, %v8978
      %v8981 = vunpack.c.l.s4 1934713408
      %v8982 = vunpack.c.0.s8 %v8981
      %v8983 = vlaneseq
      %v8984 = vshrl.u32 %v8983, 7
      %v8985 = vsub.s32 %v8982, %v8984
      %v8986 = vrot.slane %v8972, %v8985
      %v8987 = vcombine.low %v8954, %v8970
      %v8988 = vcombine.high %v8954, %v8970
      %v8990 = vunpack.c.l.s4 1934713408
      %v8991 = vunpack.c.0.s8 %v8990
      %v8992 = vlaneseq
      %v8993 = vshrl.u32 %v8992, 7
      %v8994 = vsub.s32 %v8991, %v8993
      %v8995 = vrot.slane %v8987, %v8994
      %v8997 = vunpack.c.l.s4 1934713408
      %v8998 = vunpack.c.0.s8 %v8997
      %v8999 = vlaneseq
      %v9000 = vshrl.u32 %v8999, 7
      %v9001 = vsub.s32 %v8998, %v9000
      %v9002 = vrot.slane %v8988, %v9001
      %v9003 = vcombine.high %v8979, 0.0
      %v9004 = vcombine.high %v8986, 0.0
      %v9005 = vcombine.high %v8995, 0.0
      %v9006 = vcombine.high %v9002, 0.0
      %9008 = vrot.lane.b32.xlu0 %v8935, 16
      %v9009 = vpop.permute.xlu0 %9008
      %9012 = vrot.lane.b32.xlu0 %v8918, 32
      %v9013 = vpop.permute.xlu0 %9012
      %9016 = vrot.lane.b32.xlu0 %v8936, 48
      %v9017 = vpop.permute.xlu0 %9016
      %9020 = vrot.lane.b32.xlu0 %v8927, 64
      %v9021 = vpop.permute.xlu0 %9020
      %9024 = vrot.lane.b32.xlu0 %v8937, 80
      %v9025 = vpop.permute.xlu0 %9024
      %9028 = vrot.lane.b32.xlu0 %v8934, 96
      %v9029 = vpop.permute.xlu0 %9028
      %9032 = vrot.lane.b32.xlu0 %v8938, 112
      %v9033 = vpop.permute.xlu0 %9032
      %9036 = vrot.lane.b32.xlu0 %v9003, 16
      %v9037 = vpop.permute.xlu0 %9036
      %9040 = vrot.lane.b32.xlu0 %v8986, 32
      %v9041 = vpop.permute.xlu0 %9040
      %9044 = vrot.lane.b32.xlu0 %v9004, 48
      %v9045 = vpop.permute.xlu0 %9044
      %9048 = vrot.lane.b32.xlu0 %v8995, 64
      %v9049 = vpop.permute.xlu0 %9048
      %9052 = vrot.lane.b32.xlu0 %v9005, 80
      %v9053 = vpop.permute.xlu0 %9052
      %9056 = vrot.lane.b32.xlu0 %v9002, 96
      %v9057 = vpop.permute.xlu0 %9056
      %9060 = vrot.lane.b32.xlu0 %v9006, 112
      %v9061 = vpop.permute.xlu0 %9060
      %v9063 = vsel %vm534, %v8911, %v9009
      %v9064 = vsel %vm536, %v9063, %v9013
      %v9065 = vsel %vm538, %v9064, %v9017
      %v9066 = vsel %vm540, %v9065, %v9021
      %v9067 = vsel %vm542, %v9066, %v9025
      %v9068 = vsel %vm544, %v9067, %v9029
      %v9069 = vsel %vm546, %v9068, %v9033
      %v9070 = vsel %vm534, %v8979, %v9037
      %v9071 = vsel %vm536, %v9070, %v9041
      %v9072 = vsel %vm538, %v9071, %v9045
      %v9073 = vsel %vm540, %v9072, %v9049
      %v9074 = vsel %vm542, %v9073, %v9053
      %v9075 = vsel %vm544, %v9074, %v9057
      %v9076 = vsel %vm546, %v9075, %v9061
      %v9079 = vrot.slane %v3758, 4
      %v9080 = vrot.slane %v3765, 4
      %v9085 = vrot.slane %v4218, 4
      %v9086 = vrot.slane %v4225, 4
      %v9091 = vrot.slane %v4686, 4
      %v9092 = vrot.slane %v4693, 4
      %v9097 = vrot.slane %v5146, 4
      %v9098 = vrot.slane %v5153, 4
      %v9103 = vrot.slane %v5606, 4
      %v9104 = vrot.slane %v5613, 4
      %v9109 = vrot.slane %v6070, 4
      %v9110 = vrot.slane %v6077, 4
      %v9115 = vrot.slane %v6530, 4
      %v9116 = vrot.slane %v6537, 4
      %v9121 = vrot.slane %v6995, 4
      %v9122 = vrot.slane %v7002, 4
      %v9125 = vsel %vm2993, %v3524, %v9079
      %v9126 = vsel %vm2993, %v3531, %v9080
      %v9127 = vsel %vm2993, %v3988, %v9085
      %v9128 = vsel %vm2993, %v3995, %v9086
      %v9129 = vsel %vm2993, %v4448, %v9091
      %v9130 = vsel %vm2993, %v4455, %v9092
      %v9131 = vsel %vm2993, %v4916, %v9097
      %v9132 = vsel %vm2993, %v4923, %v9098
      %v9133 = vsel %vm2993, %v5376, %v9103
      %v9134 = vsel %vm2993, %v5383, %v9104
      %v9135 = vsel %vm2993, %v5840, %v9109
      %v9136 = vsel %vm2993, %v5847, %v9110
      %v9137 = vsel %vm2993, %v6300, %v9115
      %v9138 = vsel %vm2993, %v6307, %v9116
      %v9139 = vsel %vm2993, %v6760, %v9121
      %v9140 = vsel %vm2993, %v6767, %v9122
      %v9143 = vrot.slane %v7455, 4
      %v9144 = vrot.slane %v7462, 4
      %v9149 = vrot.slane %v7915, 4
      %v9150 = vrot.slane %v7922, 4
      %v9155 = vrot.slane %v8379, 4
      %v9156 = vrot.slane %v8386, 4
      %v9161 = vrot.slane %v8839, 4
      %v9162 = vrot.slane %v8846, 4
      %v9165 = vsel %vm2993, %v7225, %v9143
      %v9166 = vsel %vm2993, %v7232, %v9144
      %v9167 = vsel %vm2993, %v7685, %v9149
      %v9168 = vsel %vm2993, %v7692, %v9150
      %v9169 = vsel %vm2993, %v8149, %v9155
      %v9170 = vsel %vm2993, %v8156, %v9156
      %v9171 = vsel %vm2993, %v8609, %v9161
      %v9172 = vsel %vm2993, %v8616, %v9162
      %v9173 = vld [vmem:[%s5] sm:$0xf]
      %v9174 = vpack.c.bf16 %v9127, %v9125
      %v9175 = vpack.c.bf16 %v9128, %v9126
      %v9176 = vpack.c.bf16 %v9131, %v9129
      %v9177 = vpack.c.bf16 %v9132, %v9130
      %v9178 = vpack.c.bf16 %v9135, %v9133
      %v9179 = vpack.c.bf16 %v9136, %v9134
      %v9180 = vpack.c.bf16 %v9139, %v9137
      %v9181 = vpack.c.bf16 %v9140, %v9138
      %v9182 = vpack.c.bf16 %v9167, %v9165
      %v9183 = vpack.c.bf16 %v9168, %v9166
      %v9184 = vpack.c.bf16 %v9171, %v9169
      %v9185 = vpack.c.bf16 %v9172, %v9170
      %v9186 = vpack.c.bf16 %v9069, %v9069
      %v9187 = vpack.c.bf16 %v9076, %v9076
      %v9188 = vld [vmem:[%s6] sm:$0xff]
      %9190 = vset.pattern.permute.xlu0 0
      %9191 = vperm.xlu0 %9190, %v9188
      %v9192 = vpop.permute.xlu0 %9191
      %vm9194 = vcmask 818176
      %v9196 = vsel %vm9194, %v9173, 0
      %v9199 = vsel %vm580, %v9186, 0
      %v9202 = vsel %vm580, %v9187, 0
      %9204 = vmatprep.subr.bf16.mxu0 %v9175
      %9205 = vmatpush1.bf16.msra.mxu0 %v9174
      %9206 = vmatprep.subr.bf16.mxu0 %v9177
      %9207 = vmatpush1.bf16.msra.mxu0 %v9176
      %9208 = vmatprep.subr.bf16.mxu0 %v9179
      %9209 = vmatpush1.bf16.msra.mxu0 %v9178
      %9210 = vmatprep.subr.bf16.mxu0 %v9181
      %9211 = vmatpush1.bf16.msra.mxu0 %v9180
      %9212 = vmatprep.subr.bf16.mxu0 %v9183
      %9213 = vmatpush1.bf16.msra.mxu0 %v9182
      %9214 = vmatprep.subr.bf16.mxu0 %v9185
      %9215 = vmatpush1.bf16.msra.mxu0 %v9184
      %9216 = vmatprep.subr.bf16.mxu0 %v9202
      %9217 = vmatpush1.bf16.msra.mxu0 %v9199
      %9218 = vmatprep.subr.bf16.mxu0 0
      %9219 = vmatpush1.bf16.msra.mxu0 0
      %9220 = vmatprep.subr.bf16.mxu0 0
      %9221 = vmatpush1.bf16.msra.mxu0 0
      %9222 = vmatprep.subr.bf16.mxu0 0
      %9223 = vmatpush1.bf16.msra.mxu0 0
      %9224 = vmatprep.subr.bf16.mxu0 0
      %9225 = vmatpush1.bf16.msra.mxu0 0
      %9226 = vmatprep.subr.bf16.mxu0 0
      %9227 = vmatpush1.bf16.msra.mxu0 0
      %9228 = vmatprep.subr.bf16.mxu0 0
      %9229 = vmatpush1.bf16.msra.mxu0 0
      %9230 = vmatprep.subr.bf16.mxu0 0
      %9231 = vmatpush1.bf16.msra.mxu0 0
      %9232 = vmatprep.subr.bf16.mxu0 0
      %9233 = vmatpush1.bf16.msra.mxu0 0
      %9234 = vmatprep.subr.bf16.mxu0 0
      %9235 = vmatpush1.bf16.msra.mxu0 0
      %9236 = vmatprep.mubr.bf16.mxu0 0
      %9237 = vmatmul.mubr.bf16.gmra.mrb[0].mxu0 %v9196
      %v9238 = vpop.f32.mrb[0].mxu0
      %v9239 = vadd.f32 %v9192, %v9238
      %v9240 = vpop.f32.mrb[0].mxu0
      %v9241 = vadd.f32 %v9192, %v9240
      %v9242 = vpop.f32.mrb[0].mxu0
      %v9243 = vpop.f32.mrb[0].mxu0
      %9244 = vdwg.mxu0
      %v9245 = vmax.f32 %v9239, 0.0
      %v9246 = vmax.f32 %v9241, 0.0
      %9255 = vrot.lane.b32.xlu0 %v334, 1
      %v9256 = vpop.permute.xlu0 %9255
      %9257 = vrot.lane.b32.xlu0 %v335, 1
      %v9258 = vpop.permute.xlu0 %9257
      %9259 = vrot.lane.b32.xlu0 %v336, 1
      %v9260 = vpop.permute.xlu0 %9259
      %9261 = vrot.lane.b32.xlu0 %v337, 1
      %v9262 = vpop.permute.xlu0 %9261
      %9263 = vrot.lane.b32.xlu0 %v338, 1
      %v9264 = vpop.permute.xlu0 %9263
      %9265 = vrot.lane.b32.xlu0 %v339, 1
      %v9266 = vpop.permute.xlu0 %9265
      %9267 = vrot.lane.b32.xlu0 %v340, 1
      %v9268 = vpop.permute.xlu0 %9267
      %9269 = vrot.lane.b32.xlu0 %v341, 1
      %v9270 = vpop.permute.xlu0 %9269
      %v9279 = vsel %vm846, -3e+38, %v9256
      %v9280 = vsel %vm846, -3e+38, %v9258
      %v9281 = vsel %vm846, -3e+38, %v9260
      %v9282 = vsel %vm846, -3e+38, %v9262
      %v9283 = vsel %vm846, -3e+38, %v9264
      %v9284 = vsel %vm846, -3e+38, %v9266
      %v9285 = vsel %vm846, -3e+38, %v9268
      %v9286 = vsel %vm846, -3e+38, %v9270
      %v9287 = vsel %vm855, %v9279, -3e+38
      %v9288 = vsel %vm855, %v9280, -3e+38
      %v9289 = vsel %vm855, %v9281, -3e+38
      %v9290 = vsel %vm855, %v9282, -3e+38
      %v9291 = vsel %vm855, %v9283, -3e+38
      %v9292 = vsel %vm855, %v9284, -3e+38
      %v9293 = vsel %vm855, %v9285, -3e+38
      %v9294 = vsel %vm855, %v9286, -3e+38
      %v9303 = vrot.slane %v9287, 7
      %v9304 = vrot.slane %v9288, 7
      %v9305 = vsel %vm872, %v9303, %v9304
      %v9306 = vrot.slane %v9289, 7
      %v9307 = vrot.slane %v9290, 7
      %v9308 = vsel %vm872, %v9306, %v9307
      %v9309 = vrot.slane %v9291, 7
      %v9310 = vrot.slane %v9292, 7
      %v9311 = vsel %vm872, %v9309, %v9310
      %v9312 = vrot.slane %v9293, 7
      %v9313 = vrot.slane %v9294, 7
      %v9314 = vsel %vm872, %v9312, %v9313
      %v9327 = vsel %vm872, -3e+38, %v9303
      %v9328 = vsel %vm872, -3e+38, %v9306
      %v9329 = vsel %vm872, -3e+38, %v9309
      %v9330 = vsel %vm872, -3e+38, %v9312
      %v9331 = vsel %vm872, %v9304, -3e+38
      %v9332 = vsel %vm872, %v9307, -3e+38
      %v9333 = vsel %vm872, %v9310, -3e+38
      %v9334 = vsel %vm872, %v9313, -3e+38
      %9339 = vrot.lane.b32.xlu0 %v9327, 127
      %v9340 = vpop.permute.xlu0 %9339
      %9341 = vrot.lane.b32.xlu0 %v9305, 127
      %v9342 = vpop.permute.xlu0 %9341
      %9343 = vrot.lane.b32.xlu0 %v9328, 127
      %v9344 = vpop.permute.xlu0 %9343
      %9345 = vrot.lane.b32.xlu0 %v9308, 127
      %v9346 = vpop.permute.xlu0 %9345
      %9347 = vrot.lane.b32.xlu0 %v9329, 127
      %v9348 = vpop.permute.xlu0 %9347
      %9349 = vrot.lane.b32.xlu0 %v9311, 127
      %v9350 = vpop.permute.xlu0 %9349
      %9351 = vrot.lane.b32.xlu0 %v9330, 127
      %v9352 = vpop.permute.xlu0 %9351
      %9353 = vrot.lane.b32.xlu0 %v9314, 127
      %v9354 = vpop.permute.xlu0 %9353
      %v9363 = vmax.f32 %v9327, %v9340
      %v9364 = vmax.f32 %v9305, %v9342
      %v9365 = vmax.f32 %v9328, %v9344
      %v9366 = vmax.f32 %v9308, %v9346
      %v9367 = vmax.f32 %v9329, %v9348
      %v9368 = vmax.f32 %v9311, %v9350
      %v9369 = vmax.f32 %v9330, %v9352
      %v9370 = vmax.f32 %v9314, %v9354
      %9371 = vrot.lane.b32.xlu0 %v9327, 126
      %v9372 = vpop.permute.xlu0 %9371
      %9373 = vrot.lane.b32.xlu0 %v9305, 126
      %v9374 = vpop.permute.xlu0 %9373
      %9375 = vrot.lane.b32.xlu0 %v9328, 126
      %v9376 = vpop.permute.xlu0 %9375
      %9377 = vrot.lane.b32.xlu0 %v9308, 126
      %v9378 = vpop.permute.xlu0 %9377
      %9379 = vrot.lane.b32.xlu0 %v9329, 126
      %v9380 = vpop.permute.xlu0 %9379
      %9381 = vrot.lane.b32.xlu0 %v9311, 126
      %v9382 = vpop.permute.xlu0 %9381
      %9383 = vrot.lane.b32.xlu0 %v9330, 126
      %v9384 = vpop.permute.xlu0 %9383
      %9385 = vrot.lane.b32.xlu0 %v9314, 126
      %v9386 = vpop.permute.xlu0 %9385
      %v9395 = vmax.f32 %v9363, %v9372
      %v9396 = vmax.f32 %v9364, %v9374
      %v9397 = vmax.f32 %v9365, %v9376
      %v9398 = vmax.f32 %v9366, %v9378
      %v9399 = vmax.f32 %v9367, %v9380
      %v9400 = vmax.f32 %v9368, %v9382
      %v9401 = vmax.f32 %v9369, %v9384
      %v9402 = vmax.f32 %v9370, %v9386
      %v9407 = vrot.slane %v9327, 1
      %v9408 = vrot.slane %v9305, 1
      %v9409 = vsel %vm1579, %v9407, %v9408
      %v9410 = vrot.slane %v9331, 1
      %v9411 = vsel %vm1579, %v9408, %v9410
      %v9412 = vrot.slane %v9328, 1
      %v9413 = vrot.slane %v9308, 1
      %v9414 = vsel %vm1579, %v9412, %v9413
      %v9415 = vrot.slane %v9332, 1
      %v9416 = vsel %vm1579, %v9413, %v9415
      %v9417 = vrot.slane %v9329, 1
      %v9418 = vrot.slane %v9311, 1
      %v9419 = vsel %vm1579, %v9417, %v9418
      %v9420 = vrot.slane %v9333, 1
      %v9421 = vsel %vm1579, %v9418, %v9420
      %v9422 = vrot.slane %v9330, 1
      %v9423 = vrot.slane %v9314, 1
      %v9424 = vsel %vm1579, %v9422, %v9423
      %v9425 = vrot.slane %v9334, 1
      %v9426 = vsel %vm1579, %v9423, %v9425
      %v9435 = vmax.f32 %v9395, %v9409
      %v9436 = vmax.f32 %v9396, %v9411
      %v9437 = vmax.f32 %v9397, %v9414
      %v9438 = vmax.f32 %v9398, %v9416
      %v9439 = vmax.f32 %v9399, %v9419
      %v9440 = vmax.f32 %v9400, %v9421
      %v9441 = vmax.f32 %v9401, %v9424
      %v9442 = vmax.f32 %v9402, %v9426
      %9443 = vrot.lane.b32.xlu0 %v9409, 127
      %v9444 = vpop.permute.xlu0 %9443
      %9445 = vrot.lane.b32.xlu0 %v9411, 127
      %v9446 = vpop.permute.xlu0 %9445
      %9447 = vrot.lane.b32.xlu0 %v9414, 127
      %v9448 = vpop.permute.xlu0 %9447
      %9449 = vrot.lane.b32.xlu0 %v9416, 127
      %v9450 = vpop.permute.xlu0 %9449
      %9451 = vrot.lane.b32.xlu0 %v9419, 127
      %v9452 = vpop.permute.xlu0 %9451
      %9453 = vrot.lane.b32.xlu0 %v9421, 127
      %v9454 = vpop.permute.xlu0 %9453
      %9455 = vrot.lane.b32.xlu0 %v9424, 127
      %v9456 = vpop.permute.xlu0 %9455
      %9457 = vrot.lane.b32.xlu0 %v9426, 127
      %v9458 = vpop.permute.xlu0 %9457
      %v9467 = vmax.f32 %v9435, %v9444
      %v9468 = vmax.f32 %v9436, %v9446
      %v9469 = vmax.f32 %v9437, %v9448
      %v9470 = vmax.f32 %v9438, %v9450
      %v9471 = vmax.f32 %v9439, %v9452
      %v9472 = vmax.f32 %v9440, %v9454
      %v9473 = vmax.f32 %v9441, %v9456
      %v9474 = vmax.f32 %v9442, %v9458
      %9475 = vrot.lane.b32.xlu0 %v9409, 126
      %v9476 = vpop.permute.xlu0 %9475
      %9477 = vrot.lane.b32.xlu0 %v9411, 126
      %v9478 = vpop.permute.xlu0 %9477
      %9479 = vrot.lane.b32.xlu0 %v9414, 126
      %v9480 = vpop.permute.xlu0 %9479
      %9481 = vrot.lane.b32.xlu0 %v9416, 126
      %v9482 = vpop.permute.xlu0 %9481
      %9483 = vrot.lane.b32.xlu0 %v9419, 126
      %v9484 = vpop.permute.xlu0 %9483
      %9485 = vrot.lane.b32.xlu0 %v9421, 126
      %v9486 = vpop.permute.xlu0 %9485
      %9487 = vrot.lane.b32.xlu0 %v9424, 126
      %v9488 = vpop.permute.xlu0 %9487
      %9489 = vrot.lane.b32.xlu0 %v9426, 126
      %v9490 = vpop.permute.xlu0 %9489
      %v9499 = vmax.f32 %v9467, %v9476
      %v9500 = vmax.f32 %v9468, %v9478
      %v9501 = vmax.f32 %v9469, %v9480
      %v9502 = vmax.f32 %v9470, %v9482
      %v9503 = vmax.f32 %v9471, %v9484
      %v9504 = vmax.f32 %v9472, %v9486
      %v9505 = vmax.f32 %v9473, %v9488
      %v9506 = vmax.f32 %v9474, %v9490
      %v9507 = vrot.slane %v9327, 2
      %v9508 = vrot.slane %v9305, 2
      %v9509 = vsel %vm2274, %v9507, %v9508
      %v9510 = vrot.slane %v9331, 2
      %v9511 = vsel %vm2274, %v9508, %v9510
      %v9512 = vrot.slane %v9328, 2
      %v9513 = vrot.slane %v9308, 2
      %v9514 = vsel %vm2274, %v9512, %v9513
      %v9515 = vrot.slane %v9332, 2
      %v9516 = vsel %vm2274, %v9513, %v9515
      %v9517 = vrot.slane %v9329, 2
      %v9518 = vrot.slane %v9311, 2
      %v9519 = vsel %vm2274, %v9517, %v9518
      %v9520 = vrot.slane %v9333, 2
      %v9521 = vsel %vm2274, %v9518, %v9520
      %v9522 = vrot.slane %v9330, 2
      %v9523 = vrot.slane %v9314, 2
      %v9524 = vsel %vm2274, %v9522, %v9523
      %v9525 = vrot.slane %v9334, 2
      %v9526 = vsel %vm2274, %v9523, %v9525
      %v9535 = vmax.f32 %v9499, %v9509
      %v9536 = vmax.f32 %v9500, %v9511
      %v9537 = vmax.f32 %v9501, %v9514
      %v9538 = vmax.f32 %v9502, %v9516
      %v9539 = vmax.f32 %v9503, %v9519
      %v9540 = vmax.f32 %v9504, %v9521
      %v9541 = vmax.f32 %v9505, %v9524
      %v9542 = vmax.f32 %v9506, %v9526
      %9543 = vrot.lane.b32.xlu0 %v9509, 127
      %v9544 = vpop.permute.xlu0 %9543
      %9545 = vrot.lane.b32.xlu0 %v9511, 127
      %v9546 = vpop.permute.xlu0 %9545
      %9547 = vrot.lane.b32.xlu0 %v9514, 127
      %v9548 = vpop.permute.xlu0 %9547
      %9549 = vrot.lane.b32.xlu0 %v9516, 127
      %v9550 = vpop.permute.xlu0 %9549
      %9551 = vrot.lane.b32.xlu0 %v9519, 127
      %v9552 = vpop.permute.xlu0 %9551
      %9553 = vrot.lane.b32.xlu0 %v9521, 127
      %v9554 = vpop.permute.xlu0 %9553
      %9555 = vrot.lane.b32.xlu0 %v9524, 127
      %v9556 = vpop.permute.xlu0 %9555
      %9557 = vrot.lane.b32.xlu0 %v9526, 127
      %v9558 = vpop.permute.xlu0 %9557
      %v9567 = vmax.f32 %v9535, %v9544
      %v9568 = vmax.f32 %v9536, %v9546
      %v9569 = vmax.f32 %v9537, %v9548
      %v9570 = vmax.f32 %v9538, %v9550
      %v9571 = vmax.f32 %v9539, %v9552
      %v9572 = vmax.f32 %v9540, %v9554
      %v9573 = vmax.f32 %v9541, %v9556
      %v9574 = vmax.f32 %v9542, %v9558
      %9575 = vrot.lane.b32.xlu0 %v9509, 126
      %v9576 = vpop.permute.xlu0 %9575
      %9577 = vrot.lane.b32.xlu0 %v9511, 126
      %v9578 = vpop.permute.xlu0 %9577
      %9579 = vrot.lane.b32.xlu0 %v9514, 126
      %v9580 = vpop.permute.xlu0 %9579
      %9581 = vrot.lane.b32.xlu0 %v9516, 126
      %v9582 = vpop.permute.xlu0 %9581
      %9583 = vrot.lane.b32.xlu0 %v9519, 126
      %v9584 = vpop.permute.xlu0 %9583
      %9585 = vrot.lane.b32.xlu0 %v9521, 126
      %v9586 = vpop.permute.xlu0 %9585
      %9587 = vrot.lane.b32.xlu0 %v9524, 126
      %v9588 = vpop.permute.xlu0 %9587
      %9589 = vrot.lane.b32.xlu0 %v9526, 126
      %v9590 = vpop.permute.xlu0 %9589
      %v9599 = vmax.f32 %v9567, %v9576
      %v9600 = vmax.f32 %v9568, %v9578
      %v9601 = vmax.f32 %v9569, %v9580
      %v9602 = vmax.f32 %v9570, %v9582
      %v9603 = vmax.f32 %v9571, %v9584
      %v9604 = vmax.f32 %v9572, %v9586
      %v9605 = vmax.f32 %v9573, %v9588
      %v9606 = vmax.f32 %v9574, %v9590
      %v9607 = vcombine.low %v9599, %v9603
      %v9608 = vcombine.high %v9599, %v9603
      %v9610 = vunpack.c.l.s4 1983009808
      %v9611 = vunpack.c.0.s8 %v9610
      %v9612 = vlaneseq
      %v9613 = vshrl.u32 %v9612, 7
      %v9614 = vsub.s32 %v9611, %v9613
      %v9615 = vrot.slane %v9607, %v9614
      %v9617 = vunpack.c.l.s4 1983009808
      %v9618 = vunpack.c.0.s8 %v9617
      %v9619 = vlaneseq
      %v9620 = vshrl.u32 %v9619, 7
      %v9621 = vsub.s32 %v9618, %v9620
      %v9622 = vrot.slane %v9608, %v9621
      %v9623 = vcombine.low %v9601, %v9605
      %v9624 = vcombine.high %v9601, %v9605
      %v9626 = vunpack.c.l.s4 1983009808
      %v9627 = vunpack.c.0.s8 %v9626
      %v9628 = vlaneseq
      %v9629 = vshrl.u32 %v9628, 7
      %v9630 = vsub.s32 %v9627, %v9629
      %v9631 = vrot.slane %v9623, %v9630
      %v9633 = vunpack.c.l.s4 1983009808
      %v9634 = vunpack.c.0.s8 %v9633
      %v9635 = vlaneseq
      %v9636 = vshrl.u32 %v9635, 7
      %v9637 = vsub.s32 %v9634, %v9636
      %v9638 = vrot.slane %v9624, %v9637
      %v9639 = vcombine.low %v9615, %v9631
      %v9640 = vcombine.high %v9615, %v9631
      %v9642 = vunpack.c.l.s4 1934713408
      %v9643 = vunpack.c.0.s8 %v9642
      %v9644 = vlaneseq
      %v9645 = vshrl.u32 %v9644, 7
      %v9646 = vsub.s32 %v9643, %v9645
      %v9647 = vrot.slane %v9639, %v9646
      %v9649 = vunpack.c.l.s4 1934713408
      %v9650 = vunpack.c.0.s8 %v9649
      %v9651 = vlaneseq
      %v9652 = vshrl.u32 %v9651, 7
      %v9653 = vsub.s32 %v9650, %v9652
      %v9654 = vrot.slane %v9640, %v9653
      %v9655 = vcombine.low %v9622, %v9638
      %v9656 = vcombine.high %v9622, %v9638
      %v9658 = vunpack.c.l.s4 1934713408
      %v9659 = vunpack.c.0.s8 %v9658
      %v9660 = vlaneseq
      %v9661 = vshrl.u32 %v9660, 7
      %v9662 = vsub.s32 %v9659, %v9661
      %v9663 = vrot.slane %v9655, %v9662
      %v9665 = vunpack.c.l.s4 1934713408
      %v9666 = vunpack.c.0.s8 %v9665
      %v9667 = vlaneseq
      %v9668 = vshrl.u32 %v9667, 7
      %v9669 = vsub.s32 %v9666, %v9668
      %v9670 = vrot.slane %v9656, %v9669
      %v9671 = vcombine.high %v9647, 0.0
      %v9672 = vcombine.high %v9654, 0.0
      %v9673 = vcombine.high %v9663, 0.0
      %v9674 = vcombine.high %v9670, 0.0
      %v9675 = vcombine.low %v9600, %v9604
      %v9676 = vcombine.high %v9600, %v9604
      %v9678 = vunpack.c.l.s4 1983009808
      %v9679 = vunpack.c.0.s8 %v9678
      %v9680 = vlaneseq
      %v9681 = vshrl.u32 %v9680, 7
      %v9682 = vsub.s32 %v9679, %v9681
      %v9683 = vrot.slane %v9675, %v9682
      %v9685 = vunpack.c.l.s4 1983009808
      %v9686 = vunpack.c.0.s8 %v9685
      %v9687 = vlaneseq
      %v9688 = vshrl.u32 %v9687, 7
      %v9689 = vsub.s32 %v9686, %v9688
      %v9690 = vrot.slane %v9676, %v9689
      %v9691 = vcombine.low %v9602, %v9606
      %v9692 = vcombine.high %v9602, %v9606
      %v9694 = vunpack.c.l.s4 1983009808
      %v9695 = vunpack.c.0.s8 %v9694
      %v9696 = vlaneseq
      %v9697 = vshrl.u32 %v9696, 7
      %v9698 = vsub.s32 %v9695, %v9697
      %v9699 = vrot.slane %v9691, %v9698
      %v9701 = vunpack.c.l.s4 1983009808
      %v9702 = vunpack.c.0.s8 %v9701
      %v9703 = vlaneseq
      %v9704 = vshrl.u32 %v9703, 7
      %v9705 = vsub.s32 %v9702, %v9704
      %v9706 = vrot.slane %v9692, %v9705
      %v9707 = vcombine.low %v9683, %v9699
      %v9708 = vcombine.high %v9683, %v9699
      %v9710 = vunpack.c.l.s4 1934713408
      %v9711 = vunpack.c.0.s8 %v9710
      %v9712 = vlaneseq
      %v9713 = vshrl.u32 %v9712, 7
      %v9714 = vsub.s32 %v9711, %v9713
      %v9715 = vrot.slane %v9707, %v9714
      %v9717 = vunpack.c.l.s4 1934713408
      %v9718 = vunpack.c.0.s8 %v9717
      %v9719 = vlaneseq
      %v9720 = vshrl.u32 %v9719, 7
      %v9721 = vsub.s32 %v9718, %v9720
      %v9722 = vrot.slane %v9708, %v9721
      %v9723 = vcombine.low %v9690, %v9706
      %v9724 = vcombine.high %v9690, %v9706
      %v9726 = vunpack.c.l.s4 1934713408
      %v9727 = vunpack.c.0.s8 %v9726
      %v9728 = vlaneseq
      %v9729 = vshrl.u32 %v9728, 7
      %v9730 = vsub.s32 %v9727, %v9729
      %v9731 = vrot.slane %v9723, %v9730
      %v9733 = vunpack.c.l.s4 1934713408
      %v9734 = vunpack.c.0.s8 %v9733
      %v9735 = vlaneseq
      %v9736 = vshrl.u32 %v9735, 7
      %v9737 = vsub.s32 %v9734, %v9736
      %v9738 = vrot.slane %v9724, %v9737
      %v9739 = vcombine.high %v9715, 0.0
      %v9740 = vcombine.high %v9722, 0.0
      %v9741 = vcombine.high %v9731, 0.0
      %v9742 = vcombine.high %v9738, 0.0
      %9744 = vrot.lane.b32.xlu0 %v9671, 16
      %v9745 = vpop.permute.xlu0 %9744
      %9748 = vrot.lane.b32.xlu0 %v9654, 32
      %v9749 = vpop.permute.xlu0 %9748
      %9752 = vrot.lane.b32.xlu0 %v9672, 48
      %v9753 = vpop.permute.xlu0 %9752
      %9756 = vrot.lane.b32.xlu0 %v9663, 64
      %v9757 = vpop.permute.xlu0 %9756
      %9760 = vrot.lane.b32.xlu0 %v9673, 80
      %v9761 = vpop.permute.xlu0 %9760
      %9764 = vrot.lane.b32.xlu0 %v9670, 96
      %v9765 = vpop.permute.xlu0 %9764
      %9768 = vrot.lane.b32.xlu0 %v9674, 112
      %v9769 = vpop.permute.xlu0 %9768
      %9772 = vrot.lane.b32.xlu0 %v9739, 16
      %v9773 = vpop.permute.xlu0 %9772
      %9776 = vrot.lane.b32.xlu0 %v9722, 32
      %v9777 = vpop.permute.xlu0 %9776
      %9780 = vrot.lane.b32.xlu0 %v9740, 48
      %v9781 = vpop.permute.xlu0 %9780
      %9784 = vrot.lane.b32.xlu0 %v9731, 64
      %v9785 = vpop.permute.xlu0 %9784
      %9788 = vrot.lane.b32.xlu0 %v9741, 80
      %v9789 = vpop.permute.xlu0 %9788
      %9792 = vrot.lane.b32.xlu0 %v9738, 96
      %v9793 = vpop.permute.xlu0 %9792
      %9796 = vrot.lane.b32.xlu0 %v9742, 112
      %v9797 = vpop.permute.xlu0 %9796
      %v9799 = vsel %vm534, %v9647, %v9745
      %v9800 = vsel %vm536, %v9799, %v9749
      %v9801 = vsel %vm538, %v9800, %v9753
      %v9802 = vsel %vm540, %v9801, %v9757
      %v9803 = vsel %vm542, %v9802, %v9761
      %v9804 = vsel %vm544, %v9803, %v9765
      %v9805 = vsel %vm546, %v9804, %v9769
      %v9806 = vsel %vm534, %v9715, %v9773
      %v9807 = vsel %vm536, %v9806, %v9777
      %v9808 = vsel %vm538, %v9807, %v9781
      %v9809 = vsel %vm540, %v9808, %v9785
      %v9810 = vsel %vm542, %v9809, %v9789
      %v9811 = vsel %vm544, %v9810, %v9793
      %v9812 = vsel %vm546, %v9811, %v9797
      %v9813 = vld [vmem:[%s7] sm:$0xf]
      %v9814 = vpack.c.bf16 %v9805, %v9805
      %v9815 = vpack.c.bf16 %v9812, %v9812
      %v9816 = vld [vmem:[%s8] sm:$0xff]
      %9818 = vset.pattern.permute.xlu0 0
      %9819 = vperm.xlu0 %9818, %v9816
      %v9820 = vpop.permute.xlu0 %9819
      %v9823 = vsel %vm576, %v9813, 0
      %v9826 = vsel %vm580, %v9814, 0
      %v9829 = vsel %vm580, %v9815, 0
      %9831 = vmatprep.subr.bf16.mxu0 %v9829
      %9832 = vmatpush1.bf16.msra.mxu0 %v9826
      %9833 = vmatprep.subr.bf16.mxu0 0
      %9834 = vmatpush1.bf16.msra.mxu0 0
      %9835 = vmatprep.subr.bf16.mxu0 0
      %9836 = vmatpush1.bf16.msra.mxu0 0
      %9837 = vmatprep.subr.bf16.mxu0 0
      %9838 = vmatpush1.bf16.msra.mxu0 0
      %9839 = vmatprep.subr.bf16.mxu0 0
      %9840 = vmatpush1.bf16.msra.mxu0 0
      %9841 = vmatprep.subr.bf16.mxu0 0
      %9842 = vmatpush1.bf16.msra.mxu0 0
      %9843 = vmatprep.subr.bf16.mxu0 0
      %9844 = vmatpush1.bf16.msra.mxu0 0
      %9845 = vmatprep.subr.bf16.mxu0 0
      %9846 = vmatpush1.bf16.msra.mxu0 0
      %9847 = vmatprep.subr.bf16.mxu0 0
      %9848 = vmatpush1.bf16.msra.mxu0 0
      %9849 = vmatprep.subr.bf16.mxu0 0
      %9850 = vmatpush1.bf16.msra.mxu0 0
      %9851 = vmatprep.subr.bf16.mxu0 0
      %9852 = vmatpush1.bf16.msra.mxu0 0
      %9853 = vmatprep.subr.bf16.mxu0 0
      %9854 = vmatpush1.bf16.msra.mxu0 0
      %9855 = vmatprep.subr.bf16.mxu0 0
      %9856 = vmatpush1.bf16.msra.mxu0 0
      %9857 = vmatprep.subr.bf16.mxu0 0
      %9858 = vmatpush1.bf16.msra.mxu0 0
      %9859 = vmatprep.subr.bf16.mxu0 0
      %9860 = vmatpush1.bf16.msra.mxu0 0
      %9861 = vmatprep.subr.bf16.mxu0 0
      %9862 = vmatpush1.bf16.msra.mxu0 0
      %9863 = vmatprep.mubr.bf16.mxu0 0
      %9864 = vmatmul.mubr.bf16.gmra.mrb[0].mxu0 %v9823
      %v9865 = vpop.f32.mrb[0].mxu0
      %v9866 = vadd.f32 %v9820, %v9865
      %v9867 = vpop.f32.mrb[0].mxu0
      %v9868 = vadd.f32 %v9820, %v9867
      %v9869 = vpop.f32.mrb[0].mxu0
      %v9870 = vpop.f32.mrb[0].mxu0
      %9871 = vdwg.mxu0
      %v9872 = vmax.f32 %v9866, 0.0
      %v9873 = vmax.f32 %v9868, 0.0
      %9874 = vst [vmem:[%s332] sm:$0xff] %v630
      %9875 = vst [vmem:[%s332 + $0x8] sm:$0xff] %v631
      %9876 = vst [vmem:[%s332 + $0x10] sm:$0xff] %v3066
      %9877 = vst [vmem:[%s332 + $0x18] sm:$0xff] %v3067
      %9878 = vst [vmem:[%s332 + $0x20] sm:$0xff] %v9245
      %9879 = vst [vmem:[%s332 + $0x28] sm:$0xff] %v9246
      %9880 = vst [vmem:[%s332 + $0x30] sm:$0xff] %v9872
      %9881 = vst [vmem:[%s332 + $0x38] sm:$0xff] %v9873
      %p9882 = scmp.lt.s32.totalorder %s20, 1
      %s9883 = scalar_select %p9882, %s20, 1
      %s9884 = smul.addr %s9883, 8
      %s9885 = smul.addr %s9884, 8
      %s9886 = scalar_lea.vmem %s9, %s9885
      // Predicated region
      $region57: #{inception_forward.1} parent=55 // pred_check
        %p9887 = pneg %p232
      $region58: #{inception_forward.1} parent=55 // pred_check_branch
        %9889 = sbr.rel (%p9887) target = $region60
      $region59: #{inception_forward.1} parent=55 // pred_region
        _
      $region60: #{inception_forward.1} parent=55 // pred_fallthru
        _
    $region56: #{inception_forward.1} parent=5 // pred_fallthru
      _
    %p9890 = scmp.le.s32.totalorder 2, %s15
    // Predicated region
    $region61: #{inception_forward.1} parent=5 // pred_check
      %p9891 = pneg %p9890
    $region62: #{inception_forward.1} parent=5 // pred_check_branch
      %9893 = sbr.rel (%p9891) target = $region64
    $region63: #{inception_forward.1} parent=5 // pred_region
      %s9894 = ssub.s32 %s15, 2
      // Predicated region
      $region65: #{inception_forward.1} parent=63 // pred_check
        %p9895 = pneg %p238
      $region66: #{inception_forward.1} parent=63 // pred_check_branch
        %9897 = sbr.rel (%p9895) target = $region68
      $region67: #{inception_forward.1} parent=63 // pred_region
        %p9898 = scmp.lt.s32.totalorder %s21, 1
        %s9899 = scalar_select %p9898, %s21, 1
        %s9900 = smul.addr %s9899, 8
        %s9901 = smul.addr %s9900, 8
        %s9902 = scalar_lea.vmem %s9, %s9901
      $region68: #{inception_forward.1} parent=63 // pred_fallthru
        _
    $region64: #{inception_forward.1} parent=5 // pred_fallthru
      _
  $region6: #{inception_forward.1} parent=0 // loop_footer
    %s19 = sadd.s32 1, %s15
  $region7: #{inception_forward.1} parent=0 // loop_footer_branch
    %14 = sbr.rel target = $region3
  $region8: #{inception_forward.1} parent=0 // loop_exit
    _

</llo_original>
